<compile_context>
chip_gen: v6e
topology: v6e:2x2x1
jax: 0.10.0
libtpu: 0.0.40
codegen_flags: <defaults>
</compile_context>

<pallas_src>
import math

import jax
import jax.numpy as jnp
from jax.experimental import pallas as pl
from jax.experimental.pallas import tpu as pltpu

BN_EPS = 1e-5


# --------------------------------------------------------------------------
# Fused Pallas kernel: 4x (conv3x3 + folded-BN + ReLU) -> Linear + folded-BN1d
# + ReLU, for one batch element per grid step.  Everything lives in VMEM.
# --------------------------------------------------------------------------
def conv_stack_kernel(x_ref,
                      w1_ref, b1_ref, w2_ref, b2_ref,
                      w3_ref, b3_ref, w4_ref, b4_ref,
                      wl_ref, bl_ref,
                      o_ref,
                      pad_a, col_a, pad_b, col_b, pad_c, col_c):
    """x_ref: (1, T, F, Cin) NHWC input tile.
    w*_ref: (9*Cin, Cout) bf16 im2col conv weights (BN scale folded in).
    b*_ref: (1, Cout) f32 folded BN shift.
    wl_ref: (F*40, Dout) bf16 linear weight (flatten permutation + BN folded).
    bl_ref: (1, Dout) f32 folded BN1d shift.
    o_ref : (1, T, Dout).
    pad_*/col_* : VMEM scratch (padded activation / im2col patch matrix).
    """
    _, T, F, _ = x_ref.shape

    def conv3x3(act, pad_ref, col_ref, w_ref, b_ref):
        """act: (T, F, Cin) f32 -> (T, F, Cout) f32 after conv+BN+ReLU."""
        cin = pad_ref.shape[-1]
        # Zero halo in VMEM, then write the interior (replaces HBM jnp.pad).
        pad_ref[...] = jnp.zeros(pad_ref.shape, pad_ref.dtype)
        pad_ref[1:T + 1, 1:F + 1, :] = act
        # Build the (T*F, 9*Cin) patch matrix once, then one big MXU dot.
        for t in range(9):
            dh, dw = t // 3, t % 3
            col_ref[:, t * cin:(t + 1) * cin] = (
                pad_ref[dh:dh + T, dw:dw + F, :].reshape(T * F, cin))
        y = jnp.dot(col_ref[...].astype(jnp.bfloat16), w_ref[...],
                    preferred_element_type=jnp.float32)
        y = jnp.maximum(y + b_ref[...], 0.0)          # bias + ReLU in f32
        return y.reshape(T, F, -1)

    a = x_ref[0].astype(jnp.float32)                  # (T, F, Cin)
    a = conv3x3(a, pad_a, col_a, w1_ref, b1_ref)      # (T, F, 20)
    a = conv3x3(a, pad_b, col_b, w2_ref, b2_ref)      # (T, F, 20)
    a = conv3x3(a, pad_b, col_b, w3_ref, b3_ref)      # (T, F, 40)
    a = conv3x3(a, pad_c, col_c, w4_ref, b4_ref)      # (T, F, 40)

    # Natural NHWC flatten -> (T, F*C); the PyTorch channel-major ordering is
    # already folded into wl's row permutation, so no activation transpose.
    cc = a.shape[-1]
    lin_in = jnp.concatenate([a[:, f, :] for f in range(F)], axis=-1)
    y = jnp.dot(lin_in.astype(jnp.bfloat16), wl_ref[...],
                preferred_element_type=jnp.float32)   # (T, Dout), K = F*40
    y = jnp.maximum(y + bl_ref[...], 0.0)
    o_ref[0, :, :] = y.astype(o_ref.dtype)


# --------------------------------------------------------------------------
# Wrapper
# --------------------------------------------------------------------------
def conv_stack_forward(x_nchw, convs, out_params):
    """x_nchw: (B, Cin, T, F) like the PyTorch module. Returns (B, T, Dout)."""
    B, Cin, T, F = x_nchw.shape
    x = jnp.transpose(x_nchw, (0, 2, 3, 1)).astype(jnp.float32)   # NHWC
    (w1, b1), (w2, b2), (w3, b3), (w4, b4) = convs
    wl, bl = out_params
    Dout = wl.shape[-1]
    c_mid = w1.shape[-1]      # 20 (input channels of conv2/conv3)
    c_hi = w3.shape[-1]       # 40 (input channels of conv4)

    def w_spec(a):
        return pl.BlockSpec(a.shape, lambda b: (0, 0))

    # grid=(B,) "parallel": with B=2 this maps one batch element per
    # TensorCore on v7x; v5e/v6e run the 2 steps back-to-back on one TC.
    return pl.pallas_call(
        conv_stack_kernel,
        out_shape=jax.ShapeDtypeStruct((B, T, Dout), jnp.float32),
        grid_spec=pltpu.PrefetchScalarGridSpec(
            num_scalar_prefetch=0,
            grid=(B,),
            in_specs=[
                pl.BlockSpec((1, T, F, Cin), lambda b: (b, 0, 0, 0)),
                w_spec(w1), w_spec(b1), w_spec(w2), w_spec(b2),
                w_spec(w3), w_spec(b3), w_spec(w4), w_spec(b4),
                w_spec(wl), w_spec(bl),
            ],
            out_specs=pl.BlockSpec((1, T, Dout), lambda b: (b, 0, 0)),
            scratch_shapes=[
                pltpu.VMEM((T + 2, F + 2, Cin), jnp.float32),    # pad_a
                pltpu.VMEM((T * F, 9 * Cin), jnp.float32),       # col_a
                pltpu.VMEM((T + 2, F + 2, c_mid), jnp.float32),  # pad_b (L2+L3)
                pltpu.VMEM((T * F, 9 * c_mid), jnp.float32),     # col_b (L2+L3)
                pltpu.VMEM((T + 2, F + 2, c_hi), jnp.float32),   # pad_c
                pltpu.VMEM((T * F, 9 * c_hi), jnp.float32),      # col_c
            ],
        ),
        compiler_params=pltpu.CompilerParams(
            dimension_semantics=("parallel",)),
    )(x, w1, b1, w2, b2, w3, b3, w4, b4, wl, bl)


# --------------------------------------------------------------------------
# Parameter construction (mirrors ConvStack.__init__/init_weight, eval mode)
# --------------------------------------------------------------------------
def xavier_uniform(key, shape, fan_in, fan_out):
    bound = math.sqrt(6.0 / (fan_in + fan_out))
    return jax.random.uniform(key, shape, jnp.float32, -bound, bound)


def fold_bn(w, gamma, beta, mean, var, eps=BN_EPS):
    """Fold eval-mode BatchNorm (per output channel) into a weight whose last
    axis is the output channel, plus an additive bias."""
    scale = gamma / jnp.sqrt(var + eps)
    return w * scale, (beta - mean * scale).reshape(1, -1)


def make_params(key, in_channels, freq_bins, output_size):
    ks = jax.random.split(key, 5)
    chans = [(in_channels, 20), (20, 20), (20, 40), (40, 40)]
    convs = []
    for k, (ci, co) in zip(ks[:4], chans):
        # torch Conv2d weight (Cout, Cin, 3, 3); xavier fan_in=Cin*9, fan_out=Cout*9
        w = xavier_uniform(k, (co, ci, 3, 3), ci * 9, co * 9)
        # -> im2col layout (9*Cin, Cout), row index = (dh*3+dw)*Cin + cin
        w = jnp.transpose(w, (2, 3, 1, 0)).reshape(9 * ci, co)
        # eval BN2d at init: mean=0, var=1, gamma=1, beta=0; Conv2d has bias=False
        ones = jnp.ones((co,), jnp.float32)
        zeros = jnp.zeros((co,), jnp.float32)
        w, b = fold_bn(w, ones, zeros, zeros, ones)
        convs.append((w.astype(jnp.bfloat16), b.astype(jnp.float32)))

    d_in = freq_bins * 40
    # torch Linear weight (Dout, 40*F); PyTorch flatten is channel-major
    # (row index c*F + f).  Permute rows to the kernel's NHWC flatten order
    # (f*C + c), folding the activation transpose into the weight.
    w = xavier_uniform(ks[4], (output_size, d_in), d_in, output_size)
    w = jnp.transpose(w)                                   # (C*F, Dout)
    w = w.reshape(40, freq_bins, output_size)
    w = jnp.transpose(w, (1, 0, 2)).reshape(freq_bins * 40, output_size)
    ones = jnp.ones((output_size,), jnp.float32)
    zeros = jnp.zeros((output_size,), jnp.float32)
    w, b = fold_bn(w, ones, zeros, zeros, ones)            # BN1d; Linear bias=False
    return convs, (w.astype(jnp.bfloat16), b.astype(jnp.float32))


# --------------------------------------------------------------------------
if __name__ == "__main__":
    B, IN_CH, T, FREQ, OUT = 2, 1, 8, 16, 32

    key = jax.random.PRNGKey(0)
    k_x, k_p = jax.random.split(key)
    x = jax.random.normal(k_x, (B, IN_CH, T, FREQ), jnp.float32)  # NCHW like torch

    convs, out_params = make_params(k_p, IN_CH, FREQ, OUT)

    # TODO(synk): dropout(p=0.2) and batch-statistics BN only act in training
    # mode; eval-mode semantics (identity dropout, running-stat BN folded into
    # the weights) are what this kernel implements.
    forward = jax.jit(conv_stack_forward)
    y = forward(x, convs, out_params)
    jax.block_until_ready(y)
    assert y.shape == (B, T, OUT), y.shape
    print("KERNEL_OK")
</pallas_src>

<mosaic_0001>
module attributes {stable_mosaic.version = 11 : i64} {
  func.func @conv_stack_kernel(%arg0: i32, %arg1: memref<1x8x16x1xf32, #tpu.memory_space<vmem>>, %arg2: memref<9x20xbf16, #tpu.memory_space<vmem>>, %arg3: memref<1x20xf32, #tpu.memory_space<vmem>>, %arg4: memref<180x20xbf16, #tpu.memory_space<vmem>>, %arg5: memref<1x20xf32, #tpu.memory_space<vmem>>, %arg6: memref<180x40xbf16, #tpu.memory_space<vmem>>, %arg7: memref<1x40xf32, #tpu.memory_space<vmem>>, %arg8: memref<360x40xbf16, #tpu.memory_space<vmem>>, %arg9: memref<1x40xf32, #tpu.memory_space<vmem>>, %arg10: memref<640x32xbf16, #tpu.memory_space<vmem>>, %arg11: memref<1x32xf32, #tpu.memory_space<vmem>>, %arg12: memref<1x8x32xf32, #tpu.memory_space<vmem>>, %arg13: memref<10x18x1xf32, #tpu.memory_space<vmem>>, %arg14: memref<128x9xf32, #tpu.memory_space<vmem>>, %arg15: memref<10x18x20xf32, #tpu.memory_space<vmem>>, %arg16: memref<128x180xf32, #tpu.memory_space<vmem>>, %arg17: memref<10x18x40xf32, #tpu.memory_space<vmem>>, %arg18: memref<128x360xf32, #tpu.memory_space<vmem>>) attributes {dimension_semantics = [#tpu.dimension_semantics<parallel>], iteration_bounds = array<i64: 2>, scalar_prefetch = 0 : i64, scratch_operands = 6 : i64, tpu.core_type = #tpu.core_type<tc>, window_params = [{transform_indices = @transform_0, window_bounds = array<i64: 1, 8, 16, 1>}, {pipeline_mode = #tpu.pipeline_mode<synchronous>, transform_indices = @transform_1, window_bounds = array<i64: 9, 20>}, {pipeline_mode = #tpu.pipeline_mode<synchronous>, transform_indices = @transform_2, window_bounds = array<i64: 1, 20>}, {pipeline_mode = #tpu.pipeline_mode<synchronous>, transform_indices = @transform_3, window_bounds = array<i64: 180, 20>}, {pipeline_mode = #tpu.pipeline_mode<synchronous>, transform_indices = @transform_4, window_bounds = array<i64: 1, 20>}, {pipeline_mode = #tpu.pipeline_mode<synchronous>, transform_indices = @transform_5, window_bounds = array<i64: 180, 40>}, {pipeline_mode = #tpu.pipeline_mode<synchronous>, transform_indices = @transform_6, window_bounds = array<i64: 1, 40>}, {pipeline_mode = #tpu.pipeline_mode<synchronous>, transform_indices = @transform_7, window_bounds = array<i64: 360, 40>}, {pipeline_mode = #tpu.pipeline_mode<synchronous>, transform_indices = @transform_8, window_bounds = array<i64: 1, 40>}, {pipeline_mode = #tpu.pipeline_mode<synchronous>, transform_indices = @transform_9, window_bounds = array<i64: 640, 32>}, {pipeline_mode = #tpu.pipeline_mode<synchronous>, transform_indices = @transform_10, window_bounds = array<i64: 1, 32>}, {transform_indices = @transform_11, window_bounds = array<i64: 1, 8, 32>}]} {
    %c0 = arith.constant 0 : index
    %c0_0 = arith.constant 0 : index
    %c0_1 = arith.constant 0 : index
    %c0_2 = arith.constant 0 : index
    %0 = vector.load %arg1[%c0, %c0_0, %c0_1, %c0_2] : memref<1x8x16x1xf32, #tpu.memory_space<vmem>>, vector<1x8x16x1xf32>
    %1 = vector.shape_cast %0 : vector<1x8x16x1xf32> to vector<8x16x1xf32>
    %cst = arith.constant 0.000000e+00 : f32
    %2 = vector.broadcast %cst : f32 to vector<10x18x1xf32>
    %c0_3 = arith.constant 0 : index
    %c0_4 = arith.constant 0 : index
    %c0_5 = arith.constant 0 : index
    %3 = vector.load %arg13[%c0_3, %c0_4, %c0_5] : memref<10x18x1xf32, #tpu.memory_space<vmem>>, vector<10x18x1xf32>
    tpu.vector_store %arg13[%c0_3, %c0_4, %c0_5], %2 {strides = array<i32>} : memref<10x18x1xf32, #tpu.memory_space<vmem>>, vector<10x18x1xf32>,
    %c1 = arith.constant 1 : index
    %c1_6 = arith.constant 1 : index
    %c0_7 = arith.constant 0 : index
    %4 = vector.load %arg13[%c1, %c1_6, %c0_7] : memref<10x18x1xf32, #tpu.memory_space<vmem>>, vector<8x16x1xf32>
    tpu.vector_store %arg13[%c1, %c1_6, %c0_7], %1 {strides = array<i32>} : memref<10x18x1xf32, #tpu.memory_space<vmem>>, vector<8x16x1xf32>,
    %c0_8 = arith.constant 0 : index
    %c0_9 = arith.constant 0 : index
    %c0_10 = arith.constant 0 : index
    %5 = vector.load %arg13[%c0_8, %c0_9, %c0_10] : memref<10x18x1xf32, #tpu.memory_space<vmem>>, vector<8x16x1xf32>
    %6 = vector.shape_cast %5 : vector<8x16x1xf32> to vector<128x1xf32>
    %c0_11 = arith.constant 0 : index
    %c0_12 = arith.constant 0 : index
    %7 = vector.load %arg14[%c0_11, %c0_12] : memref<128x9xf32, #tpu.memory_space<vmem>>, vector<128x1xf32>
    tpu.vector_store %arg14[%c0_11, %c0_12], %6 {strides = array<i32>} : memref<128x9xf32, #tpu.memory_space<vmem>>, vector<128x1xf32>,
    %c0_13 = arith.constant 0 : index
    %c1_14 = arith.constant 1 : index
    %c0_15 = arith.constant 0 : index
    %8 = vector.load %arg13[%c0_13, %c1_14, %c0_15] : memref<10x18x1xf32, #tpu.memory_space<vmem>>, vector<8x16x1xf32>
    %9 = vector.shape_cast %8 : vector<8x16x1xf32> to vector<128x1xf32>
    %c0_16 = arith.constant 0 : index
    %c1_17 = arith.constant 1 : index
    %10 = vector.load %arg14[%c0_16, %c1_17] : memref<128x9xf32, #tpu.memory_space<vmem>>, vector<128x1xf32>
    tpu.vector_store %arg14[%c0_16, %c1_17], %9 {strides = array<i32>} : memref<128x9xf32, #tpu.memory_space<vmem>>, vector<128x1xf32>,
    %c0_18 = arith.constant 0 : index
    %c2 = arith.constant 2 : index
    %c0_19 = arith.constant 0 : index
    %11 = vector.load %arg13[%c0_18, %c2, %c0_19] : memref<10x18x1xf32, #tpu.memory_space<vmem>>, vector<8x16x1xf32>
    %12 = vector.shape_cast %11 : vector<8x16x1xf32> to vector<128x1xf32>
    %c0_20 = arith.constant 0 : index
    %c2_21 = arith.constant 2 : index
    %13 = vector.load %arg14[%c0_20, %c2_21] : memref<128x9xf32, #tpu.memory_space<vmem>>, vector<128x1xf32>
    tpu.vector_store %arg14[%c0_20, %c2_21], %12 {strides = array<i32>} : memref<128x9xf32, #tpu.memory_space<vmem>>, vector<128x1xf32>,
    %c1_22 = arith.constant 1 : index
    %c0_23 = arith.constant 0 : index
    %c0_24 = arith.constant 0 : index
    %14 = vector.load %arg13[%c1_22, %c0_23, %c0_24] : memref<10x18x1xf32, #tpu.memory_space<vmem>>, vector<8x16x1xf32>
    %15 = vector.shape_cast %14 : vector<8x16x1xf32> to vector<128x1xf32>
    %c0_25 = arith.constant 0 : index
    %c3 = arith.constant 3 : index
    %16 = vector.load %arg14[%c0_25, %c3] : memref<128x9xf32, #tpu.memory_space<vmem>>, vector<128x1xf32>
    tpu.vector_store %arg14[%c0_25, %c3], %15 {strides = array<i32>} : memref<128x9xf32, #tpu.memory_space<vmem>>, vector<128x1xf32>,
    %c1_26 = arith.constant 1 : index
    %c1_27 = arith.constant 1 : index
    %c0_28 = arith.constant 0 : index
    %17 = vector.load %arg13[%c1_26, %c1_27, %c0_28] : memref<10x18x1xf32, #tpu.memory_space<vmem>>, vector<8x16x1xf32>
    %18 = vector.shape_cast %17 : vector<8x16x1xf32> to vector<128x1xf32>
    %c0_29 = arith.constant 0 : index
    %c4 = arith.constant 4 : index
    %19 = vector.load %arg14[%c0_29, %c4] : memref<128x9xf32, #tpu.memory_space<vmem>>, vector<128x1xf32>
    tpu.vector_store %arg14[%c0_29, %c4], %18 {strides = array<i32>} : memref<128x9xf32, #tpu.memory_space<vmem>>, vector<128x1xf32>,
    %c1_30 = arith.constant 1 : index
    %c2_31 = arith.constant 2 : index
    %c0_32 = arith.constant 0 : index
    %20 = vector.load %arg13[%c1_30, %c2_31, %c0_32] : memref<10x18x1xf32, #tpu.memory_space<vmem>>, vector<8x16x1xf32>
    %21 = vector.shape_cast %20 : vector<8x16x1xf32> to vector<128x1xf32>
    %c0_33 = arith.constant 0 : index
    %c5 = arith.constant 5 : index
    %22 = vector.load %arg14[%c0_33, %c5] : memref<128x9xf32, #tpu.memory_space<vmem>>, vector<128x1xf32>
    tpu.vector_store %arg14[%c0_33, %c5], %21 {strides = array<i32>} : memref<128x9xf32, #tpu.memory_space<vmem>>, vector<128x1xf32>,
    %c2_34 = arith.constant 2 : index
    %c0_35 = arith.constant 0 : index
    %c0_36 = arith.constant 0 : index
    %23 = vector.load %arg13[%c2_34, %c0_35, %c0_36] : memref<10x18x1xf32, #tpu.memory_space<vmem>>, vector<8x16x1xf32>
    %24 = vector.shape_cast %23 : vector<8x16x1xf32> to vector<128x1xf32>
    %c0_37 = arith.constant 0 : index
    %c6 = arith.constant 6 : index
    %25 = vector.load %arg14[%c0_37, %c6] : memref<128x9xf32, #tpu.memory_space<vmem>>, vector<128x1xf32>
    tpu.vector_store %arg14[%c0_37, %c6], %24 {strides = array<i32>} : memref<128x9xf32, #tpu.memory_space<vmem>>, vector<128x1xf32>,
    %c2_38 = arith.constant 2 : index
    %c1_39 = arith.constant 1 : index
    %c0_40 = arith.constant 0 : index
    %26 = vector.load %arg13[%c2_38, %c1_39, %c0_40] : memref<10x18x1xf32, #tpu.memory_space<vmem>>, vector<8x16x1xf32>
    %27 = vector.shape_cast %26 : vector<8x16x1xf32> to vector<128x1xf32>
    %c0_41 = arith.constant 0 : index
    %c7 = arith.constant 7 : index
    %28 = vector.load %arg14[%c0_41, %c7] : memref<128x9xf32, #tpu.memory_space<vmem>>, vector<128x1xf32>
    tpu.vector_store %arg14[%c0_41, %c7], %27 {strides = array<i32>} : memref<128x9xf32, #tpu.memory_space<vmem>>, vector<128x1xf32>,
    %c2_42 = arith.constant 2 : index
    %c2_43 = arith.constant 2 : index
    %c0_44 = arith.constant 0 : index
    %29 = vector.load %arg13[%c2_42, %c2_43, %c0_44] : memref<10x18x1xf32, #tpu.memory_space<vmem>>, vector<8x16x1xf32>
    %30 = vector.shape_cast %29 : vector<8x16x1xf32> to vector<128x1xf32>
    %c0_45 = arith.constant 0 : index
    %c8 = arith.constant 8 : index
    %31 = vector.load %arg14[%c0_45, %c8] : memref<128x9xf32, #tpu.memory_space<vmem>>, vector<128x1xf32>
    tpu.vector_store %arg14[%c0_45, %c8], %30 {strides = array<i32>} : memref<128x9xf32, #tpu.memory_space<vmem>>, vector<128x1xf32>,
    %c0_46 = arith.constant 0 : index
    %c0_47 = arith.constant 0 : index
    %32 = vector.load %arg14[%c0_46, %c0_47] : memref<128x9xf32, #tpu.memory_space<vmem>>, vector<128x9xf32>
    %33 = arith.truncf %32 : vector<128x9xf32> to vector<128x9xbf16>
    %c0_48 = arith.constant 0 : index
    %c0_49 = arith.constant 0 : index
    %34 = vector.load %arg2[%c0_48, %c0_49] : memref<9x20xbf16, #tpu.memory_space<vmem>>, vector<9x20xbf16>
    %cst_50 = arith.constant dense<0.000000e+00> : vector<128x20xf32>
    %35 = tpu.matmul %33, %34, %cst_50 {dimension_numbers = #tpu.dot_dimension_numbers<[1], [0], [0], [1], [0, 0, 1, 1], [], []>} : vector<128x9xbf16>, vector<9x20xbf16>, vector<128x20xf32> -> vector<128x20xf32>
    %c0_51 = arith.constant 0 : index
    %c0_52 = arith.constant 0 : index
    %36 = vector.load %arg3[%c0_51, %c0_52] : memref<1x20xf32, #tpu.memory_space<vmem>>, vector<1x20xf32>
    %37 = vector.broadcast %36 : vector<1x20xf32> to vector<128x20xf32>
    %38 = arith.addf %35, %37 : vector<128x20xf32>
    %cst_53 = arith.constant 0.000000e+00 : f32
    %39 = vector.broadcast %cst_53 : f32 to vector<128x20xf32>
    %40 = arith.maximumf %38, %39 : vector<128x20xf32>
    %41 = vector.shape_cast %40 : vector<128x20xf32> to vector<8x16x20xf32>
    %cst_54 = arith.constant 0.000000e+00 : f32
    %42 = vector.broadcast %cst_54 : f32 to vector<10x18x20xf32>
    %c0_55 = arith.constant 0 : index
    %c0_56 = arith.constant 0 : index
    %c0_57 = arith.constant 0 : index
    %43 = vector.load %arg15[%c0_55, %c0_56, %c0_57] : memref<10x18x20xf32, #tpu.memory_space<vmem>>, vector<10x18x20xf32>
    tpu.vector_store %arg15[%c0_55, %c0_56, %c0_57], %42 {strides = array<i32>} : memref<10x18x20xf32, #tpu.memory_space<vmem>>, vector<10x18x20xf32>,
    %c1_58 = arith.constant 1 : index
    %c1_59 = arith.constant 1 : index
    %c0_60 = arith.constant 0 : index
    %44 = vector.load %arg15[%c1_58, %c1_59, %c0_60] : memref<10x18x20xf32, #tpu.memory_space<vmem>>, vector<8x16x20xf32>
    tpu.vector_store %arg15[%c1_58, %c1_59, %c0_60], %41 {strides = array<i32>} : memref<10x18x20xf32, #tpu.memory_space<vmem>>, vector<8x16x20xf32>,
    %c0_61 = arith.constant 0 : index
    %c0_62 = arith.constant 0 : index
    %c0_63 = arith.constant 0 : index
    %45 = vector.load %arg15[%c0_61, %c0_62, %c0_63] : memref<10x18x20xf32, #tpu.memory_space<vmem>>, vector<8x16x20xf32>
    %46 = vector.shape_cast %45 : vector<8x16x20xf32> to vector<128x20xf32>
    %c0_64 = arith.constant 0 : index
    %c0_65 = arith.constant 0 : index
    %47 = vector.load %arg16[%c0_64, %c0_65] : memref<128x180xf32, #tpu.memory_space<vmem>>, vector<128x20xf32>
    tpu.vector_store %arg16[%c0_64, %c0_65], %46 {strides = array<i32>} : memref<128x180xf32, #tpu.memory_space<vmem>>, vector<128x20xf32>,
    %c0_66 = arith.constant 0 : index
    %c1_67 = arith.constant 1 : index
    %c0_68 = arith.constant 0 : index
    %48 = vector.load %arg15[%c0_66, %c1_67, %c0_68] : memref<10x18x20xf32, #tpu.memory_space<vmem>>, vector<8x16x20xf32>
    %49 = vector.shape_cast %48 : vector<8x16x20xf32> to vector<128x20xf32>
    %c0_69 = arith.constant 0 : index
    %c20 = arith.constant 20 : index
    %50 = vector.load %arg16[%c0_69, %c20] : memref<128x180xf32, #tpu.memory_space<vmem>>, vector<128x20xf32>
    tpu.vector_store %arg16[%c0_69, %c20], %49 {strides = array<i32>} : memref<128x180xf32, #tpu.memory_space<vmem>>, vector<128x20xf32>,
    %c0_70 = arith.constant 0 : index
    %c2_71 = arith.constant 2 : index
    %c0_72 = arith.constant 0 : index
    %51 = vector.load %arg15[%c0_70, %c2_71, %c0_72] : memref<10x18x20xf32, #tpu.memory_space<vmem>>, vector<8x16x20xf32>
    %52 = vector.shape_cast %51 : vector<8x16x20xf32> to vector<128x20xf32>
    %c0_73 = arith.constant 0 : index
    %c40 = arith.constant 40 : index
    %53 = vector.load %arg16[%c0_73, %c40] : memref<128x180xf32, #tpu.memory_space<vmem>>, vector<128x20xf32>
    tpu.vector_store %arg16[%c0_73, %c40], %52 {strides = array<i32>} : memref<128x180xf32, #tpu.memory_space<vmem>>, vector<128x20xf32>,
    %c1_74 = arith.constant 1 : index
    %c0_75 = arith.constant 0 : index
    %c0_76 = arith.constant 0 : index
    %54 = vector.load %arg15[%c1_74, %c0_75, %c0_76] : memref<10x18x20xf32, #tpu.memory_space<vmem>>, vector<8x16x20xf32>
    %55 = vector.shape_cast %54 : vector<8x16x20xf32> to vector<128x20xf32>
    %c0_77 = arith.constant 0 : index
    %c60 = arith.constant 60 : index
    %56 = vector.load %arg16[%c0_77, %c60] : memref<128x180xf32, #tpu.memory_space<vmem>>, vector<128x20xf32>
    tpu.vector_store %arg16[%c0_77, %c60], %55 {strides = array<i32>} : memref<128x180xf32, #tpu.memory_space<vmem>>, vector<128x20xf32>,
    %c1_78 = arith.constant 1 : index
    %c1_79 = arith.constant 1 : index
    %c0_80 = arith.constant 0 : index
    %57 = vector.load %arg15[%c1_78, %c1_79, %c0_80] : memref<10x18x20xf32, #tpu.memory_space<vmem>>, vector<8x16x20xf32>
    %58 = vector.shape_cast %57 : vector<8x16x20xf32> to vector<128x20xf32>
    %c0_81 = arith.constant 0 : index
    %c80 = arith.constant 80 : index
    %59 = vector.load %arg16[%c0_81, %c80] : memref<128x180xf32, #tpu.memory_space<vmem>>, vector<128x20xf32>
    tpu.vector_store %arg16[%c0_81, %c80], %58 {strides = array<i32>} : memref<128x180xf32, #tpu.memory_space<vmem>>, vector<128x20xf32>,
    %c1_82 = arith.constant 1 : index
    %c2_83 = arith.constant 2 : index
    %c0_84 = arith.constant 0 : index
    %60 = vector.load %arg15[%c1_82, %c2_83, %c0_84] : memref<10x18x20xf32, #tpu.memory_space<vmem>>, vector<8x16x20xf32>
    %61 = vector.shape_cast %60 : vector<8x16x20xf32> to vector<128x20xf32>
    %c0_85 = arith.constant 0 : index
    %c100 = arith.constant 100 : index
    %62 = vector.load %arg16[%c0_85, %c100] : memref<128x180xf32, #tpu.memory_space<vmem>>, vector<128x20xf32>
    tpu.vector_store %arg16[%c0_85, %c100], %61 {strides = array<i32>} : memref<128x180xf32, #tpu.memory_space<vmem>>, vector<128x20xf32>,
    %c2_86 = arith.constant 2 : index
    %c0_87 = arith.constant 0 : index
    %c0_88 = arith.constant 0 : index
    %63 = vector.load %arg15[%c2_86, %c0_87, %c0_88] : memref<10x18x20xf32, #tpu.memory_space<vmem>>, vector<8x16x20xf32>
    %64 = vector.shape_cast %63 : vector<8x16x20xf32> to vector<128x20xf32>
    %c0_89 = arith.constant 0 : index
    %c120 = arith.constant 120 : index
    %65 = vector.load %arg16[%c0_89, %c120] : memref<128x180xf32, #tpu.memory_space<vmem>>, vector<128x20xf32>
    tpu.vector_store %arg16[%c0_89, %c120], %64 {strides = array<i32>} : memref<128x180xf32, #tpu.memory_space<vmem>>, vector<128x20xf32>,
    %c2_90 = arith.constant 2 : index
    %c1_91 = arith.constant 1 : index
    %c0_92 = arith.constant 0 : index
    %66 = vector.load %arg15[%c2_90, %c1_91, %c0_92] : memref<10x18x20xf32, #tpu.memory_space<vmem>>, vector<8x16x20xf32>
    %67 = vector.shape_cast %66 : vector<8x16x20xf32> to vector<128x20xf32>
    %c0_93 = arith.constant 0 : index
    %c140 = arith.constant 140 : index
    %68 = vector.load %arg16[%c0_93, %c140] : memref<128x180xf32, #tpu.memory_space<vmem>>, vector<128x20xf32>
    tpu.vector_store %arg16[%c0_93, %c140], %67 {strides = array<i32>} : memref<128x180xf32, #tpu.memory_space<vmem>>, vector<128x20xf32>,
    %c2_94 = arith.constant 2 : index
    %c2_95 = arith.constant 2 : index
    %c0_96 = arith.constant 0 : index
    %69 = vector.load %arg15[%c2_94, %c2_95, %c0_96] : memref<10x18x20xf32, #tpu.memory_space<vmem>>, vector<8x16x20xf32>
    %70 = vector.shape_cast %69 : vector<8x16x20xf32> to vector<128x20xf32>
    %c0_97 = arith.constant 0 : index
    %c160 = arith.constant 160 : index
    %71 = vector.load %arg16[%c0_97, %c160] : memref<128x180xf32, #tpu.memory_space<vmem>>, vector<128x20xf32>
    tpu.vector_store %arg16[%c0_97, %c160], %70 {strides = array<i32>} : memref<128x180xf32, #tpu.memory_space<vmem>>, vector<128x20xf32>,
    %c0_98 = arith.constant 0 : index
    %c0_99 = arith.constant 0 : index
    %72 = vector.load %arg16[%c0_98, %c0_99] : memref<128x180xf32, #tpu.memory_space<vmem>>, vector<128x180xf32>
    %73 = arith.truncf %72 : vector<128x180xf32> to vector<128x180xbf16>
    %c0_100 = arith.constant 0 : index
    %c0_101 = arith.constant 0 : index
    %74 = vector.load %arg4[%c0_100, %c0_101] : memref<180x20xbf16, #tpu.memory_space<vmem>>, vector<180x20xbf16>
    %cst_102 = arith.constant dense<0.000000e+00> : vector<128x20xf32>
    %75 = tpu.matmul %73, %74, %cst_102 {dimension_numbers = #tpu.dot_dimension_numbers<[1], [0], [0], [1], [0, 0, 1, 1], [], []>} : vector<128x180xbf16>, vector<180x20xbf16>, vector<128x20xf32> -> vector<128x20xf32>
    %c0_103 = arith.constant 0 : index
    %c0_104 = arith.constant 0 : index
    %76 = vector.load %arg5[%c0_103, %c0_104] : memref<1x20xf32, #tpu.memory_space<vmem>>, vector<1x20xf32>
    %77 = vector.broadcast %76 : vector<1x20xf32> to vector<128x20xf32>
    %78 = arith.addf %75, %77 : vector<128x20xf32>
    %cst_105 = arith.constant 0.000000e+00 : f32
    %79 = vector.broadcast %cst_105 : f32 to vector<128x20xf32>
    %80 = arith.maximumf %78, %79 : vector<128x20xf32>
    %81 = vector.shape_cast %80 : vector<128x20xf32> to vector<8x16x20xf32>
    %cst_106 = arith.constant 0.000000e+00 : f32
    %82 = vector.broadcast %cst_106 : f32 to vector<10x18x20xf32>
    %c0_107 = arith.constant 0 : index
    %c0_108 = arith.constant 0 : index
    %c0_109 = arith.constant 0 : index
    %83 = vector.load %arg15[%c0_107, %c0_108, %c0_109] : memref<10x18x20xf32, #tpu.memory_space<vmem>>, vector<10x18x20xf32>
    tpu.vector_store %arg15[%c0_107, %c0_108, %c0_109], %82 {strides = array<i32>} : memref<10x18x20xf32, #tpu.memory_space<vmem>>, vector<10x18x20xf32>,
    %c1_110 = arith.constant 1 : index
    %c1_111 = arith.constant 1 : index
    %c0_112 = arith.constant 0 : index
    %84 = vector.load %arg15[%c1_110, %c1_111, %c0_112] : memref<10x18x20xf32, #tpu.memory_space<vmem>>, vector<8x16x20xf32>
    tpu.vector_store %arg15[%c1_110, %c1_111, %c0_112], %81 {strides = array<i32>} : memref<10x18x20xf32, #tpu.memory_space<vmem>>, vector<8x16x20xf32>,
    %c0_113 = arith.constant 0 : index
    %c0_114 = arith.constant 0 : index
    %c0_115 = arith.constant 0 : index
    %85 = vector.load %arg15[%c0_113, %c0_114, %c0_115] : memref<10x18x20xf32, #tpu.memory_space<vmem>>, vector<8x16x20xf32>
    %86 = vector.shape_cast %85 : vector<8x16x20xf32> to vector<128x20xf32>
    %c0_116 = arith.constant 0 : index
    %c0_117 = arith.constant 0 : index
    %87 = vector.load %arg16[%c0_116, %c0_117] : memref<128x180xf32, #tpu.memory_space<vmem>>, vector<128x20xf32>
    tpu.vector_store %arg16[%c0_116, %c0_117], %86 {strides = array<i32>} : memref<128x180xf32, #tpu.memory_space<vmem>>, vector<128x20xf32>,
    %c0_118 = arith.constant 0 : index
    %c1_119 = arith.constant 1 : index
    %c0_120 = arith.constant 0 : index
    %88 = vector.load %arg15[%c0_118, %c1_119, %c0_120] : memref<10x18x20xf32, #tpu.memory_space<vmem>>, vector<8x16x20xf32>
    %89 = vector.shape_cast %88 : vector<8x16x20xf32> to vector<128x20xf32>
    %c0_121 = arith.constant 0 : index
    %c20_122 = arith.constant 20 : index
    %90 = vector.load %arg16[%c0_121, %c20_122] : memref<128x180xf32, #tpu.memory_space<vmem>>, vector<128x20xf32>
    tpu.vector_store %arg16[%c0_121, %c20_122], %89 {strides = array<i32>} : memref<128x180xf32, #tpu.memory_space<vmem>>, vector<128x20xf32>,
    %c0_123 = arith.constant 0 : index
    %c2_124 = arith.constant 2 : index
    %c0_125 = arith.constant 0 : index
    %91 = vector.load %arg15[%c0_123, %c2_124, %c0_125] : memref<10x18x20xf32, #tpu.memory_space<vmem>>, vector<8x16x20xf32>
    %92 = vector.shape_cast %91 : vector<8x16x20xf32> to vector<128x20xf32>
    %c0_126 = arith.constant 0 : index
    %c40_127 = arith.constant 40 : index
    %93 = vector.load %arg16[%c0_126, %c40_127] : memref<128x180xf32, #tpu.memory_space<vmem>>, vector<128x20xf32>
    tpu.vector_store %arg16[%c0_126, %c40_127], %92 {strides = array<i32>} : memref<128x180xf32, #tpu.memory_space<vmem>>, vector<128x20xf32>,
    %c1_128 = arith.constant 1 : index
    %c0_129 = arith.constant 0 : index
    %c0_130 = arith.constant 0 : index
    %94 = vector.load %arg15[%c1_128, %c0_129, %c0_130] : memref<10x18x20xf32, #tpu.memory_space<vmem>>, vector<8x16x20xf32>
    %95 = vector.shape_cast %94 : vector<8x16x20xf32> to vector<128x20xf32>
    %c0_131 = arith.constant 0 : index
    %c60_132 = arith.constant 60 : index
    %96 = vector.load %arg16[%c0_131, %c60_132] : memref<128x180xf32, #tpu.memory_space<vmem>>, vector<128x20xf32>
    tpu.vector_store %arg16[%c0_131, %c60_132], %95 {strides = array<i32>} : memref<128x180xf32, #tpu.memory_space<vmem>>, vector<128x20xf32>,
    %c1_133 = arith.constant 1 : index
    %c1_134 = arith.constant 1 : index
    %c0_135 = arith.constant 0 : index
    %97 = vector.load %arg15[%c1_133, %c1_134, %c0_135] : memref<10x18x20xf32, #tpu.memory_space<vmem>>, vector<8x16x20xf32>
    %98 = vector.shape_cast %97 : vector<8x16x20xf32> to vector<128x20xf32>
    %c0_136 = arith.constant 0 : index
    %c80_137 = arith.constant 80 : index
    %99 = vector.load %arg16[%c0_136, %c80_137] : memref<128x180xf32, #tpu.memory_space<vmem>>, vector<128x20xf32>
    tpu.vector_store %arg16[%c0_136, %c80_137], %98 {strides = array<i32>} : memref<128x180xf32, #tpu.memory_space<vmem>>, vector<128x20xf32>,
    %c1_138 = arith.constant 1 : index
    %c2_139 = arith.constant 2 : index
    %c0_140 = arith.constant 0 : index
    %100 = vector.load %arg15[%c1_138, %c2_139, %c0_140] : memref<10x18x20xf32, #tpu.memory_space<vmem>>, vector<8x16x20xf32>
    %101 = vector.shape_cast %100 : vector<8x16x20xf32> to vector<128x20xf32>
    %c0_141 = arith.constant 0 : index
    %c100_142 = arith.constant 100 : index
    %102 = vector.load %arg16[%c0_141, %c100_142] : memref<128x180xf32, #tpu.memory_space<vmem>>, vector<128x20xf32>
    tpu.vector_store %arg16[%c0_141, %c100_142], %101 {strides = array<i32>} : memref<128x180xf32, #tpu.memory_space<vmem>>, vector<128x20xf32>,
    %c2_143 = arith.constant 2 : index
    %c0_144 = arith.constant 0 : index
    %c0_145 = arith.constant 0 : index
    %103 = vector.load %arg15[%c2_143, %c0_144, %c0_145] : memref<10x18x20xf32, #tpu.memory_space<vmem>>, vector<8x16x20xf32>
    %104 = vector.shape_cast %103 : vector<8x16x20xf32> to vector<128x20xf32>
    %c0_146 = arith.constant 0 : index
    %c120_147 = arith.constant 120 : index
    %105 = vector.load %arg16[%c0_146, %c120_147] : memref<128x180xf32, #tpu.memory_space<vmem>>, vector<128x20xf32>
    tpu.vector_store %arg16[%c0_146, %c120_147], %104 {strides = array<i32>} : memref<128x180xf32, #tpu.memory_space<vmem>>, vector<128x20xf32>,
    %c2_148 = arith.constant 2 : index
    %c1_149 = arith.constant 1 : index
    %c0_150 = arith.constant 0 : index
    %106 = vector.load %arg15[%c2_148, %c1_149, %c0_150] : memref<10x18x20xf32, #tpu.memory_space<vmem>>, vector<8x16x20xf32>
    %107 = vector.shape_cast %106 : vector<8x16x20xf32> to vector<128x20xf32>
    %c0_151 = arith.constant 0 : index
    %c140_152 = arith.constant 140 : index
    %108 = vector.load %arg16[%c0_151, %c140_152] : memref<128x180xf32, #tpu.memory_space<vmem>>, vector<128x20xf32>
    tpu.vector_store %arg16[%c0_151, %c140_152], %107 {strides = array<i32>} : memref<128x180xf32, #tpu.memory_space<vmem>>, vector<128x20xf32>,
    %c2_153 = arith.constant 2 : index
    %c2_154 = arith.constant 2 : index
    %c0_155 = arith.constant 0 : index
    %109 = vector.load %arg15[%c2_153, %c2_154, %c0_155] : memref<10x18x20xf32, #tpu.memory_space<vmem>>, vector<8x16x20xf32>
    %110 = vector.shape_cast %109 : vector<8x16x20xf32> to vector<128x20xf32>
    %c0_156 = arith.constant 0 : index
    %c160_157 = arith.constant 160 : index
    %111 = vector.load %arg16[%c0_156, %c160_157] : memref<128x180xf32, #tpu.memory_space<vmem>>, vector<128x20xf32>
    tpu.vector_store %arg16[%c0_156, %c160_157], %110 {strides = array<i32>} : memref<128x180xf32, #tpu.memory_space<vmem>>, vector<128x20xf32>,
    %c0_158 = arith.constant 0 : index
    %c0_159 = arith.constant 0 : index
    %112 = vector.load %arg16[%c0_158, %c0_159] : memref<128x180xf32, #tpu.memory_space<vmem>>, vector<128x180xf32>
    %113 = arith.truncf %112 : vector<128x180xf32> to vector<128x180xbf16>
    %c0_160 = arith.constant 0 : index
    %c0_161 = arith.constant 0 : index
    %114 = vector.load %arg6[%c0_160, %c0_161] : memref<180x40xbf16, #tpu.memory_space<vmem>>, vector<180x40xbf16>
    %cst_162 = arith.constant dense<0.000000e+00> : vector<128x40xf32>
    %115 = tpu.matmul %113, %114, %cst_162 {dimension_numbers = #tpu.dot_dimension_numbers<[1], [0], [0], [1], [0, 0, 1, 1], [], []>} : vector<128x180xbf16>, vector<180x40xbf16>, vector<128x40xf32> -> vector<128x40xf32>
    %c0_163 = arith.constant 0 : index
    %c0_164 = arith.constant 0 : index
    %116 = vector.load %arg7[%c0_163, %c0_164] : memref<1x40xf32, #tpu.memory_space<vmem>>, vector<1x40xf32>
    %117 = vector.broadcast %116 : vector<1x40xf32> to vector<128x40xf32>
    %118 = arith.addf %115, %117 : vector<128x40xf32>
    %cst_165 = arith.constant 0.000000e+00 : f32
    %119 = vector.broadcast %cst_165 : f32 to vector<128x40xf32>
    %120 = arith.maximumf %118, %119 : vector<128x40xf32>
    %121 = vector.shape_cast %120 : vector<128x40xf32> to vector<8x16x40xf32>
    %cst_166 = arith.constant 0.000000e+00 : f32
    %122 = vector.broadcast %cst_166 : f32 to vector<10x18x40xf32>
    %c0_167 = arith.constant 0 : index
    %c0_168 = arith.constant 0 : index
    %c0_169 = arith.constant 0 : index
    %123 = vector.load %arg17[%c0_167, %c0_168, %c0_169] : memref<10x18x40xf32, #tpu.memory_space<vmem>>, vector<10x18x40xf32>
    tpu.vector_store %arg17[%c0_167, %c0_168, %c0_169], %122 {strides = array<i32>} : memref<10x18x40xf32, #tpu.memory_space<vmem>>, vector<10x18x40xf32>,
    %c1_170 = arith.constant 1 : index
    %c1_171 = arith.constant 1 : index
    %c0_172 = arith.constant 0 : index
    %124 = vector.load %arg17[%c1_170, %c1_171, %c0_172] : memref<10x18x40xf32, #tpu.memory_space<vmem>>, vector<8x16x40xf32>
    tpu.vector_store %arg17[%c1_170, %c1_171, %c0_172], %121 {strides = array<i32>} : memref<10x18x40xf32, #tpu.memory_space<vmem>>, vector<8x16x40xf32>,
    %c0_173 = arith.constant 0 : index
    %c0_174 = arith.constant 0 : index
    %c0_175 = arith.constant 0 : index
    %125 = vector.load %arg17[%c0_173, %c0_174, %c0_175] : memref<10x18x40xf32, #tpu.memory_space<vmem>>, vector<8x16x40xf32>
    %126 = vector.shape_cast %125 : vector<8x16x40xf32> to vector<128x40xf32>
    %c0_176 = arith.constant 0 : index
    %c0_177 = arith.constant 0 : index
    %127 = vector.load %arg18[%c0_176, %c0_177] : memref<128x360xf32, #tpu.memory_space<vmem>>, vector<128x40xf32>
    tpu.vector_store %arg18[%c0_176, %c0_177], %126 {strides = array<i32>} : memref<128x360xf32, #tpu.memory_space<vmem>>, vector<128x40xf32>,
    %c0_178 = arith.constant 0 : index
    %c1_179 = arith.constant 1 : index
    %c0_180 = arith.constant 0 : index
    %128 = vector.load %arg17[%c0_178, %c1_179, %c0_180] : memref<10x18x40xf32, #tpu.memory_space<vmem>>, vector<8x16x40xf32>
    %129 = vector.shape_cast %128 : vector<8x16x40xf32> to vector<128x40xf32>
    %c0_181 = arith.constant 0 : index
    %c40_182 = arith.constant 40 : index
    %130 = vector.load %arg18[%c0_181, %c40_182] : memref<128x360xf32, #tpu.memory_space<vmem>>, vector<128x40xf32>
    tpu.vector_store %arg18[%c0_181, %c40_182], %129 {strides = array<i32>} : memref<128x360xf32, #tpu.memory_space<vmem>>, vector<128x40xf32>,
    %c0_183 = arith.constant 0 : index
    %c2_184 = arith.constant 2 : index
    %c0_185 = arith.constant 0 : index
    %131 = vector.load %arg17[%c0_183, %c2_184, %c0_185] : memref<10x18x40xf32, #tpu.memory_space<vmem>>, vector<8x16x40xf32>
    %132 = vector.shape_cast %131 : vector<8x16x40xf32> to vector<128x40xf32>
    %c0_186 = arith.constant 0 : index
    %c80_187 = arith.constant 80 : index
    %133 = vector.load %arg18[%c0_186, %c80_187] : memref<128x360xf32, #tpu.memory_space<vmem>>, vector<128x40xf32>
    tpu.vector_store %arg18[%c0_186, %c80_187], %132 {strides = array<i32>} : memref<128x360xf32, #tpu.memory_space<vmem>>, vector<128x40xf32>,
    %c1_188 = arith.constant 1 : index
    %c0_189 = arith.constant 0 : index
    %c0_190 = arith.constant 0 : index
    %134 = vector.load %arg17[%c1_188, %c0_189, %c0_190] : memref<10x18x40xf32, #tpu.memory_space<vmem>>, vector<8x16x40xf32>
    %135 = vector.shape_cast %134 : vector<8x16x40xf32> to vector<128x40xf32>
    %c0_191 = arith.constant 0 : index
    %c120_192 = arith.constant 120 : index
    %136 = vector.load %arg18[%c0_191, %c120_192] : memref<128x360xf32, #tpu.memory_space<vmem>>, vector<128x40xf32>
    tpu.vector_store %arg18[%c0_191, %c120_192], %135 {strides = array<i32>} : memref<128x360xf32, #tpu.memory_space<vmem>>, vector<128x40xf32>,
    %c1_193 = arith.constant 1 : index
    %c1_194 = arith.constant 1 : index
    %c0_195 = arith.constant 0 : index
    %137 = vector.load %arg17[%c1_193, %c1_194, %c0_195] : memref<10x18x40xf32, #tpu.memory_space<vmem>>, vector<8x16x40xf32>
    %138 = vector.shape_cast %137 : vector<8x16x40xf32> to vector<128x40xf32>
    %c0_196 = arith.constant 0 : index
    %c160_197 = arith.constant 160 : index
    %139 = vector.load %arg18[%c0_196, %c160_197] : memref<128x360xf32, #tpu.memory_space<vmem>>, vector<128x40xf32>
    tpu.vector_store %arg18[%c0_196, %c160_197], %138 {strides = array<i32>} : memref<128x360xf32, #tpu.memory_space<vmem>>, vector<128x40xf32>,
    %c1_198 = arith.constant 1 : index
    %c2_199 = arith.constant 2 : index
    %c0_200 = arith.constant 0 : index
    %140 = vector.load %arg17[%c1_198, %c2_199, %c0_200] : memref<10x18x40xf32, #tpu.memory_space<vmem>>, vector<8x16x40xf32>
    %141 = vector.shape_cast %140 : vector<8x16x40xf32> to vector<128x40xf32>
    %c0_201 = arith.constant 0 : index
    %c200 = arith.constant 200 : index
    %142 = vector.load %arg18[%c0_201, %c200] : memref<128x360xf32, #tpu.memory_space<vmem>>, vector<128x40xf32>
    tpu.vector_store %arg18[%c0_201, %c200], %141 {strides = array<i32>} : memref<128x360xf32, #tpu.memory_space<vmem>>, vector<128x40xf32>,
    %c2_202 = arith.constant 2 : index
    %c0_203 = arith.constant 0 : index
    %c0_204 = arith.constant 0 : index
    %143 = vector.load %arg17[%c2_202, %c0_203, %c0_204] : memref<10x18x40xf32, #tpu.memory_space<vmem>>, vector<8x16x40xf32>
    %144 = vector.shape_cast %143 : vector<8x16x40xf32> to vector<128x40xf32>
    %c0_205 = arith.constant 0 : index
    %c240 = arith.constant 240 : index
    %145 = vector.load %arg18[%c0_205, %c240] : memref<128x360xf32, #tpu.memory_space<vmem>>, vector<128x40xf32>
    tpu.vector_store %arg18[%c0_205, %c240], %144 {strides = array<i32>} : memref<128x360xf32, #tpu.memory_space<vmem>>, vector<128x40xf32>,
    %c2_206 = arith.constant 2 : index
    %c1_207 = arith.constant 1 : index
    %c0_208 = arith.constant 0 : index
    %146 = vector.load %arg17[%c2_206, %c1_207, %c0_208] : memref<10x18x40xf32, #tpu.memory_space<vmem>>, vector<8x16x40xf32>
    %147 = vector.shape_cast %146 : vector<8x16x40xf32> to vector<128x40xf32>
    %c0_209 = arith.constant 0 : index
    %c280 = arith.constant 280 : index
    %148 = vector.load %arg18[%c0_209, %c280] : memref<128x360xf32, #tpu.memory_space<vmem>>, vector<128x40xf32>
    tpu.vector_store %arg18[%c0_209, %c280], %147 {strides = array<i32>} : memref<128x360xf32, #tpu.memory_space<vmem>>, vector<128x40xf32>,
    %c2_210 = arith.constant 2 : index
    %c2_211 = arith.constant 2 : index
    %c0_212 = arith.constant 0 : index
    %149 = vector.load %arg17[%c2_210, %c2_211, %c0_212] : memref<10x18x40xf32, #tpu.memory_space<vmem>>, vector<8x16x40xf32>
    %150 = vector.shape_cast %149 : vector<8x16x40xf32> to vector<128x40xf32>
    %c0_213 = arith.constant 0 : index
    %c320 = arith.constant 320 : index
    %151 = vector.load %arg18[%c0_213, %c320] : memref<128x360xf32, #tpu.memory_space<vmem>>, vector<128x40xf32>
    tpu.vector_store %arg18[%c0_213, %c320], %150 {strides = array<i32>} : memref<128x360xf32, #tpu.memory_space<vmem>>, vector<128x40xf32>,
    %c0_214 = arith.constant 0 : index
    %c0_215 = arith.constant 0 : index
    %152 = vector.load %arg18[%c0_214, %c0_215] : memref<128x360xf32, #tpu.memory_space<vmem>>, vector<128x360xf32>
    %153 = arith.truncf %152 : vector<128x360xf32> to vector<128x360xbf16>
    %c0_216 = arith.constant 0 : index
    %c0_217 = arith.constant 0 : index
    %154 = vector.load %arg8[%c0_216, %c0_217] : memref<360x40xbf16, #tpu.memory_space<vmem>>, vector<360x40xbf16>
    %cst_218 = arith.constant dense<0.000000e+00> : vector<128x40xf32>
    %155 = tpu.matmul %153, %154, %cst_218 {dimension_numbers = #tpu.dot_dimension_numbers<[1], [0], [0], [1], [0, 0, 1, 1], [], []>} : vector<128x360xbf16>, vector<360x40xbf16>, vector<128x40xf32> -> vector<128x40xf32>
    %c0_219 = arith.constant 0 : index
    %c0_220 = arith.constant 0 : index
    %156 = vector.load %arg9[%c0_219, %c0_220] : memref<1x40xf32, #tpu.memory_space<vmem>>, vector<1x40xf32>
    %157 = vector.broadcast %156 : vector<1x40xf32> to vector<128x40xf32>
    %158 = arith.addf %155, %157 : vector<128x40xf32>
    %cst_221 = arith.constant 0.000000e+00 : f32
    %159 = vector.broadcast %cst_221 : f32 to vector<128x40xf32>
    %160 = arith.maximumf %158, %159 : vector<128x40xf32>
    %161 = vector.shape_cast %160 : vector<128x40xf32> to vector<8x16x40xf32>
    %162 = vector.extract_strided_slice %161 {offsets = [0, 0, 0], sizes = [8, 1, 40], strides = [1, 1, 1]} : vector<8x16x40xf32> to vector<8x1x40xf32>
    %163 = vector.shape_cast %162 : vector<8x1x40xf32> to vector<8x40xf32>
    %164 = vector.extract_strided_slice %161 {offsets = [0, 1, 0], sizes = [8, 1, 40], strides = [1, 1, 1]} : vector<8x16x40xf32> to vector<8x1x40xf32>
    %165 = vector.shape_cast %164 : vector<8x1x40xf32> to vector<8x40xf32>
    %166 = vector.extract_strided_slice %161 {offsets = [0, 2, 0], sizes = [8, 1, 40], strides = [1, 1, 1]} : vector<8x16x40xf32> to vector<8x1x40xf32>
    %167 = vector.shape_cast %166 : vector<8x1x40xf32> to vector<8x40xf32>
    %168 = vector.extract_strided_slice %161 {offsets = [0, 3, 0], sizes = [8, 1, 40], strides = [1, 1, 1]} : vector<8x16x40xf32> to vector<8x1x40xf32>
    %169 = vector.shape_cast %168 : vector<8x1x40xf32> to vector<8x40xf32>
    %170 = vector.extract_strided_slice %161 {offsets = [0, 4, 0], sizes = [8, 1, 40], strides = [1, 1, 1]} : vector<8x16x40xf32> to vector<8x1x40xf32>
    %171 = vector.shape_cast %170 : vector<8x1x40xf32> to vector<8x40xf32>
    %172 = vector.extract_strided_slice %161 {offsets = [0, 5, 0], sizes = [8, 1, 40], strides = [1, 1, 1]} : vector<8x16x40xf32> to vector<8x1x40xf32>
    %173 = vector.shape_cast %172 : vector<8x1x40xf32> to vector<8x40xf32>
    %174 = vector.extract_strided_slice %161 {offsets = [0, 6, 0], sizes = [8, 1, 40], strides = [1, 1, 1]} : vector<8x16x40xf32> to vector<8x1x40xf32>
    %175 = vector.shape_cast %174 : vector<8x1x40xf32> to vector<8x40xf32>
    %176 = vector.extract_strided_slice %161 {offsets = [0, 7, 0], sizes = [8, 1, 40], strides = [1, 1, 1]} : vector<8x16x40xf32> to vector<8x1x40xf32>
    %177 = vector.shape_cast %176 : vector<8x1x40xf32> to vector<8x40xf32>
    %178 = vector.extract_strided_slice %161 {offsets = [0, 8, 0], sizes = [8, 1, 40], strides = [1, 1, 1]} : vector<8x16x40xf32> to vector<8x1x40xf32>
    %179 = vector.shape_cast %178 : vector<8x1x40xf32> to vector<8x40xf32>
    %180 = vector.extract_strided_slice %161 {offsets = [0, 9, 0], sizes = [8, 1, 40], strides = [1, 1, 1]} : vector<8x16x40xf32> to vector<8x1x40xf32>
    %181 = vector.shape_cast %180 : vector<8x1x40xf32> to vector<8x40xf32>
    %182 = vector.extract_strided_slice %161 {offsets = [0, 10, 0], sizes = [8, 1, 40], strides = [1, 1, 1]} : vector<8x16x40xf32> to vector<8x1x40xf32>
    %183 = vector.shape_cast %182 : vector<8x1x40xf32> to vector<8x40xf32>
    %184 = vector.extract_strided_slice %161 {offsets = [0, 11, 0], sizes = [8, 1, 40], strides = [1, 1, 1]} : vector<8x16x40xf32> to vector<8x1x40xf32>
    %185 = vector.shape_cast %184 : vector<8x1x40xf32> to vector<8x40xf32>
    %186 = vector.extract_strided_slice %161 {offsets = [0, 12, 0], sizes = [8, 1, 40], strides = [1, 1, 1]} : vector<8x16x40xf32> to vector<8x1x40xf32>
    %187 = vector.shape_cast %186 : vector<8x1x40xf32> to vector<8x40xf32>
    %188 = vector.extract_strided_slice %161 {offsets = [0, 13, 0], sizes = [8, 1, 40], strides = [1, 1, 1]} : vector<8x16x40xf32> to vector<8x1x40xf32>
    %189 = vector.shape_cast %188 : vector<8x1x40xf32> to vector<8x40xf32>
    %190 = vector.extract_strided_slice %161 {offsets = [0, 14, 0], sizes = [8, 1, 40], strides = [1, 1, 1]} : vector<8x16x40xf32> to vector<8x1x40xf32>
    %191 = vector.shape_cast %190 : vector<8x1x40xf32> to vector<8x40xf32>
    %192 = vector.extract_strided_slice %161 {offsets = [0, 15, 0], sizes = [8, 1, 40], strides = [1, 1, 1]} : vector<8x16x40xf32> to vector<8x1x40xf32>
    %193 = vector.shape_cast %192 : vector<8x1x40xf32> to vector<8x40xf32>
    %194 = tpu.concatenate %163, %165, %167, %169, %171, %173, %175, %177, %179, %181, %183, %185, %187, %189, %191, %193 in 1 : vector<8x40xf32>, vector<8x40xf32>, vector<8x40xf32>, vector<8x40xf32>, vector<8x40xf32>, vector<8x40xf32>, vector<8x40xf32>, vector<8x40xf32>, vector<8x40xf32>, vector<8x40xf32>, vector<8x40xf32>, vector<8x40xf32>, vector<8x40xf32>, vector<8x40xf32>, vector<8x40xf32>, vector<8x40xf32> -> vector<8x640xf32>
    %195 = arith.truncf %194 : vector<8x640xf32> to vector<8x640xbf16>
    %c0_222 = arith.constant 0 : index
    %c0_223 = arith.constant 0 : index
    %196 = vector.load %arg10[%c0_222, %c0_223] : memref<640x32xbf16, #tpu.memory_space<vmem>>, vector<640x32xbf16>
    %cst_224 = arith.constant dense<0.000000e+00> : vector<8x32xf32>
    %197 = tpu.matmul %195, %196, %cst_224 {dimension_numbers = #tpu.dot_dimension_numbers<[1], [0], [0], [1], [0, 0, 1, 1], [], []>} : vector<8x640xbf16>, vector<640x32xbf16>, vector<8x32xf32> -> vector<8x32xf32>
    %c0_225 = arith.constant 0 : index
    %c0_226 = arith.constant 0 : index
    %198 = vector.load %arg11[%c0_225, %c0_226] : memref<1x32xf32, #tpu.memory_space<vmem>>, vector<1x32xf32>
    %199 = vector.broadcast %198 : vector<1x32xf32> to vector<8x32xf32>
    %200 = arith.addf %197, %199 : vector<8x32xf32>
    %cst_227 = arith.constant 0.000000e+00 : f32
    %201 = vector.broadcast %cst_227 : f32 to vector<8x32xf32>
    %202 = arith.maximumf %200, %201 : vector<8x32xf32>
    %c0_228 = arith.constant 0 : index
    %c0_229 = arith.constant 0 : index
    %c0_230 = arith.constant 0 : index
    %203 = vector.load %arg12[%c0_228, %c0_229, %c0_230] : memref<1x8x32xf32, #tpu.memory_space<vmem>>, vector<1x8x32xf32>
    %204 = vector.shape_cast %203 : vector<1x8x32xf32> to vector<8x32xf32>
    %205 = vector.shape_cast %202 : vector<8x32xf32> to vector<1x8x32xf32>
    tpu.vector_store %arg12[%c0_228, %c0_229, %c0_230], %205 {strides = array<i32>} : memref<1x8x32xf32, #tpu.memory_space<vmem>>, vector<1x8x32xf32>,
    return
  }
  func.func @transform_0(%arg0: i32) -> (i32, i32, i32, i32) {
    %c0_i32 = arith.constant 0 : i32
    %c0_i32_0 = arith.constant 0 : i32
    %c0_i32_1 = arith.constant 0 : i32
    %c0_i32_2 = arith.constant 0 : i32
    return %arg0, %c0_i32, %c0_i32_0, %c0_i32_1 : i32, i32, i32, i32
  }
  func.func @transform_1(%arg0: i32) -> (i32, i32) {
    %c0_i32 = arith.constant 0 : i32
    %c0_i32_0 = arith.constant 0 : i32
    %c0_i32_1 = arith.constant 0 : i32
    return %c0_i32, %c0_i32_0 : i32, i32
  }
  func.func @transform_2(%arg0: i32) -> (i32, i32) {
    %c0_i32 = arith.constant 0 : i32
    %c0_i32_0 = arith.constant 0 : i32
    %c0_i32_1 = arith.constant 0 : i32
    return %c0_i32, %c0_i32_0 : i32, i32
  }
  func.func @transform_3(%arg0: i32) -> (i32, i32) {
    %c0_i32 = arith.constant 0 : i32
    %c0_i32_0 = arith.constant 0 : i32
    %c0_i32_1 = arith.constant 0 : i32
    return %c0_i32, %c0_i32_0 : i32, i32
  }
  func.func @transform_4(%arg0: i32) -> (i32, i32) {
    %c0_i32 = arith.constant 0 : i32
    %c0_i32_0 = arith.constant 0 : i32
    %c0_i32_1 = arith.constant 0 : i32
    return %c0_i32, %c0_i32_0 : i32, i32
  }
  func.func @transform_5(%arg0: i32) -> (i32, i32) {
    %c0_i32 = arith.constant 0 : i32
    %c0_i32_0 = arith.constant 0 : i32
    %c0_i32_1 = arith.constant 0 : i32
    return %c0_i32, %c0_i32_0 : i32, i32
  }
  func.func @transform_6(%arg0: i32) -> (i32, i32) {
    %c0_i32 = arith.constant 0 : i32
    %c0_i32_0 = arith.constant 0 : i32
    %c0_i32_1 = arith.constant 0 : i32
    return %c0_i32, %c0_i32_0 : i32, i32
  }
  func.func @transform_7(%arg0: i32) -> (i32, i32) {
    %c0_i32 = arith.constant 0 : i32
    %c0_i32_0 = arith.constant 0 : i32
    %c0_i32_1 = arith.constant 0 : i32
    return %c0_i32, %c0_i32_0 : i32, i32
  }
  func.func @transform_8(%arg0: i32) -> (i32, i32) {
    %c0_i32 = arith.constant 0 : i32
    %c0_i32_0 = arith.constant 0 : i32
    %c0_i32_1 = arith.constant 0 : i32
    return %c0_i32, %c0_i32_0 : i32, i32
  }
  func.func @transform_9(%arg0: i32) -> (i32, i32) {
    %c0_i32 = arith.constant 0 : i32
    %c0_i32_0 = arith.constant 0 : i32
    %c0_i32_1 = arith.constant 0 : i32
    return %c0_i32, %c0_i32_0 : i32, i32
  }
  func.func @transform_10(%arg0: i32) -> (i32, i32) {
    %c0_i32 = arith.constant 0 : i32
    %c0_i32_0 = arith.constant 0 : i32
    %c0_i32_1 = arith.constant 0 : i32
    return %c0_i32, %c0_i32_0 : i32, i32
  }
  func.func @transform_11(%arg0: i32) -> (i32, i32, i32) {
    %c0_i32 = arith.constant 0 : i32
    %c0_i32_0 = arith.constant 0 : i32
    %c0_i32_1 = arith.constant 0 : i32
    return %arg0, %c0_i32, %c0_i32_0 : i32, i32, i32
  }
}

</mosaic_0001>

<llo_original>
// kernel: conv_stack_forward.1
$region0: #{conv_stack_forward.1}
  #allocation0 [shape = 'u32[]', space=smem, size = 0x4, offset = 0x4, fixed_abs, tag = 'smem constant byte address 0x4 - core index']
  #allocation1 [shape = 'u32[144,128]{1,0:T(1,128)}', space=vmem, size = 0x12000, scoped, tag = 'internal scratch']
  #allocation2 [shape = 'f32[10,18,1]{2,1,0:T(8,128)}', space=vmem, size = 0x1e000, scoped, tag = 'scratch operand']
  #allocation3 [shape = 'f32[128,9]{1,0:T(8,128)}', space=vmem, size = 0x10000, scoped, tag = 'scratch operand']
  #allocation4 [shape = 'f32[10,18,20]{2,1,0:T(8,128)}', space=vmem, size = 0x1e000, scoped, tag = 'scratch operand']
  #allocation5 [shape = 'f32[128,180]{1,0:T(8,128)}', space=vmem, size = 0x20000, scoped, tag = 'scratch operand']
  #allocation6 [shape = 'f32[10,18,40]{2,1,0:T(8,128)}', space=vmem, size = 0x1e000, scoped, tag = 'scratch operand']
  #allocation7 [shape = 'f32[128,360]{1,0:T(8,128)}', space=vmem, size = 0x30000, scoped, tag = 'scratch operand']
  %s0 = inlined_call_operand.vmem [shape: f32[2,8,16,1], index: 0, kind: input, shape index: {}]
  %s1 = inlined_call_operand.vmem [shape: bf16[9,20], index: 1, kind: input, shape index: {}]
  %s2 = inlined_call_operand.vmem [shape: f32[1,20], index: 2, kind: input, shape index: {}]
  %s3 = inlined_call_operand.vmem [shape: bf16[180,20], index: 3, kind: input, shape index: {}]
  %s4 = inlined_call_operand.vmem [shape: f32[1,20], index: 4, kind: input, shape index: {}]
  %s5 = inlined_call_operand.vmem [shape: bf16[180,40], index: 5, kind: input, shape index: {}]
  %s6 = inlined_call_operand.vmem [shape: f32[1,40], index: 6, kind: input, shape index: {}]
  %s7 = inlined_call_operand.vmem [shape: bf16[360,40], index: 7, kind: input, shape index: {}]
  %s8 = inlined_call_operand.vmem [shape: f32[1,40], index: 8, kind: input, shape index: {}]
  %s9 = inlined_call_operand.vmem [shape: bf16[640,32], index: 9, kind: input, shape index: {}]
  %s10 = inlined_call_operand.vmem [shape: f32[1,32], index: 10, kind: input, shape index: {}]
  %s11 = inlined_call_operand.hbm [shape: f32[2,8,32], index: 11, kind: output, shape index: {}]
  %s12 = sld [smem:[#allocation0]]
  $region77: #{conv_stack_forward.1} parent=0
    _
  %s14 = ssub.s32 1, %s12
  %s15 = scalar_select 0, %s14, %s12
  $region1: #{conv_stack_forward.1} parent=0
    #allocation8 [shape = 'u8[8192]{0}', space=vmem, size = 0x2000, scoped, tag = 'output window, operand 0']
    #allocation9 [shape = 's32[2]{0}', space=sflag, size = 0x8, scoped, tag = 'scoped memory for conv_stack_forward.1']
    %16 = vsyncpa [#allocation9], 0
    %s17 = scalar_lea.sflag [#allocation9], 1
    %18 = vsyncpa %s17, 0
    loop: start=0, step=1, limit=4
    $region2: #{conv_stack_forward.1} parent=1 // loop_pre_header
      _
    $region3: #{conv_stack_forward.1} parent=1 // loop_header
      %s20 = sphi 0, %s24
      %p21 = scmp.ge.s32.totalorder %s20, 4
      %s30 = sphi 0, %s32
      %s33 = sphi 0, %s30
      %s34 = sphi 0, %s33
      %s50 = sphi 0, %s34
      %s54 = sphi 0, %s54
      %s56 = sphi 0, %s54
      %s57 = sphi 0, %s56
      %s71 = sphi 0, %s57
      %s75 = sphi 0, %s75
      %s77 = sphi 0, %s75
      %s78 = sphi 0, %s77
      %s92 = sphi 0, %s78
      %s96 = sphi 0, %s96
      %s98 = sphi 0, %s96
      %s99 = sphi 0, %s98
      %s113 = sphi 0, %s99
      %s117 = sphi 0, %s117
      %s119 = sphi 0, %s117
      %s120 = sphi 0, %s119
      %s134 = sphi 0, %s120
      %s138 = sphi 0, %s138
      %s140 = sphi 0, %s138
      %s141 = sphi 0, %s140
      %s155 = sphi 0, %s141
      %s159 = sphi 0, %s159
      %s161 = sphi 0, %s159
      %s162 = sphi 0, %s161
      %s176 = sphi 0, %s162
      %s180 = sphi 0, %s180
      %s182 = sphi 0, %s180
      %s183 = sphi 0, %s182
      %s197 = sphi 0, %s183
      %s201 = sphi 0, %s201
      %s203 = sphi 0, %s201
      %s204 = sphi 0, %s203
      %s218 = sphi 0, %s204
      %s222 = sphi 0, %s222
      %s224 = sphi 0, %s222
      %s225 = sphi 0, %s224
      %s239 = sphi 0, %s225
      %s243 = sphi 0, %s243
      %s245 = sphi 0, %s243
      %s246 = sphi 0, %s245
      %s260 = sphi 0, %s246
      %s266 = sphi 0, %s268
      %s269 = sphi 0, %s266
      %s270 = sphi 0, %s269
      %s286 = sphi 0, %s270
    $region4: #{conv_stack_forward.1} parent=1 // loop_header_branch
      %23 = sbr.rel (%p21) target = $region8
    $region5: #{conv_stack_forward.1} parent=1 // loop_body
      %s25 = ssub.s32 %s20, 1
      %s26 = ssub.s32 %s20, 2
      %s27 = sadd.s32 %s20, 1
      %s28 = ssub.s32 %s20, %s27
      %p29 = scmp.eq.s32.totalorder %s28, 0
      %s31 = sadd.s32 %s30, 1
      %s32 = scalar_select %p29, %s30, %s31
      %p35 = pneg %p29
      %p36 = scmp.eq.s32.totalorder %s20, 1
      %p37 = por %p35, %p36
      %p38 = scmp.ne.s32.totalorder %s30, %s33
      %p39 = scmp.eq.s32.totalorder %s20, 0
      %p40 = por %p38, %p39
      %p41 = scmp.ne.s32.totalorder %s30, %s33
      %p42 = scmp.eq.s32.totalorder %s25, 1
      %p43 = por %p41, %p42
      %p44 = scmp.ne.s32.totalorder %s33, %s34
      %p45 = scmp.eq.s32.totalorder %s25, 0
      %p46 = por %p44, %p45
      %p47 = scmp.ne.s32.totalorder %s33, %s34
      %p48 = scmp.eq.s32.totalorder %s26, 1
      %p49 = por %p47, %p48
      %p51 = scmp.ne.s32.totalorder %s34, %s50
      %p52 = scmp.eq.s32.totalorder %s26, 0
      %p53 = por %p51, %p52
      %s55 = sadd.s32 %s54, 1
      %p58 = scmp.eq.s32.totalorder %s20, 1
      %p59 = scmp.ne.s32.totalorder %s54, %s56
      %p60 = scmp.eq.s32.totalorder %s20, 0
      %p61 = por %p59, %p60
      %p62 = scmp.ne.s32.totalorder %s54, %s56
      %p63 = scmp.eq.s32.totalorder %s25, 1
      %p64 = por %p62, %p63
      %p65 = scmp.ne.s32.totalorder %s56, %s57
      %p66 = scmp.eq.s32.totalorder %s25, 0
      %p67 = por %p65, %p66
      %p68 = scmp.ne.s32.totalorder %s56, %s57
      %p69 = scmp.eq.s32.totalorder %s26, 1
      %p70 = por %p68, %p69
      %p72 = scmp.ne.s32.totalorder %s57, %s71
      %p73 = scmp.eq.s32.totalorder %s26, 0
      %p74 = por %p72, %p73
      %s76 = sadd.s32 %s75, 1
      %p79 = scmp.eq.s32.totalorder %s20, 1
      %p80 = scmp.ne.s32.totalorder %s75, %s77
      %p81 = scmp.eq.s32.totalorder %s20, 0
      %p82 = por %p80, %p81
      %p83 = scmp.ne.s32.totalorder %s75, %s77
      %p84 = scmp.eq.s32.totalorder %s25, 1
      %p85 = por %p83, %p84
      %p86 = scmp.ne.s32.totalorder %s77, %s78
      %p87 = scmp.eq.s32.totalorder %s25, 0
      %p88 = por %p86, %p87
      %p89 = scmp.ne.s32.totalorder %s77, %s78
      %p90 = scmp.eq.s32.totalorder %s26, 1
      %p91 = por %p89, %p90
      %p93 = scmp.ne.s32.totalorder %s78, %s92
      %p94 = scmp.eq.s32.totalorder %s26, 0
      %p95 = por %p93, %p94
      %s97 = sadd.s32 %s96, 1
      %p100 = scmp.eq.s32.totalorder %s20, 1
      %p101 = scmp.ne.s32.totalorder %s96, %s98
      %p102 = scmp.eq.s32.totalorder %s20, 0
      %p103 = por %p101, %p102
      %p104 = scmp.ne.s32.totalorder %s96, %s98
      %p105 = scmp.eq.s32.totalorder %s25, 1
      %p106 = por %p104, %p105
      %p107 = scmp.ne.s32.totalorder %s98, %s99
      %p108 = scmp.eq.s32.totalorder %s25, 0
      %p109 = por %p107, %p108
      %p110 = scmp.ne.s32.totalorder %s98, %s99
      %p111 = scmp.eq.s32.totalorder %s26, 1
      %p112 = por %p110, %p111
      %p114 = scmp.ne.s32.totalorder %s99, %s113
      %p115 = scmp.eq.s32.totalorder %s26, 0
      %p116 = por %p114, %p115
      %s118 = sadd.s32 %s117, 1
      %p121 = scmp.eq.s32.totalorder %s20, 1
      %p122 = scmp.ne.s32.totalorder %s117, %s119
      %p123 = scmp.eq.s32.totalorder %s20, 0
      %p124 = por %p122, %p123
      %p125 = scmp.ne.s32.totalorder %s117, %s119
      %p126 = scmp.eq.s32.totalorder %s25, 1
      %p127 = por %p125, %p126
      %p128 = scmp.ne.s32.totalorder %s119, %s120
      %p129 = scmp.eq.s32.totalorder %s25, 0
      %p130 = por %p128, %p129
      %p131 = scmp.ne.s32.totalorder %s119, %s120
      %p132 = scmp.eq.s32.totalorder %s26, 1
      %p133 = por %p131, %p132
      %p135 = scmp.ne.s32.totalorder %s120, %s134
      %p136 = scmp.eq.s32.totalorder %s26, 0
      %p137 = por %p135, %p136
      %s139 = sadd.s32 %s138, 1
      %p142 = scmp.eq.s32.totalorder %s20, 1
      %p143 = scmp.ne.s32.totalorder %s138, %s140
      %p144 = scmp.eq.s32.totalorder %s20, 0
      %p145 = por %p143, %p144
      %p146 = scmp.ne.s32.totalorder %s138, %s140
      %p147 = scmp.eq.s32.totalorder %s25, 1
      %p148 = por %p146, %p147
      %p149 = scmp.ne.s32.totalorder %s140, %s141
      %p150 = scmp.eq.s32.totalorder %s25, 0
      %p151 = por %p149, %p150
      %p152 = scmp.ne.s32.totalorder %s140, %s141
      %p153 = scmp.eq.s32.totalorder %s26, 1
      %p154 = por %p152, %p153
      %p156 = scmp.ne.s32.totalorder %s141, %s155
      %p157 = scmp.eq.s32.totalorder %s26, 0
      %p158 = por %p156, %p157
      %s160 = sadd.s32 %s159, 1
      %p163 = scmp.eq.s32.totalorder %s20, 1
      %p164 = scmp.ne.s32.totalorder %s159, %s161
      %p165 = scmp.eq.s32.totalorder %s20, 0
      %p166 = por %p164, %p165
      %p167 = scmp.ne.s32.totalorder %s159, %s161
      %p168 = scmp.eq.s32.totalorder %s25, 1
      %p169 = por %p167, %p168
      %p170 = scmp.ne.s32.totalorder %s161, %s162
      %p171 = scmp.eq.s32.totalorder %s25, 0
      %p172 = por %p170, %p171
      %p173 = scmp.ne.s32.totalorder %s161, %s162
      %p174 = scmp.eq.s32.totalorder %s26, 1
      %p175 = por %p173, %p174
      %p177 = scmp.ne.s32.totalorder %s162, %s176
      %p178 = scmp.eq.s32.totalorder %s26, 0
      %p179 = por %p177, %p178
      %s181 = sadd.s32 %s180, 1
      %p184 = scmp.eq.s32.totalorder %s20, 1
      %p185 = scmp.ne.s32.totalorder %s180, %s182
      %p186 = scmp.eq.s32.totalorder %s20, 0
      %p187 = por %p185, %p186
      %p188 = scmp.ne.s32.totalorder %s180, %s182
      %p189 = scmp.eq.s32.totalorder %s25, 1
      %p190 = por %p188, %p189
      %p191 = scmp.ne.s32.totalorder %s182, %s183
      %p192 = scmp.eq.s32.totalorder %s25, 0
      %p193 = por %p191, %p192
      %p194 = scmp.ne.s32.totalorder %s182, %s183
      %p195 = scmp.eq.s32.totalorder %s26, 1
      %p196 = por %p194, %p195
      %p198 = scmp.ne.s32.totalorder %s183, %s197
      %p199 = scmp.eq.s32.totalorder %s26, 0
      %p200 = por %p198, %p199
      %s202 = sadd.s32 %s201, 1
      %p205 = scmp.eq.s32.totalorder %s20, 1
      %p206 = scmp.ne.s32.totalorder %s201, %s203
      %p207 = scmp.eq.s32.totalorder %s20, 0
      %p208 = por %p206, %p207
      %p209 = scmp.ne.s32.totalorder %s201, %s203
      %p210 = scmp.eq.s32.totalorder %s25, 1
      %p211 = por %p209, %p210
      %p212 = scmp.ne.s32.totalorder %s203, %s204
      %p213 = scmp.eq.s32.totalorder %s25, 0
      %p214 = por %p212, %p213
      %p215 = scmp.ne.s32.totalorder %s203, %s204
      %p216 = scmp.eq.s32.totalorder %s26, 1
      %p217 = por %p215, %p216
      %p219 = scmp.ne.s32.totalorder %s204, %s218
      %p220 = scmp.eq.s32.totalorder %s26, 0
      %p221 = por %p219, %p220
      %s223 = sadd.s32 %s222, 1
      %p226 = scmp.eq.s32.totalorder %s20, 1
      %p227 = scmp.ne.s32.totalorder %s222, %s224
      %p228 = scmp.eq.s32.totalorder %s20, 0
      %p229 = por %p227, %p228
      %p230 = scmp.ne.s32.totalorder %s222, %s224
      %p231 = scmp.eq.s32.totalorder %s25, 1
      %p232 = por %p230, %p231
      %p233 = scmp.ne.s32.totalorder %s224, %s225
      %p234 = scmp.eq.s32.totalorder %s25, 0
      %p235 = por %p233, %p234
      %p236 = scmp.ne.s32.totalorder %s224, %s225
      %p237 = scmp.eq.s32.totalorder %s26, 1
      %p238 = por %p236, %p237
      %p240 = scmp.ne.s32.totalorder %s225, %s239
      %p241 = scmp.eq.s32.totalorder %s26, 0
      %p242 = por %p240, %p241
      %s244 = sadd.s32 %s243, 1
      %p247 = scmp.eq.s32.totalorder %s20, 1
      %p248 = scmp.ne.s32.totalorder %s243, %s245
      %p249 = scmp.eq.s32.totalorder %s20, 0
      %p250 = por %p248, %p249
      %p251 = scmp.ne.s32.totalorder %s243, %s245
      %p252 = scmp.eq.s32.totalorder %s25, 1
      %p253 = por %p251, %p252
      %p254 = scmp.ne.s32.totalorder %s245, %s246
      %p255 = scmp.eq.s32.totalorder %s25, 0
      %p256 = por %p254, %p255
      %p257 = scmp.ne.s32.totalorder %s245, %s246
      %p258 = scmp.eq.s32.totalorder %s26, 1
      %p259 = por %p257, %p258
      %p261 = scmp.ne.s32.totalorder %s246, %s260
      %p262 = scmp.eq.s32.totalorder %s26, 0
      %p263 = por %p261, %p262
      %s264 = ssub.s32 %s20, %s27
      %p265 = scmp.eq.s32.totalorder %s264, 0
      %s267 = sadd.s32 %s266, 1
      %s268 = scalar_select %p265, %s266, %s267
      %p271 = pneg %p265
      %p272 = scmp.eq.s32.totalorder %s20, 1
      %p273 = por %p271, %p272
      %p274 = scmp.ne.s32.totalorder %s266, %s269
      %p275 = scmp.eq.s32.totalorder %s20, 0
      %p276 = por %p274, %p275
      %p277 = scmp.ne.s32.totalorder %s266, %s269
      %p278 = scmp.eq.s32.totalorder %s25, 1
      %p279 = por %p277, %p278
      %p280 = scmp.ne.s32.totalorder %s269, %s270
      %p281 = scmp.eq.s32.totalorder %s25, 0
      %p282 = por %p280, %p281
      %p283 = scmp.ne.s32.totalorder %s269, %s270
      %p284 = scmp.eq.s32.totalorder %s26, 1
      %p285 = por %p283, %p284
      %p287 = scmp.ne.s32.totalorder %s270, %s286
      %p288 = scmp.eq.s32.totalorder %s26, 0
      %p289 = por %p287, %p288
      %p290 = scmp.le.s32.totalorder 1, %s20
      %p291 = scmp.lt.s32.totalorder %s20, 3
      %p292 = pnand %p290, %p291
      %p293 = pneg %p292
      // Predicated region
      $region9: #{conv_stack_forward.1} parent=5 // pred_check
        _
      $region10: #{conv_stack_forward.1} parent=5 // pred_check_branch
        %295 = sbr.rel (%p292) target = $region12
      $region11: #{conv_stack_forward.1} parent=5 // pred_region
        %s296 = ssub.s32 %s20, 1
        // Predicated region
        $region13: #{conv_stack_forward.1} parent=11 // pred_check
          %p297 = pneg %p67
        $region14: #{conv_stack_forward.1} parent=11 // pred_check_branch
          %299 = sbr.rel (%p297) target = $region16
        $region15: #{conv_stack_forward.1} parent=11 // pred_region
          _
        $region16: #{conv_stack_forward.1} parent=11 // pred_fallthru
          _
        // Predicated region
        $region17: #{conv_stack_forward.1} parent=11 // pred_check
          %p300 = pneg %p88
        $region18: #{conv_stack_forward.1} parent=11 // pred_check_branch
          %302 = sbr.rel (%p300) target = $region20
        $region19: #{conv_stack_forward.1} parent=11 // pred_region
          _
        $region20: #{conv_stack_forward.1} parent=11 // pred_fallthru
          _
        // Predicated region
        $region21: #{conv_stack_forward.1} parent=11 // pred_check
          %p303 = pneg %p109
        $region22: #{conv_stack_forward.1} parent=11 // pred_check_branch
          %305 = sbr.rel (%p303) target = $region24
        $region23: #{conv_stack_forward.1} parent=11 // pred_region
          _
        $region24: #{conv_stack_forward.1} parent=11 // pred_fallthru
          _
        // Predicated region
        $region25: #{conv_stack_forward.1} parent=11 // pred_check
          %p306 = pneg %p130
        $region26: #{conv_stack_forward.1} parent=11 // pred_check_branch
          %308 = sbr.rel (%p306) target = $region28
        $region27: #{conv_stack_forward.1} parent=11 // pred_region
          _
        $region28: #{conv_stack_forward.1} parent=11 // pred_fallthru
          _
        // Predicated region
        $region29: #{conv_stack_forward.1} parent=11 // pred_check
          %p309 = pneg %p151
        $region30: #{conv_stack_forward.1} parent=11 // pred_check_branch
          %311 = sbr.rel (%p309) target = $region32
        $region31: #{conv_stack_forward.1} parent=11 // pred_region
          _
        $region32: #{conv_stack_forward.1} parent=11 // pred_fallthru
          _
        // Predicated region
        $region33: #{conv_stack_forward.1} parent=11 // pred_check
          %p312 = pneg %p172
        $region34: #{conv_stack_forward.1} parent=11 // pred_check_branch
          %314 = sbr.rel (%p312) target = $region36
        $region35: #{conv_stack_forward.1} parent=11 // pred_region
          _
        $region36: #{conv_stack_forward.1} parent=11 // pred_fallthru
          _
        // Predicated region
        $region37: #{conv_stack_forward.1} parent=11 // pred_check
          %p315 = pneg %p193
        $region38: #{conv_stack_forward.1} parent=11 // pred_check_branch
          %317 = sbr.rel (%p315) target = $region40
        $region39: #{conv_stack_forward.1} parent=11 // pred_region
          _
        $region40: #{conv_stack_forward.1} parent=11 // pred_fallthru
          _
        // Predicated region
        $region41: #{conv_stack_forward.1} parent=11 // pred_check
          %p318 = pneg %p214
        $region42: #{conv_stack_forward.1} parent=11 // pred_check_branch
          %320 = sbr.rel (%p318) target = $region44
        $region43: #{conv_stack_forward.1} parent=11 // pred_region
          _
        $region44: #{conv_stack_forward.1} parent=11 // pred_fallthru
          _
        // Predicated region
        $region45: #{conv_stack_forward.1} parent=11 // pred_check
          %p321 = pneg %p235
        $region46: #{conv_stack_forward.1} parent=11 // pred_check_branch
          %323 = sbr.rel (%p321) target = $region48
        $region47: #{conv_stack_forward.1} parent=11 // pred_region
          _
        $region48: #{conv_stack_forward.1} parent=11 // pred_fallthru
          _
        // Predicated region
        $region49: #{conv_stack_forward.1} parent=11 // pred_check
          %p324 = pneg %p256
        $region50: #{conv_stack_forward.1} parent=11 // pred_check_branch
          %326 = sbr.rel (%p324) target = $region52
        $region51: #{conv_stack_forward.1} parent=11 // pred_region
          _
        $region52: #{conv_stack_forward.1} parent=11 // pred_fallthru
          _
      $region12: #{conv_stack_forward.1} parent=5 // pred_fallthru
        _
      %p327 = scmp.lt.s32.totalorder %s20, 2
      // Predicated region
      $region53: #{conv_stack_forward.1} parent=5 // pred_check
        %p328 = pneg %p327
      $region54: #{conv_stack_forward.1} parent=5 // pred_check_branch
        %330 = sbr.rel (%p328) target = $region56
      $region55: #{conv_stack_forward.1} parent=5 // pred_region
        // Predicated region
        $region57: #{conv_stack_forward.1} parent=55 // pred_check
          %p331 = pneg %p40
        $region58: #{conv_stack_forward.1} parent=55 // pred_check_branch
          %333 = sbr.rel (%p331) target = $region60
        $region59: #{conv_stack_forward.1} parent=55 // pred_region
          %p334 = scmp.lt.s32.totalorder %s20, 1
          %s335 = scalar_select %p334, %s20, 1
          %s336 = smul.addr %s335, 16
          %s337 = smul.addr %s336, 8
          %s338 = scalar_lea.vmem %s0, %s337
        $region60: #{conv_stack_forward.1} parent=55 // pred_fallthru
          _
      $region56: #{conv_stack_forward.1} parent=5 // pred_fallthru
        _
      %p339 = scmp.le.s32.totalorder 1, %s20
      %p340 = scmp.lt.s32.totalorder %s20, 3
      %p341 = pnand %p339, %p340
      %p342 = pneg %p341
      // Predicated region
      $region61: #{conv_stack_forward.1} parent=5 // pred_check
        _
      $region62: #{conv_stack_forward.1} parent=5 // pred_check_branch
        %344 = sbr.rel (%p341) target = $region64
      $region63: #{conv_stack_forward.1} parent=5 // pred_region
        %s345 = ssub.s32 %s20, 1
        %p346 = scmp.lt.s32.totalorder %s25, 1
        %s347 = scalar_select %p346, %s25, 1
        %s348 = smul.addr %s347, 16
        %s349 = smul.addr %s348, 8
        %s350 = scalar_lea.vmem %s0, %s349
        %p351 = pneg %p46
        %p352 = pneg %p43
        %p353 = pneg %p67
        %p354 = pneg %p64
        %p355 = pneg %p88
        %p356 = pneg %p85
        %p357 = pneg %p109
        %p358 = pneg %p106
        %p359 = pneg %p130
        %p360 = pneg %p127
        %p361 = pneg %p151
        %p362 = pneg %p148
        %p363 = pneg %p172
        %p364 = pneg %p169
        %p365 = pneg %p193
        %p366 = pneg %p190
        %p367 = pneg %p214
        %p368 = pneg %p211
        %p369 = pneg %p235
        %p370 = pneg %p232
        %p371 = pneg %p256
        %p372 = pneg %p253
        %p373 = pneg %p282
        %p374 = pneg %p279
        %s375 = sand.u32 %s269, 1
        %s376 = scalar_lea.sflag [#allocation9], %s375
        %s377 = sand.u32 %s269, 1
        %s378 = smul.addr %s377, 8
        %s379 = scalar_lea.vmem [#allocation8], %s378
        %p380 = scmp.lt.s32.totalorder %s25, 1
        %s381 = scalar_select %p380, %s25, 1
        %s382 = smul.addr %s381, 16
        %s383 = smul.addr %s382, 8
        %s384 = scalar_lea.vmem %s0, %s383
        %v386 = vld [vmem:[%s384] sm:$0xff]
        %v387 = vld [vmem:[%s384 + $0x8] sm:$0xff]
        %v388 = vld [vmem:[%s384 + $0x10] sm:$0xff]
        %v389 = vld [vmem:[%s384 + $0x18] sm:$0xff]
        %v390 = vld [vmem:[%s384 + $0x20] sm:$0xff]
        %v391 = vld [vmem:[%s384 + $0x28] sm:$0xff]
        %v392 = vld [vmem:[%s384 + $0x30] sm:$0xff]
        %v393 = vld [vmem:[%s384 + $0x38] sm:$0xff]
        %v394 = vld [vmem:[%s384 + $0x40] sm:$0xff]
        %v395 = vld [vmem:[%s384 + $0x48] sm:$0xff]
        %v396 = vld [vmem:[%s384 + $0x50] sm:$0xff]
        %v397 = vld [vmem:[%s384 + $0x58] sm:$0xff]
        %v398 = vld [vmem:[%s384 + $0x60] sm:$0xff]
        %v399 = vld [vmem:[%s384 + $0x68] sm:$0xff]
        %v400 = vld [vmem:[%s384 + $0x70] sm:$0xff]
        %v401 = vld [vmem:[%s384 + $0x78] sm:$0xff]
        %vm402 = vcmask 7168
        %403 = vst.msk [vmem:[#allocation2] sm:$0xff] %vm402, 0.0
        %404 = vst.msk [vmem:[#allocation2 + $0x8] sm:$0xff] %vm402, 0.0
        %vm405 = vcmask 1024
        %406 = vst.msk [vmem:[#allocation2 + $0x10] sm:$0x3] %vm405, 0.0
        %407 = vst.msk [vmem:[#allocation2 + $0x18] sm:$0xff] %vm402, 0.0
        %408 = vst.msk [vmem:[#allocation2 + $0x20] sm:$0xff] %vm402, 0.0
        %409 = vst.msk [vmem:[#allocation2 + $0x28] sm:$0x3] %vm405, 0.0
        %410 = vst.msk [vmem:[#allocation2 + $0x30] sm:$0xff] %vm402, 0.0
        %411 = vst.msk [vmem:[#allocation2 + $0x38] sm:$0xff] %vm402, 0.0
        %412 = vst.msk [vmem:[#allocation2 + $0x40] sm:$0x3] %vm405, 0.0
        %413 = vst.msk [vmem:[#allocation2 + $0x48] sm:$0xff] %vm402, 0.0
        %414 = vst.msk [vmem:[#allocation2 + $0x50] sm:$0xff] %vm402, 0.0
        %415 = vst.msk [vmem:[#allocation2 + $0x58] sm:$0x3] %vm405, 0.0
        %416 = vst.msk [vmem:[#allocation2 + $0x60] sm:$0xff] %vm402, 0.0
        %417 = vst.msk [vmem:[#allocation2 + $0x68] sm:$0xff] %vm402, 0.0
        %418 = vst.msk [vmem:[#allocation2 + $0x70] sm:$0x3] %vm405, 0.0
        %419 = vst.msk [vmem:[#allocation2 + $0x78] sm:$0xff] %vm402, 0.0
        %420 = vst.msk [vmem:[#allocation2 + $0x80] sm:$0xff] %vm402, 0.0
        %421 = vst.msk [vmem:[#allocation2 + $0x88] sm:$0x3] %vm405, 0.0
        %422 = vst.msk [vmem:[#allocation2 + $0x90] sm:$0xff] %vm402, 0.0
        %423 = vst.msk [vmem:[#allocation2 + $0x98] sm:$0xff] %vm402, 0.0
        %424 = vst.msk [vmem:[#allocation2 + $0xa0] sm:$0x3] %vm405, 0.0
        %425 = vst.msk [vmem:[#allocation2 + $0xa8] sm:$0xff] %vm402, 0.0
        %426 = vst.msk [vmem:[#allocation2 + $0xb0] sm:$0xff] %vm402, 0.0
        %427 = vst.msk [vmem:[#allocation2 + $0xb8] sm:$0x3] %vm405, 0.0
        %428 = vst.msk [vmem:[#allocation2 + $0xc0] sm:$0xff] %vm402, 0.0
        %429 = vst.msk [vmem:[#allocation2 + $0xc8] sm:$0xff] %vm402, 0.0
        %430 = vst.msk [vmem:[#allocation2 + $0xd0] sm:$0x3] %vm405, 0.0
        %431 = vst.msk [vmem:[#allocation2 + $0xd8] sm:$0xff] %vm402, 0.0
        %432 = vst.msk [vmem:[#allocation2 + $0xe0] sm:$0xff] %vm402, 0.0
        %433 = vst.msk [vmem:[#allocation2 + $0xe8] sm:$0x3] %vm405, 0.0
        %s434 = scalar_lea.vmem [#allocation2], 24
        %435 = vst.msk [vmem:[%s434 + $0x1] sm:$0xff] %vm402, %v386
        %436 = vst.msk [vmem:[%s434 + $0x9] sm:$0xff] %vm402, %v387
        %437 = vst.msk [vmem:[%s434 + $0x19] sm:$0xff] %vm402, %v388
        %438 = vst.msk [vmem:[%s434 + $0x21] sm:$0xff] %vm402, %v389
        %439 = vst.msk [vmem:[%s434 + $0x31] sm:$0xff] %vm402, %v390
        %440 = vst.msk [vmem:[%s434 + $0x39] sm:$0xff] %vm402, %v391
        %441 = vst.msk [vmem:[%s434 + $0x49] sm:$0xff] %vm402, %v392
        %442 = vst.msk [vmem:[%s434 + $0x51] sm:$0xff] %vm402, %v393
        %443 = vst.msk [vmem:[%s434 + $0x61] sm:$0xff] %vm402, %v394
        %444 = vst.msk [vmem:[%s434 + $0x69] sm:$0xff] %vm402, %v395
        %445 = vst.msk [vmem:[%s434 + $0x79] sm:$0xff] %vm402, %v396
        %446 = vst.msk [vmem:[%s434 + $0x81] sm:$0xff] %vm402, %v397
        %447 = vst.msk [vmem:[%s434 + $0x91] sm:$0xff] %vm402, %v398
        %448 = vst.msk [vmem:[%s434 + $0x99] sm:$0xff] %vm402, %v399
        %449 = vst.msk [vmem:[%s434 + $0xa9] sm:$0xff] %vm402, %v400
        %450 = vst.msk [vmem:[%s434 + $0xb1] sm:$0xff] %vm402, %v401
        %v451 = vld [vmem:[#allocation2] sm:$0xff]
        %v452 = vld [vmem:[#allocation2 + $0x8] sm:$0xff]
        %v453 = vld [vmem:[#allocation2 + $0x18] sm:$0xff]
        %v454 = vld [vmem:[#allocation2 + $0x20] sm:$0xff]
        %v455 = vld [vmem:[#allocation2 + $0x30] sm:$0xff]
        %v456 = vld [vmem:[#allocation2 + $0x38] sm:$0xff]
        %v457 = vld [vmem:[#allocation2 + $0x48] sm:$0xff]
        %v458 = vld [vmem:[#allocation2 + $0x50] sm:$0xff]
        %v459 = vld [vmem:[#allocation2 + $0x60] sm:$0xff]
        %v460 = vld [vmem:[#allocation2 + $0x68] sm:$0xff]
        %v461 = vld [vmem:[#allocation2 + $0x78] sm:$0xff]
        %v462 = vld [vmem:[#allocation2 + $0x80] sm:$0xff]
        %v463 = vld [vmem:[#allocation2 + $0x90] sm:$0xff]
        %v464 = vld [vmem:[#allocation2 + $0x98] sm:$0xff]
        %v465 = vld [vmem:[#allocation2 + $0xa8] sm:$0xff]
        %v466 = vld [vmem:[#allocation2 + $0xb0] sm:$0xff]
        %467 = vst.msk [vmem:[#allocation3] sm:$0xff] %vm402, %v451
        %468 = vst.msk [vmem:[#allocation3 + $0x8] sm:$0xff] %vm402, %v452
        %469 = vst.msk [vmem:[#allocation3 + $0x10] sm:$0xff] %vm402, %v453
        %470 = vst.msk [vmem:[#allocation3 + $0x18] sm:$0xff] %vm402, %v454
        %471 = vst.msk [vmem:[#allocation3 + $0x20] sm:$0xff] %vm402, %v455
        %472 = vst.msk [vmem:[#allocation3 + $0x28] sm:$0xff] %vm402, %v456
        %473 = vst.msk [vmem:[#allocation3 + $0x30] sm:$0xff] %vm402, %v457
        %474 = vst.msk [vmem:[#allocation3 + $0x38] sm:$0xff] %vm402, %v458
        %475 = vst.msk [vmem:[#allocation3 + $0x40] sm:$0xff] %vm402, %v459
        %476 = vst.msk [vmem:[#allocation3 + $0x48] sm:$0xff] %vm402, %v460
        %477 = vst.msk [vmem:[#allocation3 + $0x50] sm:$0xff] %vm402, %v461
        %478 = vst.msk [vmem:[#allocation3 + $0x58] sm:$0xff] %vm402, %v462
        %479 = vst.msk [vmem:[#allocation3 + $0x60] sm:$0xff] %vm402, %v463
        %480 = vst.msk [vmem:[#allocation3 + $0x68] sm:$0xff] %vm402, %v464
        %481 = vst.msk [vmem:[#allocation3 + $0x70] sm:$0xff] %vm402, %v465
        %482 = vst.msk [vmem:[#allocation3 + $0x78] sm:$0xff] %vm402, %v466
        %v483 = vld [vmem:[#allocation2 + $0x1] sm:$0xff]
        %v484 = vld [vmem:[#allocation2 + $0x9] sm:$0xff]
        %v485 = vld [vmem:[#allocation2 + $0x19] sm:$0xff]
        %v486 = vld [vmem:[#allocation2 + $0x21] sm:$0xff]
        %v487 = vld [vmem:[#allocation2 + $0x31] sm:$0xff]
        %v488 = vld [vmem:[#allocation2 + $0x39] sm:$0xff]
        %v489 = vld [vmem:[#allocation2 + $0x49] sm:$0xff]
        %v490 = vld [vmem:[#allocation2 + $0x51] sm:$0xff]
        %v491 = vld [vmem:[#allocation2 + $0x61] sm:$0xff]
        %v492 = vld [vmem:[#allocation2 + $0x69] sm:$0xff]
        %v493 = vld [vmem:[#allocation2 + $0x79] sm:$0xff]
        %v494 = vld [vmem:[#allocation2 + $0x81] sm:$0xff]
        %v495 = vld [vmem:[#allocation2 + $0x91] sm:$0xff]
        %v496 = vld [vmem:[#allocation2 + $0x99] sm:$0xff]
        %v497 = vld [vmem:[#allocation2 + $0xa9] sm:$0xff]
        %v498 = vld [vmem:[#allocation2 + $0xb1] sm:$0xff]
        %515 = vrot.lane.b32.xlu0 %v483, 1
        %v516 = vpop.permute.xlu0 %515
        %517 = vrot.lane.b32.xlu0 %v484, 1
        %v518 = vpop.permute.xlu0 %517
        %519 = vrot.lane.b32.xlu0 %v485, 1
        %v520 = vpop.permute.xlu0 %519
        %521 = vrot.lane.b32.xlu0 %v486, 1
        %v522 = vpop.permute.xlu0 %521
        %523 = vrot.lane.b32.xlu0 %v487, 1
        %v524 = vpop.permute.xlu0 %523
        %525 = vrot.lane.b32.xlu0 %v488, 1
        %v526 = vpop.permute.xlu0 %525
        %527 = vrot.lane.b32.xlu0 %v489, 1
        %v528 = vpop.permute.xlu0 %527
        %529 = vrot.lane.b32.xlu0 %v490, 1
        %v530 = vpop.permute.xlu0 %529
        %531 = vrot.lane.b32.xlu0 %v491, 1
        %v532 = vpop.permute.xlu0 %531
        %533 = vrot.lane.b32.xlu0 %v492, 1
        %v534 = vpop.permute.xlu0 %533
        %535 = vrot.lane.b32.xlu0 %v493, 1
        %v536 = vpop.permute.xlu0 %535
        %537 = vrot.lane.b32.xlu0 %v494, 1
        %v538 = vpop.permute.xlu0 %537
        %539 = vrot.lane.b32.xlu0 %v495, 1
        %v540 = vpop.permute.xlu0 %539
        %541 = vrot.lane.b32.xlu0 %v496, 1
        %v542 = vpop.permute.xlu0 %541
        %543 = vrot.lane.b32.xlu0 %v497, 1
        %v544 = vpop.permute.xlu0 %543
        %545 = vrot.lane.b32.xlu0 %v498, 1
        %v546 = vpop.permute.xlu0 %545
        %vm563 = vcmask 15368
        %564 = vst.msk [vmem:[#allocation3] sm:$0xff] %vm563, %v516
        %565 = vst.msk [vmem:[#allocation3 + $0x8] sm:$0xff] %vm563, %v518
        %566 = vst.msk [vmem:[#allocation3 + $0x10] sm:$0xff] %vm563, %v520
        %567 = vst.msk [vmem:[#allocation3 + $0x18] sm:$0xff] %vm563, %v522
        %568 = vst.msk [vmem:[#allocation3 + $0x20] sm:$0xff] %vm563, %v524
        %569 = vst.msk [vmem:[#allocation3 + $0x28] sm:$0xff] %vm563, %v526
        %570 = vst.msk [vmem:[#allocation3 + $0x30] sm:$0xff] %vm563, %v528
        %571 = vst.msk [vmem:[#allocation3 + $0x38] sm:$0xff] %vm563, %v530
        %572 = vst.msk [vmem:[#allocation3 + $0x40] sm:$0xff] %vm563, %v532
        %573 = vst.msk [vmem:[#allocation3 + $0x48] sm:$0xff] %vm563, %v534
        %574 = vst.msk [vmem:[#allocation3 + $0x50] sm:$0xff] %vm563, %v536
        %575 = vst.msk [vmem:[#allocation3 + $0x58] sm:$0xff] %vm563, %v538
        %576 = vst.msk [vmem:[#allocation3 + $0x60] sm:$0xff] %vm563, %v540
        %577 = vst.msk [vmem:[#allocation3 + $0x68] sm:$0xff] %vm563, %v542
        %578 = vst.msk [vmem:[#allocation3 + $0x70] sm:$0xff] %vm563, %v544
        %579 = vst.msk [vmem:[#allocation3 + $0x78] sm:$0xff] %vm563, %v546
        %v580 = vld [vmem:[#allocation2 + $0x2] sm:$0xff]
        %v581 = vld [vmem:[#allocation2 + $0xa] sm:$0xff]
        %v582 = vld [vmem:[#allocation2 + $0x1a] sm:$0xff]
        %v583 = vld [vmem:[#allocation2 + $0x22] sm:$0xff]
        %v584 = vld [vmem:[#allocation2 + $0x32] sm:$0xff]
        %v585 = vld [vmem:[#allocation2 + $0x3a] sm:$0xff]
        %v586 = vld [vmem:[#allocation2 + $0x4a] sm:$0xff]
        %v587 = vld [vmem:[#allocation2 + $0x52] sm:$0xff]
        %v588 = vld [vmem:[#allocation2 + $0x62] sm:$0xff]
        %v589 = vld [vmem:[#allocation2 + $0x6a] sm:$0xff]
        %v590 = vld [vmem:[#allocation2 + $0x7a] sm:$0xff]
        %v591 = vld [vmem:[#allocation2 + $0x82] sm:$0xff]
        %v592 = vld [vmem:[#allocation2 + $0x92] sm:$0xff]
        %v593 = vld [vmem:[#allocation2 + $0x9a] sm:$0xff]
        %v594 = vld [vmem:[#allocation2 + $0xaa] sm:$0xff]
        %v595 = vld [vmem:[#allocation2 + $0xb2] sm:$0xff]
        %612 = vrot.lane.b32.xlu0 %v580, 2
        %v613 = vpop.permute.xlu0 %612
        %614 = vrot.lane.b32.xlu0 %v581, 2
        %v615 = vpop.permute.xlu0 %614
        %616 = vrot.lane.b32.xlu0 %v582, 2
        %v617 = vpop.permute.xlu0 %616
        %618 = vrot.lane.b32.xlu0 %v583, 2
        %v619 = vpop.permute.xlu0 %618
        %620 = vrot.lane.b32.xlu0 %v584, 2
        %v621 = vpop.permute.xlu0 %620
        %622 = vrot.lane.b32.xlu0 %v585, 2
        %v623 = vpop.permute.xlu0 %622
        %624 = vrot.lane.b32.xlu0 %v586, 2
        %v625 = vpop.permute.xlu0 %624
        %626 = vrot.lane.b32.xlu0 %v587, 2
        %v627 = vpop.permute.xlu0 %626
        %628 = vrot.lane.b32.xlu0 %v588, 2
        %v629 = vpop.permute.xlu0 %628
        %630 = vrot.lane.b32.xlu0 %v589, 2
        %v631 = vpop.permute.xlu0 %630
        %632 = vrot.lane.b32.xlu0 %v590, 2
        %v633 = vpop.permute.xlu0 %632
        %634 = vrot.lane.b32.xlu0 %v591, 2
        %v635 = vpop.permute.xlu0 %634
        %636 = vrot.lane.b32.xlu0 %v592, 2
        %v637 = vpop.permute.xlu0 %636
        %638 = vrot.lane.b32.xlu0 %v593, 2
        %v639 = vpop.permute.xlu0 %638
        %640 = vrot.lane.b32.xlu0 %v594, 2
        %v641 = vpop.permute.xlu0 %640
        %642 = vrot.lane.b32.xlu0 %v595, 2
        %v643 = vpop.permute.xlu0 %642
        %vm660 = vcmask 23568
        %661 = vst.msk [vmem:[#allocation3] sm:$0xff] %vm660, %v613
        %662 = vst.msk [vmem:[#allocation3 + $0x8] sm:$0xff] %vm660, %v615
        %663 = vst.msk [vmem:[#allocation3 + $0x10] sm:$0xff] %vm660, %v617
        %664 = vst.msk [vmem:[#allocation3 + $0x18] sm:$0xff] %vm660, %v619
        %665 = vst.msk [vmem:[#allocation3 + $0x20] sm:$0xff] %vm660, %v621
        %666 = vst.msk [vmem:[#allocation3 + $0x28] sm:$0xff] %vm660, %v623
        %667 = vst.msk [vmem:[#allocation3 + $0x30] sm:$0xff] %vm660, %v625
        %668 = vst.msk [vmem:[#allocation3 + $0x38] sm:$0xff] %vm660, %v627
        %669 = vst.msk [vmem:[#allocation3 + $0x40] sm:$0xff] %vm660, %v629
        %670 = vst.msk [vmem:[#allocation3 + $0x48] sm:$0xff] %vm660, %v631
        %671 = vst.msk [vmem:[#allocation3 + $0x50] sm:$0xff] %vm660, %v633
        %672 = vst.msk [vmem:[#allocation3 + $0x58] sm:$0xff] %vm660, %v635
        %673 = vst.msk [vmem:[#allocation3 + $0x60] sm:$0xff] %vm660, %v637
        %674 = vst.msk [vmem:[#allocation3 + $0x68] sm:$0xff] %vm660, %v639
        %675 = vst.msk [vmem:[#allocation3 + $0x70] sm:$0xff] %vm660, %v641
        %676 = vst.msk [vmem:[#allocation3 + $0x78] sm:$0xff] %vm660, %v643
        %v677 = vld [vmem:[%s434] sm:$0xff]
        %v678 = vld [vmem:[%s434 + $0x8] sm:$0xff]
        %v679 = vld [vmem:[%s434 + $0x18] sm:$0xff]
        %v680 = vld [vmem:[%s434 + $0x20] sm:$0xff]
        %v681 = vld [vmem:[%s434 + $0x30] sm:$0xff]
        %v682 = vld [vmem:[%s434 + $0x38] sm:$0xff]
        %v683 = vld [vmem:[%s434 + $0x48] sm:$0xff]
        %v684 = vld [vmem:[%s434 + $0x50] sm:$0xff]
        %v685 = vld [vmem:[%s434 + $0x60] sm:$0xff]
        %v686 = vld [vmem:[%s434 + $0x68] sm:$0xff]
        %v687 = vld [vmem:[%s434 + $0x78] sm:$0xff]
        %v688 = vld [vmem:[%s434 + $0x80] sm:$0xff]
        %v689 = vld [vmem:[%s434 + $0x90] sm:$0xff]
        %v690 = vld [vmem:[%s434 + $0x98] sm:$0xff]
        %v691 = vld [vmem:[%s434 + $0xa8] sm:$0xff]
        %v692 = vld [vmem:[%s434 + $0xb0] sm:$0xff]
        %709 = vrot.lane.b32.xlu0 %v677, 3
        %v710 = vpop.permute.xlu0 %709
        %711 = vrot.lane.b32.xlu0 %v678, 3
        %v712 = vpop.permute.xlu0 %711
        %713 = vrot.lane.b32.xlu0 %v679, 3
        %v714 = vpop.permute.xlu0 %713
        %715 = vrot.lane.b32.xlu0 %v680, 3
        %v716 = vpop.permute.xlu0 %715
        %717 = vrot.lane.b32.xlu0 %v681, 3
        %v718 = vpop.permute.xlu0 %717
        %719 = vrot.lane.b32.xlu0 %v682, 3
        %v720 = vpop.permute.xlu0 %719
        %721 = vrot.lane.b32.xlu0 %v683, 3
        %v722 = vpop.permute.xlu0 %721
        %723 = vrot.lane.b32.xlu0 %v684, 3
        %v724 = vpop.permute.xlu0 %723
        %725 = vrot.lane.b32.xlu0 %v685, 3
        %v726 = vpop.permute.xlu0 %725
        %727 = vrot.lane.b32.xlu0 %v686, 3
        %v728 = vpop.permute.xlu0 %727
        %729 = vrot.lane.b32.xlu0 %v687, 3
        %v730 = vpop.permute.xlu0 %729
        %731 = vrot.lane.b32.xlu0 %v688, 3
        %v732 = vpop.permute.xlu0 %731
        %733 = vrot.lane.b32.xlu0 %v689, 3
        %v734 = vpop.permute.xlu0 %733
        %735 = vrot.lane.b32.xlu0 %v690, 3
        %v736 = vpop.permute.xlu0 %735
        %737 = vrot.lane.b32.xlu0 %v691, 3
        %v738 = vpop.permute.xlu0 %737
        %739 = vrot.lane.b32.xlu0 %v692, 3
        %v740 = vpop.permute.xlu0 %739
        %vm757 = vcmask 31768
        %758 = vst.msk [vmem:[#allocation3] sm:$0xff] %vm757, %v710
        %759 = vst.msk [vmem:[#allocation3 + $0x8] sm:$0xff] %vm757, %v712
        %760 = vst.msk [vmem:[#allocation3 + $0x10] sm:$0xff] %vm757, %v714
        %761 = vst.msk [vmem:[#allocation3 + $0x18] sm:$0xff] %vm757, %v716
        %762 = vst.msk [vmem:[#allocation3 + $0x20] sm:$0xff] %vm757, %v718
        %763 = vst.msk [vmem:[#allocation3 + $0x28] sm:$0xff] %vm757, %v720
        %764 = vst.msk [vmem:[#allocation3 + $0x30] sm:$0xff] %vm757, %v722
        %765 = vst.msk [vmem:[#allocation3 + $0x38] sm:$0xff] %vm757, %v724
        %766 = vst.msk [vmem:[#allocation3 + $0x40] sm:$0xff] %vm757, %v726
        %767 = vst.msk [vmem:[#allocation3 + $0x48] sm:$0xff] %vm757, %v728
        %768 = vst.msk [vmem:[#allocation3 + $0x50] sm:$0xff] %vm757, %v730
        %769 = vst.msk [vmem:[#allocation3 + $0x58] sm:$0xff] %vm757, %v732
        %770 = vst.msk [vmem:[#allocation3 + $0x60] sm:$0xff] %vm757, %v734
        %771 = vst.msk [vmem:[#allocation3 + $0x68] sm:$0xff] %vm757, %v736
        %772 = vst.msk [vmem:[#allocation3 + $0x70] sm:$0xff] %vm757, %v738
        %773 = vst.msk [vmem:[#allocation3 + $0x78] sm:$0xff] %vm757, %v740
        %v774 = vld [vmem:[%s434 + $0x1] sm:$0xff]
        %v775 = vld [vmem:[%s434 + $0x9] sm:$0xff]
        %v776 = vld [vmem:[%s434 + $0x19] sm:$0xff]
        %v777 = vld [vmem:[%s434 + $0x21] sm:$0xff]
        %v778 = vld [vmem:[%s434 + $0x31] sm:$0xff]
        %v779 = vld [vmem:[%s434 + $0x39] sm:$0xff]
        %v780 = vld [vmem:[%s434 + $0x49] sm:$0xff]
        %v781 = vld [vmem:[%s434 + $0x51] sm:$0xff]
        %v782 = vld [vmem:[%s434 + $0x61] sm:$0xff]
        %v783 = vld [vmem:[%s434 + $0x69] sm:$0xff]
        %v784 = vld [vmem:[%s434 + $0x79] sm:$0xff]
        %v785 = vld [vmem:[%s434 + $0x81] sm:$0xff]
        %v786 = vld [vmem:[%s434 + $0x91] sm:$0xff]
        %v787 = vld [vmem:[%s434 + $0x99] sm:$0xff]
        %v788 = vld [vmem:[%s434 + $0xa9] sm:$0xff]
        %v789 = vld [vmem:[%s434 + $0xb1] sm:$0xff]
        %806 = vrot.lane.b32.xlu0 %v774, 4
        %v807 = vpop.permute.xlu0 %806
        %808 = vrot.lane.b32.xlu0 %v775, 4
        %v809 = vpop.permute.xlu0 %808
        %810 = vrot.lane.b32.xlu0 %v776, 4
        %v811 = vpop.permute.xlu0 %810
        %812 = vrot.lane.b32.xlu0 %v777, 4
        %v813 = vpop.permute.xlu0 %812
        %814 = vrot.lane.b32.xlu0 %v778, 4
        %v815 = vpop.permute.xlu0 %814
        %816 = vrot.lane.b32.xlu0 %v779, 4
        %v817 = vpop.permute.xlu0 %816
        %818 = vrot.lane.b32.xlu0 %v780, 4
        %v819 = vpop.permute.xlu0 %818
        %820 = vrot.lane.b32.xlu0 %v781, 4
        %v821 = vpop.permute.xlu0 %820
        %822 = vrot.lane.b32.xlu0 %v782, 4
        %v823 = vpop.permute.xlu0 %822
        %824 = vrot.lane.b32.xlu0 %v783, 4
        %v825 = vpop.permute.xlu0 %824
        %826 = vrot.lane.b32.xlu0 %v784, 4
        %v827 = vpop.permute.xlu0 %826
        %828 = vrot.lane.b32.xlu0 %v785, 4
        %v829 = vpop.permute.xlu0 %828
        %830 = vrot.lane.b32.xlu0 %v786, 4
        %v831 = vpop.permute.xlu0 %830
        %832 = vrot.lane.b32.xlu0 %v787, 4
        %v833 = vpop.permute.xlu0 %832
        %834 = vrot.lane.b32.xlu0 %v788, 4
        %v835 = vpop.permute.xlu0 %834
        %836 = vrot.lane.b32.xlu0 %v789, 4
        %v837 = vpop.permute.xlu0 %836
        %vm854 = vcmask 39968
        %855 = vst.msk [vmem:[#allocation3] sm:$0xff] %vm854, %v807
        %856 = vst.msk [vmem:[#allocation3 + $0x8] sm:$0xff] %vm854, %v809
        %857 = vst.msk [vmem:[#allocation3 + $0x10] sm:$0xff] %vm854, %v811
        %858 = vst.msk [vmem:[#allocation3 + $0x18] sm:$0xff] %vm854, %v813
        %859 = vst.msk [vmem:[#allocation3 + $0x20] sm:$0xff] %vm854, %v815
        %860 = vst.msk [vmem:[#allocation3 + $0x28] sm:$0xff] %vm854, %v817
        %861 = vst.msk [vmem:[#allocation3 + $0x30] sm:$0xff] %vm854, %v819
        %862 = vst.msk [vmem:[#allocation3 + $0x38] sm:$0xff] %vm854, %v821
        %863 = vst.msk [vmem:[#allocation3 + $0x40] sm:$0xff] %vm854, %v823
        %864 = vst.msk [vmem:[#allocation3 + $0x48] sm:$0xff] %vm854, %v825
        %865 = vst.msk [vmem:[#allocation3 + $0x50] sm:$0xff] %vm854, %v827
        %866 = vst.msk [vmem:[#allocation3 + $0x58] sm:$0xff] %vm854, %v829
        %867 = vst.msk [vmem:[#allocation3 + $0x60] sm:$0xff] %vm854, %v831
        %868 = vst.msk [vmem:[#allocation3 + $0x68] sm:$0xff] %vm854, %v833
        %869 = vst.msk [vmem:[#allocation3 + $0x70] sm:$0xff] %vm854, %v835
        %870 = vst.msk [vmem:[#allocation3 + $0x78] sm:$0xff] %vm854, %v837
        %v871 = vld [vmem:[%s434 + $0x2] sm:$0xff]
        %v872 = vld [vmem:[%s434 + $0xa] sm:$0xff]
        %v873 = vld [vmem:[%s434 + $0x1a] sm:$0xff]
        %v874 = vld [vmem:[%s434 + $0x22] sm:$0xff]
        %v875 = vld [vmem:[%s434 + $0x32] sm:$0xff]
        %v876 = vld [vmem:[%s434 + $0x3a] sm:$0xff]
        %v877 = vld [vmem:[%s434 + $0x4a] sm:$0xff]
        %v878 = vld [vmem:[%s434 + $0x52] sm:$0xff]
        %v879 = vld [vmem:[%s434 + $0x62] sm:$0xff]
        %v880 = vld [vmem:[%s434 + $0x6a] sm:$0xff]
        %v881 = vld [vmem:[%s434 + $0x7a] sm:$0xff]
        %v882 = vld [vmem:[%s434 + $0x82] sm:$0xff]
        %v883 = vld [vmem:[%s434 + $0x92] sm:$0xff]
        %v884 = vld [vmem:[%s434 + $0x9a] sm:$0xff]
        %v885 = vld [vmem:[%s434 + $0xaa] sm:$0xff]
        %v886 = vld [vmem:[%s434 + $0xb2] sm:$0xff]
        %903 = vrot.lane.b32.xlu0 %v871, 5
        %v904 = vpop.permute.xlu0 %903
        %905 = vrot.lane.b32.xlu0 %v872, 5
        %v906 = vpop.permute.xlu0 %905
        %907 = vrot.lane.b32.xlu0 %v873, 5
        %v908 = vpop.permute.xlu0 %907
        %909 = vrot.lane.b32.xlu0 %v874, 5
        %v910 = vpop.permute.xlu0 %909
        %911 = vrot.lane.b32.xlu0 %v875, 5
        %v912 = vpop.permute.xlu0 %911
        %913 = vrot.lane.b32.xlu0 %v876, 5
        %v914 = vpop.permute.xlu0 %913
        %915 = vrot.lane.b32.xlu0 %v877, 5
        %v916 = vpop.permute.xlu0 %915
        %917 = vrot.lane.b32.xlu0 %v878, 5
        %v918 = vpop.permute.xlu0 %917
        %919 = vrot.lane.b32.xlu0 %v879, 5
        %v920 = vpop.permute.xlu0 %919
        %921 = vrot.lane.b32.xlu0 %v880, 5
        %v922 = vpop.permute.xlu0 %921
        %923 = vrot.lane.b32.xlu0 %v881, 5
        %v924 = vpop.permute.xlu0 %923
        %925 = vrot.lane.b32.xlu0 %v882, 5
        %v926 = vpop.permute.xlu0 %925
        %927 = vrot.lane.b32.xlu0 %v883, 5
        %v928 = vpop.permute.xlu0 %927
        %929 = vrot.lane.b32.xlu0 %v884, 5
        %v930 = vpop.permute.xlu0 %929
        %931 = vrot.lane.b32.xlu0 %v885, 5
        %v932 = vpop.permute.xlu0 %931
        %933 = vrot.lane.b32.xlu0 %v886, 5
        %v934 = vpop.permute.xlu0 %933
        %vm951 = vcmask 48168
        %952 = vst.msk [vmem:[#allocation3] sm:$0xff] %vm951, %v904
        %953 = vst.msk [vmem:[#allocation3 + $0x8] sm:$0xff] %vm951, %v906
        %954 = vst.msk [vmem:[#allocation3 + $0x10] sm:$0xff] %vm951, %v908
        %955 = vst.msk [vmem:[#allocation3 + $0x18] sm:$0xff] %vm951, %v910
        %956 = vst.msk [vmem:[#allocation3 + $0x20] sm:$0xff] %vm951, %v912
        %957 = vst.msk [vmem:[#allocation3 + $0x28] sm:$0xff] %vm951, %v914
        %958 = vst.msk [vmem:[#allocation3 + $0x30] sm:$0xff] %vm951, %v916
        %959 = vst.msk [vmem:[#allocation3 + $0x38] sm:$0xff] %vm951, %v918
        %960 = vst.msk [vmem:[#allocation3 + $0x40] sm:$0xff] %vm951, %v920
        %961 = vst.msk [vmem:[#allocation3 + $0x48] sm:$0xff] %vm951, %v922
        %962 = vst.msk [vmem:[#allocation3 + $0x50] sm:$0xff] %vm951, %v924
        %963 = vst.msk [vmem:[#allocation3 + $0x58] sm:$0xff] %vm951, %v926
        %964 = vst.msk [vmem:[#allocation3 + $0x60] sm:$0xff] %vm951, %v928
        %965 = vst.msk [vmem:[#allocation3 + $0x68] sm:$0xff] %vm951, %v930
        %966 = vst.msk [vmem:[#allocation3 + $0x70] sm:$0xff] %vm951, %v932
        %967 = vst.msk [vmem:[#allocation3 + $0x78] sm:$0xff] %vm951, %v934
        %s968 = scalar_lea.vmem [#allocation2], 48
        %v969 = vld [vmem:[%s968] sm:$0xff]
        %v970 = vld [vmem:[%s968 + $0x8] sm:$0xff]
        %v971 = vld [vmem:[%s968 + $0x18] sm:$0xff]
        %v972 = vld [vmem:[%s968 + $0x20] sm:$0xff]
        %v973 = vld [vmem:[%s968 + $0x30] sm:$0xff]
        %v974 = vld [vmem:[%s968 + $0x38] sm:$0xff]
        %v975 = vld [vmem:[%s968 + $0x48] sm:$0xff]
        %v976 = vld [vmem:[%s968 + $0x50] sm:$0xff]
        %v977 = vld [vmem:[%s968 + $0x60] sm:$0xff]
        %v978 = vld [vmem:[%s968 + $0x68] sm:$0xff]
        %v979 = vld [vmem:[%s968 + $0x78] sm:$0xff]
        %v980 = vld [vmem:[%s968 + $0x80] sm:$0xff]
        %v981 = vld [vmem:[%s968 + $0x90] sm:$0xff]
        %v982 = vld [vmem:[%s968 + $0x98] sm:$0xff]
        %v983 = vld [vmem:[%s968 + $0xa8] sm:$0xff]
        %v984 = vld [vmem:[%s968 + $0xb0] sm:$0xff]
        %1001 = vrot.lane.b32.xlu0 %v969, 6
        %v1002 = vpop.permute.xlu0 %1001
        %1003 = vrot.lane.b32.xlu0 %v970, 6
        %v1004 = vpop.permute.xlu0 %1003
        %1005 = vrot.lane.b32.xlu0 %v971, 6
        %v1006 = vpop.permute.xlu0 %1005
        %1007 = vrot.lane.b32.xlu0 %v972, 6
        %v1008 = vpop.permute.xlu0 %1007
        %1009 = vrot.lane.b32.xlu0 %v973, 6
        %v1010 = vpop.permute.xlu0 %1009
        %1011 = vrot.lane.b32.xlu0 %v974, 6
        %v1012 = vpop.permute.xlu0 %1011
        %1013 = vrot.lane.b32.xlu0 %v975, 6
        %v1014 = vpop.permute.xlu0 %1013
        %1015 = vrot.lane.b32.xlu0 %v976, 6
        %v1016 = vpop.permute.xlu0 %1015
        %1017 = vrot.lane.b32.xlu0 %v977, 6
        %v1018 = vpop.permute.xlu0 %1017
        %1019 = vrot.lane.b32.xlu0 %v978, 6
        %v1020 = vpop.permute.xlu0 %1019
        %1021 = vrot.lane.b32.xlu0 %v979, 6
        %v1022 = vpop.permute.xlu0 %1021
        %1023 = vrot.lane.b32.xlu0 %v980, 6
        %v1024 = vpop.permute.xlu0 %1023
        %1025 = vrot.lane.b32.xlu0 %v981, 6
        %v1026 = vpop.permute.xlu0 %1025
        %1027 = vrot.lane.b32.xlu0 %v982, 6
        %v1028 = vpop.permute.xlu0 %1027
        %1029 = vrot.lane.b32.xlu0 %v983, 6
        %v1030 = vpop.permute.xlu0 %1029
        %1031 = vrot.lane.b32.xlu0 %v984, 6
        %v1032 = vpop.permute.xlu0 %1031
        %vm1049 = vcmask 56368
        %1050 = vst.msk [vmem:[#allocation3] sm:$0xff] %vm1049, %v1002
        %1051 = vst.msk [vmem:[#allocation3 + $0x8] sm:$0xff] %vm1049, %v1004
        %1052 = vst.msk [vmem:[#allocation3 + $0x10] sm:$0xff] %vm1049, %v1006
        %1053 = vst.msk [vmem:[#allocation3 + $0x18] sm:$0xff] %vm1049, %v1008
        %1054 = vst.msk [vmem:[#allocation3 + $0x20] sm:$0xff] %vm1049, %v1010
        %1055 = vst.msk [vmem:[#allocation3 + $0x28] sm:$0xff] %vm1049, %v1012
        %1056 = vst.msk [vmem:[#allocation3 + $0x30] sm:$0xff] %vm1049, %v1014
        %1057 = vst.msk [vmem:[#allocation3 + $0x38] sm:$0xff] %vm1049, %v1016
        %1058 = vst.msk [vmem:[#allocation3 + $0x40] sm:$0xff] %vm1049, %v1018
        %1059 = vst.msk [vmem:[#allocation3 + $0x48] sm:$0xff] %vm1049, %v1020
        %1060 = vst.msk [vmem:[#allocation3 + $0x50] sm:$0xff] %vm1049, %v1022
        %1061 = vst.msk [vmem:[#allocation3 + $0x58] sm:$0xff] %vm1049, %v1024
        %1062 = vst.msk [vmem:[#allocation3 + $0x60] sm:$0xff] %vm1049, %v1026
        %1063 = vst.msk [vmem:[#allocation3 + $0x68] sm:$0xff] %vm1049, %v1028
        %1064 = vst.msk [vmem:[#allocation3 + $0x70] sm:$0xff] %vm1049, %v1030
        %1065 = vst.msk [vmem:[#allocation3 + $0x78] sm:$0xff] %vm1049, %v1032
        %v1066 = vld [vmem:[%s968 + $0x1] sm:$0xff]
        %v1067 = vld [vmem:[%s968 + $0x9] sm:$0xff]
        %v1068 = vld [vmem:[%s968 + $0x19] sm:$0xff]
        %v1069 = vld [vmem:[%s968 + $0x21] sm:$0xff]
        %v1070 = vld [vmem:[%s968 + $0x31] sm:$0xff]
        %v1071 = vld [vmem:[%s968 + $0x39] sm:$0xff]
        %v1072 = vld [vmem:[%s968 + $0x49] sm:$0xff]
        %v1073 = vld [vmem:[%s968 + $0x51] sm:$0xff]
        %v1074 = vld [vmem:[%s968 + $0x61] sm:$0xff]
        %v1075 = vld [vmem:[%s968 + $0x69] sm:$0xff]
        %v1076 = vld [vmem:[%s968 + $0x79] sm:$0xff]
        %v1077 = vld [vmem:[%s968 + $0x81] sm:$0xff]
        %v1078 = vld [vmem:[%s968 + $0x91] sm:$0xff]
        %v1079 = vld [vmem:[%s968 + $0x99] sm:$0xff]
        %v1080 = vld [vmem:[%s968 + $0xa9] sm:$0xff]
        %v1081 = vld [vmem:[%s968 + $0xb1] sm:$0xff]
        %1098 = vrot.lane.b32.xlu0 %v1066, 7
        %v1099 = vpop.permute.xlu0 %1098
        %1100 = vrot.lane.b32.xlu0 %v1067, 7
        %v1101 = vpop.permute.xlu0 %1100
        %1102 = vrot.lane.b32.xlu0 %v1068, 7
        %v1103 = vpop.permute.xlu0 %1102
        %1104 = vrot.lane.b32.xlu0 %v1069, 7
        %v1105 = vpop.permute.xlu0 %1104
        %1106 = vrot.lane.b32.xlu0 %v1070, 7
        %v1107 = vpop.permute.xlu0 %1106
        %1108 = vrot.lane.b32.xlu0 %v1071, 7
        %v1109 = vpop.permute.xlu0 %1108
        %1110 = vrot.lane.b32.xlu0 %v1072, 7
        %v1111 = vpop.permute.xlu0 %1110
        %1112 = vrot.lane.b32.xlu0 %v1073, 7
        %v1113 = vpop.permute.xlu0 %1112
        %1114 = vrot.lane.b32.xlu0 %v1074, 7
        %v1115 = vpop.permute.xlu0 %1114
        %1116 = vrot.lane.b32.xlu0 %v1075, 7
        %v1117 = vpop.permute.xlu0 %1116
        %1118 = vrot.lane.b32.xlu0 %v1076, 7
        %v1119 = vpop.permute.xlu0 %1118
        %1120 = vrot.lane.b32.xlu0 %v1077, 7
        %v1121 = vpop.permute.xlu0 %1120
        %1122 = vrot.lane.b32.xlu0 %v1078, 7
        %v1123 = vpop.permute.xlu0 %1122
        %1124 = vrot.lane.b32.xlu0 %v1079, 7
        %v1125 = vpop.permute.xlu0 %1124
        %1126 = vrot.lane.b32.xlu0 %v1080, 7
        %v1127 = vpop.permute.xlu0 %1126
        %1128 = vrot.lane.b32.xlu0 %v1081, 7
        %v1129 = vpop.permute.xlu0 %1128
        %vm1146 = vcmask 64568
        %1147 = vst.msk [vmem:[#allocation3] sm:$0xff] %vm1146, %v1099
        %1148 = vst.msk [vmem:[#allocation3 + $0x8] sm:$0xff] %vm1146, %v1101
        %1149 = vst.msk [vmem:[#allocation3 + $0x10] sm:$0xff] %vm1146, %v1103
        %1150 = vst.msk [vmem:[#allocation3 + $0x18] sm:$0xff] %vm1146, %v1105
        %1151 = vst.msk [vmem:[#allocation3 + $0x20] sm:$0xff] %vm1146, %v1107
        %1152 = vst.msk [vmem:[#allocation3 + $0x28] sm:$0xff] %vm1146, %v1109
        %1153 = vst.msk [vmem:[#allocation3 + $0x30] sm:$0xff] %vm1146, %v1111
        %1154 = vst.msk [vmem:[#allocation3 + $0x38] sm:$0xff] %vm1146, %v1113
        %1155 = vst.msk [vmem:[#allocation3 + $0x40] sm:$0xff] %vm1146, %v1115
        %1156 = vst.msk [vmem:[#allocation3 + $0x48] sm:$0xff] %vm1146, %v1117
        %1157 = vst.msk [vmem:[#allocation3 + $0x50] sm:$0xff] %vm1146, %v1119
        %1158 = vst.msk [vmem:[#allocation3 + $0x58] sm:$0xff] %vm1146, %v1121
        %1159 = vst.msk [vmem:[#allocation3 + $0x60] sm:$0xff] %vm1146, %v1123
        %1160 = vst.msk [vmem:[#allocation3 + $0x68] sm:$0xff] %vm1146, %v1125
        %1161 = vst.msk [vmem:[#allocation3 + $0x70] sm:$0xff] %vm1146, %v1127
        %1162 = vst.msk [vmem:[#allocation3 + $0x78] sm:$0xff] %vm1146, %v1129
        %v1163 = vld [vmem:[%s968 + $0x2] sm:$0xff]
        %v1164 = vld [vmem:[%s968 + $0xa] sm:$0xff]
        %v1165 = vld [vmem:[%s968 + $0x1a] sm:$0xff]
        %v1166 = vld [vmem:[%s968 + $0x22] sm:$0xff]
        %v1167 = vld [vmem:[%s968 + $0x32] sm:$0xff]
        %v1168 = vld [vmem:[%s968 + $0x3a] sm:$0xff]
        %v1169 = vld [vmem:[%s968 + $0x4a] sm:$0xff]
        %v1170 = vld [vmem:[%s968 + $0x52] sm:$0xff]
        %v1171 = vld [vmem:[%s968 + $0x62] sm:$0xff]
        %v1172 = vld [vmem:[%s968 + $0x6a] sm:$0xff]
        %v1173 = vld [vmem:[%s968 + $0x7a] sm:$0xff]
        %v1174 = vld [vmem:[%s968 + $0x82] sm:$0xff]
        %v1175 = vld [vmem:[%s968 + $0x92] sm:$0xff]
        %v1176 = vld [vmem:[%s968 + $0x9a] sm:$0xff]
        %v1177 = vld [vmem:[%s968 + $0xaa] sm:$0xff]
        %v1178 = vld [vmem:[%s968 + $0xb2] sm:$0xff]
        %1195 = vrot.lane.b32.xlu0 %v1163, 8
        %v1196 = vpop.permute.xlu0 %1195
        %1197 = vrot.lane.b32.xlu0 %v1164, 8
        %v1198 = vpop.permute.xlu0 %1197
        %1199 = vrot.lane.b32.xlu0 %v1165, 8
        %v1200 = vpop.permute.xlu0 %1199
        %1201 = vrot.lane.b32.xlu0 %v1166, 8
        %v1202 = vpop.permute.xlu0 %1201
        %1203 = vrot.lane.b32.xlu0 %v1167, 8
        %v1204 = vpop.permute.xlu0 %1203
        %1205 = vrot.lane.b32.xlu0 %v1168, 8
        %v1206 = vpop.permute.xlu0 %1205
        %1207 = vrot.lane.b32.xlu0 %v1169, 8
        %v1208 = vpop.permute.xlu0 %1207
        %1209 = vrot.lane.b32.xlu0 %v1170, 8
        %v1210 = vpop.permute.xlu0 %1209
        %1211 = vrot.lane.b32.xlu0 %v1171, 8
        %v1212 = vpop.permute.xlu0 %1211
        %1213 = vrot.lane.b32.xlu0 %v1172, 8
        %v1214 = vpop.permute.xlu0 %1213
        %1215 = vrot.lane.b32.xlu0 %v1173, 8
        %v1216 = vpop.permute.xlu0 %1215
        %1217 = vrot.lane.b32.xlu0 %v1174, 8
        %v1218 = vpop.permute.xlu0 %1217
        %1219 = vrot.lane.b32.xlu0 %v1175, 8
        %v1220 = vpop.permute.xlu0 %1219
        %1221 = vrot.lane.b32.xlu0 %v1176, 8
        %v1222 = vpop.permute.xlu0 %1221
        %1223 = vrot.lane.b32.xlu0 %v1177, 8
        %v1224 = vpop.permute.xlu0 %1223
        %1225 = vrot.lane.b32.xlu0 %v1178, 8
        %v1226 = vpop.permute.xlu0 %1225
        %vm1243 = vcmask 72768
        %1244 = vst.msk [vmem:[#allocation3] sm:$0xff] %vm1243, %v1196
        %1245 = vst.msk [vmem:[#allocation3 + $0x8] sm:$0xff] %vm1243, %v1198
        %1246 = vst.msk [vmem:[#allocation3 + $0x10] sm:$0xff] %vm1243, %v1200
        %1247 = vst.msk [vmem:[#allocation3 + $0x18] sm:$0xff] %vm1243, %v1202
        %1248 = vst.msk [vmem:[#allocation3 + $0x20] sm:$0xff] %vm1243, %v1204
        %1249 = vst.msk [vmem:[#allocation3 + $0x28] sm:$0xff] %vm1243, %v1206
        %1250 = vst.msk [vmem:[#allocation3 + $0x30] sm:$0xff] %vm1243, %v1208
        %1251 = vst.msk [vmem:[#allocation3 + $0x38] sm:$0xff] %vm1243, %v1210
        %1252 = vst.msk [vmem:[#allocation3 + $0x40] sm:$0xff] %vm1243, %v1212
        %1253 = vst.msk [vmem:[#allocation3 + $0x48] sm:$0xff] %vm1243, %v1214
        %1254 = vst.msk [vmem:[#allocation3 + $0x50] sm:$0xff] %vm1243, %v1216
        %1255 = vst.msk [vmem:[#allocation3 + $0x58] sm:$0xff] %vm1243, %v1218
        %1256 = vst.msk [vmem:[#allocation3 + $0x60] sm:$0xff] %vm1243, %v1220
        %1257 = vst.msk [vmem:[#allocation3 + $0x68] sm:$0xff] %vm1243, %v1222
        %1258 = vst.msk [vmem:[#allocation3 + $0x70] sm:$0xff] %vm1243, %v1224
        %1259 = vst.msk [vmem:[#allocation3 + $0x78] sm:$0xff] %vm1243, %v1226
        %v1260 = vld [vmem:[#allocation3] sm:$0xff]
        %v1261 = vld [vmem:[#allocation3 + $0x8] sm:$0xff]
        %v1262 = vld [vmem:[#allocation3 + $0x10] sm:$0xff]
        %v1263 = vld [vmem:[#allocation3 + $0x18] sm:$0xff]
        %v1264 = vld [vmem:[#allocation3 + $0x20] sm:$0xff]
        %v1265 = vld [vmem:[#allocation3 + $0x28] sm:$0xff]
        %v1266 = vld [vmem:[#allocation3 + $0x30] sm:$0xff]
        %v1267 = vld [vmem:[#allocation3 + $0x38] sm:$0xff]
        %v1268 = vld [vmem:[#allocation3 + $0x40] sm:$0xff]
        %v1269 = vld [vmem:[#allocation3 + $0x48] sm:$0xff]
        %v1270 = vld [vmem:[#allocation3 + $0x50] sm:$0xff]
        %v1271 = vld [vmem:[#allocation3 + $0x58] sm:$0xff]
        %v1272 = vld [vmem:[#allocation3 + $0x60] sm:$0xff]
        %v1273 = vld [vmem:[#allocation3 + $0x68] sm:$0xff]
        %v1274 = vld [vmem:[#allocation3 + $0x70] sm:$0xff]
        %v1275 = vld [vmem:[#allocation3 + $0x78] sm:$0xff]
        %v1276 = vpack.c.bf16 %v1261, %v1260
        %v1277 = vpack.c.bf16 %v1263, %v1262
        %v1278 = vpack.c.bf16 %v1265, %v1264
        %v1279 = vpack.c.bf16 %v1267, %v1266
        %v1280 = vpack.c.bf16 %v1269, %v1268
        %v1281 = vpack.c.bf16 %v1271, %v1270
        %v1282 = vpack.c.bf16 %v1273, %v1272
        %v1283 = vpack.c.bf16 %v1275, %v1274
        %v1284 = vld [vmem:[%s1] sm:$0xf]
        %v1285 = vld [vmem:[%s1 + $0x4] sm:$0x1]
        %v1286 = vld [vmem:[%s2] sm:$0x1]
        %v1288 = vlaneseq
        %v1289 = vshrl.u32 %v1288, 7
        %v1290 = vsub.s32 0, %v1289
        %v1291 = vrot.slane %v1286, %v1290
        %v1295 = vunpack.c.l.b16 %v1284
        %v1296 = vunpack.c.l.b16 %v1285
        %v1297 = vpack.c.b16 %v1296, %v1295
        %vm1298 = vcmask 72704
        %v1300 = vsel %vm1298, %v1276, 0
        %v1303 = vsel %vm1298, %v1277, 0
        %v1306 = vsel %vm1298, %v1278, 0
        %v1309 = vsel %vm1298, %v1279, 0
        %v1312 = vsel %vm1298, %v1280, 0
        %v1315 = vsel %vm1298, %v1281, 0
        %v1318 = vsel %vm1298, %v1282, 0
        %v1321 = vsel %vm1298, %v1283, 0
        %vm1323 = vcmask 1043456
        %vm1324 = vcmask 1044480
        %v1325 = vsel %vm1323, 4294967295, 65535
        %v1326 = vsel %vm1324, %v1325, 0
        %v1328 = vand.u32 %v1297, %v1326
        %1330 = vmatprep.subr.bf16.mxu0 0
        %1331 = vmatpush1.bf16.msra.mxu0 0
        %1332 = vmatprep.subr.bf16.mxu0 0
        %1333 = vmatpush1.bf16.msra.mxu0 0
        %1334 = vmatprep.subr.bf16.mxu0 0
        %1335 = vmatpush1.bf16.msra.mxu0 0
        %1336 = vmatprep.subr.bf16.mxu0 0
        %1337 = vmatpush1.bf16.msra.mxu0 0
        %1338 = vmatprep.subr.bf16.mxu0 0
        %1339 = vmatpush1.bf16.msra.mxu0 0
        %1340 = vmatprep.subr.bf16.mxu0 0
        %1341 = vmatpush1.bf16.msra.mxu0 0
        %1342 = vmatprep.subr.bf16.mxu0 0
        %1343 = vmatpush1.bf16.msra.mxu0 0
        %1344 = vmatprep.subr.bf16.mxu0 0
        %1345 = vmatpush1.bf16.msra.mxu0 %v1328
        %1346 = vmatprep.subr.bf16.mxu0 0
        %1347 = vmatpush2.bf16.msra.mxu0 0
        %1348 = vmatprep.subr.bf16.mxu0 0
        %1349 = vmatpush2.bf16.msra.mxu0 0
        %1350 = vmatprep.subr.bf16.mxu0 0
        %1351 = vmatpush2.bf16.msra.mxu0 0
        %1352 = vmatprep.subr.bf16.mxu0 0
        %1353 = vmatpush2.bf16.msra.mxu0 0
        %1354 = vmatprep.subr.bf16.mxu0 0
        %1355 = vmatpush2.bf16.msra.mxu0 0
        %1356 = vmatprep.subr.bf16.mxu0 0
        %1357 = vmatpush2.bf16.msra.mxu0 0
        %1358 = vmatprep.subr.bf16.mxu0 0
        %1359 = vmatpush2.bf16.msra.mxu0 0
        %1360 = vmatprep.subr.bf16.mxu0 0
        %1361 = vmatpush2.bf16.msra.mxu0 0
        %1362 = vmatprep.mubr.bf16.mxu0 0
        %1363 = vmatmul.mubr.bf16.gmra.mxu0 %v1300
        %v1364 = vpop.f32.mrf.mxu0
        %v1365 = vadd.f32 %v1291, %v1364
        %v1366 = vpop.f32.mrf.mxu0
        %v1367 = vpop.f32.mrf.mxu0
        %v1368 = vadd.f32 %v1291, %v1367
        %v1369 = vpop.f32.mrf.mxu0
        %1370 = vmatprep.mubr.bf16.mxu0 0
        %1371 = vmatmul.mubr.bf16.gmra.mxu0 %v1303
        %v1372 = vpop.f32.mrf.mxu0
        %v1373 = vadd.f32 %v1291, %v1372
        %v1374 = vpop.f32.mrf.mxu0
        %v1375 = vpop.f32.mrf.mxu0
        %v1376 = vadd.f32 %v1291, %v1375
        %v1377 = vpop.f32.mrf.mxu0
        %1378 = vmatprep.mubr.bf16.mxu0 0
        %1379 = vmatmul.mubr.bf16.gmra.mxu0 %v1306
        %v1380 = vpop.f32.mrf.mxu0
        %v1381 = vadd.f32 %v1291, %v1380
        %v1382 = vpop.f32.mrf.mxu0
        %v1383 = vpop.f32.mrf.mxu0
        %v1384 = vadd.f32 %v1291, %v1383
        %v1385 = vpop.f32.mrf.mxu0
        %1386 = vmatprep.mubr.bf16.mxu0 0
        %1387 = vmatmul.mubr.bf16.gmra.mxu0 %v1309
        %v1388 = vpop.f32.mrf.mxu0
        %v1389 = vadd.f32 %v1291, %v1388
        %v1390 = vpop.f32.mrf.mxu0
        %v1391 = vpop.f32.mrf.mxu0
        %v1392 = vadd.f32 %v1291, %v1391
        %v1393 = vpop.f32.mrf.mxu0
        %1394 = vmatprep.mubr.bf16.mxu0 0
        %1395 = vmatmul.mubr.bf16.gmra.mxu0 %v1312
        %v1396 = vpop.f32.mrf.mxu0
        %v1397 = vadd.f32 %v1291, %v1396
        %v1398 = vpop.f32.mrf.mxu0
        %v1399 = vpop.f32.mrf.mxu0
        %v1400 = vadd.f32 %v1291, %v1399
        %v1401 = vpop.f32.mrf.mxu0
        %1402 = vmatprep.mubr.bf16.mxu0 0
        %1403 = vmatmul.mubr.bf16.gmra.mxu0 %v1315
        %v1404 = vpop.f32.mrf.mxu0
        %v1405 = vadd.f32 %v1291, %v1404
        %v1406 = vpop.f32.mrf.mxu0
        %v1407 = vpop.f32.mrf.mxu0
        %v1408 = vadd.f32 %v1291, %v1407
        %v1409 = vpop.f32.mrf.mxu0
        %1410 = vmatprep.mubr.bf16.mxu0 0
        %1411 = vmatmul.mubr.bf16.gmra.mxu0 %v1318
        %v1412 = vpop.f32.mrf.mxu0
        %v1413 = vadd.f32 %v1291, %v1412
        %v1414 = vpop.f32.mrf.mxu0
        %v1415 = vpop.f32.mrf.mxu0
        %v1416 = vadd.f32 %v1291, %v1415
        %v1417 = vpop.f32.mrf.mxu0
        %1418 = vmatprep.mubr.bf16.mxu0 0
        %1419 = vmatmul.mubr.bf16.gmra.mxu0 %v1321
        %v1420 = vpop.f32.mrf.mxu0
        %v1421 = vadd.f32 %v1291, %v1420
        %v1422 = vpop.f32.mrf.mxu0
        %v1423 = vpop.f32.mrf.mxu0
        %v1424 = vadd.f32 %v1291, %v1423
        %v1425 = vpop.f32.mrf.mxu0
        %1426 = vdwg.mxu0
        %v1427 = vmax.f32 %v1365, 0.0
        %v1428 = vmax.f32 %v1368, 0.0
        %v1429 = vmax.f32 %v1373, 0.0
        %v1430 = vmax.f32 %v1376, 0.0
        %v1431 = vmax.f32 %v1381, 0.0
        %v1432 = vmax.f32 %v1384, 0.0
        %v1433 = vmax.f32 %v1389, 0.0
        %v1434 = vmax.f32 %v1392, 0.0
        %v1435 = vmax.f32 %v1397, 0.0
        %v1436 = vmax.f32 %v1400, 0.0
        %v1437 = vmax.f32 %v1405, 0.0
        %v1438 = vmax.f32 %v1408, 0.0
        %v1439 = vmax.f32 %v1413, 0.0
        %v1440 = vmax.f32 %v1416, 0.0
        %v1441 = vmax.f32 %v1421, 0.0
        %v1442 = vmax.f32 %v1424, 0.0
        %vm1443 = vcmask 162816
        %1444 = vst.msk [vmem:[#allocation4] sm:$0xff] %vm1443, 0.0
        %1445 = vst.msk [vmem:[#allocation4 + $0x8] sm:$0xff] %vm1443, 0.0
        %vm1446 = vcmask 156672
        %1447 = vst.msk [vmem:[#allocation4 + $0x10] sm:$0x3] %vm1446, 0.0
        %1448 = vst.msk [vmem:[#allocation4 + $0x18] sm:$0xff] %vm1443, 0.0
        %1449 = vst.msk [vmem:[#allocation4 + $0x20] sm:$0xff] %vm1443, 0.0
        %1450 = vst.msk [vmem:[#allocation4 + $0x28] sm:$0x3] %vm1446, 0.0
        %1451 = vst.msk [vmem:[#allocation4 + $0x30] sm:$0xff] %vm1443, 0.0
        %1452 = vst.msk [vmem:[#allocation4 + $0x38] sm:$0xff] %vm1443, 0.0
        %1453 = vst.msk [vmem:[#allocation4 + $0x40] sm:$0x3] %vm1446, 0.0
        %1454 = vst.msk [vmem:[#allocation4 + $0x48] sm:$0xff] %vm1443, 0.0
        %1455 = vst.msk [vmem:[#allocation4 + $0x50] sm:$0xff] %vm1443, 0.0
        %1456 = vst.msk [vmem:[#allocation4 + $0x58] sm:$0x3] %vm1446, 0.0
        %1457 = vst.msk [vmem:[#allocation4 + $0x60] sm:$0xff] %vm1443, 0.0
        %1458 = vst.msk [vmem:[#allocation4 + $0x68] sm:$0xff] %vm1443, 0.0
        %1459 = vst.msk [vmem:[#allocation4 + $0x70] sm:$0x3] %vm1446, 0.0
        %1460 = vst.msk [vmem:[#allocation4 + $0x78] sm:$0xff] %vm1443, 0.0
        %1461 = vst.msk [vmem:[#allocation4 + $0x80] sm:$0xff] %vm1443, 0.0
        %1462 = vst.msk [vmem:[#allocation4 + $0x88] sm:$0x3] %vm1446, 0.0
        %1463 = vst.msk [vmem:[#allocation4 + $0x90] sm:$0xff] %vm1443, 0.0
        %1464 = vst.msk [vmem:[#allocation4 + $0x98] sm:$0xff] %vm1443, 0.0
        %1465 = vst.msk [vmem:[#allocation4 + $0xa0] sm:$0x3] %vm1446, 0.0
        %1466 = vst.msk [vmem:[#allocation4 + $0xa8] sm:$0xff] %vm1443, 0.0
        %1467 = vst.msk [vmem:[#allocation4 + $0xb0] sm:$0xff] %vm1443, 0.0
        %1468 = vst.msk [vmem:[#allocation4 + $0xb8] sm:$0x3] %vm1446, 0.0
        %1469 = vst.msk [vmem:[#allocation4 + $0xc0] sm:$0xff] %vm1443, 0.0
        %1470 = vst.msk [vmem:[#allocation4 + $0xc8] sm:$0xff] %vm1443, 0.0
        %1471 = vst.msk [vmem:[#allocation4 + $0xd0] sm:$0x3] %vm1446, 0.0
        %1472 = vst.msk [vmem:[#allocation4 + $0xd8] sm:$0xff] %vm1443, 0.0
        %1473 = vst.msk [vmem:[#allocation4 + $0xe0] sm:$0xff] %vm1443, 0.0
        %1474 = vst.msk [vmem:[#allocation4 + $0xe8] sm:$0x3] %vm1446, 0.0
        %s1475 = scalar_lea.vmem [#allocation4], 24
        %1476 = vst.msk [vmem:[%s1475 + $0x1] sm:$0xff] %vm1443, %v1427
        %1477 = vst.msk [vmem:[%s1475 + $0x9] sm:$0xff] %vm1443, %v1428
        %1478 = vst.msk [vmem:[%s1475 + $0x19] sm:$0xff] %vm1443, %v1429
        %1479 = vst.msk [vmem:[%s1475 + $0x21] sm:$0xff] %vm1443, %v1430
        %1480 = vst.msk [vmem:[%s1475 + $0x31] sm:$0xff] %vm1443, %v1431
        %1481 = vst.msk [vmem:[%s1475 + $0x39] sm:$0xff] %vm1443, %v1432
        %1482 = vst.msk [vmem:[%s1475 + $0x49] sm:$0xff] %vm1443, %v1433
        %1483 = vst.msk [vmem:[%s1475 + $0x51] sm:$0xff] %vm1443, %v1434
        %1484 = vst.msk [vmem:[%s1475 + $0x61] sm:$0xff] %vm1443, %v1435
        %1485 = vst.msk [vmem:[%s1475 + $0x69] sm:$0xff] %vm1443, %v1436
        %1486 = vst.msk [vmem:[%s1475 + $0x79] sm:$0xff] %vm1443, %v1437
        %1487 = vst.msk [vmem:[%s1475 + $0x81] sm:$0xff] %vm1443, %v1438
        %1488 = vst.msk [vmem:[%s1475 + $0x91] sm:$0xff] %vm1443, %v1439
        %1489 = vst.msk [vmem:[%s1475 + $0x99] sm:$0xff] %vm1443, %v1440
        %1490 = vst.msk [vmem:[%s1475 + $0xa9] sm:$0xff] %vm1443, %v1441
        %1491 = vst.msk [vmem:[%s1475 + $0xb1] sm:$0xff] %vm1443, %v1442
        %v1492 = vld [vmem:[#allocation4] sm:$0xff]
        %v1493 = vld [vmem:[#allocation4 + $0x8] sm:$0xff]
        %v1494 = vld [vmem:[#allocation4 + $0x18] sm:$0xff]
        %v1495 = vld [vmem:[#allocation4 + $0x20] sm:$0xff]
        %v1496 = vld [vmem:[#allocation4 + $0x30] sm:$0xff]
        %v1497 = vld [vmem:[#allocation4 + $0x38] sm:$0xff]
        %v1498 = vld [vmem:[#allocation4 + $0x48] sm:$0xff]
        %v1499 = vld [vmem:[#allocation4 + $0x50] sm:$0xff]
        %v1500 = vld [vmem:[#allocation4 + $0x60] sm:$0xff]
        %v1501 = vld [vmem:[#allocation4 + $0x68] sm:$0xff]
        %v1502 = vld [vmem:[#allocation4 + $0x78] sm:$0xff]
        %v1503 = vld [vmem:[#allocation4 + $0x80] sm:$0xff]
        %v1504 = vld [vmem:[#allocation4 + $0x90] sm:$0xff]
        %v1505 = vld [vmem:[#allocation4 + $0x98] sm:$0xff]
        %v1506 = vld [vmem:[#allocation4 + $0xa8] sm:$0xff]
        %v1507 = vld [vmem:[#allocation4 + $0xb0] sm:$0xff]
        %1508 = vst.msk [vmem:[#allocation5] sm:$0xff] %vm1443, %v1492
        %1509 = vst.msk [vmem:[#allocation5 + $0x10] sm:$0xff] %vm1443, %v1493
        %1510 = vst.msk [vmem:[#allocation5 + $0x20] sm:$0xff] %vm1443, %v1494
        %1511 = vst.msk [vmem:[#allocation5 + $0x30] sm:$0xff] %vm1443, %v1495
        %1512 = vst.msk [vmem:[#allocation5 + $0x40] sm:$0xff] %vm1443, %v1496
        %1513 = vst.msk [vmem:[#allocation5 + $0x50] sm:$0xff] %vm1443, %v1497
        %1514 = vst.msk [vmem:[#allocation5 + $0x60] sm:$0xff] %vm1443, %v1498
        %1515 = vst.msk [vmem:[#allocation5 + $0x70] sm:$0xff] %vm1443, %v1499
        %1516 = vst.msk [vmem:[#allocation5 + $0x80] sm:$0xff] %vm1443, %v1500
        %1517 = vst.msk [vmem:[#allocation5 + $0x90] sm:$0xff] %vm1443, %v1501
        %1518 = vst.msk [vmem:[#allocation5 + $0xa0] sm:$0xff] %vm1443, %v1502
        %1519 = vst.msk [vmem:[#allocation5 + $0xb0] sm:$0xff] %vm1443, %v1503
        %1520 = vst.msk [vmem:[#allocation5 + $0xc0] sm:$0xff] %vm1443, %v1504
        %1521 = vst.msk [vmem:[#allocation5 + $0xd0] sm:$0xff] %vm1443, %v1505
        %1522 = vst.msk [vmem:[#allocation5 + $0xe0] sm:$0xff] %vm1443, %v1506
        %1523 = vst.msk [vmem:[#allocation5 + $0xf0] sm:$0xff] %vm1443, %v1507
        %v1524 = vld [vmem:[#allocation4 + $0x1] sm:$0xff]
        %v1525 = vld [vmem:[#allocation4 + $0x9] sm:$0xff]
        %v1526 = vld [vmem:[#allocation4 + $0x19] sm:$0xff]
        %v1527 = vld [vmem:[#allocation4 + $0x21] sm:$0xff]
        %v1528 = vld [vmem:[#allocation4 + $0x31] sm:$0xff]
        %v1529 = vld [vmem:[#allocation4 + $0x39] sm:$0xff]
        %v1530 = vld [vmem:[#allocation4 + $0x49] sm:$0xff]
        %v1531 = vld [vmem:[#allocation4 + $0x51] sm:$0xff]
        %v1532 = vld [vmem:[#allocation4 + $0x61] sm:$0xff]
        %v1533 = vld [vmem:[#allocation4 + $0x69] sm:$0xff]
        %v1534 = vld [vmem:[#allocation4 + $0x79] sm:$0xff]
        %v1535 = vld [vmem:[#allocation4 + $0x81] sm:$0xff]
        %v1536 = vld [vmem:[#allocation4 + $0x91] sm:$0xff]
        %v1537 = vld [vmem:[#allocation4 + $0x99] sm:$0xff]
        %v1538 = vld [vmem:[#allocation4 + $0xa9] sm:$0xff]
        %v1539 = vld [vmem:[#allocation4 + $0xb1] sm:$0xff]
        %1556 = vrot.lane.b32.xlu0 %v1524, 20
        %v1557 = vpop.permute.xlu0 %1556
        %1558 = vrot.lane.b32.xlu0 %v1525, 20
        %v1559 = vpop.permute.xlu0 %1558
        %1560 = vrot.lane.b32.xlu0 %v1526, 20
        %v1561 = vpop.permute.xlu0 %1560
        %1562 = vrot.lane.b32.xlu0 %v1527, 20
        %v1563 = vpop.permute.xlu0 %1562
        %1564 = vrot.lane.b32.xlu0 %v1528, 20
        %v1565 = vpop.permute.xlu0 %1564
        %1566 = vrot.lane.b32.xlu0 %v1529, 20
        %v1567 = vpop.permute.xlu0 %1566
        %1568 = vrot.lane.b32.xlu0 %v1530, 20
        %v1569 = vpop.permute.xlu0 %1568
        %1570 = vrot.lane.b32.xlu0 %v1531, 20
        %v1571 = vpop.permute.xlu0 %1570
        %1572 = vrot.lane.b32.xlu0 %v1532, 20
        %v1573 = vpop.permute.xlu0 %1572
        %1574 = vrot.lane.b32.xlu0 %v1533, 20
        %v1575 = vpop.permute.xlu0 %1574
        %1576 = vrot.lane.b32.xlu0 %v1534, 20
        %v1577 = vpop.permute.xlu0 %1576
        %1578 = vrot.lane.b32.xlu0 %v1535, 20
        %v1579 = vpop.permute.xlu0 %1578
        %1580 = vrot.lane.b32.xlu0 %v1536, 20
        %v1581 = vpop.permute.xlu0 %1580
        %1582 = vrot.lane.b32.xlu0 %v1537, 20
        %v1583 = vpop.permute.xlu0 %1582
        %1584 = vrot.lane.b32.xlu0 %v1538, 20
        %v1585 = vpop.permute.xlu0 %1584
        %1586 = vrot.lane.b32.xlu0 %v1539, 20
        %v1587 = vpop.permute.xlu0 %1586
        %vm1604 = vcmask 326816
        %1605 = vst.msk [vmem:[#allocation5] sm:$0xff] %vm1604, %v1557
        %1606 = vst.msk [vmem:[#allocation5 + $0x10] sm:$0xff] %vm1604, %v1559
        %1607 = vst.msk [vmem:[#allocation5 + $0x20] sm:$0xff] %vm1604, %v1561
        %1608 = vst.msk [vmem:[#allocation5 + $0x30] sm:$0xff] %vm1604, %v1563
        %1609 = vst.msk [vmem:[#allocation5 + $0x40] sm:$0xff] %vm1604, %v1565
        %1610 = vst.msk [vmem:[#allocation5 + $0x50] sm:$0xff] %vm1604, %v1567
        %1611 = vst.msk [vmem:[#allocation5 + $0x60] sm:$0xff] %vm1604, %v1569
        %1612 = vst.msk [vmem:[#allocation5 + $0x70] sm:$0xff] %vm1604, %v1571
        %1613 = vst.msk [vmem:[#allocation5 + $0x80] sm:$0xff] %vm1604, %v1573
        %1614 = vst.msk [vmem:[#allocation5 + $0x90] sm:$0xff] %vm1604, %v1575
        %1615 = vst.msk [vmem:[#allocation5 + $0xa0] sm:$0xff] %vm1604, %v1577
        %1616 = vst.msk [vmem:[#allocation5 + $0xb0] sm:$0xff] %vm1604, %v1579
        %1617 = vst.msk [vmem:[#allocation5 + $0xc0] sm:$0xff] %vm1604, %v1581
        %1618 = vst.msk [vmem:[#allocation5 + $0xd0] sm:$0xff] %vm1604, %v1583
        %1619 = vst.msk [vmem:[#allocation5 + $0xe0] sm:$0xff] %vm1604, %v1585
        %1620 = vst.msk [vmem:[#allocation5 + $0xf0] sm:$0xff] %vm1604, %v1587
        %v1621 = vld [vmem:[#allocation4 + $0x2] sm:$0xff]
        %v1622 = vld [vmem:[#allocation4 + $0xa] sm:$0xff]
        %v1623 = vld [vmem:[#allocation4 + $0x1a] sm:$0xff]
        %v1624 = vld [vmem:[#allocation4 + $0x22] sm:$0xff]
        %v1625 = vld [vmem:[#allocation4 + $0x32] sm:$0xff]
        %v1626 = vld [vmem:[#allocation4 + $0x3a] sm:$0xff]
        %v1627 = vld [vmem:[#allocation4 + $0x4a] sm:$0xff]
        %v1628 = vld [vmem:[#allocation4 + $0x52] sm:$0xff]
        %v1629 = vld [vmem:[#allocation4 + $0x62] sm:$0xff]
        %v1630 = vld [vmem:[#allocation4 + $0x6a] sm:$0xff]
        %v1631 = vld [vmem:[#allocation4 + $0x7a] sm:$0xff]
        %v1632 = vld [vmem:[#allocation4 + $0x82] sm:$0xff]
        %v1633 = vld [vmem:[#allocation4 + $0x92] sm:$0xff]
        %v1634 = vld [vmem:[#allocation4 + $0x9a] sm:$0xff]
        %v1635 = vld [vmem:[#allocation4 + $0xaa] sm:$0xff]
        %v1636 = vld [vmem:[#allocation4 + $0xb2] sm:$0xff]
        %1653 = vrot.lane.b32.xlu0 %v1621, 40
        %v1654 = vpop.permute.xlu0 %1653
        %1655 = vrot.lane.b32.xlu0 %v1622, 40
        %v1656 = vpop.permute.xlu0 %1655
        %1657 = vrot.lane.b32.xlu0 %v1623, 40
        %v1658 = vpop.permute.xlu0 %1657
        %1659 = vrot.lane.b32.xlu0 %v1624, 40
        %v1660 = vpop.permute.xlu0 %1659
        %1661 = vrot.lane.b32.xlu0 %v1625, 40
        %v1662 = vpop.permute.xlu0 %1661
        %1663 = vrot.lane.b32.xlu0 %v1626, 40
        %v1664 = vpop.permute.xlu0 %1663
        %1665 = vrot.lane.b32.xlu0 %v1627, 40
        %v1666 = vpop.permute.xlu0 %1665
        %1667 = vrot.lane.b32.xlu0 %v1628, 40
        %v1668 = vpop.permute.xlu0 %1667
        %1669 = vrot.lane.b32.xlu0 %v1629, 40
        %v1670 = vpop.permute.xlu0 %1669
        %1671 = vrot.lane.b32.xlu0 %v1630, 40
        %v1672 = vpop.permute.xlu0 %1671
        %1673 = vrot.lane.b32.xlu0 %v1631, 40
        %v1674 = vpop.permute.xlu0 %1673
        %1675 = vrot.lane.b32.xlu0 %v1632, 40
        %v1676 = vpop.permute.xlu0 %1675
        %1677 = vrot.lane.b32.xlu0 %v1633, 40
        %v1678 = vpop.permute.xlu0 %1677
        %1679 = vrot.lane.b32.xlu0 %v1634, 40
        %v1680 = vpop.permute.xlu0 %1679
        %1681 = vrot.lane.b32.xlu0 %v1635, 40
        %v1682 = vpop.permute.xlu0 %1681
        %1683 = vrot.lane.b32.xlu0 %v1636, 40
        %v1684 = vpop.permute.xlu0 %1683
        %vm1701 = vcmask 490816
        %1702 = vst.msk [vmem:[#allocation5] sm:$0xff] %vm1701, %v1654
        %1703 = vst.msk [vmem:[#allocation5 + $0x10] sm:$0xff] %vm1701, %v1656
        %1704 = vst.msk [vmem:[#allocation5 + $0x20] sm:$0xff] %vm1701, %v1658
        %1705 = vst.msk [vmem:[#allocation5 + $0x30] sm:$0xff] %vm1701, %v1660
        %1706 = vst.msk [vmem:[#allocation5 + $0x40] sm:$0xff] %vm1701, %v1662
        %1707 = vst.msk [vmem:[#allocation5 + $0x50] sm:$0xff] %vm1701, %v1664
        %1708 = vst.msk [vmem:[#allocation5 + $0x60] sm:$0xff] %vm1701, %v1666
        %1709 = vst.msk [vmem:[#allocation5 + $0x70] sm:$0xff] %vm1701, %v1668
        %1710 = vst.msk [vmem:[#allocation5 + $0x80] sm:$0xff] %vm1701, %v1670
        %1711 = vst.msk [vmem:[#allocation5 + $0x90] sm:$0xff] %vm1701, %v1672
        %1712 = vst.msk [vmem:[#allocation5 + $0xa0] sm:$0xff] %vm1701, %v1674
        %1713 = vst.msk [vmem:[#allocation5 + $0xb0] sm:$0xff] %vm1701, %v1676
        %1714 = vst.msk [vmem:[#allocation5 + $0xc0] sm:$0xff] %vm1701, %v1678
        %1715 = vst.msk [vmem:[#allocation5 + $0xd0] sm:$0xff] %vm1701, %v1680
        %1716 = vst.msk [vmem:[#allocation5 + $0xe0] sm:$0xff] %vm1701, %v1682
        %1717 = vst.msk [vmem:[#allocation5 + $0xf0] sm:$0xff] %vm1701, %v1684
        %v1718 = vld [vmem:[%s1475] sm:$0xff]
        %v1719 = vld [vmem:[%s1475 + $0x8] sm:$0xff]
        %v1720 = vld [vmem:[%s1475 + $0x18] sm:$0xff]
        %v1721 = vld [vmem:[%s1475 + $0x20] sm:$0xff]
        %v1722 = vld [vmem:[%s1475 + $0x30] sm:$0xff]
        %v1723 = vld [vmem:[%s1475 + $0x38] sm:$0xff]
        %v1724 = vld [vmem:[%s1475 + $0x48] sm:$0xff]
        %v1725 = vld [vmem:[%s1475 + $0x50] sm:$0xff]
        %v1726 = vld [vmem:[%s1475 + $0x60] sm:$0xff]
        %v1727 = vld [vmem:[%s1475 + $0x68] sm:$0xff]
        %v1728 = vld [vmem:[%s1475 + $0x78] sm:$0xff]
        %v1729 = vld [vmem:[%s1475 + $0x80] sm:$0xff]
        %v1730 = vld [vmem:[%s1475 + $0x90] sm:$0xff]
        %v1731 = vld [vmem:[%s1475 + $0x98] sm:$0xff]
        %v1732 = vld [vmem:[%s1475 + $0xa8] sm:$0xff]
        %v1733 = vld [vmem:[%s1475 + $0xb0] sm:$0xff]
        %1750 = vrot.lane.b32.xlu0 %v1718, 60
        %v1751 = vpop.permute.xlu0 %1750
        %1752 = vrot.lane.b32.xlu0 %v1719, 60
        %v1753 = vpop.permute.xlu0 %1752
        %1754 = vrot.lane.b32.xlu0 %v1720, 60
        %v1755 = vpop.permute.xlu0 %1754
        %1756 = vrot.lane.b32.xlu0 %v1721, 60
        %v1757 = vpop.permute.xlu0 %1756
        %1758 = vrot.lane.b32.xlu0 %v1722, 60
        %v1759 = vpop.permute.xlu0 %1758
        %1760 = vrot.lane.b32.xlu0 %v1723, 60
        %v1761 = vpop.permute.xlu0 %1760
        %1762 = vrot.lane.b32.xlu0 %v1724, 60
        %v1763 = vpop.permute.xlu0 %1762
        %1764 = vrot.lane.b32.xlu0 %v1725, 60
        %v1765 = vpop.permute.xlu0 %1764
        %1766 = vrot.lane.b32.xlu0 %v1726, 60
        %v1767 = vpop.permute.xlu0 %1766
        %1768 = vrot.lane.b32.xlu0 %v1727, 60
        %v1769 = vpop.permute.xlu0 %1768
        %1770 = vrot.lane.b32.xlu0 %v1728, 60
        %v1771 = vpop.permute.xlu0 %1770
        %1772 = vrot.lane.b32.xlu0 %v1729, 60
        %v1773 = vpop.permute.xlu0 %1772
        %1774 = vrot.lane.b32.xlu0 %v1730, 60
        %v1775 = vpop.permute.xlu0 %1774
        %1776 = vrot.lane.b32.xlu0 %v1731, 60
        %v1777 = vpop.permute.xlu0 %1776
        %1778 = vrot.lane.b32.xlu0 %v1732, 60
        %v1779 = vpop.permute.xlu0 %1778
        %1780 = vrot.lane.b32.xlu0 %v1733, 60
        %v1781 = vpop.permute.xlu0 %1780
        %vm1798 = vcmask 654816
        %1799 = vst.msk [vmem:[#allocation5] sm:$0xff] %vm1798, %v1751
        %1800 = vst.msk [vmem:[#allocation5 + $0x10] sm:$0xff] %vm1798, %v1753
        %1801 = vst.msk [vmem:[#allocation5 + $0x20] sm:$0xff] %vm1798, %v1755
        %1802 = vst.msk [vmem:[#allocation5 + $0x30] sm:$0xff] %vm1798, %v1757
        %1803 = vst.msk [vmem:[#allocation5 + $0x40] sm:$0xff] %vm1798, %v1759
        %1804 = vst.msk [vmem:[#allocation5 + $0x50] sm:$0xff] %vm1798, %v1761
        %1805 = vst.msk [vmem:[#allocation5 + $0x60] sm:$0xff] %vm1798, %v1763
        %1806 = vst.msk [vmem:[#allocation5 + $0x70] sm:$0xff] %vm1798, %v1765
        %1807 = vst.msk [vmem:[#allocation5 + $0x80] sm:$0xff] %vm1798, %v1767
        %1808 = vst.msk [vmem:[#allocation5 + $0x90] sm:$0xff] %vm1798, %v1769
        %1809 = vst.msk [vmem:[#allocation5 + $0xa0] sm:$0xff] %vm1798, %v1771
        %1810 = vst.msk [vmem:[#allocation5 + $0xb0] sm:$0xff] %vm1798, %v1773
        %1811 = vst.msk [vmem:[#allocation5 + $0xc0] sm:$0xff] %vm1798, %v1775
        %1812 = vst.msk [vmem:[#allocation5 + $0xd0] sm:$0xff] %vm1798, %v1777
        %1813 = vst.msk [vmem:[#allocation5 + $0xe0] sm:$0xff] %vm1798, %v1779
        %1814 = vst.msk [vmem:[#allocation5 + $0xf0] sm:$0xff] %vm1798, %v1781
        %v1815 = vld [vmem:[%s1475 + $0x1] sm:$0xff]
        %v1816 = vld [vmem:[%s1475 + $0x9] sm:$0xff]
        %v1817 = vld [vmem:[%s1475 + $0x19] sm:$0xff]
        %v1818 = vld [vmem:[%s1475 + $0x21] sm:$0xff]
        %v1819 = vld [vmem:[%s1475 + $0x31] sm:$0xff]
        %v1820 = vld [vmem:[%s1475 + $0x39] sm:$0xff]
        %v1821 = vld [vmem:[%s1475 + $0x49] sm:$0xff]
        %v1822 = vld [vmem:[%s1475 + $0x51] sm:$0xff]
        %v1823 = vld [vmem:[%s1475 + $0x61] sm:$0xff]
        %v1824 = vld [vmem:[%s1475 + $0x69] sm:$0xff]
        %v1825 = vld [vmem:[%s1475 + $0x79] sm:$0xff]
        %v1826 = vld [vmem:[%s1475 + $0x81] sm:$0xff]
        %v1827 = vld [vmem:[%s1475 + $0x91] sm:$0xff]
        %v1828 = vld [vmem:[%s1475 + $0x99] sm:$0xff]
        %v1829 = vld [vmem:[%s1475 + $0xa9] sm:$0xff]
        %v1830 = vld [vmem:[%s1475 + $0xb1] sm:$0xff]
        %1847 = vrot.lane.b32.xlu0 %v1815, 80
        %v1848 = vpop.permute.xlu0 %1847
        %1849 = vrot.lane.b32.xlu0 %v1816, 80
        %v1850 = vpop.permute.xlu0 %1849
        %1851 = vrot.lane.b32.xlu0 %v1817, 80
        %v1852 = vpop.permute.xlu0 %1851
        %1853 = vrot.lane.b32.xlu0 %v1818, 80
        %v1854 = vpop.permute.xlu0 %1853
        %1855 = vrot.lane.b32.xlu0 %v1819, 80
        %v1856 = vpop.permute.xlu0 %1855
        %1857 = vrot.lane.b32.xlu0 %v1820, 80
        %v1858 = vpop.permute.xlu0 %1857
        %1859 = vrot.lane.b32.xlu0 %v1821, 80
        %v1860 = vpop.permute.xlu0 %1859
        %1861 = vrot.lane.b32.xlu0 %v1822, 80
        %v1862 = vpop.permute.xlu0 %1861
        %1863 = vrot.lane.b32.xlu0 %v1823, 80
        %v1864 = vpop.permute.xlu0 %1863
        %1865 = vrot.lane.b32.xlu0 %v1824, 80
        %v1866 = vpop.permute.xlu0 %1865
        %1867 = vrot.lane.b32.xlu0 %v1825, 80
        %v1868 = vpop.permute.xlu0 %1867
        %1869 = vrot.lane.b32.xlu0 %v1826, 80
        %v1870 = vpop.permute.xlu0 %1869
        %1871 = vrot.lane.b32.xlu0 %v1827, 80
        %v1872 = vpop.permute.xlu0 %1871
        %1873 = vrot.lane.b32.xlu0 %v1828, 80
        %v1874 = vpop.permute.xlu0 %1873
        %1875 = vrot.lane.b32.xlu0 %v1829, 80
        %v1876 = vpop.permute.xlu0 %1875
        %1877 = vrot.lane.b32.xlu0 %v1830, 80
        %v1878 = vpop.permute.xlu0 %1877
        %vm1895 = vcmask 818816
        %1896 = vst.msk [vmem:[#allocation5] sm:$0xff] %vm1895, %v1848
        %1897 = vst.msk [vmem:[#allocation5 + $0x10] sm:$0xff] %vm1895, %v1850
        %1898 = vst.msk [vmem:[#allocation5 + $0x20] sm:$0xff] %vm1895, %v1852
        %1899 = vst.msk [vmem:[#allocation5 + $0x30] sm:$0xff] %vm1895, %v1854
        %1900 = vst.msk [vmem:[#allocation5 + $0x40] sm:$0xff] %vm1895, %v1856
        %1901 = vst.msk [vmem:[#allocation5 + $0x50] sm:$0xff] %vm1895, %v1858
        %1902 = vst.msk [vmem:[#allocation5 + $0x60] sm:$0xff] %vm1895, %v1860
        %1903 = vst.msk [vmem:[#allocation5 + $0x70] sm:$0xff] %vm1895, %v1862
        %1904 = vst.msk [vmem:[#allocation5 + $0x80] sm:$0xff] %vm1895, %v1864
        %1905 = vst.msk [vmem:[#allocation5 + $0x90] sm:$0xff] %vm1895, %v1866
        %1906 = vst.msk [vmem:[#allocation5 + $0xa0] sm:$0xff] %vm1895, %v1868
        %1907 = vst.msk [vmem:[#allocation5 + $0xb0] sm:$0xff] %vm1895, %v1870
        %1908 = vst.msk [vmem:[#allocation5 + $0xc0] sm:$0xff] %vm1895, %v1872
        %1909 = vst.msk [vmem:[#allocation5 + $0xd0] sm:$0xff] %vm1895, %v1874
        %1910 = vst.msk [vmem:[#allocation5 + $0xe0] sm:$0xff] %vm1895, %v1876
        %1911 = vst.msk [vmem:[#allocation5 + $0xf0] sm:$0xff] %vm1895, %v1878
        %v1912 = vld [vmem:[%s1475 + $0x2] sm:$0xff]
        %v1913 = vld [vmem:[%s1475 + $0xa] sm:$0xff]
        %v1914 = vld [vmem:[%s1475 + $0x1a] sm:$0xff]
        %v1915 = vld [vmem:[%s1475 + $0x22] sm:$0xff]
        %v1916 = vld [vmem:[%s1475 + $0x32] sm:$0xff]
        %v1917 = vld [vmem:[%s1475 + $0x3a] sm:$0xff]
        %v1918 = vld [vmem:[%s1475 + $0x4a] sm:$0xff]
        %v1919 = vld [vmem:[%s1475 + $0x52] sm:$0xff]
        %v1920 = vld [vmem:[%s1475 + $0x62] sm:$0xff]
        %v1921 = vld [vmem:[%s1475 + $0x6a] sm:$0xff]
        %v1922 = vld [vmem:[%s1475 + $0x7a] sm:$0xff]
        %v1923 = vld [vmem:[%s1475 + $0x82] sm:$0xff]
        %v1924 = vld [vmem:[%s1475 + $0x92] sm:$0xff]
        %v1925 = vld [vmem:[%s1475 + $0x9a] sm:$0xff]
        %v1926 = vld [vmem:[%s1475 + $0xaa] sm:$0xff]
        %v1927 = vld [vmem:[%s1475 + $0xb2] sm:$0xff]
        %1944 = vrot.lane.b32.xlu0 %v1912, 100
        %v1945 = vpop.permute.xlu0 %1944
        %1946 = vrot.lane.b32.xlu0 %v1913, 100
        %v1947 = vpop.permute.xlu0 %1946
        %1948 = vrot.lane.b32.xlu0 %v1914, 100
        %v1949 = vpop.permute.xlu0 %1948
        %1950 = vrot.lane.b32.xlu0 %v1915, 100
        %v1951 = vpop.permute.xlu0 %1950
        %1952 = vrot.lane.b32.xlu0 %v1916, 100
        %v1953 = vpop.permute.xlu0 %1952
        %1954 = vrot.lane.b32.xlu0 %v1917, 100
        %v1955 = vpop.permute.xlu0 %1954
        %1956 = vrot.lane.b32.xlu0 %v1918, 100
        %v1957 = vpop.permute.xlu0 %1956
        %1958 = vrot.lane.b32.xlu0 %v1919, 100
        %v1959 = vpop.permute.xlu0 %1958
        %1960 = vrot.lane.b32.xlu0 %v1920, 100
        %v1961 = vpop.permute.xlu0 %1960
        %1962 = vrot.lane.b32.xlu0 %v1921, 100
        %v1963 = vpop.permute.xlu0 %1962
        %1964 = vrot.lane.b32.xlu0 %v1922, 100
        %v1965 = vpop.permute.xlu0 %1964
        %1966 = vrot.lane.b32.xlu0 %v1923, 100
        %v1967 = vpop.permute.xlu0 %1966
        %1968 = vrot.lane.b32.xlu0 %v1924, 100
        %v1969 = vpop.permute.xlu0 %1968
        %1970 = vrot.lane.b32.xlu0 %v1925, 100
        %v1971 = vpop.permute.xlu0 %1970
        %1972 = vrot.lane.b32.xlu0 %v1926, 100
        %v1973 = vpop.permute.xlu0 %1972
        %1974 = vrot.lane.b32.xlu0 %v1927, 100
        %v1975 = vpop.permute.xlu0 %1974
        %vm1992 = vcmask 982816
        %1993 = vst.msk [vmem:[#allocation5] sm:$0xff] %vm1992, %v1945
        %1994 = vst.msk [vmem:[#allocation5 + $0x10] sm:$0xff] %vm1992, %v1947
        %1995 = vst.msk [vmem:[#allocation5 + $0x20] sm:$0xff] %vm1992, %v1949
        %1996 = vst.msk [vmem:[#allocation5 + $0x30] sm:$0xff] %vm1992, %v1951
        %1997 = vst.msk [vmem:[#allocation5 + $0x40] sm:$0xff] %vm1992, %v1953
        %1998 = vst.msk [vmem:[#allocation5 + $0x50] sm:$0xff] %vm1992, %v1955
        %1999 = vst.msk [vmem:[#allocation5 + $0x60] sm:$0xff] %vm1992, %v1957
        %2000 = vst.msk [vmem:[#allocation5 + $0x70] sm:$0xff] %vm1992, %v1959
        %2001 = vst.msk [vmem:[#allocation5 + $0x80] sm:$0xff] %vm1992, %v1961
        %2002 = vst.msk [vmem:[#allocation5 + $0x90] sm:$0xff] %vm1992, %v1963
        %2003 = vst.msk [vmem:[#allocation5 + $0xa0] sm:$0xff] %vm1992, %v1965
        %2004 = vst.msk [vmem:[#allocation5 + $0xb0] sm:$0xff] %vm1992, %v1967
        %2005 = vst.msk [vmem:[#allocation5 + $0xc0] sm:$0xff] %vm1992, %v1969
        %2006 = vst.msk [vmem:[#allocation5 + $0xd0] sm:$0xff] %vm1992, %v1971
        %2007 = vst.msk [vmem:[#allocation5 + $0xe0] sm:$0xff] %vm1992, %v1973
        %2008 = vst.msk [vmem:[#allocation5 + $0xf0] sm:$0xff] %vm1992, %v1975
        %s2009 = scalar_lea.vmem [#allocation4], 48
        %v2010 = vld [vmem:[%s2009] sm:$0xff]
        %v2011 = vld [vmem:[%s2009 + $0x8] sm:$0xff]
        %v2012 = vld [vmem:[%s2009 + $0x18] sm:$0xff]
        %v2013 = vld [vmem:[%s2009 + $0x20] sm:$0xff]
        %v2014 = vld [vmem:[%s2009 + $0x30] sm:$0xff]
        %v2015 = vld [vmem:[%s2009 + $0x38] sm:$0xff]
        %v2016 = vld [vmem:[%s2009 + $0x48] sm:$0xff]
        %v2017 = vld [vmem:[%s2009 + $0x50] sm:$0xff]
        %v2018 = vld [vmem:[%s2009 + $0x60] sm:$0xff]
        %v2019 = vld [vmem:[%s2009 + $0x68] sm:$0xff]
        %v2020 = vld [vmem:[%s2009 + $0x78] sm:$0xff]
        %v2021 = vld [vmem:[%s2009 + $0x80] sm:$0xff]
        %v2022 = vld [vmem:[%s2009 + $0x90] sm:$0xff]
        %v2023 = vld [vmem:[%s2009 + $0x98] sm:$0xff]
        %v2024 = vld [vmem:[%s2009 + $0xa8] sm:$0xff]
        %v2025 = vld [vmem:[%s2009 + $0xb0] sm:$0xff]
        %2042 = vrot.lane.b32.xlu0 %v2010, 120
        %v2043 = vpop.permute.xlu0 %2042
        %2044 = vrot.lane.b32.xlu0 %v2011, 120
        %v2045 = vpop.permute.xlu0 %2044
        %2046 = vrot.lane.b32.xlu0 %v2012, 120
        %v2047 = vpop.permute.xlu0 %2046
        %2048 = vrot.lane.b32.xlu0 %v2013, 120
        %v2049 = vpop.permute.xlu0 %2048
        %2050 = vrot.lane.b32.xlu0 %v2014, 120
        %v2051 = vpop.permute.xlu0 %2050
        %2052 = vrot.lane.b32.xlu0 %v2015, 120
        %v2053 = vpop.permute.xlu0 %2052
        %2054 = vrot.lane.b32.xlu0 %v2016, 120
        %v2055 = vpop.permute.xlu0 %2054
        %2056 = vrot.lane.b32.xlu0 %v2017, 120
        %v2057 = vpop.permute.xlu0 %2056
        %2058 = vrot.lane.b32.xlu0 %v2018, 120
        %v2059 = vpop.permute.xlu0 %2058
        %2060 = vrot.lane.b32.xlu0 %v2019, 120
        %v2061 = vpop.permute.xlu0 %2060
        %2062 = vrot.lane.b32.xlu0 %v2020, 120
        %v2063 = vpop.permute.xlu0 %2062
        %2064 = vrot.lane.b32.xlu0 %v2021, 120
        %v2065 = vpop.permute.xlu0 %2064
        %2066 = vrot.lane.b32.xlu0 %v2022, 120
        %v2067 = vpop.permute.xlu0 %2066
        %2068 = vrot.lane.b32.xlu0 %v2023, 120
        %v2069 = vpop.permute.xlu0 %2068
        %2070 = vrot.lane.b32.xlu0 %v2024, 120
        %v2071 = vpop.permute.xlu0 %2070
        %2072 = vrot.lane.b32.xlu0 %v2025, 120
        %v2073 = vpop.permute.xlu0 %2072
        %vm2090 = vcmask 1048512
        %2091 = vst.msk [vmem:[#allocation5] sm:$0xff] %vm2090, %v2043
        %vm2092 = vcmask 97280
        %2093 = vst.msk [vmem:[#allocation5 + $0x8] sm:$0xff] %vm2092, %v2043
        %2094 = vst.msk [vmem:[#allocation5 + $0x10] sm:$0xff] %vm2090, %v2045
        %2095 = vst.msk [vmem:[#allocation5 + $0x18] sm:$0xff] %vm2092, %v2045
        %2096 = vst.msk [vmem:[#allocation5 + $0x20] sm:$0xff] %vm2090, %v2047
        %2097 = vst.msk [vmem:[#allocation5 + $0x28] sm:$0xff] %vm2092, %v2047
        %2098 = vst.msk [vmem:[#allocation5 + $0x30] sm:$0xff] %vm2090, %v2049
        %2099 = vst.msk [vmem:[#allocation5 + $0x38] sm:$0xff] %vm2092, %v2049
        %2100 = vst.msk [vmem:[#allocation5 + $0x40] sm:$0xff] %vm2090, %v2051
        %2101 = vst.msk [vmem:[#allocation5 + $0x48] sm:$0xff] %vm2092, %v2051
        %2102 = vst.msk [vmem:[#allocation5 + $0x50] sm:$0xff] %vm2090, %v2053
        %2103 = vst.msk [vmem:[#allocation5 + $0x58] sm:$0xff] %vm2092, %v2053
        %2104 = vst.msk [vmem:[#allocation5 + $0x60] sm:$0xff] %vm2090, %v2055
        %2105 = vst.msk [vmem:[#allocation5 + $0x68] sm:$0xff] %vm2092, %v2055
        %2106 = vst.msk [vmem:[#allocation5 + $0x70] sm:$0xff] %vm2090, %v2057
        %2107 = vst.msk [vmem:[#allocation5 + $0x78] sm:$0xff] %vm2092, %v2057
        %2108 = vst.msk [vmem:[#allocation5 + $0x80] sm:$0xff] %vm2090, %v2059
        %2109 = vst.msk [vmem:[#allocation5 + $0x88] sm:$0xff] %vm2092, %v2059
        %2110 = vst.msk [vmem:[#allocation5 + $0x90] sm:$0xff] %vm2090, %v2061
        %2111 = vst.msk [vmem:[#allocation5 + $0x98] sm:$0xff] %vm2092, %v2061
        %2112 = vst.msk [vmem:[#allocation5 + $0xa0] sm:$0xff] %vm2090, %v2063
        %2113 = vst.msk [vmem:[#allocation5 + $0xa8] sm:$0xff] %vm2092, %v2063
        %2114 = vst.msk [vmem:[#allocation5 + $0xb0] sm:$0xff] %vm2090, %v2065
        %2115 = vst.msk [vmem:[#allocation5 + $0xb8] sm:$0xff] %vm2092, %v2065
        %2116 = vst.msk [vmem:[#allocation5 + $0xc0] sm:$0xff] %vm2090, %v2067
        %2117 = vst.msk [vmem:[#allocation5 + $0xc8] sm:$0xff] %vm2092, %v2067
        %2118 = vst.msk [vmem:[#allocation5 + $0xd0] sm:$0xff] %vm2090, %v2069
        %2119 = vst.msk [vmem:[#allocation5 + $0xd8] sm:$0xff] %vm2092, %v2069
        %2120 = vst.msk [vmem:[#allocation5 + $0xe0] sm:$0xff] %vm2090, %v2071
        %2121 = vst.msk [vmem:[#allocation5 + $0xe8] sm:$0xff] %vm2092, %v2071
        %2122 = vst.msk [vmem:[#allocation5 + $0xf0] sm:$0xff] %vm2090, %v2073
        %2123 = vst.msk [vmem:[#allocation5 + $0xf8] sm:$0xff] %vm2092, %v2073
        %v2124 = vld [vmem:[%s2009 + $0x1] sm:$0xff]
        %v2125 = vld [vmem:[%s2009 + $0x9] sm:$0xff]
        %v2126 = vld [vmem:[%s2009 + $0x19] sm:$0xff]
        %v2127 = vld [vmem:[%s2009 + $0x21] sm:$0xff]
        %v2128 = vld [vmem:[%s2009 + $0x31] sm:$0xff]
        %v2129 = vld [vmem:[%s2009 + $0x39] sm:$0xff]
        %v2130 = vld [vmem:[%s2009 + $0x49] sm:$0xff]
        %v2131 = vld [vmem:[%s2009 + $0x51] sm:$0xff]
        %v2132 = vld [vmem:[%s2009 + $0x61] sm:$0xff]
        %v2133 = vld [vmem:[%s2009 + $0x69] sm:$0xff]
        %v2134 = vld [vmem:[%s2009 + $0x79] sm:$0xff]
        %v2135 = vld [vmem:[%s2009 + $0x81] sm:$0xff]
        %v2136 = vld [vmem:[%s2009 + $0x91] sm:$0xff]
        %v2137 = vld [vmem:[%s2009 + $0x99] sm:$0xff]
        %v2138 = vld [vmem:[%s2009 + $0xa9] sm:$0xff]
        %v2139 = vld [vmem:[%s2009 + $0xb1] sm:$0xff]
        %2156 = vrot.lane.b32.xlu0 %v2124, 12
        %v2157 = vpop.permute.xlu0 %2156
        %2158 = vrot.lane.b32.xlu0 %v2125, 12
        %v2159 = vpop.permute.xlu0 %2158
        %2160 = vrot.lane.b32.xlu0 %v2126, 12
        %v2161 = vpop.permute.xlu0 %2160
        %2162 = vrot.lane.b32.xlu0 %v2127, 12
        %v2163 = vpop.permute.xlu0 %2162
        %2164 = vrot.lane.b32.xlu0 %v2128, 12
        %v2165 = vpop.permute.xlu0 %2164
        %2166 = vrot.lane.b32.xlu0 %v2129, 12
        %v2167 = vpop.permute.xlu0 %2166
        %2168 = vrot.lane.b32.xlu0 %v2130, 12
        %v2169 = vpop.permute.xlu0 %2168
        %2170 = vrot.lane.b32.xlu0 %v2131, 12
        %v2171 = vpop.permute.xlu0 %2170
        %2172 = vrot.lane.b32.xlu0 %v2132, 12
        %v2173 = vpop.permute.xlu0 %2172
        %2174 = vrot.lane.b32.xlu0 %v2133, 12
        %v2175 = vpop.permute.xlu0 %2174
        %2176 = vrot.lane.b32.xlu0 %v2134, 12
        %v2177 = vpop.permute.xlu0 %2176
        %2178 = vrot.lane.b32.xlu0 %v2135, 12
        %v2179 = vpop.permute.xlu0 %2178
        %2180 = vrot.lane.b32.xlu0 %v2136, 12
        %v2181 = vpop.permute.xlu0 %2180
        %2182 = vrot.lane.b32.xlu0 %v2137, 12
        %v2183 = vpop.permute.xlu0 %2182
        %2184 = vrot.lane.b32.xlu0 %v2138, 12
        %v2185 = vpop.permute.xlu0 %2184
        %2186 = vrot.lane.b32.xlu0 %v2139, 12
        %v2187 = vpop.permute.xlu0 %2186
        %vm2204 = vcmask 261216
        %2205 = vst.msk [vmem:[#allocation5 + $0x8] sm:$0xff] %vm2204, %v2157
        %2206 = vst.msk [vmem:[#allocation5 + $0x18] sm:$0xff] %vm2204, %v2159
        %2207 = vst.msk [vmem:[#allocation5 + $0x28] sm:$0xff] %vm2204, %v2161
        %2208 = vst.msk [vmem:[#allocation5 + $0x38] sm:$0xff] %vm2204, %v2163
        %2209 = vst.msk [vmem:[#allocation5 + $0x48] sm:$0xff] %vm2204, %v2165
        %2210 = vst.msk [vmem:[#allocation5 + $0x58] sm:$0xff] %vm2204, %v2167
        %2211 = vst.msk [vmem:[#allocation5 + $0x68] sm:$0xff] %vm2204, %v2169
        %2212 = vst.msk [vmem:[#allocation5 + $0x78] sm:$0xff] %vm2204, %v2171
        %2213 = vst.msk [vmem:[#allocation5 + $0x88] sm:$0xff] %vm2204, %v2173
        %2214 = vst.msk [vmem:[#allocation5 + $0x98] sm:$0xff] %vm2204, %v2175
        %2215 = vst.msk [vmem:[#allocation5 + $0xa8] sm:$0xff] %vm2204, %v2177
        %2216 = vst.msk [vmem:[#allocation5 + $0xb8] sm:$0xff] %vm2204, %v2179
        %2217 = vst.msk [vmem:[#allocation5 + $0xc8] sm:$0xff] %vm2204, %v2181
        %2218 = vst.msk [vmem:[#allocation5 + $0xd8] sm:$0xff] %vm2204, %v2183
        %2219 = vst.msk [vmem:[#allocation5 + $0xe8] sm:$0xff] %vm2204, %v2185
        %2220 = vst.msk [vmem:[#allocation5 + $0xf8] sm:$0xff] %vm2204, %v2187
        %v2221 = vld [vmem:[%s2009 + $0x2] sm:$0xff]
        %v2222 = vld [vmem:[%s2009 + $0xa] sm:$0xff]
        %v2223 = vld [vmem:[%s2009 + $0x1a] sm:$0xff]
        %v2224 = vld [vmem:[%s2009 + $0x22] sm:$0xff]
        %v2225 = vld [vmem:[%s2009 + $0x32] sm:$0xff]
        %v2226 = vld [vmem:[%s2009 + $0x3a] sm:$0xff]
        %v2227 = vld [vmem:[%s2009 + $0x4a] sm:$0xff]
        %v2228 = vld [vmem:[%s2009 + $0x52] sm:$0xff]
        %v2229 = vld [vmem:[%s2009 + $0x62] sm:$0xff]
        %v2230 = vld [vmem:[%s2009 + $0x6a] sm:$0xff]
        %v2231 = vld [vmem:[%s2009 + $0x7a] sm:$0xff]
        %v2232 = vld [vmem:[%s2009 + $0x82] sm:$0xff]
        %v2233 = vld [vmem:[%s2009 + $0x92] sm:$0xff]
        %v2234 = vld [vmem:[%s2009 + $0x9a] sm:$0xff]
        %v2235 = vld [vmem:[%s2009 + $0xaa] sm:$0xff]
        %v2236 = vld [vmem:[%s2009 + $0xb2] sm:$0xff]
        %2253 = vrot.lane.b32.xlu0 %v2221, 32
        %v2254 = vpop.permute.xlu0 %2253
        %2255 = vrot.lane.b32.xlu0 %v2222, 32
        %v2256 = vpop.permute.xlu0 %2255
        %2257 = vrot.lane.b32.xlu0 %v2223, 32
        %v2258 = vpop.permute.xlu0 %2257
        %2259 = vrot.lane.b32.xlu0 %v2224, 32
        %v2260 = vpop.permute.xlu0 %2259
        %2261 = vrot.lane.b32.xlu0 %v2225, 32
        %v2262 = vpop.permute.xlu0 %2261
        %2263 = vrot.lane.b32.xlu0 %v2226, 32
        %v2264 = vpop.permute.xlu0 %2263
        %2265 = vrot.lane.b32.xlu0 %v2227, 32
        %v2266 = vpop.permute.xlu0 %2265
        %2267 = vrot.lane.b32.xlu0 %v2228, 32
        %v2268 = vpop.permute.xlu0 %2267
        %2269 = vrot.lane.b32.xlu0 %v2229, 32
        %v2270 = vpop.permute.xlu0 %2269
        %2271 = vrot.lane.b32.xlu0 %v2230, 32
        %v2272 = vpop.permute.xlu0 %2271
        %2273 = vrot.lane.b32.xlu0 %v2231, 32
        %v2274 = vpop.permute.xlu0 %2273
        %2275 = vrot.lane.b32.xlu0 %v2232, 32
        %v2276 = vpop.permute.xlu0 %2275
        %2277 = vrot.lane.b32.xlu0 %v2233, 32
        %v2278 = vpop.permute.xlu0 %2277
        %2279 = vrot.lane.b32.xlu0 %v2234, 32
        %v2280 = vpop.permute.xlu0 %2279
        %2281 = vrot.lane.b32.xlu0 %v2235, 32
        %v2282 = vpop.permute.xlu0 %2281
        %2283 = vrot.lane.b32.xlu0 %v2236, 32
        %v2284 = vpop.permute.xlu0 %2283
        %vm2301 = vcmask 425216
        %2302 = vst.msk [vmem:[#allocation5 + $0x8] sm:$0xff] %vm2301, %v2254
        %2303 = vst.msk [vmem:[#allocation5 + $0x18] sm:$0xff] %vm2301, %v2256
        %2304 = vst.msk [vmem:[#allocation5 + $0x28] sm:$0xff] %vm2301, %v2258
        %2305 = vst.msk [vmem:[#allocation5 + $0x38] sm:$0xff] %vm2301, %v2260
        %2306 = vst.msk [vmem:[#allocation5 + $0x48] sm:$0xff] %vm2301, %v2262
        %2307 = vst.msk [vmem:[#allocation5 + $0x58] sm:$0xff] %vm2301, %v2264
        %2308 = vst.msk [vmem:[#allocation5 + $0x68] sm:$0xff] %vm2301, %v2266
        %2309 = vst.msk [vmem:[#allocation5 + $0x78] sm:$0xff] %vm2301, %v2268
        %2310 = vst.msk [vmem:[#allocation5 + $0x88] sm:$0xff] %vm2301, %v2270
        %2311 = vst.msk [vmem:[#allocation5 + $0x98] sm:$0xff] %vm2301, %v2272
        %2312 = vst.msk [vmem:[#allocation5 + $0xa8] sm:$0xff] %vm2301, %v2274
        %2313 = vst.msk [vmem:[#allocation5 + $0xb8] sm:$0xff] %vm2301, %v2276
        %2314 = vst.msk [vmem:[#allocation5 + $0xc8] sm:$0xff] %vm2301, %v2278
        %2315 = vst.msk [vmem:[#allocation5 + $0xd8] sm:$0xff] %vm2301, %v2280
        %2316 = vst.msk [vmem:[#allocation5 + $0xe8] sm:$0xff] %vm2301, %v2282
        %2317 = vst.msk [vmem:[#allocation5 + $0xf8] sm:$0xff] %vm2301, %v2284
        %v2318 = vld [vmem:[#allocation5] sm:$0xff]
        %v2319 = vld [vmem:[#allocation5 + $0x8] sm:$0xff]
        %v2320 = vld [vmem:[#allocation5 + $0x10] sm:$0xff]
        %v2321 = vld [vmem:[#allocation5 + $0x18] sm:$0xff]
        %v2322 = vld [vmem:[#allocation5 + $0x20] sm:$0xff]
        %v2323 = vld [vmem:[#allocation5 + $0x28] sm:$0xff]
        %v2324 = vld [vmem:[#allocation5 + $0x30] sm:$0xff]
        %v2325 = vld [vmem:[#allocation5 + $0x38] sm:$0xff]
        %v2326 = vld [vmem:[#allocation5 + $0x40] sm:$0xff]
        %v2327 = vld [vmem:[#allocation5 + $0x48] sm:$0xff]
        %v2328 = vld [vmem:[#allocation5 + $0x50] sm:$0xff]
        %v2329 = vld [vmem:[#allocation5 + $0x58] sm:$0xff]
        %v2330 = vld [vmem:[#allocation5 + $0x60] sm:$0xff]
        %v2331 = vld [vmem:[#allocation5 + $0x68] sm:$0xff]
        %v2332 = vld [vmem:[#allocation5 + $0x70] sm:$0xff]
        %v2333 = vld [vmem:[#allocation5 + $0x78] sm:$0xff]
        %v2334 = vld [vmem:[#allocation5 + $0x80] sm:$0xff]
        %v2335 = vld [vmem:[#allocation5 + $0x88] sm:$0xff]
        %v2336 = vld [vmem:[#allocation5 + $0x90] sm:$0xff]
        %v2337 = vld [vmem:[#allocation5 + $0x98] sm:$0xff]
        %v2338 = vld [vmem:[#allocation5 + $0xa0] sm:$0xff]
        %v2339 = vld [vmem:[#allocation5 + $0xa8] sm:$0xff]
        %v2340 = vld [vmem:[#allocation5 + $0xb0] sm:$0xff]
        %v2341 = vld [vmem:[#allocation5 + $0xb8] sm:$0xff]
        %v2342 = vld [vmem:[#allocation5 + $0xc0] sm:$0xff]
        %v2343 = vld [vmem:[#allocation5 + $0xc8] sm:$0xff]
        %v2344 = vld [vmem:[#allocation5 + $0xd0] sm:$0xff]
        %v2345 = vld [vmem:[#allocation5 + $0xd8] sm:$0xff]
        %v2346 = vld [vmem:[#allocation5 + $0xe0] sm:$0xff]
        %v2347 = vld [vmem:[#allocation5 + $0xe8] sm:$0xff]
        %v2348 = vld [vmem:[#allocation5 + $0xf0] sm:$0xff]
        %v2349 = vld [vmem:[#allocation5 + $0xf8] sm:$0xff]
        %v2350 = vpack.c.bf16 %v2320, %v2318
        %v2351 = vpack.c.bf16 %v2321, %v2319
        %v2352 = vpack.c.bf16 %v2324, %v2322
        %v2353 = vpack.c.bf16 %v2325, %v2323
        %v2354 = vpack.c.bf16 %v2328, %v2326
        %v2355 = vpack.c.bf16 %v2329, %v2327
        %v2356 = vpack.c.bf16 %v2332, %v2330
        %v2357 = vpack.c.bf16 %v2333, %v2331
        %v2358 = vpack.c.bf16 %v2336, %v2334
        %v2359 = vpack.c.bf16 %v2337, %v2335
        %v2360 = vpack.c.bf16 %v2340, %v2338
        %v2361 = vpack.c.bf16 %v2341, %v2339
        %v2362 = vpack.c.bf16 %v2344, %v2342
        %v2363 = vpack.c.bf16 %v2345, %v2343
        %v2364 = vpack.c.bf16 %v2348, %v2346
        %v2365 = vpack.c.bf16 %v2349, %v2347
        %v2366 = vld [vmem:[%s3] sm:$0xf]
        %v2367 = vld [vmem:[%s3 + $0x4] sm:$0xf]
        %v2368 = vld [vmem:[%s3 + $0x8] sm:$0xf]
        %v2369 = vld [vmem:[%s3 + $0xc] sm:$0xf]
        %v2370 = vld [vmem:[%s3 + $0x10] sm:$0xf]
        %v2371 = vld [vmem:[%s3 + $0x14] sm:$0xf]
        %v2372 = vld [vmem:[%s3 + $0x18] sm:$0xf]
        %v2373 = vld [vmem:[%s3 + $0x1c] sm:$0xf]
        %v2374 = vld [vmem:[%s3 + $0x20] sm:$0xf]
        %v2375 = vld [vmem:[%s3 + $0x24] sm:$0xf]
        %v2376 = vld [vmem:[%s3 + $0x28] sm:$0xf]
        %v2377 = vld [vmem:[%s3 + $0x2c] sm:$0xf]
        %v2378 = vld [vmem:[%s3 + $0x30] sm:$0xf]
        %v2379 = vld [vmem:[%s3 + $0x34] sm:$0xf]
        %v2380 = vld [vmem:[%s3 + $0x38] sm:$0xf]
        %v2381 = vld [vmem:[%s3 + $0x3c] sm:$0xf]
        %v2382 = vld [vmem:[%s3 + $0x40] sm:$0xf]
        %v2383 = vld [vmem:[%s3 + $0x44] sm:$0xf]
        %v2384 = vld [vmem:[%s3 + $0x48] sm:$0xf]
        %v2385 = vld [vmem:[%s3 + $0x4c] sm:$0xf]
        %v2386 = vld [vmem:[%s3 + $0x50] sm:$0xf]
        %v2387 = vld [vmem:[%s3 + $0x54] sm:$0xf]
        %v2388 = vld [vmem:[%s3 + $0x58] sm:$0x3]
        %v2389 = vld [vmem:[%s4] sm:$0x1]
        %v2391 = vlaneseq
        %v2392 = vshrl.u32 %v2391, 7
        %v2393 = vsub.s32 0, %v2392
        %v2394 = vrot.slane %v2389, %v2393
        %v2419 = vunpack.c.l.b16 %v2366
        %v2420 = vunpack.c.l.b16 %v2367
        %v2421 = vunpack.c.l.b16 %v2368
        %v2422 = vunpack.c.l.b16 %v2369
        %v2423 = vunpack.c.l.b16 %v2370
        %v2424 = vunpack.c.l.b16 %v2371
        %v2425 = vunpack.c.l.b16 %v2372
        %v2426 = vunpack.c.l.b16 %v2373
        %v2427 = vunpack.c.l.b16 %v2374
        %v2428 = vunpack.c.l.b16 %v2375
        %v2429 = vunpack.c.l.b16 %v2376
        %v2430 = vunpack.c.l.b16 %v2377
        %v2431 = vunpack.c.l.b16 %v2378
        %v2432 = vunpack.c.l.b16 %v2379
        %v2433 = vunpack.c.l.b16 %v2380
        %v2434 = vunpack.c.l.b16 %v2381
        %v2435 = vunpack.c.l.b16 %v2382
        %v2436 = vunpack.c.l.b16 %v2383
        %v2437 = vunpack.c.l.b16 %v2384
        %v2438 = vunpack.c.l.b16 %v2385
        %v2439 = vunpack.c.l.b16 %v2386
        %v2440 = vunpack.c.l.b16 %v2387
        %v2441 = vunpack.c.l.b16 %v2388
        %v2442 = vpack.c.b16 %v2420, %v2419
        %v2443 = vpack.c.b16 %v2422, %v2421
        %v2444 = vpack.c.b16 %v2424, %v2423
        %v2445 = vpack.c.b16 %v2426, %v2425
        %v2446 = vpack.c.b16 %v2428, %v2427
        %v2447 = vpack.c.b16 %v2430, %v2429
        %v2448 = vpack.c.b16 %v2432, %v2431
        %v2449 = vpack.c.b16 %v2434, %v2433
        %v2450 = vpack.c.b16 %v2436, %v2435
        %v2451 = vpack.c.b16 %v2438, %v2437
        %v2452 = vpack.c.b16 %v2440, %v2439
        %v2453 = vpack.c.b16 %v2441, %v2441
        %vm2465 = vcmask 424960
        %v2467 = vsel %vm2465, %v2351, 0
        %v2470 = vsel %vm2465, %v2353, 0
        %v2473 = vsel %vm2465, %v2355, 0
        %v2476 = vsel %vm2465, %v2357, 0
        %v2479 = vsel %vm2465, %v2359, 0
        %v2482 = vsel %vm2465, %v2361, 0
        %v2485 = vsel %vm2465, %v2363, 0
        %v2488 = vsel %vm2465, %v2365, 0
        %vm2490 = vcmask 1041408
        %v2492 = vsel %vm2490, %v2453, 0
        %2494 = vmatprep.subr.bf16.mxu0 0
        %2495 = vmatpush1.bf16.msra.mxu0 %v2449
        %2496 = vmatprep.subr.bf16.mxu0 0
        %2497 = vmatpush1.bf16.msra.mxu0 %v2448
        %2498 = vmatprep.subr.bf16.mxu0 0
        %2499 = vmatpush1.bf16.msra.mxu0 %v2447
        %2500 = vmatprep.subr.bf16.mxu0 0
        %2501 = vmatpush1.bf16.msra.mxu0 %v2446
        %2502 = vmatprep.subr.bf16.mxu0 0
        %2503 = vmatpush1.bf16.msra.mxu0 %v2445
        %2504 = vmatprep.subr.bf16.mxu0 0
        %2505 = vmatpush1.bf16.msra.mxu0 %v2444
        %2506 = vmatprep.subr.bf16.mxu0 0
        %2507 = vmatpush1.bf16.msra.mxu0 %v2443
        %2508 = vmatprep.subr.bf16.mxu0 0
        %2509 = vmatpush1.bf16.msra.mxu0 %v2442
        %2510 = vmatprep.subr.bf16.mxu0 0
        %2511 = vmatpush2.bf16.msra.mxu0 0
        %2512 = vmatprep.subr.bf16.mxu0 0
        %2513 = vmatpush2.bf16.msra.mxu0 0
        %2514 = vmatprep.subr.bf16.mxu0 0
        %2515 = vmatpush2.bf16.msra.mxu0 0
        %2516 = vmatprep.subr.bf16.mxu0 0
        %2517 = vmatpush2.bf16.msra.mxu0 0
        %2518 = vmatprep.subr.bf16.mxu0 0
        %2519 = vmatpush2.bf16.msra.mxu0 %v2492
        %2520 = vmatprep.subr.bf16.mxu0 0
        %2521 = vmatpush2.bf16.msra.mxu0 %v2452
        %2522 = vmatprep.subr.bf16.mxu0 0
        %2523 = vmatpush2.bf16.msra.mxu0 %v2451
        %2524 = vmatprep.subr.bf16.mxu0 0
        %2525 = vmatpush2.bf16.msra.mxu0 %v2450
        %2526 = vmatprep.mubr.bf16.mxu0 %v2467
        %2527 = vmatmul.mubr.bf16.gmra.mxu0 %v2350
        %v2528 = vpop.f32.mrf.mxu0
        %v2529 = vadd.f32 %v2394, %v2528
        %v2530 = vpop.f32.mrf.mxu0
        %v2531 = vpop.f32.mrf.mxu0
        %v2532 = vadd.f32 %v2394, %v2531
        %v2533 = vpop.f32.mrf.mxu0
        %2534 = vmatprep.mubr.bf16.mxu0 %v2470
        %2535 = vmatmul.mubr.bf16.gmra.mxu0 %v2352
        %v2536 = vpop.f32.mrf.mxu0
        %v2537 = vadd.f32 %v2394, %v2536
        %v2538 = vpop.f32.mrf.mxu0
        %v2539 = vpop.f32.mrf.mxu0
        %v2540 = vadd.f32 %v2394, %v2539
        %v2541 = vpop.f32.mrf.mxu0
        %2542 = vmatprep.mubr.bf16.mxu0 %v2473
        %2543 = vmatmul.mubr.bf16.gmra.mxu0 %v2354
        %v2544 = vpop.f32.mrf.mxu0
        %v2545 = vadd.f32 %v2394, %v2544
        %v2546 = vpop.f32.mrf.mxu0
        %v2547 = vpop.f32.mrf.mxu0
        %v2548 = vadd.f32 %v2394, %v2547
        %v2549 = vpop.f32.mrf.mxu0
        %2550 = vmatprep.mubr.bf16.mxu0 %v2476
        %2551 = vmatmul.mubr.bf16.gmra.mxu0 %v2356
        %v2552 = vpop.f32.mrf.mxu0
        %v2553 = vadd.f32 %v2394, %v2552
        %v2554 = vpop.f32.mrf.mxu0
        %v2555 = vpop.f32.mrf.mxu0
        %v2556 = vadd.f32 %v2394, %v2555
        %v2557 = vpop.f32.mrf.mxu0
        %2558 = vmatprep.mubr.bf16.mxu0 %v2479
        %2559 = vmatmul.mubr.bf16.gmra.mxu0 %v2358
        %v2560 = vpop.f32.mrf.mxu0
        %v2561 = vadd.f32 %v2394, %v2560
        %v2562 = vpop.f32.mrf.mxu0
        %v2563 = vpop.f32.mrf.mxu0
        %v2564 = vadd.f32 %v2394, %v2563
        %v2565 = vpop.f32.mrf.mxu0
        %2566 = vmatprep.mubr.bf16.mxu0 %v2482
        %2567 = vmatmul.mubr.bf16.gmra.mxu0 %v2360
        %v2568 = vpop.f32.mrf.mxu0
        %v2569 = vadd.f32 %v2394, %v2568
        %v2570 = vpop.f32.mrf.mxu0
        %v2571 = vpop.f32.mrf.mxu0
        %v2572 = vadd.f32 %v2394, %v2571
        %v2573 = vpop.f32.mrf.mxu0
        %2574 = vmatprep.mubr.bf16.mxu0 %v2485
        %2575 = vmatmul.mubr.bf16.gmra.mxu0 %v2362
        %v2576 = vpop.f32.mrf.mxu0
        %v2577 = vadd.f32 %v2394, %v2576
        %v2578 = vpop.f32.mrf.mxu0
        %v2579 = vpop.f32.mrf.mxu0
        %v2580 = vadd.f32 %v2394, %v2579
        %v2581 = vpop.f32.mrf.mxu0
        %2582 = vmatprep.mubr.bf16.mxu0 %v2488
        %2583 = vmatmul.mubr.bf16.gmra.mxu0 %v2364
        %v2584 = vpop.f32.mrf.mxu0
        %v2585 = vadd.f32 %v2394, %v2584
        %v2586 = vpop.f32.mrf.mxu0
        %v2587 = vpop.f32.mrf.mxu0
        %v2588 = vadd.f32 %v2394, %v2587
        %v2589 = vpop.f32.mrf.mxu0
        %2590 = vdwg.mxu0
        %v2591 = vmax.f32 %v2529, 0.0
        %v2592 = vmax.f32 %v2532, 0.0
        %v2593 = vmax.f32 %v2537, 0.0
        %v2594 = vmax.f32 %v2540, 0.0
        %v2595 = vmax.f32 %v2545, 0.0
        %v2596 = vmax.f32 %v2548, 0.0
        %v2597 = vmax.f32 %v2553, 0.0
        %v2598 = vmax.f32 %v2556, 0.0
        %v2599 = vmax.f32 %v2561, 0.0
        %v2600 = vmax.f32 %v2564, 0.0
        %v2601 = vmax.f32 %v2569, 0.0
        %v2602 = vmax.f32 %v2572, 0.0
        %v2603 = vmax.f32 %v2577, 0.0
        %v2604 = vmax.f32 %v2580, 0.0
        %v2605 = vmax.f32 %v2585, 0.0
        %v2606 = vmax.f32 %v2588, 0.0
        %2607 = vst.msk [vmem:[#allocation4] sm:$0xff] %vm1443, 0.0
        %2608 = vst.msk [vmem:[#allocation4 + $0x8] sm:$0xff] %vm1443, 0.0
        %2609 = vst.msk [vmem:[#allocation4 + $0x10] sm:$0x3] %vm1446, 0.0
        %2610 = vst.msk [vmem:[#allocation4 + $0x18] sm:$0xff] %vm1443, 0.0
        %2611 = vst.msk [vmem:[#allocation4 + $0x20] sm:$0xff] %vm1443, 0.0
        %2612 = vst.msk [vmem:[#allocation4 + $0x28] sm:$0x3] %vm1446, 0.0
        %2613 = vst.msk [vmem:[#allocation4 + $0x30] sm:$0xff] %vm1443, 0.0
        %2614 = vst.msk [vmem:[#allocation4 + $0x38] sm:$0xff] %vm1443, 0.0
        %2615 = vst.msk [vmem:[#allocation4 + $0x40] sm:$0x3] %vm1446, 0.0
        %2616 = vst.msk [vmem:[#allocation4 + $0x48] sm:$0xff] %vm1443, 0.0
        %2617 = vst.msk [vmem:[#allocation4 + $0x50] sm:$0xff] %vm1443, 0.0
        %2618 = vst.msk [vmem:[#allocation4 + $0x58] sm:$0x3] %vm1446, 0.0
        %2619 = vst.msk [vmem:[#allocation4 + $0x60] sm:$0xff] %vm1443, 0.0
        %2620 = vst.msk [vmem:[#allocation4 + $0x68] sm:$0xff] %vm1443, 0.0
        %2621 = vst.msk [vmem:[#allocation4 + $0x70] sm:$0x3] %vm1446, 0.0
        %2622 = vst.msk [vmem:[#allocation4 + $0x78] sm:$0xff] %vm1443, 0.0
        %2623 = vst.msk [vmem:[#allocation4 + $0x80] sm:$0xff] %vm1443, 0.0
        %2624 = vst.msk [vmem:[#allocation4 + $0x88] sm:$0x3] %vm1446, 0.0
        %2625 = vst.msk [vmem:[#allocation4 + $0x90] sm:$0xff] %vm1443, 0.0
        %2626 = vst.msk [vmem:[#allocation4 + $0x98] sm:$0xff] %vm1443, 0.0
        %2627 = vst.msk [vmem:[#allocation4 + $0xa0] sm:$0x3] %vm1446, 0.0
        %2628 = vst.msk [vmem:[#allocation4 + $0xa8] sm:$0xff] %vm1443, 0.0
        %2629 = vst.msk [vmem:[#allocation4 + $0xb0] sm:$0xff] %vm1443, 0.0
        %2630 = vst.msk [vmem:[#allocation4 + $0xb8] sm:$0x3] %vm1446, 0.0
        %2631 = vst.msk [vmem:[#allocation4 + $0xc0] sm:$0xff] %vm1443, 0.0
        %2632 = vst.msk [vmem:[#allocation4 + $0xc8] sm:$0xff] %vm1443, 0.0
        %2633 = vst.msk [vmem:[#allocation4 + $0xd0] sm:$0x3] %vm1446, 0.0
        %2634 = vst.msk [vmem:[#allocation4 + $0xd8] sm:$0xff] %vm1443, 0.0
        %2635 = vst.msk [vmem:[#allocation4 + $0xe0] sm:$0xff] %vm1443, 0.0
        %2636 = vst.msk [vmem:[#allocation4 + $0xe8] sm:$0x3] %vm1446, 0.0
        %2637 = vst.msk [vmem:[%s1475 + $0x1] sm:$0xff] %vm1443, %v2591
        %2638 = vst.msk [vmem:[%s1475 + $0x9] sm:$0xff] %vm1443, %v2592
        %2639 = vst.msk [vmem:[%s1475 + $0x19] sm:$0xff] %vm1443, %v2593
        %2640 = vst.msk [vmem:[%s1475 + $0x21] sm:$0xff] %vm1443, %v2594
        %2641 = vst.msk [vmem:[%s1475 + $0x31] sm:$0xff] %vm1443, %v2595
        %2642 = vst.msk [vmem:[%s1475 + $0x39] sm:$0xff] %vm1443, %v2596
        %2643 = vst.msk [vmem:[%s1475 + $0x49] sm:$0xff] %vm1443, %v2597
        %2644 = vst.msk [vmem:[%s1475 + $0x51] sm:$0xff] %vm1443, %v2598
        %2645 = vst.msk [vmem:[%s1475 + $0x61] sm:$0xff] %vm1443, %v2599
        %2646 = vst.msk [vmem:[%s1475 + $0x69] sm:$0xff] %vm1443, %v2600
        %2647 = vst.msk [vmem:[%s1475 + $0x79] sm:$0xff] %vm1443, %v2601
        %2648 = vst.msk [vmem:[%s1475 + $0x81] sm:$0xff] %vm1443, %v2602
        %2649 = vst.msk [vmem:[%s1475 + $0x91] sm:$0xff] %vm1443, %v2603
        %2650 = vst.msk [vmem:[%s1475 + $0x99] sm:$0xff] %vm1443, %v2604
        %2651 = vst.msk [vmem:[%s1475 + $0xa9] sm:$0xff] %vm1443, %v2605
        %2652 = vst.msk [vmem:[%s1475 + $0xb1] sm:$0xff] %vm1443, %v2606
        %v2653 = vld [vmem:[#allocation4] sm:$0xff]
        %v2654 = vld [vmem:[#allocation4 + $0x8] sm:$0xff]
        %v2655 = vld [vmem:[#allocation4 + $0x18] sm:$0xff]
        %v2656 = vld [vmem:[#allocation4 + $0x20] sm:$0xff]
        %v2657 = vld [vmem:[#allocation4 + $0x30] sm:$0xff]
        %v2658 = vld [vmem:[#allocation4 + $0x38] sm:$0xff]
        %v2659 = vld [vmem:[#allocation4 + $0x48] sm:$0xff]
        %v2660 = vld [vmem:[#allocation4 + $0x50] sm:$0xff]
        %v2661 = vld [vmem:[#allocation4 + $0x60] sm:$0xff]
        %v2662 = vld [vmem:[#allocation4 + $0x68] sm:$0xff]
        %v2663 = vld [vmem:[#allocation4 + $0x78] sm:$0xff]
        %v2664 = vld [vmem:[#allocation4 + $0x80] sm:$0xff]
        %v2665 = vld [vmem:[#allocation4 + $0x90] sm:$0xff]
        %v2666 = vld [vmem:[#allocation4 + $0x98] sm:$0xff]
        %v2667 = vld [vmem:[#allocation4 + $0xa8] sm:$0xff]
        %v2668 = vld [vmem:[#allocation4 + $0xb0] sm:$0xff]
        %2669 = vst.msk [vmem:[#allocation5] sm:$0xff] %vm1443, %v2653
        %2670 = vst.msk [vmem:[#allocation5 + $0x10] sm:$0xff] %vm1443, %v2654
        %2671 = vst.msk [vmem:[#allocation5 + $0x20] sm:$0xff] %vm1443, %v2655
        %2672 = vst.msk [vmem:[#allocation5 + $0x30] sm:$0xff] %vm1443, %v2656
        %2673 = vst.msk [vmem:[#allocation5 + $0x40] sm:$0xff] %vm1443, %v2657
        %2674 = vst.msk [vmem:[#allocation5 + $0x50] sm:$0xff] %vm1443, %v2658
        %2675 = vst.msk [vmem:[#allocation5 + $0x60] sm:$0xff] %vm1443, %v2659
        %2676 = vst.msk [vmem:[#allocation5 + $0x70] sm:$0xff] %vm1443, %v2660
        %2677 = vst.msk [vmem:[#allocation5 + $0x80] sm:$0xff] %vm1443, %v2661
        %2678 = vst.msk [vmem:[#allocation5 + $0x90] sm:$0xff] %vm1443, %v2662
        %2679 = vst.msk [vmem:[#allocation5 + $0xa0] sm:$0xff] %vm1443, %v2663
        %2680 = vst.msk [vmem:[#allocation5 + $0xb0] sm:$0xff] %vm1443, %v2664
        %2681 = vst.msk [vmem:[#allocation5 + $0xc0] sm:$0xff] %vm1443, %v2665
        %2682 = vst.msk [vmem:[#allocation5 + $0xd0] sm:$0xff] %vm1443, %v2666
        %2683 = vst.msk [vmem:[#allocation5 + $0xe0] sm:$0xff] %vm1443, %v2667
        %2684 = vst.msk [vmem:[#allocation5 + $0xf0] sm:$0xff] %vm1443, %v2668
        %v2685 = vld [vmem:[#allocation4 + $0x1] sm:$0xff]
        %v2686 = vld [vmem:[#allocation4 + $0x9] sm:$0xff]
        %v2687 = vld [vmem:[#allocation4 + $0x19] sm:$0xff]
        %v2688 = vld [vmem:[#allocation4 + $0x21] sm:$0xff]
        %v2689 = vld [vmem:[#allocation4 + $0x31] sm:$0xff]
        %v2690 = vld [vmem:[#allocation4 + $0x39] sm:$0xff]
        %v2691 = vld [vmem:[#allocation4 + $0x49] sm:$0xff]
        %v2692 = vld [vmem:[#allocation4 + $0x51] sm:$0xff]
        %v2693 = vld [vmem:[#allocation4 + $0x61] sm:$0xff]
        %v2694 = vld [vmem:[#allocation4 + $0x69] sm:$0xff]
        %v2695 = vld [vmem:[#allocation4 + $0x79] sm:$0xff]
        %v2696 = vld [vmem:[#allocation4 + $0x81] sm:$0xff]
        %v2697 = vld [vmem:[#allocation4 + $0x91] sm:$0xff]
        %v2698 = vld [vmem:[#allocation4 + $0x99] sm:$0xff]
        %v2699 = vld [vmem:[#allocation4 + $0xa9] sm:$0xff]
        %v2700 = vld [vmem:[#allocation4 + $0xb1] sm:$0xff]
        %2717 = vrot.lane.b32.xlu0 %v2685, 20
        %v2718 = vpop.permute.xlu0 %2717
        %2719 = vrot.lane.b32.xlu0 %v2686, 20
        %v2720 = vpop.permute.xlu0 %2719
        %2721 = vrot.lane.b32.xlu0 %v2687, 20
        %v2722 = vpop.permute.xlu0 %2721
        %2723 = vrot.lane.b32.xlu0 %v2688, 20
        %v2724 = vpop.permute.xlu0 %2723
        %2725 = vrot.lane.b32.xlu0 %v2689, 20
        %v2726 = vpop.permute.xlu0 %2725
        %2727 = vrot.lane.b32.xlu0 %v2690, 20
        %v2728 = vpop.permute.xlu0 %2727
        %2729 = vrot.lane.b32.xlu0 %v2691, 20
        %v2730 = vpop.permute.xlu0 %2729
        %2731 = vrot.lane.b32.xlu0 %v2692, 20
        %v2732 = vpop.permute.xlu0 %2731
        %2733 = vrot.lane.b32.xlu0 %v2693, 20
        %v2734 = vpop.permute.xlu0 %2733
        %2735 = vrot.lane.b32.xlu0 %v2694, 20
        %v2736 = vpop.permute.xlu0 %2735
        %2737 = vrot.lane.b32.xlu0 %v2695, 20
        %v2738 = vpop.permute.xlu0 %2737
        %2739 = vrot.lane.b32.xlu0 %v2696, 20
        %v2740 = vpop.permute.xlu0 %2739
        %2741 = vrot.lane.b32.xlu0 %v2697, 20
        %v2742 = vpop.permute.xlu0 %2741
        %2743 = vrot.lane.b32.xlu0 %v2698, 20
        %v2744 = vpop.permute.xlu0 %2743
        %2745 = vrot.lane.b32.xlu0 %v2699, 20
        %v2746 = vpop.permute.xlu0 %2745
        %2747 = vrot.lane.b32.xlu0 %v2700, 20
        %v2748 = vpop.permute.xlu0 %2747
        %2765 = vst.msk [vmem:[#allocation5] sm:$0xff] %vm1604, %v2718
        %2766 = vst.msk [vmem:[#allocation5 + $0x10] sm:$0xff] %vm1604, %v2720
        %2767 = vst.msk [vmem:[#allocation5 + $0x20] sm:$0xff] %vm1604, %v2722
        %2768 = vst.msk [vmem:[#allocation5 + $0x30] sm:$0xff] %vm1604, %v2724
        %2769 = vst.msk [vmem:[#allocation5 + $0x40] sm:$0xff] %vm1604, %v2726
        %2770 = vst.msk [vmem:[#allocation5 + $0x50] sm:$0xff] %vm1604, %v2728
        %2771 = vst.msk [vmem:[#allocation5 + $0x60] sm:$0xff] %vm1604, %v2730
        %2772 = vst.msk [vmem:[#allocation5 + $0x70] sm:$0xff] %vm1604, %v2732
        %2773 = vst.msk [vmem:[#allocation5 + $0x80] sm:$0xff] %vm1604, %v2734
        %2774 = vst.msk [vmem:[#allocation5 + $0x90] sm:$0xff] %vm1604, %v2736
        %2775 = vst.msk [vmem:[#allocation5 + $0xa0] sm:$0xff] %vm1604, %v2738
        %2776 = vst.msk [vmem:[#allocation5 + $0xb0] sm:$0xff] %vm1604, %v2740
        %2777 = vst.msk [vmem:[#allocation5 + $0xc0] sm:$0xff] %vm1604, %v2742
        %2778 = vst.msk [vmem:[#allocation5 + $0xd0] sm:$0xff] %vm1604, %v2744
        %2779 = vst.msk [vmem:[#allocation5 + $0xe0] sm:$0xff] %vm1604, %v2746
        %2780 = vst.msk [vmem:[#allocation5 + $0xf0] sm:$0xff] %vm1604, %v2748
        %v2781 = vld [vmem:[#allocation4 + $0x2] sm:$0xff]
        %v2782 = vld [vmem:[#allocation4 + $0xa] sm:$0xff]
        %v2783 = vld [vmem:[#allocation4 + $0x1a] sm:$0xff]
        %v2784 = vld [vmem:[#allocation4 + $0x22] sm:$0xff]
        %v2785 = vld [vmem:[#allocation4 + $0x32] sm:$0xff]
        %v2786 = vld [vmem:[#allocation4 + $0x3a] sm:$0xff]
        %v2787 = vld [vmem:[#allocation4 + $0x4a] sm:$0xff]
        %v2788 = vld [vmem:[#allocation4 + $0x52] sm:$0xff]
        %v2789 = vld [vmem:[#allocation4 + $0x62] sm:$0xff]
        %v2790 = vld [vmem:[#allocation4 + $0x6a] sm:$0xff]
        %v2791 = vld [vmem:[#allocation4 + $0x7a] sm:$0xff]
        %v2792 = vld [vmem:[#allocation4 + $0x82] sm:$0xff]
        %v2793 = vld [vmem:[#allocation4 + $0x92] sm:$0xff]
        %v2794 = vld [vmem:[#allocation4 + $0x9a] sm:$0xff]
        %v2795 = vld [vmem:[#allocation4 + $0xaa] sm:$0xff]
        %v2796 = vld [vmem:[#allocation4 + $0xb2] sm:$0xff]
        %2813 = vrot.lane.b32.xlu0 %v2781, 40
        %v2814 = vpop.permute.xlu0 %2813
        %2815 = vrot.lane.b32.xlu0 %v2782, 40
        %v2816 = vpop.permute.xlu0 %2815
        %2817 = vrot.lane.b32.xlu0 %v2783, 40
        %v2818 = vpop.permute.xlu0 %2817
        %2819 = vrot.lane.b32.xlu0 %v2784, 40
        %v2820 = vpop.permute.xlu0 %2819
        %2821 = vrot.lane.b32.xlu0 %v2785, 40
        %v2822 = vpop.permute.xlu0 %2821
        %2823 = vrot.lane.b32.xlu0 %v2786, 40
        %v2824 = vpop.permute.xlu0 %2823
        %2825 = vrot.lane.b32.xlu0 %v2787, 40
        %v2826 = vpop.permute.xlu0 %2825
        %2827 = vrot.lane.b32.xlu0 %v2788, 40
        %v2828 = vpop.permute.xlu0 %2827
        %2829 = vrot.lane.b32.xlu0 %v2789, 40
        %v2830 = vpop.permute.xlu0 %2829
        %2831 = vrot.lane.b32.xlu0 %v2790, 40
        %v2832 = vpop.permute.xlu0 %2831
        %2833 = vrot.lane.b32.xlu0 %v2791, 40
        %v2834 = vpop.permute.xlu0 %2833
        %2835 = vrot.lane.b32.xlu0 %v2792, 40
        %v2836 = vpop.permute.xlu0 %2835
        %2837 = vrot.lane.b32.xlu0 %v2793, 40
        %v2838 = vpop.permute.xlu0 %2837
        %2839 = vrot.lane.b32.xlu0 %v2794, 40
        %v2840 = vpop.permute.xlu0 %2839
        %2841 = vrot.lane.b32.xlu0 %v2795, 40
        %v2842 = vpop.permute.xlu0 %2841
        %2843 = vrot.lane.b32.xlu0 %v2796, 40
        %v2844 = vpop.permute.xlu0 %2843
        %2861 = vst.msk [vmem:[#allocation5] sm:$0xff] %vm1701, %v2814
        %2862 = vst.msk [vmem:[#allocation5 + $0x10] sm:$0xff] %vm1701, %v2816
        %2863 = vst.msk [vmem:[#allocation5 + $0x20] sm:$0xff] %vm1701, %v2818
        %2864 = vst.msk [vmem:[#allocation5 + $0x30] sm:$0xff] %vm1701, %v2820
        %2865 = vst.msk [vmem:[#allocation5 + $0x40] sm:$0xff] %vm1701, %v2822
        %2866 = vst.msk [vmem:[#allocation5 + $0x50] sm:$0xff] %vm1701, %v2824
        %2867 = vst.msk [vmem:[#allocation5 + $0x60] sm:$0xff] %vm1701, %v2826
        %2868 = vst.msk [vmem:[#allocation5 + $0x70] sm:$0xff] %vm1701, %v2828
        %2869 = vst.msk [vmem:[#allocation5 + $0x80] sm:$0xff] %vm1701, %v2830
        %2870 = vst.msk [vmem:[#allocation5 + $0x90] sm:$0xff] %vm1701, %v2832
        %2871 = vst.msk [vmem:[#allocation5 + $0xa0] sm:$0xff] %vm1701, %v2834
        %2872 = vst.msk [vmem:[#allocation5 + $0xb0] sm:$0xff] %vm1701, %v2836
        %2873 = vst.msk [vmem:[#allocation5 + $0xc0] sm:$0xff] %vm1701, %v2838
        %2874 = vst.msk [vmem:[#allocation5 + $0xd0] sm:$0xff] %vm1701, %v2840
        %2875 = vst.msk [vmem:[#allocation5 + $0xe0] sm:$0xff] %vm1701, %v2842
        %2876 = vst.msk [vmem:[#allocation5 + $0xf0] sm:$0xff] %vm1701, %v2844
        %v2877 = vld [vmem:[%s1475] sm:$0xff]
        %v2878 = vld [vmem:[%s1475 + $0x8] sm:$0xff]
        %v2879 = vld [vmem:[%s1475 + $0x18] sm:$0xff]
        %v2880 = vld [vmem:[%s1475 + $0x20] sm:$0xff]
        %v2881 = vld [vmem:[%s1475 + $0x30] sm:$0xff]
        %v2882 = vld [vmem:[%s1475 + $0x38] sm:$0xff]
        %v2883 = vld [vmem:[%s1475 + $0x48] sm:$0xff]
        %v2884 = vld [vmem:[%s1475 + $0x50] sm:$0xff]
        %v2885 = vld [vmem:[%s1475 + $0x60] sm:$0xff]
        %v2886 = vld [vmem:[%s1475 + $0x68] sm:$0xff]
        %v2887 = vld [vmem:[%s1475 + $0x78] sm:$0xff]
        %v2888 = vld [vmem:[%s1475 + $0x80] sm:$0xff]
        %v2889 = vld [vmem:[%s1475 + $0x90] sm:$0xff]
        %v2890 = vld [vmem:[%s1475 + $0x98] sm:$0xff]
        %v2891 = vld [vmem:[%s1475 + $0xa8] sm:$0xff]
        %v2892 = vld [vmem:[%s1475 + $0xb0] sm:$0xff]
        %2909 = vrot.lane.b32.xlu0 %v2877, 60
        %v2910 = vpop.permute.xlu0 %2909
        %2911 = vrot.lane.b32.xlu0 %v2878, 60
        %v2912 = vpop.permute.xlu0 %2911
        %2913 = vrot.lane.b32.xlu0 %v2879, 60
        %v2914 = vpop.permute.xlu0 %2913
        %2915 = vrot.lane.b32.xlu0 %v2880, 60
        %v2916 = vpop.permute.xlu0 %2915
        %2917 = vrot.lane.b32.xlu0 %v2881, 60
        %v2918 = vpop.permute.xlu0 %2917
        %2919 = vrot.lane.b32.xlu0 %v2882, 60
        %v2920 = vpop.permute.xlu0 %2919
        %2921 = vrot.lane.b32.xlu0 %v2883, 60
        %v2922 = vpop.permute.xlu0 %2921
        %2923 = vrot.lane.b32.xlu0 %v2884, 60
        %v2924 = vpop.permute.xlu0 %2923
        %2925 = vrot.lane.b32.xlu0 %v2885, 60
        %v2926 = vpop.permute.xlu0 %2925
        %2927 = vrot.lane.b32.xlu0 %v2886, 60
        %v2928 = vpop.permute.xlu0 %2927
        %2929 = vrot.lane.b32.xlu0 %v2887, 60
        %v2930 = vpop.permute.xlu0 %2929
        %2931 = vrot.lane.b32.xlu0 %v2888, 60
        %v2932 = vpop.permute.xlu0 %2931
        %2933 = vrot.lane.b32.xlu0 %v2889, 60
        %v2934 = vpop.permute.xlu0 %2933
        %2935 = vrot.lane.b32.xlu0 %v2890, 60
        %v2936 = vpop.permute.xlu0 %2935
        %2937 = vrot.lane.b32.xlu0 %v2891, 60
        %v2938 = vpop.permute.xlu0 %2937
        %2939 = vrot.lane.b32.xlu0 %v2892, 60
        %v2940 = vpop.permute.xlu0 %2939
        %2957 = vst.msk [vmem:[#allocation5] sm:$0xff] %vm1798, %v2910
        %2958 = vst.msk [vmem:[#allocation5 + $0x10] sm:$0xff] %vm1798, %v2912
        %2959 = vst.msk [vmem:[#allocation5 + $0x20] sm:$0xff] %vm1798, %v2914
        %2960 = vst.msk [vmem:[#allocation5 + $0x30] sm:$0xff] %vm1798, %v2916
        %2961 = vst.msk [vmem:[#allocation5 + $0x40] sm:$0xff] %vm1798, %v2918
        %2962 = vst.msk [vmem:[#allocation5 + $0x50] sm:$0xff] %vm1798, %v2920
        %2963 = vst.msk [vmem:[#allocation5 + $0x60] sm:$0xff] %vm1798, %v2922
        %2964 = vst.msk [vmem:[#allocation5 + $0x70] sm:$0xff] %vm1798, %v2924
        %2965 = vst.msk [vmem:[#allocation5 + $0x80] sm:$0xff] %vm1798, %v2926
        %2966 = vst.msk [vmem:[#allocation5 + $0x90] sm:$0xff] %vm1798, %v2928
        %2967 = vst.msk [vmem:[#allocation5 + $0xa0] sm:$0xff] %vm1798, %v2930
        %2968 = vst.msk [vmem:[#allocation5 + $0xb0] sm:$0xff] %vm1798, %v2932
        %2969 = vst.msk [vmem:[#allocation5 + $0xc0] sm:$0xff] %vm1798, %v2934
        %2970 = vst.msk [vmem:[#allocation5 + $0xd0] sm:$0xff] %vm1798, %v2936
        %2971 = vst.msk [vmem:[#allocation5 + $0xe0] sm:$0xff] %vm1798, %v2938
        %2972 = vst.msk [vmem:[#allocation5 + $0xf0] sm:$0xff] %vm1798, %v2940
        %v2973 = vld [vmem:[%s1475 + $0x1] sm:$0xff]
        %v2974 = vld [vmem:[%s1475 + $0x9] sm:$0xff]
        %v2975 = vld [vmem:[%s1475 + $0x19] sm:$0xff]
        %v2976 = vld [vmem:[%s1475 + $0x21] sm:$0xff]
        %v2977 = vld [vmem:[%s1475 + $0x31] sm:$0xff]
        %v2978 = vld [vmem:[%s1475 + $0x39] sm:$0xff]
        %v2979 = vld [vmem:[%s1475 + $0x49] sm:$0xff]
        %v2980 = vld [vmem:[%s1475 + $0x51] sm:$0xff]
        %v2981 = vld [vmem:[%s1475 + $0x61] sm:$0xff]
        %v2982 = vld [vmem:[%s1475 + $0x69] sm:$0xff]
        %v2983 = vld [vmem:[%s1475 + $0x79] sm:$0xff]
        %v2984 = vld [vmem:[%s1475 + $0x81] sm:$0xff]
        %v2985 = vld [vmem:[%s1475 + $0x91] sm:$0xff]
        %v2986 = vld [vmem:[%s1475 + $0x99] sm:$0xff]
        %v2987 = vld [vmem:[%s1475 + $0xa9] sm:$0xff]
        %v2988 = vld [vmem:[%s1475 + $0xb1] sm:$0xff]
        %3005 = vrot.lane.b32.xlu0 %v2973, 80
        %v3006 = vpop.permute.xlu0 %3005
        %3007 = vrot.lane.b32.xlu0 %v2974, 80
        %v3008 = vpop.permute.xlu0 %3007
        %3009 = vrot.lane.b32.xlu0 %v2975, 80
        %v3010 = vpop.permute.xlu0 %3009
        %3011 = vrot.lane.b32.xlu0 %v2976, 80
        %v3012 = vpop.permute.xlu0 %3011
        %3013 = vrot.lane.b32.xlu0 %v2977, 80
        %v3014 = vpop.permute.xlu0 %3013
        %3015 = vrot.lane.b32.xlu0 %v2978, 80
        %v3016 = vpop.permute.xlu0 %3015
        %3017 = vrot.lane.b32.xlu0 %v2979, 80
        %v3018 = vpop.permute.xlu0 %3017
        %3019 = vrot.lane.b32.xlu0 %v2980, 80
        %v3020 = vpop.permute.xlu0 %3019
        %3021 = vrot.lane.b32.xlu0 %v2981, 80
        %v3022 = vpop.permute.xlu0 %3021
        %3023 = vrot.lane.b32.xlu0 %v2982, 80
        %v3024 = vpop.permute.xlu0 %3023
        %3025 = vrot.lane.b32.xlu0 %v2983, 80
        %v3026 = vpop.permute.xlu0 %3025
        %3027 = vrot.lane.b32.xlu0 %v2984, 80
        %v3028 = vpop.permute.xlu0 %3027
        %3029 = vrot.lane.b32.xlu0 %v2985, 80
        %v3030 = vpop.permute.xlu0 %3029
        %3031 = vrot.lane.b32.xlu0 %v2986, 80
        %v3032 = vpop.permute.xlu0 %3031
        %3033 = vrot.lane.b32.xlu0 %v2987, 80
        %v3034 = vpop.permute.xlu0 %3033
        %3035 = vrot.lane.b32.xlu0 %v2988, 80
        %v3036 = vpop.permute.xlu0 %3035
        %3053 = vst.msk [vmem:[#allocation5] sm:$0xff] %vm1895, %v3006
        %3054 = vst.msk [vmem:[#allocation5 + $0x10] sm:$0xff] %vm1895, %v3008
        %3055 = vst.msk [vmem:[#allocation5 + $0x20] sm:$0xff] %vm1895, %v3010
        %3056 = vst.msk [vmem:[#allocation5 + $0x30] sm:$0xff] %vm1895, %v3012
        %3057 = vst.msk [vmem:[#allocation5 + $0x40] sm:$0xff] %vm1895, %v3014
        %3058 = vst.msk [vmem:[#allocation5 + $0x50] sm:$0xff] %vm1895, %v3016
        %3059 = vst.msk [vmem:[#allocation5 + $0x60] sm:$0xff] %vm1895, %v3018
        %3060 = vst.msk [vmem:[#allocation5 + $0x70] sm:$0xff] %vm1895, %v3020
        %3061 = vst.msk [vmem:[#allocation5 + $0x80] sm:$0xff] %vm1895, %v3022
        %3062 = vst.msk [vmem:[#allocation5 + $0x90] sm:$0xff] %vm1895, %v3024
        %3063 = vst.msk [vmem:[#allocation5 + $0xa0] sm:$0xff] %vm1895, %v3026
        %3064 = vst.msk [vmem:[#allocation5 + $0xb0] sm:$0xff] %vm1895, %v3028
        %3065 = vst.msk [vmem:[#allocation5 + $0xc0] sm:$0xff] %vm1895, %v3030
        %3066 = vst.msk [vmem:[#allocation5 + $0xd0] sm:$0xff] %vm1895, %v3032
        %3067 = vst.msk [vmem:[#allocation5 + $0xe0] sm:$0xff] %vm1895, %v3034
        %3068 = vst.msk [vmem:[#allocation5 + $0xf0] sm:$0xff] %vm1895, %v3036
        %v3069 = vld [vmem:[%s1475 + $0x2] sm:$0xff]
        %v3070 = vld [vmem:[%s1475 + $0xa] sm:$0xff]
        %v3071 = vld [vmem:[%s1475 + $0x1a] sm:$0xff]
        %v3072 = vld [vmem:[%s1475 + $0x22] sm:$0xff]
        %v3073 = vld [vmem:[%s1475 + $0x32] sm:$0xff]
        %v3074 = vld [vmem:[%s1475 + $0x3a] sm:$0xff]
        %v3075 = vld [vmem:[%s1475 + $0x4a] sm:$0xff]
        %v3076 = vld [vmem:[%s1475 + $0x52] sm:$0xff]
        %v3077 = vld [vmem:[%s1475 + $0x62] sm:$0xff]
        %v3078 = vld [vmem:[%s1475 + $0x6a] sm:$0xff]
        %v3079 = vld [vmem:[%s1475 + $0x7a] sm:$0xff]
        %v3080 = vld [vmem:[%s1475 + $0x82] sm:$0xff]
        %v3081 = vld [vmem:[%s1475 + $0x92] sm:$0xff]
        %v3082 = vld [vmem:[%s1475 + $0x9a] sm:$0xff]
        %v3083 = vld [vmem:[%s1475 + $0xaa] sm:$0xff]
        %v3084 = vld [vmem:[%s1475 + $0xb2] sm:$0xff]
        %3101 = vrot.lane.b32.xlu0 %v3069, 100
        %v3102 = vpop.permute.xlu0 %3101
        %3103 = vrot.lane.b32.xlu0 %v3070, 100
        %v3104 = vpop.permute.xlu0 %3103
        %3105 = vrot.lane.b32.xlu0 %v3071, 100
        %v3106 = vpop.permute.xlu0 %3105
        %3107 = vrot.lane.b32.xlu0 %v3072, 100
        %v3108 = vpop.permute.xlu0 %3107
        %3109 = vrot.lane.b32.xlu0 %v3073, 100
        %v3110 = vpop.permute.xlu0 %3109
        %3111 = vrot.lane.b32.xlu0 %v3074, 100
        %v3112 = vpop.permute.xlu0 %3111
        %3113 = vrot.lane.b32.xlu0 %v3075, 100
        %v3114 = vpop.permute.xlu0 %3113
        %3115 = vrot.lane.b32.xlu0 %v3076, 100
        %v3116 = vpop.permute.xlu0 %3115
        %3117 = vrot.lane.b32.xlu0 %v3077, 100
        %v3118 = vpop.permute.xlu0 %3117
        %3119 = vrot.lane.b32.xlu0 %v3078, 100
        %v3120 = vpop.permute.xlu0 %3119
        %3121 = vrot.lane.b32.xlu0 %v3079, 100
        %v3122 = vpop.permute.xlu0 %3121
        %3123 = vrot.lane.b32.xlu0 %v3080, 100
        %v3124 = vpop.permute.xlu0 %3123
        %3125 = vrot.lane.b32.xlu0 %v3081, 100
        %v3126 = vpop.permute.xlu0 %3125
        %3127 = vrot.lane.b32.xlu0 %v3082, 100
        %v3128 = vpop.permute.xlu0 %3127
        %3129 = vrot.lane.b32.xlu0 %v3083, 100
        %v3130 = vpop.permute.xlu0 %3129
        %3131 = vrot.lane.b32.xlu0 %v3084, 100
        %v3132 = vpop.permute.xlu0 %3131
        %3149 = vst.msk [vmem:[#allocation5] sm:$0xff] %vm1992, %v3102
        %3150 = vst.msk [vmem:[#allocation5 + $0x10] sm:$0xff] %vm1992, %v3104
        %3151 = vst.msk [vmem:[#allocation5 + $0x20] sm:$0xff] %vm1992, %v3106
        %3152 = vst.msk [vmem:[#allocation5 + $0x30] sm:$0xff] %vm1992, %v3108
        %3153 = vst.msk [vmem:[#allocation5 + $0x40] sm:$0xff] %vm1992, %v3110
        %3154 = vst.msk [vmem:[#allocation5 + $0x50] sm:$0xff] %vm1992, %v3112
        %3155 = vst.msk [vmem:[#allocation5 + $0x60] sm:$0xff] %vm1992, %v3114
        %3156 = vst.msk [vmem:[#allocation5 + $0x70] sm:$0xff] %vm1992, %v3116
        %3157 = vst.msk [vmem:[#allocation5 + $0x80] sm:$0xff] %vm1992, %v3118
        %3158 = vst.msk [vmem:[#allocation5 + $0x90] sm:$0xff] %vm1992, %v3120
        %3159 = vst.msk [vmem:[#allocation5 + $0xa0] sm:$0xff] %vm1992, %v3122
        %3160 = vst.msk [vmem:[#allocation5 + $0xb0] sm:$0xff] %vm1992, %v3124
        %3161 = vst.msk [vmem:[#allocation5 + $0xc0] sm:$0xff] %vm1992, %v3126
        %3162 = vst.msk [vmem:[#allocation5 + $0xd0] sm:$0xff] %vm1992, %v3128
        %3163 = vst.msk [vmem:[#allocation5 + $0xe0] sm:$0xff] %vm1992, %v3130
        %3164 = vst.msk [vmem:[#allocation5 + $0xf0] sm:$0xff] %vm1992, %v3132
        %v3165 = vld [vmem:[%s2009] sm:$0xff]
        %v3166 = vld [vmem:[%s2009 + $0x8] sm:$0xff]
        %v3167 = vld [vmem:[%s2009 + $0x18] sm:$0xff]
        %v3168 = vld [vmem:[%s2009 + $0x20] sm:$0xff]
        %v3169 = vld [vmem:[%s2009 + $0x30] sm:$0xff]
        %v3170 = vld [vmem:[%s2009 + $0x38] sm:$0xff]
        %v3171 = vld [vmem:[%s2009 + $0x48] sm:$0xff]
        %v3172 = vld [vmem:[%s2009 + $0x50] sm:$0xff]
        %v3173 = vld [vmem:[%s2009 + $0x60] sm:$0xff]
        %v3174 = vld [vmem:[%s2009 + $0x68] sm:$0xff]
        %v3175 = vld [vmem:[%s2009 + $0x78] sm:$0xff]
        %v3176 = vld [vmem:[%s2009 + $0x80] sm:$0xff]
        %v3177 = vld [vmem:[%s2009 + $0x90] sm:$0xff]
        %v3178 = vld [vmem:[%s2009 + $0x98] sm:$0xff]
        %v3179 = vld [vmem:[%s2009 + $0xa8] sm:$0xff]
        %v3180 = vld [vmem:[%s2009 + $0xb0] sm:$0xff]
        %3197 = vrot.lane.b32.xlu0 %v3165, 120
        %v3198 = vpop.permute.xlu0 %3197
        %3199 = vrot.lane.b32.xlu0 %v3166, 120
        %v3200 = vpop.permute.xlu0 %3199
        %3201 = vrot.lane.b32.xlu0 %v3167, 120
        %v3202 = vpop.permute.xlu0 %3201
        %3203 = vrot.lane.b32.xlu0 %v3168, 120
        %v3204 = vpop.permute.xlu0 %3203
        %3205 = vrot.lane.b32.xlu0 %v3169, 120
        %v3206 = vpop.permute.xlu0 %3205
        %3207 = vrot.lane.b32.xlu0 %v3170, 120
        %v3208 = vpop.permute.xlu0 %3207
        %3209 = vrot.lane.b32.xlu0 %v3171, 120
        %v3210 = vpop.permute.xlu0 %3209
        %3211 = vrot.lane.b32.xlu0 %v3172, 120
        %v3212 = vpop.permute.xlu0 %3211
        %3213 = vrot.lane.b32.xlu0 %v3173, 120
        %v3214 = vpop.permute.xlu0 %3213
        %3215 = vrot.lane.b32.xlu0 %v3174, 120
        %v3216 = vpop.permute.xlu0 %3215
        %3217 = vrot.lane.b32.xlu0 %v3175, 120
        %v3218 = vpop.permute.xlu0 %3217
        %3219 = vrot.lane.b32.xlu0 %v3176, 120
        %v3220 = vpop.permute.xlu0 %3219
        %3221 = vrot.lane.b32.xlu0 %v3177, 120
        %v3222 = vpop.permute.xlu0 %3221
        %3223 = vrot.lane.b32.xlu0 %v3178, 120
        %v3224 = vpop.permute.xlu0 %3223
        %3225 = vrot.lane.b32.xlu0 %v3179, 120
        %v3226 = vpop.permute.xlu0 %3225
        %3227 = vrot.lane.b32.xlu0 %v3180, 120
        %v3228 = vpop.permute.xlu0 %3227
        %3245 = vst.msk [vmem:[#allocation5] sm:$0xff] %vm2090, %v3198
        %3246 = vst.msk [vmem:[#allocation5 + $0x8] sm:$0xff] %vm2092, %v3198
        %3247 = vst.msk [vmem:[#allocation5 + $0x10] sm:$0xff] %vm2090, %v3200
        %3248 = vst.msk [vmem:[#allocation5 + $0x18] sm:$0xff] %vm2092, %v3200
        %3249 = vst.msk [vmem:[#allocation5 + $0x20] sm:$0xff] %vm2090, %v3202
        %3250 = vst.msk [vmem:[#allocation5 + $0x28] sm:$0xff] %vm2092, %v3202
        %3251 = vst.msk [vmem:[#allocation5 + $0x30] sm:$0xff] %vm2090, %v3204
        %3252 = vst.msk [vmem:[#allocation5 + $0x38] sm:$0xff] %vm2092, %v3204
        %3253 = vst.msk [vmem:[#allocation5 + $0x40] sm:$0xff] %vm2090, %v3206
        %3254 = vst.msk [vmem:[#allocation5 + $0x48] sm:$0xff] %vm2092, %v3206
        %3255 = vst.msk [vmem:[#allocation5 + $0x50] sm:$0xff] %vm2090, %v3208
        %3256 = vst.msk [vmem:[#allocation5 + $0x58] sm:$0xff] %vm2092, %v3208
        %3257 = vst.msk [vmem:[#allocation5 + $0x60] sm:$0xff] %vm2090, %v3210
        %3258 = vst.msk [vmem:[#allocation5 + $0x68] sm:$0xff] %vm2092, %v3210
        %3259 = vst.msk [vmem:[#allocation5 + $0x70] sm:$0xff] %vm2090, %v3212
        %3260 = vst.msk [vmem:[#allocation5 + $0x78] sm:$0xff] %vm2092, %v3212
        %3261 = vst.msk [vmem:[#allocation5 + $0x80] sm:$0xff] %vm2090, %v3214
        %3262 = vst.msk [vmem:[#allocation5 + $0x88] sm:$0xff] %vm2092, %v3214
        %3263 = vst.msk [vmem:[#allocation5 + $0x90] sm:$0xff] %vm2090, %v3216
        %3264 = vst.msk [vmem:[#allocation5 + $0x98] sm:$0xff] %vm2092, %v3216
        %3265 = vst.msk [vmem:[#allocation5 + $0xa0] sm:$0xff] %vm2090, %v3218
        %3266 = vst.msk [vmem:[#allocation5 + $0xa8] sm:$0xff] %vm2092, %v3218
        %3267 = vst.msk [vmem:[#allocation5 + $0xb0] sm:$0xff] %vm2090, %v3220
        %3268 = vst.msk [vmem:[#allocation5 + $0xb8] sm:$0xff] %vm2092, %v3220
        %3269 = vst.msk [vmem:[#allocation5 + $0xc0] sm:$0xff] %vm2090, %v3222
        %3270 = vst.msk [vmem:[#allocation5 + $0xc8] sm:$0xff] %vm2092, %v3222
        %3271 = vst.msk [vmem:[#allocation5 + $0xd0] sm:$0xff] %vm2090, %v3224
        %3272 = vst.msk [vmem:[#allocation5 + $0xd8] sm:$0xff] %vm2092, %v3224
        %3273 = vst.msk [vmem:[#allocation5 + $0xe0] sm:$0xff] %vm2090, %v3226
        %3274 = vst.msk [vmem:[#allocation5 + $0xe8] sm:$0xff] %vm2092, %v3226
        %3275 = vst.msk [vmem:[#allocation5 + $0xf0] sm:$0xff] %vm2090, %v3228
        %3276 = vst.msk [vmem:[#allocation5 + $0xf8] sm:$0xff] %vm2092, %v3228
        %v3277 = vld [vmem:[%s2009 + $0x1] sm:$0xff]
        %v3278 = vld [vmem:[%s2009 + $0x9] sm:$0xff]
        %v3279 = vld [vmem:[%s2009 + $0x19] sm:$0xff]
        %v3280 = vld [vmem:[%s2009 + $0x21] sm:$0xff]
        %v3281 = vld [vmem:[%s2009 + $0x31] sm:$0xff]
        %v3282 = vld [vmem:[%s2009 + $0x39] sm:$0xff]
        %v3283 = vld [vmem:[%s2009 + $0x49] sm:$0xff]
        %v3284 = vld [vmem:[%s2009 + $0x51] sm:$0xff]
        %v3285 = vld [vmem:[%s2009 + $0x61] sm:$0xff]
        %v3286 = vld [vmem:[%s2009 + $0x69] sm:$0xff]
        %v3287 = vld [vmem:[%s2009 + $0x79] sm:$0xff]
        %v3288 = vld [vmem:[%s2009 + $0x81] sm:$0xff]
        %v3289 = vld [vmem:[%s2009 + $0x91] sm:$0xff]
        %v3290 = vld [vmem:[%s2009 + $0x99] sm:$0xff]
        %v3291 = vld [vmem:[%s2009 + $0xa9] sm:$0xff]
        %v3292 = vld [vmem:[%s2009 + $0xb1] sm:$0xff]
        %3309 = vrot.lane.b32.xlu0 %v3277, 12
        %v3310 = vpop.permute.xlu0 %3309
        %3311 = vrot.lane.b32.xlu0 %v3278, 12
        %v3312 = vpop.permute.xlu0 %3311
        %3313 = vrot.lane.b32.xlu0 %v3279, 12
        %v3314 = vpop.permute.xlu0 %3313
        %3315 = vrot.lane.b32.xlu0 %v3280, 12
        %v3316 = vpop.permute.xlu0 %3315
        %3317 = vrot.lane.b32.xlu0 %v3281, 12
        %v3318 = vpop.permute.xlu0 %3317
        %3319 = vrot.lane.b32.xlu0 %v3282, 12
        %v3320 = vpop.permute.xlu0 %3319
        %3321 = vrot.lane.b32.xlu0 %v3283, 12
        %v3322 = vpop.permute.xlu0 %3321
        %3323 = vrot.lane.b32.xlu0 %v3284, 12
        %v3324 = vpop.permute.xlu0 %3323
        %3325 = vrot.lane.b32.xlu0 %v3285, 12
        %v3326 = vpop.permute.xlu0 %3325
        %3327 = vrot.lane.b32.xlu0 %v3286, 12
        %v3328 = vpop.permute.xlu0 %3327
        %3329 = vrot.lane.b32.xlu0 %v3287, 12
        %v3330 = vpop.permute.xlu0 %3329
        %3331 = vrot.lane.b32.xlu0 %v3288, 12
        %v3332 = vpop.permute.xlu0 %3331
        %3333 = vrot.lane.b32.xlu0 %v3289, 12
        %v3334 = vpop.permute.xlu0 %3333
        %3335 = vrot.lane.b32.xlu0 %v3290, 12
        %v3336 = vpop.permute.xlu0 %3335
        %3337 = vrot.lane.b32.xlu0 %v3291, 12
        %v3338 = vpop.permute.xlu0 %3337
        %3339 = vrot.lane.b32.xlu0 %v3292, 12
        %v3340 = vpop.permute.xlu0 %3339
        %3357 = vst.msk [vmem:[#allocation5 + $0x8] sm:$0xff] %vm2204, %v3310
        %3358 = vst.msk [vmem:[#allocation5 + $0x18] sm:$0xff] %vm2204, %v3312
        %3359 = vst.msk [vmem:[#allocation5 + $0x28] sm:$0xff] %vm2204, %v3314
        %3360 = vst.msk [vmem:[#allocation5 + $0x38] sm:$0xff] %vm2204, %v3316
        %3361 = vst.msk [vmem:[#allocation5 + $0x48] sm:$0xff] %vm2204, %v3318
        %3362 = vst.msk [vmem:[#allocation5 + $0x58] sm:$0xff] %vm2204, %v3320
        %3363 = vst.msk [vmem:[#allocation5 + $0x68] sm:$0xff] %vm2204, %v3322
        %3364 = vst.msk [vmem:[#allocation5 + $0x78] sm:$0xff] %vm2204, %v3324
        %3365 = vst.msk [vmem:[#allocation5 + $0x88] sm:$0xff] %vm2204, %v3326
        %3366 = vst.msk [vmem:[#allocation5 + $0x98] sm:$0xff] %vm2204, %v3328
        %3367 = vst.msk [vmem:[#allocation5 + $0xa8] sm:$0xff] %vm2204, %v3330
        %3368 = vst.msk [vmem:[#allocation5 + $0xb8] sm:$0xff] %vm2204, %v3332
        %3369 = vst.msk [vmem:[#allocation5 + $0xc8] sm:$0xff] %vm2204, %v3334
        %3370 = vst.msk [vmem:[#allocation5 + $0xd8] sm:$0xff] %vm2204, %v3336
        %3371 = vst.msk [vmem:[#allocation5 + $0xe8] sm:$0xff] %vm2204, %v3338
        %3372 = vst.msk [vmem:[#allocation5 + $0xf8] sm:$0xff] %vm2204, %v3340
        %v3373 = vld [vmem:[%s2009 + $0x2] sm:$0xff]
        %v3374 = vld [vmem:[%s2009 + $0xa] sm:$0xff]
        %v3375 = vld [vmem:[%s2009 + $0x1a] sm:$0xff]
        %v3376 = vld [vmem:[%s2009 + $0x22] sm:$0xff]
        %v3377 = vld [vmem:[%s2009 + $0x32] sm:$0xff]
        %v3378 = vld [vmem:[%s2009 + $0x3a] sm:$0xff]
        %v3379 = vld [vmem:[%s2009 + $0x4a] sm:$0xff]
        %v3380 = vld [vmem:[%s2009 + $0x52] sm:$0xff]
        %v3381 = vld [vmem:[%s2009 + $0x62] sm:$0xff]
        %v3382 = vld [vmem:[%s2009 + $0x6a] sm:$0xff]
        %v3383 = vld [vmem:[%s2009 + $0x7a] sm:$0xff]
        %v3384 = vld [vmem:[%s2009 + $0x82] sm:$0xff]
        %v3385 = vld [vmem:[%s2009 + $0x92] sm:$0xff]
        %v3386 = vld [vmem:[%s2009 + $0x9a] sm:$0xff]
        %v3387 = vld [vmem:[%s2009 + $0xaa] sm:$0xff]
        %v3388 = vld [vmem:[%s2009 + $0xb2] sm:$0xff]
        %3405 = vrot.lane.b32.xlu0 %v3373, 32
        %v3406 = vpop.permute.xlu0 %3405
        %3407 = vrot.lane.b32.xlu0 %v3374, 32
        %v3408 = vpop.permute.xlu0 %3407
        %3409 = vrot.lane.b32.xlu0 %v3375, 32
        %v3410 = vpop.permute.xlu0 %3409
        %3411 = vrot.lane.b32.xlu0 %v3376, 32
        %v3412 = vpop.permute.xlu0 %3411
        %3413 = vrot.lane.b32.xlu0 %v3377, 32
        %v3414 = vpop.permute.xlu0 %3413
        %3415 = vrot.lane.b32.xlu0 %v3378, 32
        %v3416 = vpop.permute.xlu0 %3415
        %3417 = vrot.lane.b32.xlu0 %v3379, 32
        %v3418 = vpop.permute.xlu0 %3417
        %3419 = vrot.lane.b32.xlu0 %v3380, 32
        %v3420 = vpop.permute.xlu0 %3419
        %3421 = vrot.lane.b32.xlu0 %v3381, 32
        %v3422 = vpop.permute.xlu0 %3421
        %3423 = vrot.lane.b32.xlu0 %v3382, 32
        %v3424 = vpop.permute.xlu0 %3423
        %3425 = vrot.lane.b32.xlu0 %v3383, 32
        %v3426 = vpop.permute.xlu0 %3425
        %3427 = vrot.lane.b32.xlu0 %v3384, 32
        %v3428 = vpop.permute.xlu0 %3427
        %3429 = vrot.lane.b32.xlu0 %v3385, 32
        %v3430 = vpop.permute.xlu0 %3429
        %3431 = vrot.lane.b32.xlu0 %v3386, 32
        %v3432 = vpop.permute.xlu0 %3431
        %3433 = vrot.lane.b32.xlu0 %v3387, 32
        %v3434 = vpop.permute.xlu0 %3433
        %3435 = vrot.lane.b32.xlu0 %v3388, 32
        %v3436 = vpop.permute.xlu0 %3435
        %3453 = vst.msk [vmem:[#allocation5 + $0x8] sm:$0xff] %vm2301, %v3406
        %3454 = vst.msk [vmem:[#allocation5 + $0x18] sm:$0xff] %vm2301, %v3408
        %3455 = vst.msk [vmem:[#allocation5 + $0x28] sm:$0xff] %vm2301, %v3410
        %3456 = vst.msk [vmem:[#allocation5 + $0x38] sm:$0xff] %vm2301, %v3412
        %3457 = vst.msk [vmem:[#allocation5 + $0x48] sm:$0xff] %vm2301, %v3414
        %3458 = vst.msk [vmem:[#allocation5 + $0x58] sm:$0xff] %vm2301, %v3416
        %3459 = vst.msk [vmem:[#allocation5 + $0x68] sm:$0xff] %vm2301, %v3418
        %3460 = vst.msk [vmem:[#allocation5 + $0x78] sm:$0xff] %vm2301, %v3420
        %3461 = vst.msk [vmem:[#allocation5 + $0x88] sm:$0xff] %vm2301, %v3422
        %3462 = vst.msk [vmem:[#allocation5 + $0x98] sm:$0xff] %vm2301, %v3424
        %3463 = vst.msk [vmem:[#allocation5 + $0xa8] sm:$0xff] %vm2301, %v3426
        %3464 = vst.msk [vmem:[#allocation5 + $0xb8] sm:$0xff] %vm2301, %v3428
        %3465 = vst.msk [vmem:[#allocation5 + $0xc8] sm:$0xff] %vm2301, %v3430
        %3466 = vst.msk [vmem:[#allocation5 + $0xd8] sm:$0xff] %vm2301, %v3432
        %3467 = vst.msk [vmem:[#allocation5 + $0xe8] sm:$0xff] %vm2301, %v3434
        %3468 = vst.msk [vmem:[#allocation5 + $0xf8] sm:$0xff] %vm2301, %v3436
        %v3469 = vld [vmem:[#allocation5] sm:$0xff]
        %v3470 = vld [vmem:[#allocation5 + $0x8] sm:$0xff]
        %v3471 = vld [vmem:[#allocation5 + $0x10] sm:$0xff]
        %v3472 = vld [vmem:[#allocation5 + $0x18] sm:$0xff]
        %v3473 = vld [vmem:[#allocation5 + $0x20] sm:$0xff]
        %v3474 = vld [vmem:[#allocation5 + $0x28] sm:$0xff]
        %v3475 = vld [vmem:[#allocation5 + $0x30] sm:$0xff]
        %v3476 = vld [vmem:[#allocation5 + $0x38] sm:$0xff]
        %v3477 = vld [vmem:[#allocation5 + $0x40] sm:$0xff]
        %v3478 = vld [vmem:[#allocation5 + $0x48] sm:$0xff]
        %v3479 = vld [vmem:[#allocation5 + $0x50] sm:$0xff]
        %v3480 = vld [vmem:[#allocation5 + $0x58] sm:$0xff]
        %v3481 = vld [vmem:[#allocation5 + $0x60] sm:$0xff]
        %v3482 = vld [vmem:[#allocation5 + $0x68] sm:$0xff]
        %v3483 = vld [vmem:[#allocation5 + $0x70] sm:$0xff]
        %v3484 = vld [vmem:[#allocation5 + $0x78] sm:$0xff]
        %v3485 = vld [vmem:[#allocation5 + $0x80] sm:$0xff]
        %v3486 = vld [vmem:[#allocation5 + $0x88] sm:$0xff]
        %v3487 = vld [vmem:[#allocation5 + $0x90] sm:$0xff]
        %v3488 = vld [vmem:[#allocation5 + $0x98] sm:$0xff]
        %v3489 = vld [vmem:[#allocation5 + $0xa0] sm:$0xff]
        %v3490 = vld [vmem:[#allocation5 + $0xa8] sm:$0xff]
        %v3491 = vld [vmem:[#allocation5 + $0xb0] sm:$0xff]
        %v3492 = vld [vmem:[#allocation5 + $0xb8] sm:$0xff]
        %v3493 = vld [vmem:[#allocation5 + $0xc0] sm:$0xff]
        %v3494 = vld [vmem:[#allocation5 + $0xc8] sm:$0xff]
        %v3495 = vld [vmem:[#allocation5 + $0xd0] sm:$0xff]
        %v3496 = vld [vmem:[#allocation5 + $0xd8] sm:$0xff]
        %v3497 = vld [vmem:[#allocation5 + $0xe0] sm:$0xff]
        %v3498 = vld [vmem:[#allocation5 + $0xe8] sm:$0xff]
        %v3499 = vld [vmem:[#allocation5 + $0xf0] sm:$0xff]
        %v3500 = vld [vmem:[#allocation5 + $0xf8] sm:$0xff]
        %v3501 = vpack.c.bf16 %v3471, %v3469
        %v3502 = vpack.c.bf16 %v3472, %v3470
        %v3503 = vpack.c.bf16 %v3475, %v3473
        %v3504 = vpack.c.bf16 %v3476, %v3474
        %v3505 = vpack.c.bf16 %v3479, %v3477
        %v3506 = vpack.c.bf16 %v3480, %v3478
        %v3507 = vpack.c.bf16 %v3483, %v3481
        %v3508 = vpack.c.bf16 %v3484, %v3482
        %v3509 = vpack.c.bf16 %v3487, %v3485
        %v3510 = vpack.c.bf16 %v3488, %v3486
        %v3511 = vpack.c.bf16 %v3491, %v3489
        %v3512 = vpack.c.bf16 %v3492, %v3490
        %v3513 = vpack.c.bf16 %v3495, %v3493
        %v3514 = vpack.c.bf16 %v3496, %v3494
        %v3515 = vpack.c.bf16 %v3499, %v3497
        %v3516 = vpack.c.bf16 %v3500, %v3498
        %v3517 = vld [vmem:[%s5] sm:$0xf]
        %v3518 = vld [vmem:[%s5 + $0x4] sm:$0xf]
        %v3519 = vld [vmem:[%s5 + $0x8] sm:$0xf]
        %v3520 = vld [vmem:[%s5 + $0xc] sm:$0xf]
        %v3521 = vld [vmem:[%s5 + $0x10] sm:$0xf]
        %v3522 = vld [vmem:[%s5 + $0x14] sm:$0xf]
        %v3523 = vld [vmem:[%s5 + $0x18] sm:$0xf]
        %v3524 = vld [vmem:[%s5 + $0x1c] sm:$0xf]
        %v3525 = vld [vmem:[%s5 + $0x20] sm:$0xf]
        %v3526 = vld [vmem:[%s5 + $0x24] sm:$0xf]
        %v3527 = vld [vmem:[%s5 + $0x28] sm:$0xf]
        %v3528 = vld [vmem:[%s5 + $0x2c] sm:$0xf]
        %v3529 = vld [vmem:[%s5 + $0x30] sm:$0xf]
        %v3530 = vld [vmem:[%s5 + $0x34] sm:$0xf]
        %v3531 = vld [vmem:[%s5 + $0x38] sm:$0xf]
        %v3532 = vld [vmem:[%s5 + $0x3c] sm:$0xf]
        %v3533 = vld [vmem:[%s5 + $0x40] sm:$0xf]
        %v3534 = vld [vmem:[%s5 + $0x44] sm:$0xf]
        %v3535 = vld [vmem:[%s5 + $0x48] sm:$0xf]
        %v3536 = vld [vmem:[%s5 + $0x4c] sm:$0xf]
        %v3537 = vld [vmem:[%s5 + $0x50] sm:$0xf]
        %v3538 = vld [vmem:[%s5 + $0x54] sm:$0xf]
        %v3539 = vld [vmem:[%s5 + $0x58] sm:$0x3]
        %v3540 = vld [vmem:[%s6] sm:$0x1]
        %v3542 = vlaneseq
        %v3543 = vshrl.u32 %v3542, 7
        %v3544 = vsub.s32 0, %v3543
        %v3545 = vrot.slane %v3540, %v3544
        %v3570 = vunpack.c.l.b16 %v3517
        %v3571 = vunpack.c.l.b16 %v3518
        %v3572 = vunpack.c.l.b16 %v3519
        %v3573 = vunpack.c.l.b16 %v3520
        %v3574 = vunpack.c.l.b16 %v3521
        %v3575 = vunpack.c.l.b16 %v3522
        %v3576 = vunpack.c.l.b16 %v3523
        %v3577 = vunpack.c.l.b16 %v3524
        %v3578 = vunpack.c.l.b16 %v3525
        %v3579 = vunpack.c.l.b16 %v3526
        %v3580 = vunpack.c.l.b16 %v3527
        %v3581 = vunpack.c.l.b16 %v3528
        %v3582 = vunpack.c.l.b16 %v3529
        %v3583 = vunpack.c.l.b16 %v3530
        %v3584 = vunpack.c.l.b16 %v3531
        %v3585 = vunpack.c.l.b16 %v3532
        %v3586 = vunpack.c.l.b16 %v3533
        %v3587 = vunpack.c.l.b16 %v3534
        %v3588 = vunpack.c.l.b16 %v3535
        %v3589 = vunpack.c.l.b16 %v3536
        %v3590 = vunpack.c.l.b16 %v3537
        %v3591 = vunpack.c.l.b16 %v3538
        %v3592 = vunpack.c.l.b16 %v3539
        %v3593 = vpack.c.b16 %v3571, %v3570
        %v3594 = vpack.c.b16 %v3573, %v3572
        %v3595 = vpack.c.b16 %v3575, %v3574
        %v3596 = vpack.c.b16 %v3577, %v3576
        %v3597 = vpack.c.b16 %v3579, %v3578
        %v3598 = vpack.c.b16 %v3581, %v3580
        %v3599 = vpack.c.b16 %v3583, %v3582
        %v3600 = vpack.c.b16 %v3585, %v3584
        %v3601 = vpack.c.b16 %v3587, %v3586
        %v3602 = vpack.c.b16 %v3589, %v3588
        %v3603 = vpack.c.b16 %v3591, %v3590
        %v3604 = vpack.c.b16 %v3592, %v3592
        %v3617 = vsel %vm2465, %v3502, 0
        %v3620 = vsel %vm2465, %v3504, 0
        %v3623 = vsel %vm2465, %v3506, 0
        %v3626 = vsel %vm2465, %v3508, 0
        %v3629 = vsel %vm2465, %v3510, 0
        %v3632 = vsel %vm2465, %v3512, 0
        %v3635 = vsel %vm2465, %v3514, 0
        %v3638 = vsel %vm2465, %v3516, 0
        %v3641 = vsel %vm2490, %v3604, 0
        %3643 = vmatprep.subr.bf16.mxu0 0
        %3644 = vmatpush1.bf16.msra.mxu0 %v3600
        %3645 = vmatprep.subr.bf16.mxu0 0
        %3646 = vmatpush1.bf16.msra.mxu0 %v3599
        %3647 = vmatprep.subr.bf16.mxu0 0
        %3648 = vmatpush1.bf16.msra.mxu0 %v3598
        %3649 = vmatprep.subr.bf16.mxu0 0
        %3650 = vmatpush1.bf16.msra.mxu0 %v3597
        %3651 = vmatprep.subr.bf16.mxu0 0
        %3652 = vmatpush1.bf16.msra.mxu0 %v3596
        %3653 = vmatprep.subr.bf16.mxu0 0
        %3654 = vmatpush1.bf16.msra.mxu0 %v3595
        %3655 = vmatprep.subr.bf16.mxu0 0
        %3656 = vmatpush1.bf16.msra.mxu0 %v3594
        %3657 = vmatprep.subr.bf16.mxu0 0
        %3658 = vmatpush1.bf16.msra.mxu0 %v3593
        %3659 = vmatprep.subr.bf16.mxu0 0
        %3660 = vmatpush2.bf16.msra.mxu0 0
        %3661 = vmatprep.subr.bf16.mxu0 0
        %3662 = vmatpush2.bf16.msra.mxu0 0
        %3663 = vmatprep.subr.bf16.mxu0 0
        %3664 = vmatpush2.bf16.msra.mxu0 0
        %3665 = vmatprep.subr.bf16.mxu0 0
        %3666 = vmatpush2.bf16.msra.mxu0 0
        %3667 = vmatprep.subr.bf16.mxu0 0
        %3668 = vmatpush2.bf16.msra.mxu0 %v3641
        %3669 = vmatprep.subr.bf16.mxu0 0
        %3670 = vmatpush2.bf16.msra.mxu0 %v3603
        %3671 = vmatprep.subr.bf16.mxu0 0
        %3672 = vmatpush2.bf16.msra.mxu0 %v3602
        %3673 = vmatprep.subr.bf16.mxu0 0
        %3674 = vmatpush2.bf16.msra.mxu0 %v3601
        %3675 = vmatprep.mubr.bf16.mxu0 %v3617
        %3676 = vmatmul.mubr.bf16.gmra.mxu0 %v3501
        %v3677 = vpop.f32.mrf.mxu0
        %v3678 = vadd.f32 %v3545, %v3677
        %v3679 = vpop.f32.mrf.mxu0
        %v3680 = vpop.f32.mrf.mxu0
        %v3681 = vadd.f32 %v3545, %v3680
        %v3682 = vpop.f32.mrf.mxu0
        %3683 = vmatprep.mubr.bf16.mxu0 %v3620
        %3684 = vmatmul.mubr.bf16.gmra.mxu0 %v3503
        %v3685 = vpop.f32.mrf.mxu0
        %v3686 = vadd.f32 %v3545, %v3685
        %v3687 = vpop.f32.mrf.mxu0
        %v3688 = vpop.f32.mrf.mxu0
        %v3689 = vadd.f32 %v3545, %v3688
        %v3690 = vpop.f32.mrf.mxu0
        %3691 = vmatprep.mubr.bf16.mxu0 %v3623
        %3692 = vmatmul.mubr.bf16.gmra.mxu0 %v3505
        %v3693 = vpop.f32.mrf.mxu0
        %v3694 = vadd.f32 %v3545, %v3693
        %v3695 = vpop.f32.mrf.mxu0
        %v3696 = vpop.f32.mrf.mxu0
        %v3697 = vadd.f32 %v3545, %v3696
        %v3698 = vpop.f32.mrf.mxu0
        %3699 = vmatprep.mubr.bf16.mxu0 %v3626
        %3700 = vmatmul.mubr.bf16.gmra.mxu0 %v3507
        %v3701 = vpop.f32.mrf.mxu0
        %v3702 = vadd.f32 %v3545, %v3701
        %v3703 = vpop.f32.mrf.mxu0
        %v3704 = vpop.f32.mrf.mxu0
        %v3705 = vadd.f32 %v3545, %v3704
        %v3706 = vpop.f32.mrf.mxu0
        %3707 = vmatprep.mubr.bf16.mxu0 %v3629
        %3708 = vmatmul.mubr.bf16.gmra.mxu0 %v3509
        %v3709 = vpop.f32.mrf.mxu0
        %v3710 = vadd.f32 %v3545, %v3709
        %v3711 = vpop.f32.mrf.mxu0
        %v3712 = vpop.f32.mrf.mxu0
        %v3713 = vadd.f32 %v3545, %v3712
        %v3714 = vpop.f32.mrf.mxu0
        %3715 = vmatprep.mubr.bf16.mxu0 %v3632
        %3716 = vmatmul.mubr.bf16.gmra.mxu0 %v3511
        %v3717 = vpop.f32.mrf.mxu0
        %v3718 = vadd.f32 %v3545, %v3717
        %v3719 = vpop.f32.mrf.mxu0
        %v3720 = vpop.f32.mrf.mxu0
        %v3721 = vadd.f32 %v3545, %v3720
        %v3722 = vpop.f32.mrf.mxu0
        %3723 = vmatprep.mubr.bf16.mxu0 %v3635
        %3724 = vmatmul.mubr.bf16.gmra.mxu0 %v3513
        %v3725 = vpop.f32.mrf.mxu0
        %v3726 = vadd.f32 %v3545, %v3725
        %v3727 = vpop.f32.mrf.mxu0
        %v3728 = vpop.f32.mrf.mxu0
        %v3729 = vadd.f32 %v3545, %v3728
        %v3730 = vpop.f32.mrf.mxu0
        %3731 = vmatprep.mubr.bf16.mxu0 %v3638
        %3732 = vmatmul.mubr.bf16.gmra.mxu0 %v3515
        %v3733 = vpop.f32.mrf.mxu0
        %v3734 = vadd.f32 %v3545, %v3733
        %v3735 = vpop.f32.mrf.mxu0
        %v3736 = vpop.f32.mrf.mxu0
        %v3737 = vadd.f32 %v3545, %v3736
        %v3738 = vpop.f32.mrf.mxu0
        %3739 = vdwg.mxu0
        %v3740 = vmax.f32 %v3678, 0.0
        %v3741 = vmax.f32 %v3681, 0.0
        %v3742 = vmax.f32 %v3686, 0.0
        %v3743 = vmax.f32 %v3689, 0.0
        %v3744 = vmax.f32 %v3694, 0.0
        %v3745 = vmax.f32 %v3697, 0.0
        %v3746 = vmax.f32 %v3702, 0.0
        %v3747 = vmax.f32 %v3705, 0.0
        %v3748 = vmax.f32 %v3710, 0.0
        %v3749 = vmax.f32 %v3713, 0.0
        %v3750 = vmax.f32 %v3718, 0.0
        %v3751 = vmax.f32 %v3721, 0.0
        %v3752 = vmax.f32 %v3726, 0.0
        %v3753 = vmax.f32 %v3729, 0.0
        %v3754 = vmax.f32 %v3734, 0.0
        %v3755 = vmax.f32 %v3737, 0.0
        %vm3756 = vcmask 326656
        %3757 = vst.msk [vmem:[#allocation6] sm:$0xff] %vm3756, 0.0
        %3758 = vst.msk [vmem:[#allocation6 + $0x8] sm:$0xff] %vm3756, 0.0
        %vm3759 = vcmask 320512
        %3760 = vst.msk [vmem:[#allocation6 + $0x10] sm:$0x3] %vm3759, 0.0
        %3761 = vst.msk [vmem:[#allocation6 + $0x18] sm:$0xff] %vm3756, 0.0
        %3762 = vst.msk [vmem:[#allocation6 + $0x20] sm:$0xff] %vm3756, 0.0
        %3763 = vst.msk [vmem:[#allocation6 + $0x28] sm:$0x3] %vm3759, 0.0
        %3764 = vst.msk [vmem:[#allocation6 + $0x30] sm:$0xff] %vm3756, 0.0
        %3765 = vst.msk [vmem:[#allocation6 + $0x38] sm:$0xff] %vm3756, 0.0
        %3766 = vst.msk [vmem:[#allocation6 + $0x40] sm:$0x3] %vm3759, 0.0
        %3767 = vst.msk [vmem:[#allocation6 + $0x48] sm:$0xff] %vm3756, 0.0
        %3768 = vst.msk [vmem:[#allocation6 + $0x50] sm:$0xff] %vm3756, 0.0
        %3769 = vst.msk [vmem:[#allocation6 + $0x58] sm:$0x3] %vm3759, 0.0
        %3770 = vst.msk [vmem:[#allocation6 + $0x60] sm:$0xff] %vm3756, 0.0
        %3771 = vst.msk [vmem:[#allocation6 + $0x68] sm:$0xff] %vm3756, 0.0
        %3772 = vst.msk [vmem:[#allocation6 + $0x70] sm:$0x3] %vm3759, 0.0
        %3773 = vst.msk [vmem:[#allocation6 + $0x78] sm:$0xff] %vm3756, 0.0
        %3774 = vst.msk [vmem:[#allocation6 + $0x80] sm:$0xff] %vm3756, 0.0
        %3775 = vst.msk [vmem:[#allocation6 + $0x88] sm:$0x3] %vm3759, 0.0
        %3776 = vst.msk [vmem:[#allocation6 + $0x90] sm:$0xff] %vm3756, 0.0
        %3777 = vst.msk [vmem:[#allocation6 + $0x98] sm:$0xff] %vm3756, 0.0
        %3778 = vst.msk [vmem:[#allocation6 + $0xa0] sm:$0x3] %vm3759, 0.0
        %3779 = vst.msk [vmem:[#allocation6 + $0xa8] sm:$0xff] %vm3756, 0.0
        %3780 = vst.msk [vmem:[#allocation6 + $0xb0] sm:$0xff] %vm3756, 0.0
        %3781 = vst.msk [vmem:[#allocation6 + $0xb8] sm:$0x3] %vm3759, 0.0
        %3782 = vst.msk [vmem:[#allocation6 + $0xc0] sm:$0xff] %vm3756, 0.0
        %3783 = vst.msk [vmem:[#allocation6 + $0xc8] sm:$0xff] %vm3756, 0.0
        %3784 = vst.msk [vmem:[#allocation6 + $0xd0] sm:$0x3] %vm3759, 0.0
        %3785 = vst.msk [vmem:[#allocation6 + $0xd8] sm:$0xff] %vm3756, 0.0
        %3786 = vst.msk [vmem:[#allocation6 + $0xe0] sm:$0xff] %vm3756, 0.0
        %3787 = vst.msk [vmem:[#allocation6 + $0xe8] sm:$0x3] %vm3759, 0.0
        %s3788 = scalar_lea.vmem [#allocation6], 24
        %3789 = vst.msk [vmem:[%s3788 + $0x1] sm:$0xff] %vm3756, %v3740
        %3790 = vst.msk [vmem:[%s3788 + $0x9] sm:$0xff] %vm3756, %v3741
        %3791 = vst.msk [vmem:[%s3788 + $0x19] sm:$0xff] %vm3756, %v3742
        %3792 = vst.msk [vmem:[%s3788 + $0x21] sm:$0xff] %vm3756, %v3743
        %3793 = vst.msk [vmem:[%s3788 + $0x31] sm:$0xff] %vm3756, %v3744
        %3794 = vst.msk [vmem:[%s3788 + $0x39] sm:$0xff] %vm3756, %v3745
        %3795 = vst.msk [vmem:[%s3788 + $0x49] sm:$0xff] %vm3756, %v3746
        %3796 = vst.msk [vmem:[%s3788 + $0x51] sm:$0xff] %vm3756, %v3747
        %3797 = vst.msk [vmem:[%s3788 + $0x61] sm:$0xff] %vm3756, %v3748
        %3798 = vst.msk [vmem:[%s3788 + $0x69] sm:$0xff] %vm3756, %v3749
        %3799 = vst.msk [vmem:[%s3788 + $0x79] sm:$0xff] %vm3756, %v3750
        %3800 = vst.msk [vmem:[%s3788 + $0x81] sm:$0xff] %vm3756, %v3751
        %3801 = vst.msk [vmem:[%s3788 + $0x91] sm:$0xff] %vm3756, %v3752
        %3802 = vst.msk [vmem:[%s3788 + $0x99] sm:$0xff] %vm3756, %v3753
        %3803 = vst.msk [vmem:[%s3788 + $0xa9] sm:$0xff] %vm3756, %v3754
        %3804 = vst.msk [vmem:[%s3788 + $0xb1] sm:$0xff] %vm3756, %v3755
        %v3805 = vld [vmem:[#allocation6] sm:$0xff]
        %v3806 = vld [vmem:[#allocation6 + $0x8] sm:$0xff]
        %v3807 = vld [vmem:[#allocation6 + $0x18] sm:$0xff]
        %v3808 = vld [vmem:[#allocation6 + $0x20] sm:$0xff]
        %v3809 = vld [vmem:[#allocation6 + $0x30] sm:$0xff]
        %v3810 = vld [vmem:[#allocation6 + $0x38] sm:$0xff]
        %v3811 = vld [vmem:[#allocation6 + $0x48] sm:$0xff]
        %v3812 = vld [vmem:[#allocation6 + $0x50] sm:$0xff]
        %v3813 = vld [vmem:[#allocation6 + $0x60] sm:$0xff]
        %v3814 = vld [vmem:[#allocation6 + $0x68] sm:$0xff]
        %v3815 = vld [vmem:[#allocation6 + $0x78] sm:$0xff]
        %v3816 = vld [vmem:[#allocation6 + $0x80] sm:$0xff]
        %v3817 = vld [vmem:[#allocation6 + $0x90] sm:$0xff]
        %v3818 = vld [vmem:[#allocation6 + $0x98] sm:$0xff]
        %v3819 = vld [vmem:[#allocation6 + $0xa8] sm:$0xff]
        %v3820 = vld [vmem:[#allocation6 + $0xb0] sm:$0xff]
        %3821 = vst.msk [vmem:[#allocation7] sm:$0xff] %vm3756, %v3805
        %3822 = vst.msk [vmem:[#allocation7 + $0x18] sm:$0xff] %vm3756, %v3806
        %3823 = vst.msk [vmem:[#allocation7 + $0x30] sm:$0xff] %vm3756, %v3807
        %3824 = vst.msk [vmem:[#allocation7 + $0x48] sm:$0xff] %vm3756, %v3808
        %3825 = vst.msk [vmem:[#allocation7 + $0x60] sm:$0xff] %vm3756, %v3809
        %3826 = vst.msk [vmem:[#allocation7 + $0x78] sm:$0xff] %vm3756, %v3810
        %3827 = vst.msk [vmem:[#allocation7 + $0x90] sm:$0xff] %vm3756, %v3811
        %3828 = vst.msk [vmem:[#allocation7 + $0xa8] sm:$0xff] %vm3756, %v3812
        %3829 = vst.msk [vmem:[#allocation7 + $0xc0] sm:$0xff] %vm3756, %v3813
        %3830 = vst.msk [vmem:[#allocation7 + $0xd8] sm:$0xff] %vm3756, %v3814
        %3831 = vst.msk [vmem:[#allocation7 + $0xf0] sm:$0xff] %vm3756, %v3815
        %3832 = vst.msk [vmem:[#allocation7 + $0x108] sm:$0xff] %vm3756, %v3816
        %3833 = vst.msk [vmem:[#allocation7 + $0x120] sm:$0xff] %vm3756, %v3817
        %3834 = vst.msk [vmem:[#allocation7 + $0x138] sm:$0xff] %vm3756, %v3818
        %3835 = vst.msk [vmem:[#allocation7 + $0x150] sm:$0xff] %vm3756, %v3819
        %3836 = vst.msk [vmem:[#allocation7 + $0x168] sm:$0xff] %vm3756, %v3820
        %v3837 = vld [vmem:[#allocation6 + $0x1] sm:$0xff]
        %v3838 = vld [vmem:[#allocation6 + $0x9] sm:$0xff]
        %v3839 = vld [vmem:[#allocation6 + $0x19] sm:$0xff]
        %v3840 = vld [vmem:[#allocation6 + $0x21] sm:$0xff]
        %v3841 = vld [vmem:[#allocation6 + $0x31] sm:$0xff]
        %v3842 = vld [vmem:[#allocation6 + $0x39] sm:$0xff]
        %v3843 = vld [vmem:[#allocation6 + $0x49] sm:$0xff]
        %v3844 = vld [vmem:[#allocation6 + $0x51] sm:$0xff]
        %v3845 = vld [vmem:[#allocation6 + $0x61] sm:$0xff]
        %v3846 = vld [vmem:[#allocation6 + $0x69] sm:$0xff]
        %v3847 = vld [vmem:[#allocation6 + $0x79] sm:$0xff]
        %v3848 = vld [vmem:[#allocation6 + $0x81] sm:$0xff]
        %v3849 = vld [vmem:[#allocation6 + $0x91] sm:$0xff]
        %v3850 = vld [vmem:[#allocation6 + $0x99] sm:$0xff]
        %v3851 = vld [vmem:[#allocation6 + $0xa9] sm:$0xff]
        %v3852 = vld [vmem:[#allocation6 + $0xb1] sm:$0xff]
        %3869 = vrot.lane.b32.xlu0 %v3837, 40
        %v3870 = vpop.permute.xlu0 %3869
        %3871 = vrot.lane.b32.xlu0 %v3838, 40
        %v3872 = vpop.permute.xlu0 %3871
        %3873 = vrot.lane.b32.xlu0 %v3839, 40
        %v3874 = vpop.permute.xlu0 %3873
        %3875 = vrot.lane.b32.xlu0 %v3840, 40
        %v3876 = vpop.permute.xlu0 %3875
        %3877 = vrot.lane.b32.xlu0 %v3841, 40
        %v3878 = vpop.permute.xlu0 %3877
        %3879 = vrot.lane.b32.xlu0 %v3842, 40
        %v3880 = vpop.permute.xlu0 %3879
        %3881 = vrot.lane.b32.xlu0 %v3843, 40
        %v3882 = vpop.permute.xlu0 %3881
        %3883 = vrot.lane.b32.xlu0 %v3844, 40
        %v3884 = vpop.permute.xlu0 %3883
        %3885 = vrot.lane.b32.xlu0 %v3845, 40
        %v3886 = vpop.permute.xlu0 %3885
        %3887 = vrot.lane.b32.xlu0 %v3846, 40
        %v3888 = vpop.permute.xlu0 %3887
        %3889 = vrot.lane.b32.xlu0 %v3847, 40
        %v3890 = vpop.permute.xlu0 %3889
        %3891 = vrot.lane.b32.xlu0 %v3848, 40
        %v3892 = vpop.permute.xlu0 %3891
        %3893 = vrot.lane.b32.xlu0 %v3849, 40
        %v3894 = vpop.permute.xlu0 %3893
        %3895 = vrot.lane.b32.xlu0 %v3850, 40
        %v3896 = vpop.permute.xlu0 %3895
        %3897 = vrot.lane.b32.xlu0 %v3851, 40
        %v3898 = vpop.permute.xlu0 %3897
        %3899 = vrot.lane.b32.xlu0 %v3852, 40
        %v3900 = vpop.permute.xlu0 %3899
        %vm3917 = vcmask 654656
        %3918 = vst.msk [vmem:[#allocation7] sm:$0xff] %vm3917, %v3870
        %3919 = vst.msk [vmem:[#allocation7 + $0x18] sm:$0xff] %vm3917, %v3872
        %3920 = vst.msk [vmem:[#allocation7 + $0x30] sm:$0xff] %vm3917, %v3874
        %3921 = vst.msk [vmem:[#allocation7 + $0x48] sm:$0xff] %vm3917, %v3876
        %3922 = vst.msk [vmem:[#allocation7 + $0x60] sm:$0xff] %vm3917, %v3878
        %3923 = vst.msk [vmem:[#allocation7 + $0x78] sm:$0xff] %vm3917, %v3880
        %3924 = vst.msk [vmem:[#allocation7 + $0x90] sm:$0xff] %vm3917, %v3882
        %3925 = vst.msk [vmem:[#allocation7 + $0xa8] sm:$0xff] %vm3917, %v3884
        %3926 = vst.msk [vmem:[#allocation7 + $0xc0] sm:$0xff] %vm3917, %v3886
        %3927 = vst.msk [vmem:[#allocation7 + $0xd8] sm:$0xff] %vm3917, %v3888
        %3928 = vst.msk [vmem:[#allocation7 + $0xf0] sm:$0xff] %vm3917, %v3890
        %3929 = vst.msk [vmem:[#allocation7 + $0x108] sm:$0xff] %vm3917, %v3892
        %3930 = vst.msk [vmem:[#allocation7 + $0x120] sm:$0xff] %vm3917, %v3894
        %3931 = vst.msk [vmem:[#allocation7 + $0x138] sm:$0xff] %vm3917, %v3896
        %3932 = vst.msk [vmem:[#allocation7 + $0x150] sm:$0xff] %vm3917, %v3898
        %3933 = vst.msk [vmem:[#allocation7 + $0x168] sm:$0xff] %vm3917, %v3900
        %v3934 = vld [vmem:[#allocation6 + $0x2] sm:$0xff]
        %v3935 = vld [vmem:[#allocation6 + $0xa] sm:$0xff]
        %v3936 = vld [vmem:[#allocation6 + $0x1a] sm:$0xff]
        %v3937 = vld [vmem:[#allocation6 + $0x22] sm:$0xff]
        %v3938 = vld [vmem:[#allocation6 + $0x32] sm:$0xff]
        %v3939 = vld [vmem:[#allocation6 + $0x3a] sm:$0xff]
        %v3940 = vld [vmem:[#allocation6 + $0x4a] sm:$0xff]
        %v3941 = vld [vmem:[#allocation6 + $0x52] sm:$0xff]
        %v3942 = vld [vmem:[#allocation6 + $0x62] sm:$0xff]
        %v3943 = vld [vmem:[#allocation6 + $0x6a] sm:$0xff]
        %v3944 = vld [vmem:[#allocation6 + $0x7a] sm:$0xff]
        %v3945 = vld [vmem:[#allocation6 + $0x82] sm:$0xff]
        %v3946 = vld [vmem:[#allocation6 + $0x92] sm:$0xff]
        %v3947 = vld [vmem:[#allocation6 + $0x9a] sm:$0xff]
        %v3948 = vld [vmem:[#allocation6 + $0xaa] sm:$0xff]
        %v3949 = vld [vmem:[#allocation6 + $0xb2] sm:$0xff]
        %3966 = vrot.lane.b32.xlu0 %v3934, 80
        %v3967 = vpop.permute.xlu0 %3966
        %3968 = vrot.lane.b32.xlu0 %v3935, 80
        %v3969 = vpop.permute.xlu0 %3968
        %3970 = vrot.lane.b32.xlu0 %v3936, 80
        %v3971 = vpop.permute.xlu0 %3970
        %3972 = vrot.lane.b32.xlu0 %v3937, 80
        %v3973 = vpop.permute.xlu0 %3972
        %3974 = vrot.lane.b32.xlu0 %v3938, 80
        %v3975 = vpop.permute.xlu0 %3974
        %3976 = vrot.lane.b32.xlu0 %v3939, 80
        %v3977 = vpop.permute.xlu0 %3976
        %3978 = vrot.lane.b32.xlu0 %v3940, 80
        %v3979 = vpop.permute.xlu0 %3978
        %3980 = vrot.lane.b32.xlu0 %v3941, 80
        %v3981 = vpop.permute.xlu0 %3980
        %3982 = vrot.lane.b32.xlu0 %v3942, 80
        %v3983 = vpop.permute.xlu0 %3982
        %3984 = vrot.lane.b32.xlu0 %v3943, 80
        %v3985 = vpop.permute.xlu0 %3984
        %3986 = vrot.lane.b32.xlu0 %v3944, 80
        %v3987 = vpop.permute.xlu0 %3986
        %3988 = vrot.lane.b32.xlu0 %v3945, 80
        %v3989 = vpop.permute.xlu0 %3988
        %3990 = vrot.lane.b32.xlu0 %v3946, 80
        %v3991 = vpop.permute.xlu0 %3990
        %3992 = vrot.lane.b32.xlu0 %v3947, 80
        %v3993 = vpop.permute.xlu0 %3992
        %3994 = vrot.lane.b32.xlu0 %v3948, 80
        %v3995 = vpop.permute.xlu0 %3994
        %3996 = vrot.lane.b32.xlu0 %v3949, 80
        %v3997 = vpop.permute.xlu0 %3996
        %vm4014 = vcmask 982656
        %4015 = vst.msk [vmem:[#allocation7] sm:$0xff] %vm4014, %v3967
        %4016 = vst.msk [vmem:[#allocation7 + $0x18] sm:$0xff] %vm4014, %v3969
        %4017 = vst.msk [vmem:[#allocation7 + $0x30] sm:$0xff] %vm4014, %v3971
        %4018 = vst.msk [vmem:[#allocation7 + $0x48] sm:$0xff] %vm4014, %v3973
        %4019 = vst.msk [vmem:[#allocation7 + $0x60] sm:$0xff] %vm4014, %v3975
        %4020 = vst.msk [vmem:[#allocation7 + $0x78] sm:$0xff] %vm4014, %v3977
        %4021 = vst.msk [vmem:[#allocation7 + $0x90] sm:$0xff] %vm4014, %v3979
        %4022 = vst.msk [vmem:[#allocation7 + $0xa8] sm:$0xff] %vm4014, %v3981
        %4023 = vst.msk [vmem:[#allocation7 + $0xc0] sm:$0xff] %vm4014, %v3983
        %4024 = vst.msk [vmem:[#allocation7 + $0xd8] sm:$0xff] %vm4014, %v3985
        %4025 = vst.msk [vmem:[#allocation7 + $0xf0] sm:$0xff] %vm4014, %v3987
        %4026 = vst.msk [vmem:[#allocation7 + $0x108] sm:$0xff] %vm4014, %v3989
        %4027 = vst.msk [vmem:[#allocation7 + $0x120] sm:$0xff] %vm4014, %v3991
        %4028 = vst.msk [vmem:[#allocation7 + $0x138] sm:$0xff] %vm4014, %v3993
        %4029 = vst.msk [vmem:[#allocation7 + $0x150] sm:$0xff] %vm4014, %v3995
        %4030 = vst.msk [vmem:[#allocation7 + $0x168] sm:$0xff] %vm4014, %v3997
        %v4031 = vld [vmem:[%s3788] sm:$0xff]
        %v4032 = vld [vmem:[%s3788 + $0x8] sm:$0xff]
        %v4033 = vld [vmem:[%s3788 + $0x18] sm:$0xff]
        %v4034 = vld [vmem:[%s3788 + $0x20] sm:$0xff]
        %v4035 = vld [vmem:[%s3788 + $0x30] sm:$0xff]
        %v4036 = vld [vmem:[%s3788 + $0x38] sm:$0xff]
        %v4037 = vld [vmem:[%s3788 + $0x48] sm:$0xff]
        %v4038 = vld [vmem:[%s3788 + $0x50] sm:$0xff]
        %v4039 = vld [vmem:[%s3788 + $0x60] sm:$0xff]
        %v4040 = vld [vmem:[%s3788 + $0x68] sm:$0xff]
        %v4041 = vld [vmem:[%s3788 + $0x78] sm:$0xff]
        %v4042 = vld [vmem:[%s3788 + $0x80] sm:$0xff]
        %v4043 = vld [vmem:[%s3788 + $0x90] sm:$0xff]
        %v4044 = vld [vmem:[%s3788 + $0x98] sm:$0xff]
        %v4045 = vld [vmem:[%s3788 + $0xa8] sm:$0xff]
        %v4046 = vld [vmem:[%s3788 + $0xb0] sm:$0xff]
        %4063 = vrot.lane.b32.xlu0 %v4031, 120
        %v4064 = vpop.permute.xlu0 %4063
        %4065 = vrot.lane.b32.xlu0 %v4032, 120
        %v4066 = vpop.permute.xlu0 %4065
        %4067 = vrot.lane.b32.xlu0 %v4033, 120
        %v4068 = vpop.permute.xlu0 %4067
        %4069 = vrot.lane.b32.xlu0 %v4034, 120
        %v4070 = vpop.permute.xlu0 %4069
        %4071 = vrot.lane.b32.xlu0 %v4035, 120
        %v4072 = vpop.permute.xlu0 %4071
        %4073 = vrot.lane.b32.xlu0 %v4036, 120
        %v4074 = vpop.permute.xlu0 %4073
        %4075 = vrot.lane.b32.xlu0 %v4037, 120
        %v4076 = vpop.permute.xlu0 %4075
        %4077 = vrot.lane.b32.xlu0 %v4038, 120
        %v4078 = vpop.permute.xlu0 %4077
        %4079 = vrot.lane.b32.xlu0 %v4039, 120
        %v4080 = vpop.permute.xlu0 %4079
        %4081 = vrot.lane.b32.xlu0 %v4040, 120
        %v4082 = vpop.permute.xlu0 %4081
        %4083 = vrot.lane.b32.xlu0 %v4041, 120
        %v4084 = vpop.permute.xlu0 %4083
        %4085 = vrot.lane.b32.xlu0 %v4042, 120
        %v4086 = vpop.permute.xlu0 %4085
        %4087 = vrot.lane.b32.xlu0 %v4043, 120
        %v4088 = vpop.permute.xlu0 %4087
        %4089 = vrot.lane.b32.xlu0 %v4044, 120
        %v4090 = vpop.permute.xlu0 %4089
        %4091 = vrot.lane.b32.xlu0 %v4045, 120
        %v4092 = vpop.permute.xlu0 %4091
        %4093 = vrot.lane.b32.xlu0 %v4046, 120
        %v4094 = vpop.permute.xlu0 %4093
        %4111 = vst.msk [vmem:[#allocation7] sm:$0xff] %vm2090, %v4064
        %vm4112 = vcmask 261120
        %4113 = vst.msk [vmem:[#allocation7 + $0x8] sm:$0xff] %vm4112, %v4064
        %4114 = vst.msk [vmem:[#allocation7 + $0x18] sm:$0xff] %vm2090, %v4066
        %4115 = vst.msk [vmem:[#allocation7 + $0x20] sm:$0xff] %vm4112, %v4066
        %4116 = vst.msk [vmem:[#allocation7 + $0x30] sm:$0xff] %vm2090, %v4068
        %4117 = vst.msk [vmem:[#allocation7 + $0x38] sm:$0xff] %vm4112, %v4068
        %4118 = vst.msk [vmem:[#allocation7 + $0x48] sm:$0xff] %vm2090, %v4070
        %4119 = vst.msk [vmem:[#allocation7 + $0x50] sm:$0xff] %vm4112, %v4070
        %4120 = vst.msk [vmem:[#allocation7 + $0x60] sm:$0xff] %vm2090, %v4072
        %4121 = vst.msk [vmem:[#allocation7 + $0x68] sm:$0xff] %vm4112, %v4072
        %4122 = vst.msk [vmem:[#allocation7 + $0x78] sm:$0xff] %vm2090, %v4074
        %4123 = vst.msk [vmem:[#allocation7 + $0x80] sm:$0xff] %vm4112, %v4074
        %4124 = vst.msk [vmem:[#allocation7 + $0x90] sm:$0xff] %vm2090, %v4076
        %4125 = vst.msk [vmem:[#allocation7 + $0x98] sm:$0xff] %vm4112, %v4076
        %4126 = vst.msk [vmem:[#allocation7 + $0xa8] sm:$0xff] %vm2090, %v4078
        %4127 = vst.msk [vmem:[#allocation7 + $0xb0] sm:$0xff] %vm4112, %v4078
        %4128 = vst.msk [vmem:[#allocation7 + $0xc0] sm:$0xff] %vm2090, %v4080
        %4129 = vst.msk [vmem:[#allocation7 + $0xc8] sm:$0xff] %vm4112, %v4080
        %4130 = vst.msk [vmem:[#allocation7 + $0xd8] sm:$0xff] %vm2090, %v4082
        %4131 = vst.msk [vmem:[#allocation7 + $0xe0] sm:$0xff] %vm4112, %v4082
        %4132 = vst.msk [vmem:[#allocation7 + $0xf0] sm:$0xff] %vm2090, %v4084
        %4133 = vst.msk [vmem:[#allocation7 + $0xf8] sm:$0xff] %vm4112, %v4084
        %4134 = vst.msk [vmem:[#allocation7 + $0x108] sm:$0xff] %vm2090, %v4086
        %4135 = vst.msk [vmem:[#allocation7 + $0x110] sm:$0xff] %vm4112, %v4086
        %4136 = vst.msk [vmem:[#allocation7 + $0x120] sm:$0xff] %vm2090, %v4088
        %4137 = vst.msk [vmem:[#allocation7 + $0x128] sm:$0xff] %vm4112, %v4088
        %4138 = vst.msk [vmem:[#allocation7 + $0x138] sm:$0xff] %vm2090, %v4090
        %4139 = vst.msk [vmem:[#allocation7 + $0x140] sm:$0xff] %vm4112, %v4090
        %4140 = vst.msk [vmem:[#allocation7 + $0x150] sm:$0xff] %vm2090, %v4092
        %4141 = vst.msk [vmem:[#allocation7 + $0x158] sm:$0xff] %vm4112, %v4092
        %4142 = vst.msk [vmem:[#allocation7 + $0x168] sm:$0xff] %vm2090, %v4094
        %4143 = vst.msk [vmem:[#allocation7 + $0x170] sm:$0xff] %vm4112, %v4094
        %v4144 = vld [vmem:[%s3788 + $0x1] sm:$0xff]
        %v4145 = vld [vmem:[%s3788 + $0x9] sm:$0xff]
        %v4146 = vld [vmem:[%s3788 + $0x19] sm:$0xff]
        %v4147 = vld [vmem:[%s3788 + $0x21] sm:$0xff]
        %v4148 = vld [vmem:[%s3788 + $0x31] sm:$0xff]
        %v4149 = vld [vmem:[%s3788 + $0x39] sm:$0xff]
        %v4150 = vld [vmem:[%s3788 + $0x49] sm:$0xff]
        %v4151 = vld [vmem:[%s3788 + $0x51] sm:$0xff]
        %v4152 = vld [vmem:[%s3788 + $0x61] sm:$0xff]
        %v4153 = vld [vmem:[%s3788 + $0x69] sm:$0xff]
        %v4154 = vld [vmem:[%s3788 + $0x79] sm:$0xff]
        %v4155 = vld [vmem:[%s3788 + $0x81] sm:$0xff]
        %v4156 = vld [vmem:[%s3788 + $0x91] sm:$0xff]
        %v4157 = vld [vmem:[%s3788 + $0x99] sm:$0xff]
        %v4158 = vld [vmem:[%s3788 + $0xa9] sm:$0xff]
        %v4159 = vld [vmem:[%s3788 + $0xb1] sm:$0xff]
        %4176 = vrot.lane.b32.xlu0 %v4144, 32
        %v4177 = vpop.permute.xlu0 %4176
        %4178 = vrot.lane.b32.xlu0 %v4145, 32
        %v4179 = vpop.permute.xlu0 %4178
        %4180 = vrot.lane.b32.xlu0 %v4146, 32
        %v4181 = vpop.permute.xlu0 %4180
        %4182 = vrot.lane.b32.xlu0 %v4147, 32
        %v4183 = vpop.permute.xlu0 %4182
        %4184 = vrot.lane.b32.xlu0 %v4148, 32
        %v4185 = vpop.permute.xlu0 %4184
        %4186 = vrot.lane.b32.xlu0 %v4149, 32
        %v4187 = vpop.permute.xlu0 %4186
        %4188 = vrot.lane.b32.xlu0 %v4150, 32
        %v4189 = vpop.permute.xlu0 %4188
        %4190 = vrot.lane.b32.xlu0 %v4151, 32
        %v4191 = vpop.permute.xlu0 %4190
        %4192 = vrot.lane.b32.xlu0 %v4152, 32
        %v4193 = vpop.permute.xlu0 %4192
        %4194 = vrot.lane.b32.xlu0 %v4153, 32
        %v4195 = vpop.permute.xlu0 %4194
        %4196 = vrot.lane.b32.xlu0 %v4154, 32
        %v4197 = vpop.permute.xlu0 %4196
        %4198 = vrot.lane.b32.xlu0 %v4155, 32
        %v4199 = vpop.permute.xlu0 %4198
        %4200 = vrot.lane.b32.xlu0 %v4156, 32
        %v4201 = vpop.permute.xlu0 %4200
        %4202 = vrot.lane.b32.xlu0 %v4157, 32
        %v4203 = vpop.permute.xlu0 %4202
        %4204 = vrot.lane.b32.xlu0 %v4158, 32
        %v4205 = vpop.permute.xlu0 %4204
        %4206 = vrot.lane.b32.xlu0 %v4159, 32
        %v4207 = vpop.permute.xlu0 %4206
        %vm4224 = vcmask 589056
        %4225 = vst.msk [vmem:[#allocation7 + $0x8] sm:$0xff] %vm4224, %v4177
        %4226 = vst.msk [vmem:[#allocation7 + $0x20] sm:$0xff] %vm4224, %v4179
        %4227 = vst.msk [vmem:[#allocation7 + $0x38] sm:$0xff] %vm4224, %v4181
        %4228 = vst.msk [vmem:[#allocation7 + $0x50] sm:$0xff] %vm4224, %v4183
        %4229 = vst.msk [vmem:[#allocation7 + $0x68] sm:$0xff] %vm4224, %v4185
        %4230 = vst.msk [vmem:[#allocation7 + $0x80] sm:$0xff] %vm4224, %v4187
        %4231 = vst.msk [vmem:[#allocation7 + $0x98] sm:$0xff] %vm4224, %v4189
        %4232 = vst.msk [vmem:[#allocation7 + $0xb0] sm:$0xff] %vm4224, %v4191
        %4233 = vst.msk [vmem:[#allocation7 + $0xc8] sm:$0xff] %vm4224, %v4193
        %4234 = vst.msk [vmem:[#allocation7 + $0xe0] sm:$0xff] %vm4224, %v4195
        %4235 = vst.msk [vmem:[#allocation7 + $0xf8] sm:$0xff] %vm4224, %v4197
        %4236 = vst.msk [vmem:[#allocation7 + $0x110] sm:$0xff] %vm4224, %v4199
        %4237 = vst.msk [vmem:[#allocation7 + $0x128] sm:$0xff] %vm4224, %v4201
        %4238 = vst.msk [vmem:[#allocation7 + $0x140] sm:$0xff] %vm4224, %v4203
        %4239 = vst.msk [vmem:[#allocation7 + $0x158] sm:$0xff] %vm4224, %v4205
        %4240 = vst.msk [vmem:[#allocation7 + $0x170] sm:$0xff] %vm4224, %v4207
        %v4241 = vld [vmem:[%s3788 + $0x2] sm:$0xff]
        %v4242 = vld [vmem:[%s3788 + $0xa] sm:$0xff]
        %v4243 = vld [vmem:[%s3788 + $0x1a] sm:$0xff]
        %v4244 = vld [vmem:[%s3788 + $0x22] sm:$0xff]
        %v4245 = vld [vmem:[%s3788 + $0x32] sm:$0xff]
        %v4246 = vld [vmem:[%s3788 + $0x3a] sm:$0xff]
        %v4247 = vld [vmem:[%s3788 + $0x4a] sm:$0xff]
        %v4248 = vld [vmem:[%s3788 + $0x52] sm:$0xff]
        %v4249 = vld [vmem:[%s3788 + $0x62] sm:$0xff]
        %v4250 = vld [vmem:[%s3788 + $0x6a] sm:$0xff]
        %v4251 = vld [vmem:[%s3788 + $0x7a] sm:$0xff]
        %v4252 = vld [vmem:[%s3788 + $0x82] sm:$0xff]
        %v4253 = vld [vmem:[%s3788 + $0x92] sm:$0xff]
        %v4254 = vld [vmem:[%s3788 + $0x9a] sm:$0xff]
        %v4255 = vld [vmem:[%s3788 + $0xaa] sm:$0xff]
        %v4256 = vld [vmem:[%s3788 + $0xb2] sm:$0xff]
        %4273 = vrot.lane.b32.xlu0 %v4241, 72
        %v4274 = vpop.permute.xlu0 %4273
        %4275 = vrot.lane.b32.xlu0 %v4242, 72
        %v4276 = vpop.permute.xlu0 %4275
        %4277 = vrot.lane.b32.xlu0 %v4243, 72
        %v4278 = vpop.permute.xlu0 %4277
        %4279 = vrot.lane.b32.xlu0 %v4244, 72
        %v4280 = vpop.permute.xlu0 %4279
        %4281 = vrot.lane.b32.xlu0 %v4245, 72
        %v4282 = vpop.permute.xlu0 %4281
        %4283 = vrot.lane.b32.xlu0 %v4246, 72
        %v4284 = vpop.permute.xlu0 %4283
        %4285 = vrot.lane.b32.xlu0 %v4247, 72
        %v4286 = vpop.permute.xlu0 %4285
        %4287 = vrot.lane.b32.xlu0 %v4248, 72
        %v4288 = vpop.permute.xlu0 %4287
        %4289 = vrot.lane.b32.xlu0 %v4249, 72
        %v4290 = vpop.permute.xlu0 %4289
        %4291 = vrot.lane.b32.xlu0 %v4250, 72
        %v4292 = vpop.permute.xlu0 %4291
        %4293 = vrot.lane.b32.xlu0 %v4251, 72
        %v4294 = vpop.permute.xlu0 %4293
        %4295 = vrot.lane.b32.xlu0 %v4252, 72
        %v4296 = vpop.permute.xlu0 %4295
        %4297 = vrot.lane.b32.xlu0 %v4253, 72
        %v4298 = vpop.permute.xlu0 %4297
        %4299 = vrot.lane.b32.xlu0 %v4254, 72
        %v4300 = vpop.permute.xlu0 %4299
        %4301 = vrot.lane.b32.xlu0 %v4255, 72
        %v4302 = vpop.permute.xlu0 %4301
        %4303 = vrot.lane.b32.xlu0 %v4256, 72
        %v4304 = vpop.permute.xlu0 %4303
        %vm4321 = vcmask 917056
        %4322 = vst.msk [vmem:[#allocation7 + $0x8] sm:$0xff] %vm4321, %v4274
        %4323 = vst.msk [vmem:[#allocation7 + $0x20] sm:$0xff] %vm4321, %v4276
        %4324 = vst.msk [vmem:[#allocation7 + $0x38] sm:$0xff] %vm4321, %v4278
        %4325 = vst.msk [vmem:[#allocation7 + $0x50] sm:$0xff] %vm4321, %v4280
        %4326 = vst.msk [vmem:[#allocation7 + $0x68] sm:$0xff] %vm4321, %v4282
        %4327 = vst.msk [vmem:[#allocation7 + $0x80] sm:$0xff] %vm4321, %v4284
        %4328 = vst.msk [vmem:[#allocation7 + $0x98] sm:$0xff] %vm4321, %v4286
        %4329 = vst.msk [vmem:[#allocation7 + $0xb0] sm:$0xff] %vm4321, %v4288
        %4330 = vst.msk [vmem:[#allocation7 + $0xc8] sm:$0xff] %vm4321, %v4290
        %4331 = vst.msk [vmem:[#allocation7 + $0xe0] sm:$0xff] %vm4321, %v4292
        %4332 = vst.msk [vmem:[#allocation7 + $0xf8] sm:$0xff] %vm4321, %v4294
        %4333 = vst.msk [vmem:[#allocation7 + $0x110] sm:$0xff] %vm4321, %v4296
        %4334 = vst.msk [vmem:[#allocation7 + $0x128] sm:$0xff] %vm4321, %v4298
        %4335 = vst.msk [vmem:[#allocation7 + $0x140] sm:$0xff] %vm4321, %v4300
        %4336 = vst.msk [vmem:[#allocation7 + $0x158] sm:$0xff] %vm4321, %v4302
        %4337 = vst.msk [vmem:[#allocation7 + $0x170] sm:$0xff] %vm4321, %v4304
        %s4338 = scalar_lea.vmem [#allocation6], 48
        %v4339 = vld [vmem:[%s4338] sm:$0xff]
        %v4340 = vld [vmem:[%s4338 + $0x8] sm:$0xff]
        %v4341 = vld [vmem:[%s4338 + $0x18] sm:$0xff]
        %v4342 = vld [vmem:[%s4338 + $0x20] sm:$0xff]
        %v4343 = vld [vmem:[%s4338 + $0x30] sm:$0xff]
        %v4344 = vld [vmem:[%s4338 + $0x38] sm:$0xff]
        %v4345 = vld [vmem:[%s4338 + $0x48] sm:$0xff]
        %v4346 = vld [vmem:[%s4338 + $0x50] sm:$0xff]
        %v4347 = vld [vmem:[%s4338 + $0x60] sm:$0xff]
        %v4348 = vld [vmem:[%s4338 + $0x68] sm:$0xff]
        %v4349 = vld [vmem:[%s4338 + $0x78] sm:$0xff]
        %v4350 = vld [vmem:[%s4338 + $0x80] sm:$0xff]
        %v4351 = vld [vmem:[%s4338 + $0x90] sm:$0xff]
        %v4352 = vld [vmem:[%s4338 + $0x98] sm:$0xff]
        %v4353 = vld [vmem:[%s4338 + $0xa8] sm:$0xff]
        %v4354 = vld [vmem:[%s4338 + $0xb0] sm:$0xff]
        %4371 = vrot.lane.b32.xlu0 %v4339, 112
        %v4372 = vpop.permute.xlu0 %4371
        %4373 = vrot.lane.b32.xlu0 %v4340, 112
        %v4374 = vpop.permute.xlu0 %4373
        %4375 = vrot.lane.b32.xlu0 %v4341, 112
        %v4376 = vpop.permute.xlu0 %4375
        %4377 = vrot.lane.b32.xlu0 %v4342, 112
        %v4378 = vpop.permute.xlu0 %4377
        %4379 = vrot.lane.b32.xlu0 %v4343, 112
        %v4380 = vpop.permute.xlu0 %4379
        %4381 = vrot.lane.b32.xlu0 %v4344, 112
        %v4382 = vpop.permute.xlu0 %4381
        %4383 = vrot.lane.b32.xlu0 %v4345, 112
        %v4384 = vpop.permute.xlu0 %4383
        %4385 = vrot.lane.b32.xlu0 %v4346, 112
        %v4386 = vpop.permute.xlu0 %4385
        %4387 = vrot.lane.b32.xlu0 %v4347, 112
        %v4388 = vpop.permute.xlu0 %4387
        %4389 = vrot.lane.b32.xlu0 %v4348, 112
        %v4390 = vpop.permute.xlu0 %4389
        %4391 = vrot.lane.b32.xlu0 %v4349, 112
        %v4392 = vpop.permute.xlu0 %4391
        %4393 = vrot.lane.b32.xlu0 %v4350, 112
        %v4394 = vpop.permute.xlu0 %4393
        %4395 = vrot.lane.b32.xlu0 %v4351, 112
        %v4396 = vpop.permute.xlu0 %4395
        %4397 = vrot.lane.b32.xlu0 %v4352, 112
        %v4398 = vpop.permute.xlu0 %4397
        %4399 = vrot.lane.b32.xlu0 %v4353, 112
        %v4400 = vpop.permute.xlu0 %4399
        %4401 = vrot.lane.b32.xlu0 %v4354, 112
        %v4402 = vpop.permute.xlu0 %4401
        %vm4419 = vcmask 1048448
        %4420 = vst.msk [vmem:[#allocation7 + $0x8] sm:$0xff] %vm4419, %v4372
        %vm4421 = vcmask 195584
        %4422 = vst.msk [vmem:[#allocation7 + $0x10] sm:$0xff] %vm4421, %v4372
        %4423 = vst.msk [vmem:[#allocation7 + $0x20] sm:$0xff] %vm4419, %v4374
        %4424 = vst.msk [vmem:[#allocation7 + $0x28] sm:$0xff] %vm4421, %v4374
        %4425 = vst.msk [vmem:[#allocation7 + $0x38] sm:$0xff] %vm4419, %v4376
        %4426 = vst.msk [vmem:[#allocation7 + $0x40] sm:$0xff] %vm4421, %v4376
        %4427 = vst.msk [vmem:[#allocation7 + $0x50] sm:$0xff] %vm4419, %v4378
        %4428 = vst.msk [vmem:[#allocation7 + $0x58] sm:$0xff] %vm4421, %v4378
        %4429 = vst.msk [vmem:[#allocation7 + $0x68] sm:$0xff] %vm4419, %v4380
        %4430 = vst.msk [vmem:[#allocation7 + $0x70] sm:$0xff] %vm4421, %v4380
        %4431 = vst.msk [vmem:[#allocation7 + $0x80] sm:$0xff] %vm4419, %v4382
        %4432 = vst.msk [vmem:[#allocation7 + $0x88] sm:$0xff] %vm4421, %v4382
        %4433 = vst.msk [vmem:[#allocation7 + $0x98] sm:$0xff] %vm4419, %v4384
        %4434 = vst.msk [vmem:[#allocation7 + $0xa0] sm:$0xff] %vm4421, %v4384
        %4435 = vst.msk [vmem:[#allocation7 + $0xb0] sm:$0xff] %vm4419, %v4386
        %4436 = vst.msk [vmem:[#allocation7 + $0xb8] sm:$0xff] %vm4421, %v4386
        %4437 = vst.msk [vmem:[#allocation7 + $0xc8] sm:$0xff] %vm4419, %v4388
        %4438 = vst.msk [vmem:[#allocation7 + $0xd0] sm:$0xff] %vm4421, %v4388
        %4439 = vst.msk [vmem:[#allocation7 + $0xe0] sm:$0xff] %vm4419, %v4390
        %4440 = vst.msk [vmem:[#allocation7 + $0xe8] sm:$0xff] %vm4421, %v4390
        %4441 = vst.msk [vmem:[#allocation7 + $0xf8] sm:$0xff] %vm4419, %v4392
        %4442 = vst.msk [vmem:[#allocation7 + $0x100] sm:$0xff] %vm4421, %v4392
        %4443 = vst.msk [vmem:[#allocation7 + $0x110] sm:$0xff] %vm4419, %v4394
        %4444 = vst.msk [vmem:[#allocation7 + $0x118] sm:$0xff] %vm4421, %v4394
        %4445 = vst.msk [vmem:[#allocation7 + $0x128] sm:$0xff] %vm4419, %v4396
        %4446 = vst.msk [vmem:[#allocation7 + $0x130] sm:$0xff] %vm4421, %v4396
        %4447 = vst.msk [vmem:[#allocation7 + $0x140] sm:$0xff] %vm4419, %v4398
        %4448 = vst.msk [vmem:[#allocation7 + $0x148] sm:$0xff] %vm4421, %v4398
        %4449 = vst.msk [vmem:[#allocation7 + $0x158] sm:$0xff] %vm4419, %v4400
        %4450 = vst.msk [vmem:[#allocation7 + $0x160] sm:$0xff] %vm4421, %v4400
        %4451 = vst.msk [vmem:[#allocation7 + $0x170] sm:$0xff] %vm4419, %v4402
        %4452 = vst.msk [vmem:[#allocation7 + $0x178] sm:$0xff] %vm4421, %v4402
        %v4453 = vld [vmem:[%s4338 + $0x1] sm:$0xff]
        %v4454 = vld [vmem:[%s4338 + $0x9] sm:$0xff]
        %v4455 = vld [vmem:[%s4338 + $0x19] sm:$0xff]
        %v4456 = vld [vmem:[%s4338 + $0x21] sm:$0xff]
        %v4457 = vld [vmem:[%s4338 + $0x31] sm:$0xff]
        %v4458 = vld [vmem:[%s4338 + $0x39] sm:$0xff]
        %v4459 = vld [vmem:[%s4338 + $0x49] sm:$0xff]
        %v4460 = vld [vmem:[%s4338 + $0x51] sm:$0xff]
        %v4461 = vld [vmem:[%s4338 + $0x61] sm:$0xff]
        %v4462 = vld [vmem:[%s4338 + $0x69] sm:$0xff]
        %v4463 = vld [vmem:[%s4338 + $0x79] sm:$0xff]
        %v4464 = vld [vmem:[%s4338 + $0x81] sm:$0xff]
        %v4465 = vld [vmem:[%s4338 + $0x91] sm:$0xff]
        %v4466 = vld [vmem:[%s4338 + $0x99] sm:$0xff]
        %v4467 = vld [vmem:[%s4338 + $0xa9] sm:$0xff]
        %v4468 = vld [vmem:[%s4338 + $0xb1] sm:$0xff]
        %4485 = vrot.lane.b32.xlu0 %v4453, 24
        %v4486 = vpop.permute.xlu0 %4485
        %4487 = vrot.lane.b32.xlu0 %v4454, 24
        %v4488 = vpop.permute.xlu0 %4487
        %4489 = vrot.lane.b32.xlu0 %v4455, 24
        %v4490 = vpop.permute.xlu0 %4489
        %4491 = vrot.lane.b32.xlu0 %v4456, 24
        %v4492 = vpop.permute.xlu0 %4491
        %4493 = vrot.lane.b32.xlu0 %v4457, 24
        %v4494 = vpop.permute.xlu0 %4493
        %4495 = vrot.lane.b32.xlu0 %v4458, 24
        %v4496 = vpop.permute.xlu0 %4495
        %4497 = vrot.lane.b32.xlu0 %v4459, 24
        %v4498 = vpop.permute.xlu0 %4497
        %4499 = vrot.lane.b32.xlu0 %v4460, 24
        %v4500 = vpop.permute.xlu0 %4499
        %4501 = vrot.lane.b32.xlu0 %v4461, 24
        %v4502 = vpop.permute.xlu0 %4501
        %4503 = vrot.lane.b32.xlu0 %v4462, 24
        %v4504 = vpop.permute.xlu0 %4503
        %4505 = vrot.lane.b32.xlu0 %v4463, 24
        %v4506 = vpop.permute.xlu0 %4505
        %4507 = vrot.lane.b32.xlu0 %v4464, 24
        %v4508 = vpop.permute.xlu0 %4507
        %4509 = vrot.lane.b32.xlu0 %v4465, 24
        %v4510 = vpop.permute.xlu0 %4509
        %4511 = vrot.lane.b32.xlu0 %v4466, 24
        %v4512 = vpop.permute.xlu0 %4511
        %4513 = vrot.lane.b32.xlu0 %v4467, 24
        %v4514 = vpop.permute.xlu0 %4513
        %4515 = vrot.lane.b32.xlu0 %v4468, 24
        %v4516 = vpop.permute.xlu0 %4515
        %vm4533 = vcmask 523456
        %4534 = vst.msk [vmem:[#allocation7 + $0x10] sm:$0xff] %vm4533, %v4486
        %4535 = vst.msk [vmem:[#allocation7 + $0x28] sm:$0xff] %vm4533, %v4488
        %4536 = vst.msk [vmem:[#allocation7 + $0x40] sm:$0xff] %vm4533, %v4490
        %4537 = vst.msk [vmem:[#allocation7 + $0x58] sm:$0xff] %vm4533, %v4492
        %4538 = vst.msk [vmem:[#allocation7 + $0x70] sm:$0xff] %vm4533, %v4494
        %4539 = vst.msk [vmem:[#allocation7 + $0x88] sm:$0xff] %vm4533, %v4496
        %4540 = vst.msk [vmem:[#allocation7 + $0xa0] sm:$0xff] %vm4533, %v4498
        %4541 = vst.msk [vmem:[#allocation7 + $0xb8] sm:$0xff] %vm4533, %v4500
        %4542 = vst.msk [vmem:[#allocation7 + $0xd0] sm:$0xff] %vm4533, %v4502
        %4543 = vst.msk [vmem:[#allocation7 + $0xe8] sm:$0xff] %vm4533, %v4504
        %4544 = vst.msk [vmem:[#allocation7 + $0x100] sm:$0xff] %vm4533, %v4506
        %4545 = vst.msk [vmem:[#allocation7 + $0x118] sm:$0xff] %vm4533, %v4508
        %4546 = vst.msk [vmem:[#allocation7 + $0x130] sm:$0xff] %vm4533, %v4510
        %4547 = vst.msk [vmem:[#allocation7 + $0x148] sm:$0xff] %vm4533, %v4512
        %4548 = vst.msk [vmem:[#allocation7 + $0x160] sm:$0xff] %vm4533, %v4514
        %4549 = vst.msk [vmem:[#allocation7 + $0x178] sm:$0xff] %vm4533, %v4516
        %v4550 = vld [vmem:[%s4338 + $0x2] sm:$0xff]
        %v4551 = vld [vmem:[%s4338 + $0xa] sm:$0xff]
        %v4552 = vld [vmem:[%s4338 + $0x1a] sm:$0xff]
        %v4553 = vld [vmem:[%s4338 + $0x22] sm:$0xff]
        %v4554 = vld [vmem:[%s4338 + $0x32] sm:$0xff]
        %v4555 = vld [vmem:[%s4338 + $0x3a] sm:$0xff]
        %v4556 = vld [vmem:[%s4338 + $0x4a] sm:$0xff]
        %v4557 = vld [vmem:[%s4338 + $0x52] sm:$0xff]
        %v4558 = vld [vmem:[%s4338 + $0x62] sm:$0xff]
        %v4559 = vld [vmem:[%s4338 + $0x6a] sm:$0xff]
        %v4560 = vld [vmem:[%s4338 + $0x7a] sm:$0xff]
        %v4561 = vld [vmem:[%s4338 + $0x82] sm:$0xff]
        %v4562 = vld [vmem:[%s4338 + $0x92] sm:$0xff]
        %v4563 = vld [vmem:[%s4338 + $0x9a] sm:$0xff]
        %v4564 = vld [vmem:[%s4338 + $0xaa] sm:$0xff]
        %v4565 = vld [vmem:[%s4338 + $0xb2] sm:$0xff]
        %4582 = vrot.lane.b32.xlu0 %v4550, 64
        %v4583 = vpop.permute.xlu0 %4582
        %4584 = vrot.lane.b32.xlu0 %v4551, 64
        %v4585 = vpop.permute.xlu0 %4584
        %4586 = vrot.lane.b32.xlu0 %v4552, 64
        %v4587 = vpop.permute.xlu0 %4586
        %4588 = vrot.lane.b32.xlu0 %v4553, 64
        %v4589 = vpop.permute.xlu0 %4588
        %4590 = vrot.lane.b32.xlu0 %v4554, 64
        %v4591 = vpop.permute.xlu0 %4590
        %4592 = vrot.lane.b32.xlu0 %v4555, 64
        %v4593 = vpop.permute.xlu0 %4592
        %4594 = vrot.lane.b32.xlu0 %v4556, 64
        %v4595 = vpop.permute.xlu0 %4594
        %4596 = vrot.lane.b32.xlu0 %v4557, 64
        %v4597 = vpop.permute.xlu0 %4596
        %4598 = vrot.lane.b32.xlu0 %v4558, 64
        %v4599 = vpop.permute.xlu0 %4598
        %4600 = vrot.lane.b32.xlu0 %v4559, 64
        %v4601 = vpop.permute.xlu0 %4600
        %4602 = vrot.lane.b32.xlu0 %v4560, 64
        %v4603 = vpop.permute.xlu0 %4602
        %4604 = vrot.lane.b32.xlu0 %v4561, 64
        %v4605 = vpop.permute.xlu0 %4604
        %4606 = vrot.lane.b32.xlu0 %v4562, 64
        %v4607 = vpop.permute.xlu0 %4606
        %4608 = vrot.lane.b32.xlu0 %v4563, 64
        %v4609 = vpop.permute.xlu0 %4608
        %4610 = vrot.lane.b32.xlu0 %v4564, 64
        %v4611 = vpop.permute.xlu0 %4610
        %4612 = vrot.lane.b32.xlu0 %v4565, 64
        %v4613 = vpop.permute.xlu0 %4612
        %vm4630 = vcmask 851456
        %4631 = vst.msk [vmem:[#allocation7 + $0x10] sm:$0xff] %vm4630, %v4583
        %4632 = vst.msk [vmem:[#allocation7 + $0x28] sm:$0xff] %vm4630, %v4585
        %4633 = vst.msk [vmem:[#allocation7 + $0x40] sm:$0xff] %vm4630, %v4587
        %4634 = vst.msk [vmem:[#allocation7 + $0x58] sm:$0xff] %vm4630, %v4589
        %4635 = vst.msk [vmem:[#allocation7 + $0x70] sm:$0xff] %vm4630, %v4591
        %4636 = vst.msk [vmem:[#allocation7 + $0x88] sm:$0xff] %vm4630, %v4593
        %4637 = vst.msk [vmem:[#allocation7 + $0xa0] sm:$0xff] %vm4630, %v4595
        %4638 = vst.msk [vmem:[#allocation7 + $0xb8] sm:$0xff] %vm4630, %v4597
        %4639 = vst.msk [vmem:[#allocation7 + $0xd0] sm:$0xff] %vm4630, %v4599
        %4640 = vst.msk [vmem:[#allocation7 + $0xe8] sm:$0xff] %vm4630, %v4601
        %4641 = vst.msk [vmem:[#allocation7 + $0x100] sm:$0xff] %vm4630, %v4603
        %4642 = vst.msk [vmem:[#allocation7 + $0x118] sm:$0xff] %vm4630, %v4605
        %4643 = vst.msk [vmem:[#allocation7 + $0x130] sm:$0xff] %vm4630, %v4607
        %4644 = vst.msk [vmem:[#allocation7 + $0x148] sm:$0xff] %vm4630, %v4609
        %4645 = vst.msk [vmem:[#allocation7 + $0x160] sm:$0xff] %vm4630, %v4611
        %4646 = vst.msk [vmem:[#allocation7 + $0x178] sm:$0xff] %vm4630, %v4613
        %v4647 = vld [vmem:[#allocation7] sm:$0xff]
        %v4648 = vld [vmem:[#allocation7 + $0x8] sm:$0xff]
        %v4649 = vld [vmem:[#allocation7 + $0x10] sm:$0xff]
        %v4650 = vld [vmem:[#allocation7 + $0x18] sm:$0xff]
        %v4651 = vld [vmem:[#allocation7 + $0x20] sm:$0xff]
        %v4652 = vld [vmem:[#allocation7 + $0x28] sm:$0xff]
        %v4653 = vld [vmem:[#allocation7 + $0x30] sm:$0xff]
        %v4654 = vld [vmem:[#allocation7 + $0x38] sm:$0xff]
        %v4655 = vld [vmem:[#allocation7 + $0x40] sm:$0xff]
        %v4656 = vld [vmem:[#allocation7 + $0x48] sm:$0xff]
        %v4657 = vld [vmem:[#allocation7 + $0x50] sm:$0xff]
        %v4658 = vld [vmem:[#allocation7 + $0x58] sm:$0xff]
        %v4659 = vld [vmem:[#allocation7 + $0x60] sm:$0xff]
        %v4660 = vld [vmem:[#allocation7 + $0x68] sm:$0xff]
        %v4661 = vld [vmem:[#allocation7 + $0x70] sm:$0xff]
        %v4662 = vld [vmem:[#allocation7 + $0x78] sm:$0xff]
        %v4663 = vld [vmem:[#allocation7 + $0x80] sm:$0xff]
        %v4664 = vld [vmem:[#allocation7 + $0x88] sm:$0xff]
        %v4665 = vld [vmem:[#allocation7 + $0x90] sm:$0xff]
        %v4666 = vld [vmem:[#allocation7 + $0x98] sm:$0xff]
        %v4667 = vld [vmem:[#allocation7 + $0xa0] sm:$0xff]
        %v4668 = vld [vmem:[#allocation7 + $0xa8] sm:$0xff]
        %v4669 = vld [vmem:[#allocation7 + $0xb0] sm:$0xff]
        %v4670 = vld [vmem:[#allocation7 + $0xb8] sm:$0xff]
        %v4671 = vld [vmem:[#allocation7 + $0xc0] sm:$0xff]
        %v4672 = vld [vmem:[#allocation7 + $0xc8] sm:$0xff]
        %v4673 = vld [vmem:[#allocation7 + $0xd0] sm:$0xff]
        %v4674 = vld [vmem:[#allocation7 + $0xd8] sm:$0xff]
        %v4675 = vld [vmem:[#allocation7 + $0xe0] sm:$0xff]
        %v4676 = vld [vmem:[#allocation7 + $0xe8] sm:$0xff]
        %v4677 = vld [vmem:[#allocation7 + $0xf0] sm:$0xff]
        %v4678 = vld [vmem:[#allocation7 + $0xf8] sm:$0xff]
        %v4679 = vld [vmem:[#allocation7 + $0x100] sm:$0xff]
        %v4680 = vld [vmem:[#allocation7 + $0x108] sm:$0xff]
        %v4681 = vld [vmem:[#allocation7 + $0x110] sm:$0xff]
        %v4682 = vld [vmem:[#allocation7 + $0x118] sm:$0xff]
        %v4683 = vld [vmem:[#allocation7 + $0x120] sm:$0xff]
        %v4684 = vld [vmem:[#allocation7 + $0x128] sm:$0xff]
        %v4685 = vld [vmem:[#allocation7 + $0x130] sm:$0xff]
        %v4686 = vld [vmem:[#allocation7 + $0x138] sm:$0xff]
        %v4687 = vld [vmem:[#allocation7 + $0x140] sm:$0xff]
        %v4688 = vld [vmem:[#allocation7 + $0x148] sm:$0xff]
        %v4689 = vld [vmem:[#allocation7 + $0x150] sm:$0xff]
        %v4690 = vld [vmem:[#allocation7 + $0x158] sm:$0xff]
        %v4691 = vld [vmem:[#allocation7 + $0x160] sm:$0xff]
        %v4692 = vld [vmem:[#allocation7 + $0x168] sm:$0xff]
        %v4693 = vld [vmem:[#allocation7 + $0x170] sm:$0xff]
        %v4694 = vld [vmem:[#allocation7 + $0x178] sm:$0xff]
        %v4695 = vpack.c.bf16 %v4650, %v4647
        %v4696 = vpack.c.bf16 %v4651, %v4648
        %v4697 = vpack.c.bf16 %v4652, %v4649
        %v4698 = vpack.c.bf16 %v4656, %v4653
        %v4699 = vpack.c.bf16 %v4657, %v4654
        %v4700 = vpack.c.bf16 %v4658, %v4655
        %v4701 = vpack.c.bf16 %v4662, %v4659
        %v4702 = vpack.c.bf16 %v4663, %v4660
        %v4703 = vpack.c.bf16 %v4664, %v4661
        %v4704 = vpack.c.bf16 %v4668, %v4665
        %v4705 = vpack.c.bf16 %v4669, %v4666
        %v4706 = vpack.c.bf16 %v4670, %v4667
        %v4707 = vpack.c.bf16 %v4674, %v4671
        %v4708 = vpack.c.bf16 %v4675, %v4672
        %v4709 = vpack.c.bf16 %v4676, %v4673
        %v4710 = vpack.c.bf16 %v4680, %v4677
        %v4711 = vpack.c.bf16 %v4681, %v4678
        %v4712 = vpack.c.bf16 %v4682, %v4679
        %v4713 = vpack.c.bf16 %v4686, %v4683
        %v4714 = vpack.c.bf16 %v4687, %v4684
        %v4715 = vpack.c.bf16 %v4688, %v4685
        %v4716 = vpack.c.bf16 %v4692, %v4689
        %v4717 = vpack.c.bf16 %v4693, %v4690
        %v4718 = vpack.c.bf16 %v4694, %v4691
        %v4719 = vld [vmem:[%s7] sm:$0xf]
        %v4720 = vld [vmem:[%s7 + $0x4] sm:$0xf]
        %v4721 = vld [vmem:[%s7 + $0x8] sm:$0xf]
        %v4722 = vld [vmem:[%s7 + $0xc] sm:$0xf]
        %v4723 = vld [vmem:[%s7 + $0x10] sm:$0xf]
        %v4724 = vld [vmem:[%s7 + $0x14] sm:$0xf]
        %v4725 = vld [vmem:[%s7 + $0x18] sm:$0xf]
        %v4726 = vld [vmem:[%s7 + $0x1c] sm:$0xf]
        %v4727 = vld [vmem:[%s7 + $0x20] sm:$0xf]
        %v4728 = vld [vmem:[%s7 + $0x24] sm:$0xf]
        %v4729 = vld [vmem:[%s7 + $0x28] sm:$0xf]
        %v4730 = vld [vmem:[%s7 + $0x2c] sm:$0xf]
        %v4731 = vld [vmem:[%s7 + $0x30] sm:$0xf]
        %v4732 = vld [vmem:[%s7 + $0x34] sm:$0xf]
        %v4733 = vld [vmem:[%s7 + $0x38] sm:$0xf]
        %v4734 = vld [vmem:[%s7 + $0x3c] sm:$0xf]
        %v4735 = vld [vmem:[%s7 + $0x40] sm:$0xf]
        %v4736 = vld [vmem:[%s7 + $0x44] sm:$0xf]
        %v4737 = vld [vmem:[%s7 + $0x48] sm:$0xf]
        %v4738 = vld [vmem:[%s7 + $0x4c] sm:$0xf]
        %v4739 = vld [vmem:[%s7 + $0x50] sm:$0xf]
        %v4740 = vld [vmem:[%s7 + $0x54] sm:$0xf]
        %v4741 = vld [vmem:[%s7 + $0x58] sm:$0xf]
        %v4742 = vld [vmem:[%s7 + $0x5c] sm:$0xf]
        %v4743 = vld [vmem:[%s7 + $0x60] sm:$0xf]
        %v4744 = vld [vmem:[%s7 + $0x64] sm:$0xf]
        %v4745 = vld [vmem:[%s7 + $0x68] sm:$0xf]
        %v4746 = vld [vmem:[%s7 + $0x6c] sm:$0xf]
        %v4747 = vld [vmem:[%s7 + $0x70] sm:$0xf]
        %v4748 = vld [vmem:[%s7 + $0x74] sm:$0xf]
        %v4749 = vld [vmem:[%s7 + $0x78] sm:$0xf]
        %v4750 = vld [vmem:[%s7 + $0x7c] sm:$0xf]
        %v4751 = vld [vmem:[%s7 + $0x80] sm:$0xf]
        %v4752 = vld [vmem:[%s7 + $0x84] sm:$0xf]
        %v4753 = vld [vmem:[%s7 + $0x88] sm:$0xf]
        %v4754 = vld [vmem:[%s7 + $0x8c] sm:$0xf]
        %v4755 = vld [vmem:[%s7 + $0x90] sm:$0xf]
        %v4756 = vld [vmem:[%s7 + $0x94] sm:$0xf]
        %v4757 = vld [vmem:[%s7 + $0x98] sm:$0xf]
        %v4758 = vld [vmem:[%s7 + $0x9c] sm:$0xf]
        %v4759 = vld [vmem:[%s7 + $0xa0] sm:$0xf]
        %v4760 = vld [vmem:[%s7 + $0xa4] sm:$0xf]
        %v4761 = vld [vmem:[%s7 + $0xa8] sm:$0xf]
        %v4762 = vld [vmem:[%s7 + $0xac] sm:$0xf]
        %v4763 = vld [vmem:[%s7 + $0xb0] sm:$0xf]
        %v4764 = vld [vmem:[%s8] sm:$0x1]
        %v4766 = vlaneseq
        %v4767 = vshrl.u32 %v4766, 7
        %v4768 = vsub.s32 0, %v4767
        %v4769 = vrot.slane %v4764, %v4768
        %v4816 = vunpack.c.l.b16 %v4719
        %v4817 = vunpack.c.l.b16 %v4720
        %v4818 = vunpack.c.l.b16 %v4721
        %v4819 = vunpack.c.l.b16 %v4722
        %v4820 = vunpack.c.l.b16 %v4723
        %v4821 = vunpack.c.l.b16 %v4724
        %v4822 = vunpack.c.l.b16 %v4725
        %v4823 = vunpack.c.l.b16 %v4726
        %v4824 = vunpack.c.l.b16 %v4727
        %v4825 = vunpack.c.l.b16 %v4728
        %v4826 = vunpack.c.l.b16 %v4729
        %v4827 = vunpack.c.l.b16 %v4730
        %v4828 = vunpack.c.l.b16 %v4731
        %v4829 = vunpack.c.l.b16 %v4732
        %v4830 = vunpack.c.l.b16 %v4733
        %v4831 = vunpack.c.l.b16 %v4734
        %v4832 = vunpack.c.l.b16 %v4735
        %v4833 = vunpack.c.l.b16 %v4736
        %v4834 = vunpack.c.l.b16 %v4737
        %v4835 = vunpack.c.l.b16 %v4738
        %v4836 = vunpack.c.l.b16 %v4739
        %v4837 = vunpack.c.l.b16 %v4740
        %v4838 = vunpack.c.l.b16 %v4741
        %v4839 = vunpack.c.l.b16 %v4742
        %v4840 = vunpack.c.l.b16 %v4743
        %v4841 = vunpack.c.l.b16 %v4744
        %v4842 = vunpack.c.l.b16 %v4745
        %v4843 = vunpack.c.l.b16 %v4746
        %v4844 = vunpack.c.l.b16 %v4747
        %v4845 = vunpack.c.l.b16 %v4748
        %v4846 = vunpack.c.l.b16 %v4749
        %v4847 = vunpack.c.l.b16 %v4750
        %v4848 = vunpack.c.l.b16 %v4751
        %v4849 = vunpack.c.l.b16 %v4752
        %v4850 = vunpack.c.l.b16 %v4753
        %v4851 = vunpack.c.l.b16 %v4754
        %v4852 = vunpack.c.l.b16 %v4755
        %v4853 = vunpack.c.l.b16 %v4756
        %v4854 = vunpack.c.l.b16 %v4757
        %v4855 = vunpack.c.l.b16 %v4758
        %v4856 = vunpack.c.l.b16 %v4759
        %v4857 = vunpack.c.l.b16 %v4760
        %v4858 = vunpack.c.l.b16 %v4761
        %v4859 = vunpack.c.l.b16 %v4762
        %v4860 = vunpack.c.l.b16 %v4763
        %v4861 = vpack.c.b16 %v4817, %v4816
        %v4862 = vpack.c.b16 %v4819, %v4818
        %v4863 = vpack.c.b16 %v4821, %v4820
        %v4864 = vpack.c.b16 %v4823, %v4822
        %v4865 = vpack.c.b16 %v4825, %v4824
        %v4866 = vpack.c.b16 %v4827, %v4826
        %v4867 = vpack.c.b16 %v4829, %v4828
        %v4868 = vpack.c.b16 %v4831, %v4830
        %v4869 = vpack.c.b16 %v4833, %v4832
        %v4870 = vpack.c.b16 %v4835, %v4834
        %v4871 = vpack.c.b16 %v4837, %v4836
        %v4872 = vpack.c.b16 %v4839, %v4838
        %v4873 = vpack.c.b16 %v4841, %v4840
        %v4874 = vpack.c.b16 %v4843, %v4842
        %v4875 = vpack.c.b16 %v4845, %v4844
        %v4876 = vpack.c.b16 %v4847, %v4846
        %v4877 = vpack.c.b16 %v4849, %v4848
        %v4878 = vpack.c.b16 %v4851, %v4850
        %v4879 = vpack.c.b16 %v4853, %v4852
        %v4880 = vpack.c.b16 %v4855, %v4854
        %v4881 = vpack.c.b16 %v4857, %v4856
        %v4882 = vpack.c.b16 %v4859, %v4858
        %v4883 = vpack.c.b16 %v4860, %v4860
        %vm4906 = vcmask 850944
        %v4908 = vsel %vm4906, %v4697, 0
        %v4911 = vsel %vm4906, %v4700, 0
        %v4914 = vsel %vm4906, %v4703, 0
        %v4917 = vsel %vm4906, %v4706, 0
        %v4920 = vsel %vm4906, %v4709, 0
        %v4923 = vsel %vm4906, %v4712, 0
        %v4926 = vsel %vm4906, %v4715, 0
        %v4929 = vsel %vm4906, %v4718, 0
        %v4932 = vsel %vm1323, %v4883, 0
        %4934 = vmatprep.subr.bf16.mxu0 0
        %4935 = vmatpush1.bf16.msra.mxu0 %v4868
        %4936 = vmatprep.subr.bf16.mxu0 0
        %4937 = vmatpush1.bf16.msra.mxu0 %v4867
        %4938 = vmatprep.subr.bf16.mxu0 0
        %4939 = vmatpush1.bf16.msra.mxu0 %v4866
        %4940 = vmatprep.subr.bf16.mxu0 0
        %4941 = vmatpush1.bf16.msra.mxu0 %v4865
        %4942 = vmatprep.subr.bf16.mxu0 0
        %4943 = vmatpush1.bf16.msra.mxu0 %v4864
        %4944 = vmatprep.subr.bf16.mxu0 0
        %4945 = vmatpush1.bf16.msra.mxu0 %v4863
        %4946 = vmatprep.subr.bf16.mxu0 0
        %4947 = vmatpush1.bf16.msra.mxu0 %v4862
        %4948 = vmatprep.subr.bf16.mxu0 0
        %4949 = vmatpush1.bf16.msra.mxu0 %v4861
        %4950 = vmatprep.subr.bf16.mxu0 0
        %4951 = vmatpush2.bf16.msra.mxu0 %v4876
        %4952 = vmatprep.subr.bf16.mxu0 0
        %4953 = vmatpush2.bf16.msra.mxu0 %v4875
        %4954 = vmatprep.subr.bf16.mxu0 0
        %4955 = vmatpush2.bf16.msra.mxu0 %v4874
        %4956 = vmatprep.subr.bf16.mxu0 0
        %4957 = vmatpush2.bf16.msra.mxu0 %v4873
        %4958 = vmatprep.subr.bf16.mxu0 0
        %4959 = vmatpush2.bf16.msra.mxu0 %v4872
        %4960 = vmatprep.subr.bf16.mxu0 0
        %4961 = vmatpush2.bf16.msra.mxu0 %v4871
        %4962 = vmatprep.subr.bf16.mxu0 0
        %4963 = vmatpush2.bf16.msra.mxu0 %v4870
        %4964 = vmatprep.subr.bf16.mxu0 0
        %4965 = vmatpush2.bf16.msra.mxu0 %v4869
        %4966 = vmatprep.mubr.bf16.mxu0 %v4696
        %4967 = vmatmul.mubr.bf16.gmra.mxu0 %v4695
        %v4968 = vpop.f32.mrf.mxu0
        %v4969 = vadd.f32 %v4769, %v4968
        %v4970 = vpop.f32.mrf.mxu0
        %v4971 = vpop.f32.mrf.mxu0
        %v4972 = vadd.f32 %v4769, %v4971
        %v4973 = vpop.f32.mrf.mxu0
        %4974 = vmatprep.mubr.bf16.mxu0 %v4699
        %4975 = vmatmul.mubr.bf16.gmra.mxu0 %v4698
        %v4976 = vpop.f32.mrf.mxu0
        %v4977 = vadd.f32 %v4769, %v4976
        %v4978 = vpop.f32.mrf.mxu0
        %v4979 = vpop.f32.mrf.mxu0
        %v4980 = vadd.f32 %v4769, %v4979
        %v4981 = vpop.f32.mrf.mxu0
        %4982 = vmatprep.mubr.bf16.mxu0 %v4702
        %4983 = vmatmul.mubr.bf16.gmra.mxu0 %v4701
        %v4984 = vpop.f32.mrf.mxu0
        %v4985 = vadd.f32 %v4769, %v4984
        %v4986 = vpop.f32.mrf.mxu0
        %v4987 = vpop.f32.mrf.mxu0
        %v4988 = vadd.f32 %v4769, %v4987
        %v4989 = vpop.f32.mrf.mxu0
        %4990 = vmatprep.mubr.bf16.mxu0 %v4705
        %4991 = vmatmul.mubr.bf16.gmra.mxu0 %v4704
        %v4992 = vpop.f32.mrf.mxu0
        %v4993 = vadd.f32 %v4769, %v4992
        %v4994 = vpop.f32.mrf.mxu0
        %v4995 = vpop.f32.mrf.mxu0
        %v4996 = vadd.f32 %v4769, %v4995
        %v4997 = vpop.f32.mrf.mxu0
        %4998 = vmatprep.mubr.bf16.mxu0 %v4708
        %4999 = vmatmul.mubr.bf16.gmra.mxu0 %v4707
        %v5000 = vpop.f32.mrf.mxu0
        %v5001 = vadd.f32 %v4769, %v5000
        %v5002 = vpop.f32.mrf.mxu0
        %v5003 = vpop.f32.mrf.mxu0
        %v5004 = vadd.f32 %v4769, %v5003
        %v5005 = vpop.f32.mrf.mxu0
        %5006 = vmatprep.mubr.bf16.mxu0 %v4711
        %5007 = vmatmul.mubr.bf16.gmra.mxu0 %v4710
        %v5008 = vpop.f32.mrf.mxu0
        %v5009 = vadd.f32 %v4769, %v5008
        %v5010 = vpop.f32.mrf.mxu0
        %v5011 = vpop.f32.mrf.mxu0
        %v5012 = vadd.f32 %v4769, %v5011
        %v5013 = vpop.f32.mrf.mxu0
        %5014 = vmatprep.mubr.bf16.mxu0 %v4714
        %5015 = vmatmul.mubr.bf16.gmra.mxu0 %v4713
        %v5016 = vpop.f32.mrf.mxu0
        %v5017 = vadd.f32 %v4769, %v5016
        %v5018 = vpop.f32.mrf.mxu0
        %v5019 = vpop.f32.mrf.mxu0
        %v5020 = vadd.f32 %v4769, %v5019
        %v5021 = vpop.f32.mrf.mxu0
        %5022 = vmatprep.mubr.bf16.mxu0 %v4717
        %5023 = vmatmul.mubr.bf16.gmra.mxu0 %v4716
        %v5024 = vpop.f32.mrf.mxu0
        %v5025 = vadd.f32 %v4769, %v5024
        %v5026 = vpop.f32.mrf.mxu0
        %v5027 = vpop.f32.mrf.mxu0
        %v5028 = vadd.f32 %v4769, %v5027
        %v5029 = vpop.f32.mrf.mxu0
        %5030 = vdwg.mxu0
        %5031 = vmatprep.subr.bf16.mxu0 0
        %5032 = vmatpush1.bf16.msra.mxu0 0
        %5033 = vmatprep.subr.bf16.mxu0 0
        %5034 = vmatpush1.bf16.msra.mxu0 %v4932
        %5035 = vmatprep.subr.bf16.mxu0 0
        %5036 = vmatpush1.bf16.msra.mxu0 %v4882
        %5037 = vmatprep.subr.bf16.mxu0 0
        %5038 = vmatpush1.bf16.msra.mxu0 %v4881
        %5039 = vmatprep.subr.bf16.mxu0 0
        %5040 = vmatpush1.bf16.msra.mxu0 %v4880
        %5041 = vmatprep.subr.bf16.mxu0 0
        %5042 = vmatpush1.bf16.msra.mxu0 %v4879
        %5043 = vmatprep.subr.bf16.mxu0 0
        %5044 = vmatpush1.bf16.msra.mxu0 %v4878
        %5045 = vmatprep.subr.bf16.mxu0 0
        %5046 = vmatpush1.bf16.msra.mxu0 %v4877
        %5047 = vmatprep.subr.bf16.mxu0 0
        %5048 = vmatpush2.bf16.msra.mxu0 0
        %5049 = vmatprep.subr.bf16.mxu0 0
        %5050 = vmatpush2.bf16.msra.mxu0 0
        %5051 = vmatprep.subr.bf16.mxu0 0
        %5052 = vmatpush2.bf16.msra.mxu0 0
        %5053 = vmatprep.subr.bf16.mxu0 0
        %5054 = vmatpush2.bf16.msra.mxu0 0
        %5055 = vmatprep.subr.bf16.mxu0 0
        %5056 = vmatpush2.bf16.msra.mxu0 0
        %5057 = vmatprep.subr.bf16.mxu0 0
        %5058 = vmatpush2.bf16.msra.mxu0 0
        %5059 = vmatprep.subr.bf16.mxu0 0
        %5060 = vmatpush2.bf16.msra.mxu0 0
        %5061 = vmatprep.subr.bf16.mxu0 0
        %5062 = vmatpush2.bf16.msra.mxu0 0
        %5063 = vmatprep.mubr.bf16.mxu0 0
        %5064 = vmatmul.mubr.bf16.gmra.mxu0 %v4908
        %v5065 = vpop.f32.mrf.mxu0
        %v5066 = vadd.f32 %v4969, %v5065
        %v5067 = vpop.f32.mrf.mxu0
        %v5068 = vpop.f32.mrf.mxu0
        %v5069 = vadd.f32 %v4972, %v5068
        %v5070 = vpop.f32.mrf.mxu0
        %5071 = vmatprep.mubr.bf16.mxu0 0
        %5072 = vmatmul.mubr.bf16.gmra.mxu0 %v4911
        %v5073 = vpop.f32.mrf.mxu0
        %v5074 = vadd.f32 %v4977, %v5073
        %v5075 = vpop.f32.mrf.mxu0
        %v5076 = vpop.f32.mrf.mxu0
        %v5077 = vadd.f32 %v4980, %v5076
        %v5078 = vpop.f32.mrf.mxu0
        %5079 = vmatprep.mubr.bf16.mxu0 0
        %5080 = vmatmul.mubr.bf16.gmra.mxu0 %v4914
        %v5081 = vpop.f32.mrf.mxu0
        %v5082 = vadd.f32 %v4985, %v5081
        %v5083 = vpop.f32.mrf.mxu0
        %v5084 = vpop.f32.mrf.mxu0
        %v5085 = vadd.f32 %v4988, %v5084
        %v5086 = vpop.f32.mrf.mxu0
        %5087 = vmatprep.mubr.bf16.mxu0 0
        %5088 = vmatmul.mubr.bf16.gmra.mxu0 %v4917
        %v5089 = vpop.f32.mrf.mxu0
        %v5090 = vadd.f32 %v4993, %v5089
        %v5091 = vpop.f32.mrf.mxu0
        %v5092 = vpop.f32.mrf.mxu0
        %v5093 = vadd.f32 %v4996, %v5092
        %v5094 = vpop.f32.mrf.mxu0
        %5095 = vmatprep.mubr.bf16.mxu0 0
        %5096 = vmatmul.mubr.bf16.gmra.mxu0 %v4920
        %v5097 = vpop.f32.mrf.mxu0
        %v5098 = vadd.f32 %v5001, %v5097
        %v5099 = vpop.f32.mrf.mxu0
        %v5100 = vpop.f32.mrf.mxu0
        %v5101 = vadd.f32 %v5004, %v5100
        %v5102 = vpop.f32.mrf.mxu0
        %5103 = vmatprep.mubr.bf16.mxu0 0
        %5104 = vmatmul.mubr.bf16.gmra.mxu0 %v4923
        %v5105 = vpop.f32.mrf.mxu0
        %v5106 = vadd.f32 %v5009, %v5105
        %v5107 = vpop.f32.mrf.mxu0
        %v5108 = vpop.f32.mrf.mxu0
        %v5109 = vadd.f32 %v5012, %v5108
        %v5110 = vpop.f32.mrf.mxu0
        %5111 = vmatprep.mubr.bf16.mxu0 0
        %5112 = vmatmul.mubr.bf16.gmra.mxu0 %v4926
        %v5113 = vpop.f32.mrf.mxu0
        %v5114 = vadd.f32 %v5017, %v5113
        %v5115 = vpop.f32.mrf.mxu0
        %v5116 = vpop.f32.mrf.mxu0
        %v5117 = vadd.f32 %v5020, %v5116
        %v5118 = vpop.f32.mrf.mxu0
        %5119 = vmatprep.mubr.bf16.mxu0 0
        %5120 = vmatmul.mubr.bf16.gmra.mxu0 %v4929
        %v5121 = vpop.f32.mrf.mxu0
        %v5122 = vadd.f32 %v5025, %v5121
        %v5123 = vpop.f32.mrf.mxu0
        %v5124 = vpop.f32.mrf.mxu0
        %v5125 = vadd.f32 %v5028, %v5124
        %v5126 = vpop.f32.mrf.mxu0
        %5127 = vdwg.mxu0
        %v5128 = vmax.f32 %v5066, 0.0
        %v5129 = vmax.f32 %v5069, 0.0
        %v5130 = vmax.f32 %v5074, 0.0
        %v5131 = vmax.f32 %v5077, 0.0
        %v5132 = vmax.f32 %v5082, 0.0
        %v5133 = vmax.f32 %v5085, 0.0
        %v5134 = vmax.f32 %v5090, 0.0
        %v5135 = vmax.f32 %v5093, 0.0
        %v5136 = vmax.f32 %v5098, 0.0
        %v5137 = vmax.f32 %v5101, 0.0
        %v5138 = vmax.f32 %v5106, 0.0
        %v5139 = vmax.f32 %v5109, 0.0
        %v5140 = vmax.f32 %v5114, 0.0
        %v5141 = vmax.f32 %v5117, 0.0
        %v5142 = vmax.f32 %v5122, 0.0
        %v5143 = vmax.f32 %v5125, 0.0
        %v5152 = vrot.slane %v5130, 7
        %vm5153 = vcmask 1041409
        %v5154 = vsel %vm5153, %v5152, %v5128
        %v5155 = vrot.slane %v5132, 6
        %vm5156 = vcmask 1042434
        %v5157 = vsel %vm5156, %v5155, %v5154
        %v5158 = vrot.slane %v5134, 5
        %vm5159 = vcmask 1043459
        %v5160 = vsel %vm5159, %v5158, %v5157
        %v5161 = vrot.slane %v5136, 4
        %vm5162 = vcmask 1044484
        %v5163 = vsel %vm5162, %v5161, %v5160
        %v5164 = vrot.slane %v5138, 3
        %vm5165 = vcmask 1045509
        %v5166 = vsel %vm5165, %v5164, %v5163
        %v5167 = vrot.slane %v5140, 2
        %vm5168 = vcmask 1046534
        %v5169 = vsel %vm5168, %v5167, %v5166
        %v5170 = vrot.slane %v5142, 1
        %vm5171 = vcmask 1047559
        %v5172 = vsel %vm5171, %v5170, %v5169
        %v5174 = vrot.slane %v5128, 1
        %v5175 = vsel %vm5153, %v5130, %v5174
        %v5176 = vrot.slane %v5132, 7
        %v5177 = vsel %vm5156, %v5176, %v5175
        %v5178 = vrot.slane %v5134, 6
        %v5179 = vsel %vm5159, %v5178, %v5177
        %v5180 = vrot.slane %v5136, 5
        %v5181 = vsel %vm5162, %v5180, %v5179
        %v5182 = vrot.slane %v5138, 4
        %v5183 = vsel %vm5165, %v5182, %v5181
        %v5184 = vrot.slane %v5140, 3
        %v5185 = vsel %vm5168, %v5184, %v5183
        %v5186 = vrot.slane %v5142, 2
        %v5187 = vsel %vm5171, %v5186, %v5185
        %5188 = vrot.lane.b32.xlu0 %v5187, 40
        %v5189 = vpop.permute.xlu0 %5188
        %v5191 = vrot.slane %v5128, 2
        %v5192 = vrot.slane %v5130, 1
        %v5193 = vsel %vm5153, %v5192, %v5191
        %v5194 = vsel %vm5156, %v5132, %v5193
        %v5195 = vrot.slane %v5134, 7
        %v5196 = vsel %vm5159, %v5195, %v5194
        %v5197 = vrot.slane %v5136, 6
        %v5198 = vsel %vm5162, %v5197, %v5196
        %v5199 = vrot.slane %v5138, 5
        %v5200 = vsel %vm5165, %v5199, %v5198
        %v5201 = vrot.slane %v5140, 4
        %v5202 = vsel %vm5168, %v5201, %v5200
        %v5203 = vrot.slane %v5142, 3
        %v5204 = vsel %vm5171, %v5203, %v5202
        %5205 = vrot.lane.b32.xlu0 %v5204, 80
        %v5206 = vpop.permute.xlu0 %5205
        %v5208 = vrot.slane %v5128, 3
        %v5209 = vrot.slane %v5130, 2
        %v5210 = vsel %vm5153, %v5209, %v5208
        %v5211 = vrot.slane %v5132, 1
        %v5212 = vsel %vm5156, %v5211, %v5210
        %v5213 = vsel %vm5159, %v5134, %v5212
        %v5214 = vrot.slane %v5136, 7
        %v5215 = vsel %vm5162, %v5214, %v5213
        %v5216 = vrot.slane %v5138, 6
        %v5217 = vsel %vm5165, %v5216, %v5215
        %v5218 = vrot.slane %v5140, 5
        %v5219 = vsel %vm5168, %v5218, %v5217
        %v5220 = vrot.slane %v5142, 4
        %v5221 = vsel %vm5171, %v5220, %v5219
        %5222 = vrot.lane.b32.xlu0 %v5221, 120
        %v5223 = vpop.permute.xlu0 %5222
        %v5225 = vrot.slane %v5128, 4
        %v5226 = vrot.slane %v5130, 3
        %v5227 = vsel %vm5153, %v5226, %v5225
        %v5228 = vrot.slane %v5132, 2
        %v5229 = vsel %vm5156, %v5228, %v5227
        %v5230 = vrot.slane %v5134, 1
        %v5231 = vsel %vm5159, %v5230, %v5229
        %v5232 = vsel %vm5162, %v5136, %v5231
        %v5233 = vrot.slane %v5138, 7
        %v5234 = vsel %vm5165, %v5233, %v5232
        %v5235 = vrot.slane %v5140, 6
        %v5236 = vsel %vm5168, %v5235, %v5234
        %v5237 = vrot.slane %v5142, 5
        %v5238 = vsel %vm5171, %v5237, %v5236
        %5239 = vrot.lane.b32.xlu0 %v5238, 32
        %v5240 = vpop.permute.xlu0 %5239
        %v5242 = vrot.slane %v5128, 5
        %v5243 = vrot.slane %v5130, 4
        %v5244 = vsel %vm5153, %v5243, %v5242
        %v5245 = vrot.slane %v5132, 3
        %v5246 = vsel %vm5156, %v5245, %v5244
        %v5247 = vrot.slane %v5134, 2
        %v5248 = vsel %vm5159, %v5247, %v5246
        %v5249 = vrot.slane %v5136, 1
        %v5250 = vsel %vm5162, %v5249, %v5248
        %v5251 = vsel %vm5165, %v5138, %v5250
        %v5252 = vrot.slane %v5140, 7
        %v5253 = vsel %vm5168, %v5252, %v5251
        %v5254 = vrot.slane %v5142, 6
        %v5255 = vsel %vm5171, %v5254, %v5253
        %5256 = vrot.lane.b32.xlu0 %v5255, 72
        %v5257 = vpop.permute.xlu0 %5256
        %v5259 = vrot.slane %v5128, 6
        %v5260 = vrot.slane %v5130, 5
        %v5261 = vsel %vm5153, %v5260, %v5259
        %v5262 = vrot.slane %v5132, 4
        %v5263 = vsel %vm5156, %v5262, %v5261
        %v5264 = vrot.slane %v5134, 3
        %v5265 = vsel %vm5159, %v5264, %v5263
        %v5266 = vrot.slane %v5136, 2
        %v5267 = vsel %vm5162, %v5266, %v5265
        %v5268 = vrot.slane %v5138, 1
        %v5269 = vsel %vm5165, %v5268, %v5267
        %v5270 = vsel %vm5168, %v5140, %v5269
        %v5271 = vrot.slane %v5142, 7
        %v5272 = vsel %vm5171, %v5271, %v5270
        %5273 = vrot.lane.b32.xlu0 %v5272, 112
        %v5274 = vpop.permute.xlu0 %5273
        %v5276 = vrot.slane %v5128, 7
        %v5277 = vrot.slane %v5130, 6
        %v5278 = vsel %vm5153, %v5277, %v5276
        %v5279 = vrot.slane %v5132, 5
        %v5280 = vsel %vm5156, %v5279, %v5278
        %v5281 = vrot.slane %v5134, 4
        %v5282 = vsel %vm5159, %v5281, %v5280
        %v5283 = vrot.slane %v5136, 3
        %v5284 = vsel %vm5162, %v5283, %v5282
        %v5285 = vrot.slane %v5138, 2
        %v5286 = vsel %vm5165, %v5285, %v5284
        %v5287 = vrot.slane %v5140, 1
        %v5288 = vsel %vm5168, %v5287, %v5286
        %v5289 = vsel %vm5171, %v5142, %v5288
        %5290 = vrot.lane.b32.xlu0 %v5289, 24
        %v5291 = vpop.permute.xlu0 %5290
        %v5301 = vrot.slane %v5131, 7
        %v5302 = vsel %vm5153, %v5301, %v5129
        %v5303 = vrot.slane %v5133, 6
        %v5304 = vsel %vm5156, %v5303, %v5302
        %v5305 = vrot.slane %v5135, 5
        %v5306 = vsel %vm5159, %v5305, %v5304
        %v5307 = vrot.slane %v5137, 4
        %v5308 = vsel %vm5162, %v5307, %v5306
        %v5309 = vrot.slane %v5139, 3
        %v5310 = vsel %vm5165, %v5309, %v5308
        %v5311 = vrot.slane %v5141, 2
        %v5312 = vsel %vm5168, %v5311, %v5310
        %v5313 = vrot.slane %v5143, 1
        %v5314 = vsel %vm5171, %v5313, %v5312
        %5315 = vrot.lane.b32.xlu0 %v5314, 64
        %v5316 = vpop.permute.xlu0 %5315
        %v5318 = vrot.slane %v5129, 1
        %v5319 = vsel %vm5153, %v5131, %v5318
        %v5320 = vrot.slane %v5133, 7
        %v5321 = vsel %vm5156, %v5320, %v5319
        %v5322 = vrot.slane %v5135, 6
        %v5323 = vsel %vm5159, %v5322, %v5321
        %v5324 = vrot.slane %v5137, 5
        %v5325 = vsel %vm5162, %v5324, %v5323
        %v5326 = vrot.slane %v5139, 4
        %v5327 = vsel %vm5165, %v5326, %v5325
        %v5328 = vrot.slane %v5141, 3
        %v5329 = vsel %vm5168, %v5328, %v5327
        %v5330 = vrot.slane %v5143, 2
        %v5331 = vsel %vm5171, %v5330, %v5329
        %5332 = vrot.lane.b32.xlu0 %v5331, 104
        %v5333 = vpop.permute.xlu0 %5332
        %v5335 = vrot.slane %v5129, 2
        %v5336 = vrot.slane %v5131, 1
        %v5337 = vsel %vm5153, %v5336, %v5335
        %v5338 = vsel %vm5156, %v5133, %v5337
        %v5339 = vrot.slane %v5135, 7
        %v5340 = vsel %vm5159, %v5339, %v5338
        %v5341 = vrot.slane %v5137, 6
        %v5342 = vsel %vm5162, %v5341, %v5340
        %v5343 = vrot.slane %v5139, 5
        %v5344 = vsel %vm5165, %v5343, %v5342
        %v5345 = vrot.slane %v5141, 4
        %v5346 = vsel %vm5168, %v5345, %v5344
        %v5347 = vrot.slane %v5143, 3
        %v5348 = vsel %vm5171, %v5347, %v5346
        %5349 = vrot.lane.b32.xlu0 %v5348, 16
        %v5350 = vpop.permute.xlu0 %5349
        %v5352 = vrot.slane %v5129, 3
        %v5353 = vrot.slane %v5131, 2
        %v5354 = vsel %vm5153, %v5353, %v5352
        %v5355 = vrot.slane %v5133, 1
        %v5356 = vsel %vm5156, %v5355, %v5354
        %v5357 = vsel %vm5159, %v5135, %v5356
        %v5358 = vrot.slane %v5137, 7
        %v5359 = vsel %vm5162, %v5358, %v5357
        %v5360 = vrot.slane %v5139, 6
        %v5361 = vsel %vm5165, %v5360, %v5359
        %v5362 = vrot.slane %v5141, 5
        %v5363 = vsel %vm5168, %v5362, %v5361
        %v5364 = vrot.slane %v5143, 4
        %v5365 = vsel %vm5171, %v5364, %v5363
        %5366 = vrot.lane.b32.xlu0 %v5365, 56
        %v5367 = vpop.permute.xlu0 %5366
        %v5369 = vrot.slane %v5129, 4
        %v5370 = vrot.slane %v5131, 3
        %v5371 = vsel %vm5153, %v5370, %v5369
        %v5372 = vrot.slane %v5133, 2
        %v5373 = vsel %vm5156, %v5372, %v5371
        %v5374 = vrot.slane %v5135, 1
        %v5375 = vsel %vm5159, %v5374, %v5373
        %v5376 = vsel %vm5162, %v5137, %v5375
        %v5377 = vrot.slane %v5139, 7
        %v5378 = vsel %vm5165, %v5377, %v5376
        %v5379 = vrot.slane %v5141, 6
        %v5380 = vsel %vm5168, %v5379, %v5378
        %v5381 = vrot.slane %v5143, 5
        %v5382 = vsel %vm5171, %v5381, %v5380
        %5383 = vrot.lane.b32.xlu0 %v5382, 96
        %v5384 = vpop.permute.xlu0 %5383
        %v5386 = vrot.slane %v5129, 5
        %v5387 = vrot.slane %v5131, 4
        %v5388 = vsel %vm5153, %v5387, %v5386
        %v5389 = vrot.slane %v5133, 3
        %v5390 = vsel %vm5156, %v5389, %v5388
        %v5391 = vrot.slane %v5135, 2
        %v5392 = vsel %vm5159, %v5391, %v5390
        %v5393 = vrot.slane %v5137, 1
        %v5394 = vsel %vm5162, %v5393, %v5392
        %v5395 = vsel %vm5165, %v5139, %v5394
        %v5396 = vrot.slane %v5141, 7
        %v5397 = vsel %vm5168, %v5396, %v5395
        %v5398 = vrot.slane %v5143, 6
        %v5399 = vsel %vm5171, %v5398, %v5397
        %5400 = vrot.lane.b32.xlu0 %v5399, 8
        %v5401 = vpop.permute.xlu0 %5400
        %v5403 = vrot.slane %v5129, 6
        %v5404 = vrot.slane %v5131, 5
        %v5405 = vsel %vm5153, %v5404, %v5403
        %v5406 = vrot.slane %v5133, 4
        %v5407 = vsel %vm5156, %v5406, %v5405
        %v5408 = vrot.slane %v5135, 3
        %v5409 = vsel %vm5159, %v5408, %v5407
        %v5410 = vrot.slane %v5137, 2
        %v5411 = vsel %vm5162, %v5410, %v5409
        %v5412 = vrot.slane %v5139, 1
        %v5413 = vsel %vm5165, %v5412, %v5411
        %v5414 = vsel %vm5168, %v5141, %v5413
        %v5415 = vrot.slane %v5143, 7
        %v5416 = vsel %vm5171, %v5415, %v5414
        %5417 = vrot.lane.b32.xlu0 %v5416, 48
        %v5418 = vpop.permute.xlu0 %5417
        %v5420 = vrot.slane %v5129, 7
        %v5421 = vrot.slane %v5131, 6
        %v5422 = vsel %vm5153, %v5421, %v5420
        %v5423 = vrot.slane %v5133, 5
        %v5424 = vsel %vm5156, %v5423, %v5422
        %v5425 = vrot.slane %v5135, 4
        %v5426 = vsel %vm5159, %v5425, %v5424
        %v5427 = vrot.slane %v5137, 3
        %v5428 = vsel %vm5162, %v5427, %v5426
        %v5429 = vrot.slane %v5139, 2
        %v5430 = vsel %vm5165, %v5429, %v5428
        %v5431 = vrot.slane %v5141, 1
        %v5432 = vsel %vm5168, %v5431, %v5430
        %v5433 = vsel %vm5171, %v5143, %v5432
        %5434 = vrot.lane.b32.xlu0 %v5433, 88
        %v5435 = vpop.permute.xlu0 %5434
        %v5437 = vsel %vm3756, %v5172, %v5189
        %vm5438 = vcmask 654336
        %v5439 = vsel %vm5438, %v5437, %v5206
        %vm5440 = vcmask 982016
        %v5441 = vsel %vm5440, %v5439, %v5223
        %v5442 = vsel %vm4112, %v5223, %v5240
        %vm5443 = vcmask 588800
        %v5444 = vsel %vm5443, %v5442, %v5257
        %vm5445 = vcmask 916480
        %v5446 = vsel %vm5445, %v5444, %v5274
        %v5447 = vsel %vm4421, %v5274, %v5291
        %vm5448 = vcmask 523264
        %v5449 = vsel %vm5448, %v5447, %v5316
        %v5450 = vsel %vm4906, %v5449, %v5333
        %vm5451 = vcmask 130048
        %v5452 = vsel %vm5451, %v5333, %v5350
        %vm5453 = vcmask 457728
        %v5454 = vsel %vm5453, %v5452, %v5367
        %vm5455 = vcmask 785408
        %v5456 = vsel %vm5455, %v5454, %v5384
        %vm5457 = vcmask 64512
        %v5458 = vsel %vm5457, %v5384, %v5401
        %vm5459 = vcmask 392192
        %v5460 = vsel %vm5459, %v5458, %v5418
        %vm5461 = vcmask 719872
        %v5462 = vsel %vm5461, %v5460, %v5435
        %v5463 = vpack.c.bf16 %v5441, %v5441
        %v5464 = vpack.c.bf16 %v5446, %v5446
        %v5465 = vpack.c.bf16 %v5450, %v5450
        %v5466 = vpack.c.bf16 %v5456, %v5456
        %v5467 = vpack.c.bf16 %v5462, %v5462
        %v5468 = vld [vmem:[%s9] sm:$0xf]
        %v5469 = vld [vmem:[%s9 + $0x4] sm:$0xf]
        %v5470 = vld [vmem:[%s9 + $0x8] sm:$0xf]
        %v5471 = vld [vmem:[%s9 + $0xc] sm:$0xf]
        %v5472 = vld [vmem:[%s9 + $0x10] sm:$0xf]
        %v5473 = vld [vmem:[%s9 + $0x14] sm:$0xf]
        %v5474 = vld [vmem:[%s9 + $0x18] sm:$0xf]
        %v5475 = vld [vmem:[%s9 + $0x1c] sm:$0xf]
        %v5476 = vld [vmem:[%s9 + $0x20] sm:$0xf]
        %v5477 = vld [vmem:[%s9 + $0x24] sm:$0xf]
        %v5478 = vld [vmem:[%s9 + $0x28] sm:$0xf]
        %v5479 = vld [vmem:[%s9 + $0x2c] sm:$0xf]
        %v5480 = vld [vmem:[%s9 + $0x30] sm:$0xf]
        %v5481 = vld [vmem:[%s9 + $0x34] sm:$0xf]
        %v5482 = vld [vmem:[%s9 + $0x38] sm:$0xf]
        %v5483 = vld [vmem:[%s9 + $0x3c] sm:$0xf]
        %v5484 = vld [vmem:[%s9 + $0x40] sm:$0xf]
        %v5485 = vld [vmem:[%s9 + $0x44] sm:$0xf]
        %v5486 = vld [vmem:[%s9 + $0x48] sm:$0xf]
        %v5487 = vld [vmem:[%s9 + $0x4c] sm:$0xf]
        %v5488 = vld [vmem:[%s9 + $0x50] sm:$0xf]
        %v5489 = vld [vmem:[%s9 + $0x54] sm:$0xf]
        %v5490 = vld [vmem:[%s9 + $0x58] sm:$0xf]
        %v5491 = vld [vmem:[%s9 + $0x5c] sm:$0xf]
        %v5492 = vld [vmem:[%s9 + $0x60] sm:$0xf]
        %v5493 = vld [vmem:[%s9 + $0x64] sm:$0xf]
        %v5494 = vld [vmem:[%s9 + $0x68] sm:$0xf]
        %v5495 = vld [vmem:[%s9 + $0x6c] sm:$0xf]
        %v5496 = vld [vmem:[%s9 + $0x70] sm:$0xf]
        %v5497 = vld [vmem:[%s9 + $0x74] sm:$0xf]
        %v5498 = vld [vmem:[%s9 + $0x78] sm:$0xf]
        %v5499 = vld [vmem:[%s9 + $0x7c] sm:$0xf]
        %v5500 = vld [vmem:[%s9 + $0x80] sm:$0xf]
        %v5501 = vld [vmem:[%s9 + $0x84] sm:$0xf]
        %v5502 = vld [vmem:[%s9 + $0x88] sm:$0xf]
        %v5503 = vld [vmem:[%s9 + $0x8c] sm:$0xf]
        %v5504 = vld [vmem:[%s9 + $0x90] sm:$0xf]
        %v5505 = vld [vmem:[%s9 + $0x94] sm:$0xf]
        %v5506 = vld [vmem:[%s9 + $0x98] sm:$0xf]
        %v5507 = vld [vmem:[%s9 + $0x9c] sm:$0xf]
        %v5508 = vld [vmem:[%s9 + $0xa0] sm:$0xf]
        %v5509 = vld [vmem:[%s9 + $0xa4] sm:$0xf]
        %v5510 = vld [vmem:[%s9 + $0xa8] sm:$0xf]
        %v5511 = vld [vmem:[%s9 + $0xac] sm:$0xf]
        %v5512 = vld [vmem:[%s9 + $0xb0] sm:$0xf]
        %v5513 = vld [vmem:[%s9 + $0xb4] sm:$0xf]
        %v5514 = vld [vmem:[%s9 + $0xb8] sm:$0xf]
        %v5515 = vld [vmem:[%s9 + $0xbc] sm:$0xf]
        %v5516 = vld [vmem:[%s9 + $0xc0] sm:$0xf]
        %v5517 = vld [vmem:[%s9 + $0xc4] sm:$0xf]
        %v5518 = vld [vmem:[%s9 + $0xc8] sm:$0xf]
        %v5519 = vld [vmem:[%s9 + $0xcc] sm:$0xf]
        %v5520 = vld [vmem:[%s9 + $0xd0] sm:$0xf]
        %v5521 = vld [vmem:[%s9 + $0xd4] sm:$0xf]
        %v5522 = vld [vmem:[%s9 + $0xd8] sm:$0xf]
        %v5523 = vld [vmem:[%s9 + $0xdc] sm:$0xf]
        %v5524 = vld [vmem:[%s9 + $0xe0] sm:$0xf]
        %v5525 = vld [vmem:[%s9 + $0xe4] sm:$0xf]
        %v5526 = vld [vmem:[%s9 + $0xe8] sm:$0xf]
        %v5527 = vld [vmem:[%s9 + $0xec] sm:$0xf]
        %v5528 = vld [vmem:[%s9 + $0xf0] sm:$0xf]
        %v5529 = vld [vmem:[%s9 + $0xf4] sm:$0xf]
        %v5530 = vld [vmem:[%s9 + $0xf8] sm:$0xf]
        %v5531 = vld [vmem:[%s9 + $0xfc] sm:$0xf]
        %v5532 = vld [vmem:[%s9 + $0x100] sm:$0xf]
        %v5533 = vld [vmem:[%s9 + $0x104] sm:$0xf]
        %v5534 = vld [vmem:[%s9 + $0x108] sm:$0xf]
        %v5535 = vld [vmem:[%s9 + $0x10c] sm:$0xf]
        %v5536 = vld [vmem:[%s9 + $0x110] sm:$0xf]
        %v5537 = vld [vmem:[%s9 + $0x114] sm:$0xf]
        %v5538 = vld [vmem:[%s9 + $0x118] sm:$0xf]
        %v5539 = vld [vmem:[%s9 + $0x11c] sm:$0xf]
        %v5540 = vld [vmem:[%s9 + $0x120] sm:$0xf]
        %v5541 = vld [vmem:[%s9 + $0x124] sm:$0xf]
        %v5542 = vld [vmem:[%s9 + $0x128] sm:$0xf]
        %v5543 = vld [vmem:[%s9 + $0x12c] sm:$0xf]
        %v5544 = vld [vmem:[%s9 + $0x130] sm:$0xf]
        %v5545 = vld [vmem:[%s9 + $0x134] sm:$0xf]
        %v5546 = vld [vmem:[%s9 + $0x138] sm:$0xf]
        %v5547 = vld [vmem:[%s9 + $0x13c] sm:$0xf]
        %v5548 = vld [vmem:[%s10] sm:$0x1]
        %v5550 = vlaneseq
        %v5551 = vshrl.u32 %v5550, 7
        %v5552 = vsub.s32 0, %v5551
        %v5553 = vrot.slane %v5548, %v5552
        %v5635 = vunpack.c.l.b16 %v5468
        %v5636 = vunpack.c.l.b16 %v5469
        %v5637 = vunpack.c.l.b16 %v5470
        %v5638 = vunpack.c.l.b16 %v5471
        %v5639 = vunpack.c.l.b16 %v5472
        %v5640 = vunpack.c.l.b16 %v5473
        %v5641 = vunpack.c.l.b16 %v5474
        %v5642 = vunpack.c.l.b16 %v5475
        %v5643 = vunpack.c.l.b16 %v5476
        %v5644 = vunpack.c.l.b16 %v5477
        %v5645 = vunpack.c.l.b16 %v5478
        %v5646 = vunpack.c.l.b16 %v5479
        %v5647 = vunpack.c.l.b16 %v5480
        %v5648 = vunpack.c.l.b16 %v5481
        %v5649 = vunpack.c.l.b16 %v5482
        %v5650 = vunpack.c.l.b16 %v5483
        %v5651 = vunpack.c.l.b16 %v5484
        %v5652 = vunpack.c.l.b16 %v5485
        %v5653 = vunpack.c.l.b16 %v5486
        %v5654 = vunpack.c.l.b16 %v5487
        %v5655 = vunpack.c.l.b16 %v5488
        %v5656 = vunpack.c.l.b16 %v5489
        %v5657 = vunpack.c.l.b16 %v5490
        %v5658 = vunpack.c.l.b16 %v5491
        %v5659 = vunpack.c.l.b16 %v5492
        %v5660 = vunpack.c.l.b16 %v5493
        %v5661 = vunpack.c.l.b16 %v5494
        %v5662 = vunpack.c.l.b16 %v5495
        %v5663 = vunpack.c.l.b16 %v5496
        %v5664 = vunpack.c.l.b16 %v5497
        %v5665 = vunpack.c.l.b16 %v5498
        %v5666 = vunpack.c.l.b16 %v5499
        %v5667 = vunpack.c.l.b16 %v5500
        %v5668 = vunpack.c.l.b16 %v5501
        %v5669 = vunpack.c.l.b16 %v5502
        %v5670 = vunpack.c.l.b16 %v5503
        %v5671 = vunpack.c.l.b16 %v5504
        %v5672 = vunpack.c.l.b16 %v5505
        %v5673 = vunpack.c.l.b16 %v5506
        %v5674 = vunpack.c.l.b16 %v5507
        %v5675 = vunpack.c.l.b16 %v5508
        %v5676 = vunpack.c.l.b16 %v5509
        %v5677 = vunpack.c.l.b16 %v5510
        %v5678 = vunpack.c.l.b16 %v5511
        %v5679 = vunpack.c.l.b16 %v5512
        %v5680 = vunpack.c.l.b16 %v5513
        %v5681 = vunpack.c.l.b16 %v5514
        %v5682 = vunpack.c.l.b16 %v5515
        %v5683 = vunpack.c.l.b16 %v5516
        %v5684 = vunpack.c.l.b16 %v5517
        %v5685 = vunpack.c.l.b16 %v5518
        %v5686 = vunpack.c.l.b16 %v5519
        %v5687 = vunpack.c.l.b16 %v5520
        %v5688 = vunpack.c.l.b16 %v5521
        %v5689 = vunpack.c.l.b16 %v5522
        %v5690 = vunpack.c.l.b16 %v5523
        %v5691 = vunpack.c.l.b16 %v5524
        %v5692 = vunpack.c.l.b16 %v5525
        %v5693 = vunpack.c.l.b16 %v5526
        %v5694 = vunpack.c.l.b16 %v5527
        %v5695 = vunpack.c.l.b16 %v5528
        %v5696 = vunpack.c.l.b16 %v5529
        %v5697 = vunpack.c.l.b16 %v5530
        %v5698 = vunpack.c.l.b16 %v5531
        %v5699 = vunpack.c.l.b16 %v5532
        %v5700 = vunpack.c.l.b16 %v5533
        %v5701 = vunpack.c.l.b16 %v5534
        %v5702 = vunpack.c.l.b16 %v5535
        %v5703 = vunpack.c.l.b16 %v5536
        %v5704 = vunpack.c.l.b16 %v5537
        %v5705 = vunpack.c.l.b16 %v5538
        %v5706 = vunpack.c.l.b16 %v5539
        %v5707 = vunpack.c.l.b16 %v5540
        %v5708 = vunpack.c.l.b16 %v5541
        %v5709 = vunpack.c.l.b16 %v5542
        %v5710 = vunpack.c.l.b16 %v5543
        %v5711 = vunpack.c.l.b16 %v5544
        %v5712 = vunpack.c.l.b16 %v5545
        %v5713 = vunpack.c.l.b16 %v5546
        %v5714 = vunpack.c.l.b16 %v5547
        %v5715 = vpack.c.b16 %v5636, %v5635
        %v5716 = vpack.c.b16 %v5638, %v5637
        %v5717 = vpack.c.b16 %v5640, %v5639
        %v5718 = vpack.c.b16 %v5642, %v5641
        %v5719 = vpack.c.b16 %v5644, %v5643
        %v5720 = vpack.c.b16 %v5646, %v5645
        %v5721 = vpack.c.b16 %v5648, %v5647
        %v5722 = vpack.c.b16 %v5650, %v5649
        %v5723 = vpack.c.b16 %v5652, %v5651
        %v5724 = vpack.c.b16 %v5654, %v5653
        %v5725 = vpack.c.b16 %v5656, %v5655
        %v5726 = vpack.c.b16 %v5658, %v5657
        %v5727 = vpack.c.b16 %v5660, %v5659
        %v5728 = vpack.c.b16 %v5662, %v5661
        %v5729 = vpack.c.b16 %v5664, %v5663
        %v5730 = vpack.c.b16 %v5666, %v5665
        %v5731 = vpack.c.b16 %v5668, %v5667
        %v5732 = vpack.c.b16 %v5670, %v5669
        %v5733 = vpack.c.b16 %v5672, %v5671
        %v5734 = vpack.c.b16 %v5674, %v5673
        %v5735 = vpack.c.b16 %v5676, %v5675
        %v5736 = vpack.c.b16 %v5678, %v5677
        %v5737 = vpack.c.b16 %v5680, %v5679
        %v5738 = vpack.c.b16 %v5682, %v5681
        %v5739 = vpack.c.b16 %v5684, %v5683
        %v5740 = vpack.c.b16 %v5686, %v5685
        %v5741 = vpack.c.b16 %v5688, %v5687
        %v5742 = vpack.c.b16 %v5690, %v5689
        %v5743 = vpack.c.b16 %v5692, %v5691
        %v5744 = vpack.c.b16 %v5694, %v5693
        %v5745 = vpack.c.b16 %v5696, %v5695
        %v5746 = vpack.c.b16 %v5698, %v5697
        %v5747 = vpack.c.b16 %v5700, %v5699
        %v5748 = vpack.c.b16 %v5702, %v5701
        %v5749 = vpack.c.b16 %v5704, %v5703
        %v5750 = vpack.c.b16 %v5706, %v5705
        %v5751 = vpack.c.b16 %v5708, %v5707
        %v5752 = vpack.c.b16 %v5710, %v5709
        %v5753 = vpack.c.b16 %v5712, %v5711
        %v5754 = vpack.c.b16 %v5714, %v5713
        %5795 = vmatprep.subr.bf16.mxu0 0
        %5796 = vmatpush1.bf16.msra.mxu0 %v5722
        %5797 = vmatprep.subr.bf16.mxu0 0
        %5798 = vmatpush1.bf16.msra.mxu0 %v5721
        %5799 = vmatprep.subr.bf16.mxu0 0
        %5800 = vmatpush1.bf16.msra.mxu0 %v5720
        %5801 = vmatprep.subr.bf16.mxu0 0
        %5802 = vmatpush1.bf16.msra.mxu0 %v5719
        %5803 = vmatprep.subr.bf16.mxu0 0
        %5804 = vmatpush1.bf16.msra.mxu0 %v5718
        %5805 = vmatprep.subr.bf16.mxu0 0
        %5806 = vmatpush1.bf16.msra.mxu0 %v5717
        %5807 = vmatprep.subr.bf16.mxu0 0
        %5808 = vmatpush1.bf16.msra.mxu0 %v5716
        %5809 = vmatprep.subr.bf16.mxu0 0
        %5810 = vmatpush1.bf16.msra.mxu0 %v5715
        %5811 = vmatprep.subr.bf16.mxu0 0
        %5812 = vmatpush2.bf16.msra.mxu0 %v5730
        %5813 = vmatprep.subr.bf16.mxu0 0
        %5814 = vmatpush2.bf16.msra.mxu0 %v5729
        %5815 = vmatprep.subr.bf16.mxu0 0
        %5816 = vmatpush2.bf16.msra.mxu0 %v5728
        %5817 = vmatprep.subr.bf16.mxu0 0
        %5818 = vmatpush2.bf16.msra.mxu0 %v5727
        %5819 = vmatprep.subr.bf16.mxu0 0
        %5820 = vmatpush2.bf16.msra.mxu0 %v5726
        %5821 = vmatprep.subr.bf16.mxu0 0
        %5822 = vmatpush2.bf16.msra.mxu0 %v5725
        %5823 = vmatprep.subr.bf16.mxu0 0
        %5824 = vmatpush2.bf16.msra.mxu0 %v5724
        %5825 = vmatprep.subr.bf16.mxu0 0
        %5826 = vmatpush2.bf16.msra.mxu0 %v5723
        %5827 = vmatprep.mubr.bf16.mxu0 %v5464
        %5828 = vmatmul.mubr.bf16.gmra.mxu0 %v5463
        %v5829 = vpop.f32.mrf.mxu0
        %v5830 = vadd.f32 %v5553, %v5829
        %v5831 = vpop.f32.mrf.mxu0
        %v5832 = vpop.f32.mrf.mxu0
        %v5833 = vpop.f32.mrf.mxu0
        %5834 = vdwg.mxu0
        %5835 = vmatprep.subr.bf16.mxu0 0
        %5836 = vmatpush1.bf16.msra.mxu0 %v5738
        %5837 = vmatprep.subr.bf16.mxu0 0
        %5838 = vmatpush1.bf16.msra.mxu0 %v5737
        %5839 = vmatprep.subr.bf16.mxu0 0
        %5840 = vmatpush1.bf16.msra.mxu0 %v5736
        %5841 = vmatprep.subr.bf16.mxu0 0
        %5842 = vmatpush1.bf16.msra.mxu0 %v5735
        %5843 = vmatprep.subr.bf16.mxu0 0
        %5844 = vmatpush1.bf16.msra.mxu0 %v5734
        %5845 = vmatprep.subr.bf16.mxu0 0
        %5846 = vmatpush1.bf16.msra.mxu0 %v5733
        %5847 = vmatprep.subr.bf16.mxu0 0
        %5848 = vmatpush1.bf16.msra.mxu0 %v5732
        %5849 = vmatprep.subr.bf16.mxu0 0
        %5850 = vmatpush1.bf16.msra.mxu0 %v5731
        %5851 = vmatprep.subr.bf16.mxu0 0
        %5852 = vmatpush2.bf16.msra.mxu0 %v5746
        %5853 = vmatprep.subr.bf16.mxu0 0
        %5854 = vmatpush2.bf16.msra.mxu0 %v5745
        %5855 = vmatprep.subr.bf16.mxu0 0
        %5856 = vmatpush2.bf16.msra.mxu0 %v5744
        %5857 = vmatprep.subr.bf16.mxu0 0
        %5858 = vmatpush2.bf16.msra.mxu0 %v5743
        %5859 = vmatprep.subr.bf16.mxu0 0
        %5860 = vmatpush2.bf16.msra.mxu0 %v5742
        %5861 = vmatprep.subr.bf16.mxu0 0
        %5862 = vmatpush2.bf16.msra.mxu0 %v5741
        %5863 = vmatprep.subr.bf16.mxu0 0
        %5864 = vmatpush2.bf16.msra.mxu0 %v5740
        %5865 = vmatprep.subr.bf16.mxu0 0
        %5866 = vmatpush2.bf16.msra.mxu0 %v5739
        %5867 = vmatprep.mubr.bf16.mxu0 %v5466
        %5868 = vmatmul.mubr.bf16.gmra.mxu0 %v5465
        %v5869 = vpop.f32.mrf.mxu0
        %v5870 = vadd.f32 %v5830, %v5869
        %v5871 = vpop.f32.mrf.mxu0
        %v5872 = vpop.f32.mrf.mxu0
        %v5873 = vpop.f32.mrf.mxu0
        %5874 = vdwg.mxu0
        %5875 = vmatprep.subr.bf16.mxu0 0
        %5876 = vmatpush1.bf16.msra.mxu0 %v5754
        %5877 = vmatprep.subr.bf16.mxu0 0
        %5878 = vmatpush1.bf16.msra.mxu0 %v5753
        %5879 = vmatprep.subr.bf16.mxu0 0
        %5880 = vmatpush1.bf16.msra.mxu0 %v5752
        %5881 = vmatprep.subr.bf16.mxu0 0
        %5882 = vmatpush1.bf16.msra.mxu0 %v5751
        %5883 = vmatprep.subr.bf16.mxu0 0
        %5884 = vmatpush1.bf16.msra.mxu0 %v5750
        %5885 = vmatprep.subr.bf16.mxu0 0
        %5886 = vmatpush1.bf16.msra.mxu0 %v5749
        %5887 = vmatprep.subr.bf16.mxu0 0
        %5888 = vmatpush1.bf16.msra.mxu0 %v5748
        %5889 = vmatprep.subr.bf16.mxu0 0
        %5890 = vmatpush1.bf16.msra.mxu0 %v5747
        %5891 = vmatprep.subr.bf16.mxu0 0
        %5892 = vmatpush2.bf16.msra.mxu0 0
        %5893 = vmatprep.subr.bf16.mxu0 0
        %5894 = vmatpush2.bf16.msra.mxu0 0
        %5895 = vmatprep.subr.bf16.mxu0 0
        %5896 = vmatpush2.bf16.msra.mxu0 0
        %5897 = vmatprep.subr.bf16.mxu0 0
        %5898 = vmatpush2.bf16.msra.mxu0 0
        %5899 = vmatprep.subr.bf16.mxu0 0
        %5900 = vmatpush2.bf16.msra.mxu0 0
        %5901 = vmatprep.subr.bf16.mxu0 0
        %5902 = vmatpush2.bf16.msra.mxu0 0
        %5903 = vmatprep.subr.bf16.mxu0 0
        %5904 = vmatpush2.bf16.msra.mxu0 0
        %5905 = vmatprep.subr.bf16.mxu0 0
        %5906 = vmatpush2.bf16.msra.mxu0 0
        %5907 = vmatprep.mubr.bf16.mxu0 0
        %5908 = vmatmul.mubr.bf16.gmra.mxu0 %v5467
        %v5909 = vpop.f32.mrf.mxu0
        %v5910 = vadd.f32 %v5870, %v5909
        %v5911 = vpop.f32.mrf.mxu0
        %v5912 = vpop.f32.mrf.mxu0
        %v5913 = vpop.f32.mrf.mxu0
        %5914 = vdwg.mxu0
        %v5915 = vmax.f32 %v5910, 0.0
        %5916 = vst.msk [vmem:[%s379] sm:$0xff] %vm4112, %v5915
        %s5917 = sand.u32 %s269, 1
        %s5918 = scalar_lea.sflag [#allocation9], %s5917
        %s5919 = sand.u32 %s269, 1
        %s5920 = smul.addr %s5919, 8
        %s5921 = scalar_lea.vmem [#allocation8], %s5920
        // Predicated region
        $region65: #{conv_stack_forward.1} parent=63 // pred_check
          %p5922 = pneg %p279
        $region66: #{conv_stack_forward.1} parent=63 // pred_check_branch
          %5924 = sbr.rel (%p5922) target = $region68
        $region67: #{conv_stack_forward.1} parent=63 // pred_region
          %s5926 = ssub.s32 128, 128
          %5927 = vsyncadd %s5918, %s5926
          %s5928 = smul.addr %s25, 128
          %s5929 = scalar_lea.hbm %s11, %s5928
          %s5931 = sshll.u32 %s5921, 4
          %s5932 = int_to_ptr.vmem [resolvable:$true] %s5931
          %5934 = dma.vmem_to_hbm [thread:$0]  %s5932, 128, %s5929, %s5918
        $region68: #{conv_stack_forward.1} parent=63 // pred_fallthru
          _
      $region64: #{conv_stack_forward.1} parent=5 // pred_fallthru
        _
      %p5935 = scmp.le.s32.totalorder 2, %s20
      // Predicated region
      $region69: #{conv_stack_forward.1} parent=5 // pred_check
        %p5936 = pneg %p5935
      $region70: #{conv_stack_forward.1} parent=5 // pred_check_branch
        %5938 = sbr.rel (%p5936) target = $region72
      $region71: #{conv_stack_forward.1} parent=5 // pred_region
        %s5939 = ssub.s32 %s20, 2
        // Predicated region
        $region73: #{conv_stack_forward.1} parent=71 // pred_check
          %p5940 = pneg %p285
        $region74: #{conv_stack_forward.1} parent=71 // pred_check_branch
          %5942 = sbr.rel (%p5940) target = $region76
        $region75: #{conv_stack_forward.1} parent=71 // pred_region
          %s5943 = sand.u32 %s270, 1
          %s5944 = scalar_lea.sflag [#allocation9], %s5943
          %s5945 = sand.u32 %s270, 1
          %s5946 = smul.addr %s5945, 8
          %s5947 = scalar_lea.vmem [#allocation8], %s5946
          %5948 = dma.done %s5944, 128
        $region76: #{conv_stack_forward.1} parent=71 // pred_fallthru
          _
      $region72: #{conv_stack_forward.1} parent=5 // pred_fallthru
        _
    $region6: #{conv_stack_forward.1} parent=1 // loop_footer
      %s24 = sadd.s32 1, %s20
    $region7: #{conv_stack_forward.1} parent=1 // loop_footer_branch
      %19 = sbr.rel target = $region3
    $region8: #{conv_stack_forward.1} parent=1 // loop_exit
      _
    %5949 = vsyncpa [#allocation9], 1
    %s5950 = scalar_lea.sflag [#allocation9], 1
    %5951 = vsyncpa %s5950, 1

</llo_original>
